<compile_context>
chip_gen: v5e
topology: v5e:2x2
jax: 0.10.0
libtpu: 0.0.40
codegen_flags: <defaults>
</compile_context>

<pallas_src>
import functools

import numpy as np
import jax
import jax.numpy as jnp
from jax.experimental import pallas as pl
from jax.experimental.pallas import tpu as pltpu

CP = 128  # padded channel width (lane dimension) used for every layer


# ----------------------------------------------------------------------------
# Fully fused Pallas kernel
# ----------------------------------------------------------------------------
def _fused_kernel(x_ref, w_ref, b_ref, w6_ref, b6_ref, m1_ref, m3_ref, pv_ref,
                  o_ref, abuf, bbuf, ybuf, *, H, W):
    """Entire my_ConvNet forward for ONE image, fully VMEM-resident.

    x_ref:  (1, (H+2)*(W+2)+2, CP) bf16   padded-flat input image
    w_ref:  (45, CP, CP) bf16             5 stacked 3x3 convs, tap-major, BN folded
    b_ref:  (5, 1, CP)  f32               folded BN biases
    w6_ref: (CP, CP)    bf16              1x1 conv (conv6)
    b6_ref: (1, CP)     f32
    m1_ref: (H*(W+2), 1) f32              1.0 on valid columns, 0.0 on wrap cols
    m3_ref: ((H/2)*(W/2+2), 1) f32        same, for the 8x8 layers
    pv_ref: ((H/4)*(W/4+2), 1) f32        1/(H/4*W/4) on valid cols, 0 elsewhere
    o_ref:  (1, 1, CP)  f32               logits (first 10 lanes meaningful)
    abuf/bbuf: VMEM ping-pong activation buffers (padded-flat, bf16)
    ybuf:   VMEM f32 conv-output buffer (maxpool source)
    """
    # ---- static per-layer geometry ------------------------------------------
    H1, W1 = H, W
    P1 = W1 + 2
    HP1 = H1 * P1
    H3, W3 = H1 // 2, W1 // 2
    P3 = W3 + 2
    HP3 = H3 * P3
    H5, W5 = H3 // 2, W3 // 2
    P5 = W5 + 2
    HP5 = H5 * P5

    def conv_relu(read, layer, P, HP):
        # 9-tap 3x3 conv as chained MXU dots (no scratch RMW), f32 accumulation,
        # folded-BN bias, ReLU.
        acc = jnp.dot(read(0), w_ref[9 * layer],
                      preferred_element_type=jnp.float32)
        for t in range(1, 9):
            di, dj = divmod(t, 3)
            acc = acc + jnp.dot(read(di * P + dj), w_ref[9 * layer + t],
                                preferred_element_type=jnp.float32)
        return jnp.maximum(acc + b_ref[layer], 0.0)

    def repack(dst, y, mask, HP, Pn):
        # Zero-mask the 2 wrap-around columns and store straight into the NEXT
        # layer's padded-flat layout (interior starts at row Pn+1); the padding
        # ring comes from the full-buffer zero fill.
        dst[...] = jnp.zeros_like(dst)
        dst[pl.ds(Pn + 1, HP), :] = (y * mask).astype(jnp.bfloat16)

    def maxpool_into(dst, src, Hs, Ws, P, Pn):
        # 2x2 stride-2 maxpool of the flat f32 conv output in `src`, written
        # directly into the next layer's padded-flat layout in `dst`.
        Hh, Wh = Hs // 2, Ws // 2
        dst[...] = jnp.zeros_like(dst)
        for ip in range(Hh):
            base = 2 * ip * P
            v = jnp.maximum(
                jnp.maximum(src[pl.ds(base, Wh, 2), :],
                            src[pl.ds(base + 1, Wh, 2), :]),
                jnp.maximum(src[pl.ds(base + P, Wh, 2), :],
                            src[pl.ds(base + P + 1, Wh, 2), :]))
            dst[pl.ds((ip + 1) * Pn + 1, Wh), :] = v.astype(jnp.bfloat16)

    # ---- conv1 + BN + ReLU (reads the pipelined input block directly) -------
    y = conv_relu(lambda off: x_ref[0, pl.ds(off, HP1), :], 0, P1, HP1)
    repack(bbuf, y, m1_ref[...], HP1, P1)              # -> conv2 input layout

    # ---- conv2 + BN + ReLU -> maxpool 2x2 ------------------------------------
    y = conv_relu(lambda off: bbuf[pl.ds(off, HP1), :], 1, P1, HP1)
    ybuf[pl.ds(0, HP1), :] = y
    maxpool_into(abuf, ybuf, H1, W1, P1, P3)           # -> conv3 input layout

    # ---- conv3 + BN + ReLU ----------------------------------------------------
    y = conv_relu(lambda off: abuf[pl.ds(off, HP3), :], 2, P3, HP3)
    repack(bbuf, y, m3_ref[...], HP3, P3)              # -> conv4 input layout

    # ---- conv4 + BN + ReLU -> maxpool 2x2 ------------------------------------
    y = conv_relu(lambda off: bbuf[pl.ds(off, HP3), :], 3, P3, HP3)
    ybuf[pl.ds(0, HP3), :] = y
    maxpool_into(abuf, ybuf, H3, W3, P3, P5)           # -> conv5 input layout

    # ---- conv5 + BN + ReLU -> global avg pool -> conv6 (1x1) -----------------
    # conv6 and the average pool are both linear and come after the ReLU, so we
    # pool first and do a single tiny matmul (saves the (HP,CP) 1x1-conv pass).
    y = conv_relu(lambda off: abuf[pl.ds(off, HP5), :], 4, P5, HP5)
    pooled = jnp.sum(y * pv_ref[...], axis=0, keepdims=True)        # (1, CP)
    o_ref[0] = jnp.dot(pooled.astype(jnp.bfloat16), w6_ref[...],
                       preferred_element_type=jnp.float32) + b6_ref[...]


# ----------------------------------------------------------------------------
# Wrapper: one pallas_call for the whole network
# ----------------------------------------------------------------------------
def _valid_col_mask(Hs, Ws):
    P = Ws + 2
    col = np.arange(Hs * P) % P
    return jnp.asarray((col < Ws).astype(np.float32).reshape(Hs * P, 1))


def _avg_pool_vec(Hs, Ws):
    P = Ws + 2
    col = np.arange(Hs * P) % P
    v = np.where(col < Ws, 1.0 / (Hs * Ws), 0.0).astype(np.float32)
    return jnp.asarray(v.reshape(Hs * P, 1))


def _flatten_padded(x_nhwc):
    """NHWC (C==CP) -> spatially padded, row-flattened bf16 matrix per image."""
    N, Hs, Ws, C = x_nhwc.shape
    xp = jnp.pad(x_nhwc.astype(jnp.bfloat16), ((0, 0), (1, 1), (1, 1), (0, 0)))
    x_flat = xp.reshape(N, (Hs + 2) * (Ws + 2), C)
    return jnp.pad(x_flat, ((0, 0), (0, 2), (0, 0)))   # +2 rows for tap (2,2)


def fused_convnet(x_flat, pp, *, H, W):
    N = x_flat.shape[0]
    P1 = W + 2
    FLAT1 = (H + 2) * P1 + 2
    HP1 = H * P1
    H3, W3 = H // 2, W // 2
    HP3 = H3 * (W3 + 2)
    H5, W5 = H3 // 2, W3 // 2
    HP5 = H5 * (W5 + 2)

    m1 = _valid_col_mask(H, W)     # wrap-column masks (trace-time constants)
    m3 = _valid_col_mask(H3, W3)
    pv = _avg_pool_vec(H5, W5)

    out = pl.pallas_call(
        functools.partial(_fused_kernel, H=H, W=W),
        out_shape=jax.ShapeDtypeStruct((N, 1, CP), jnp.float32),
        grid_spec=pltpu.PrefetchScalarGridSpec(
            num_scalar_prefetch=0,
            grid=(N,),
            in_specs=[
                pl.BlockSpec((1, FLAT1, CP), lambda n: (n, 0, 0)),   # image
                pl.BlockSpec((45, CP, CP), lambda n: (0, 0, 0)),     # conv1..5 w
                pl.BlockSpec((5, 1, CP), lambda n: (0, 0, 0)),       # folded biases
                pl.BlockSpec((CP, CP), lambda n: (0, 0)),            # conv6 w
                pl.BlockSpec((1, CP), lambda n: (0, 0)),             # conv6 b
                pl.BlockSpec((HP1, 1), lambda n: (0, 0)),            # mask 16x16
                pl.BlockSpec((HP3, 1), lambda n: (0, 0)),            # mask 8x8
                pl.BlockSpec((HP5, 1), lambda n: (0, 0)),            # avg-pool vec
            ],
            out_specs=pl.BlockSpec((1, 1, CP), lambda n: (n, 0, 0)),
            scratch_shapes=[
                pltpu.VMEM((FLAT1, CP), jnp.bfloat16),   # activation ping
                pltpu.VMEM((FLAT1, CP), jnp.bfloat16),   # activation pong
                pltpu.VMEM((HP1, CP), jnp.float32),      # f32 conv out (pool src)
            ],
        ),
        compiler_params=pltpu.CompilerParams(
            dimension_semantics=("parallel",)),   # batch across v7x's 2 TCs
    )(x_flat, pp["w_all"], pp["b_all"], pp["w6"], pp["b6"], m1, m3, pv)
    return out[:, 0, :]   # (N, CP)


# ----------------------------------------------------------------------------
# Parameter construction / one-time preparation (fold BN, pad channels, bf16)
# ----------------------------------------------------------------------------
def fold_bn(conv_b, gamma, beta, mean, var, eps=1e-5):
    scale = gamma / jnp.sqrt(var + eps)
    bias = (conv_b - mean) * scale + beta
    return scale, bias


def _prep_conv3x3(w_oihw, scale, bias):
    """(Cout,Cin,3,3) + per-Cout scale/bias -> ((9,CP,CP) bf16, (1,CP) f32)."""
    cout, cin, kh, kw = w_oihw.shape
    w = jnp.transpose(w_oihw, (2, 3, 1, 0)) * scale[None, None, None, :]
    w = jnp.pad(w, ((0, 0), (0, 0), (0, CP - cin), (0, CP - cout)))
    w = w.reshape(kh * kw, CP, CP).astype(jnp.bfloat16)
    b = jnp.pad(bias, (0, CP - cout)).reshape(1, CP).astype(jnp.float32)
    return w, b


def prepare_params(p):
    pp = {}
    ws, bs = [], []
    for cname, bname in (("c1", "bn1"), ("c2", "bn2"), ("c3", "bn3"),
                         ("c4", "bn4"), ("c5", "bn5")):
        s, b = fold_bn(p[cname + "_b"], p[bname + "_gamma"], p[bname + "_beta"],
                       p[bname + "_mean"], p[bname + "_var"])
        w9, b1 = _prep_conv3x3(p[cname + "_w"], s, b)
        ws.append(w9)
        bs.append(b1)
    pp["w_all"] = jnp.concatenate(ws, axis=0)          # (45, CP, CP) bf16
    pp["b_all"] = jnp.stack(bs, axis=0)                # (5, 1, CP) f32
    cout, cin = p["c6_w"].shape[0], p["c6_w"].shape[1]
    w6 = jnp.transpose(p["c6_w"][:, :, 0, 0], (1, 0))  # (Cin, Cout)
    pp["w6"] = jnp.pad(w6, ((0, CP - cin), (0, CP - cout))).astype(jnp.bfloat16)
    pp["b6"] = jnp.pad(p["c6_b"], (0, CP - cout)).reshape(1, CP).astype(jnp.float32)
    return pp


def make_params(key):
    params = {}
    conv_defs = [
        ("c1", 3, 16, 3), ("c2", 16, 64, 3), ("c3", 64, 128, 3),
        ("c4", 128, 64, 3), ("c5", 64, 32, 3), ("c6", 32, 10, 1),
    ]
    for name, cin, cout, k in conv_defs:
        key, kw_, kb_ = jax.random.split(key, 3)
        fan_in = cin * k * k
        params[name + "_w"] = (
            jax.random.normal(kw_, (cout, cin, k, k), jnp.float32) / jnp.sqrt(fan_in)
        )
        params[name + "_b"] = 0.01 * jax.random.normal(kb_, (cout,), jnp.float32)
    bn_defs = [("bn1", 16), ("bn2", 64), ("bn3", 128), ("bn4", 64), ("bn5", 32)]
    for name, c in bn_defs:
        key, kg, kb, km, kv = jax.random.split(key, 5)
        params[name + "_gamma"] = 1.0 + 0.1 * jax.random.normal(kg, (c,), jnp.float32)
        params[name + "_beta"] = 0.1 * jax.random.normal(kb, (c,), jnp.float32)
        params[name + "_mean"] = 0.1 * jax.random.normal(km, (c,), jnp.float32)
        params[name + "_var"] = jnp.abs(jax.random.normal(kv, (c,), jnp.float32)) + 0.5
    return params


# ----------------------------------------------------------------------------
# Forward pass (matches nn.Sequential in my_ConvNet._make_layers, eval mode)
# ----------------------------------------------------------------------------
def my_convnet_forward(x_nchw, pp):
    N, C, H, W = x_nchw.shape
    assert H % 4 == 0 and W % 4 == 0, "spatial dims must be divisible by 4"
    x = jnp.transpose(x_nchw, (0, 2, 3, 1)).astype(jnp.float32)      # NCHW->NHWC
    x = jnp.pad(x, ((0, 0), (0, 0), (0, 0), (0, CP - C)))            # C -> 128
    x_flat = _flatten_padded(x)                                      # (N,FLAT,CP)

    out = fused_convnet(x_flat, pp, H=H, W=W)                        # (N, CP)
    out = out[:, :10]                 # drop channel padding
    if out.shape[0] == 1:             # match torch's out.squeeze() when N == 1
        out = out[0]
    return out


# ----------------------------------------------------------------------------
# Plain-JAX f32 reference (for a loose-tolerance sanity check)
# ----------------------------------------------------------------------------
def reference_forward(x_nchw, p, eps=1e-5):
    def conv(x, w, b, pad):
        y = jax.lax.conv_general_dilated(
            x, w, window_strides=(1, 1), padding=pad,
            dimension_numbers=("NCHW", "OIHW", "NCHW"))
        return y + b[None, :, None, None]

    def bn(x, name):
        g = p[name + "_gamma"][None, :, None, None]
        be = p[name + "_beta"][None, :, None, None]
        m = p[name + "_mean"][None, :, None, None]
        v = p[name + "_var"][None, :, None, None]
        return (x - m) / jnp.sqrt(v + eps) * g + be

    def block(x, c, b_):
        return jax.nn.relu(bn(conv(x, p[c + "_w"], p[c + "_b"], "SAME"), b_))

    def pool(x):
        N, C, Hs, Ws = x.shape
        return x.reshape(N, C, Hs // 2, 2, Ws // 2, 2).max(axis=(3, 5))

    x = block(x_nchw, "c1", "bn1")
    x = block(x, "c2", "bn2")
    x = pool(x)
    x = block(x, "c3", "bn3")
    x = block(x, "c4", "bn4")
    x = pool(x)
    x = block(x, "c5", "bn5")
    x = conv(x, p["c6_w"], p["c6_b"], "VALID")
    return jnp.mean(x, axis=(2, 3))          # (N, 10)


if __name__ == "__main__":
    key = jax.random.PRNGKey(0)
    key, kx = jax.random.split(key)

    # Small input consistent with the module: N=2, C=3 (required), 16x16 spatial.
    x = jax.random.normal(kx, (2, 3, 16, 16), jnp.float32)
    raw_params = make_params(key)
    pp = prepare_params(raw_params)   # one-time BN fold / pad / bf16 cast

    out = jax.jit(my_convnet_forward)(x, pp)
    out = jax.block_until_ready(out)

    assert out.shape == (2, 10), out.shape
    assert bool(jnp.all(jnp.isfinite(out)))

    # Loose-tolerance check vs. the plain-JAX f32 reference (kernel runs bf16
    # activations with f32 accumulation, so a few % error is expected).
    ref = reference_forward(x, raw_params)
    max_err = float(jnp.max(jnp.abs(out - ref)))
    tol = 0.08 * (1.0 + float(jnp.max(jnp.abs(ref))))
    assert max_err <= tol, (max_err, tol)

    print("KERNEL_OK")
</pallas_src>

<mosaic_0001>
module attributes {stable_mosaic.version = 11 : i64} {
  func.func @_fused_kernel(%arg0: i32, %arg1: memref<1x326x128xbf16, #tpu.memory_space<vmem>>, %arg2: memref<45x128x128xbf16, #tpu.memory_space<vmem>>, %arg3: memref<5x1x128xf32, #tpu.memory_space<vmem>>, %arg4: memref<128x128xbf16, #tpu.memory_space<vmem>>, %arg5: memref<1x128xf32, #tpu.memory_space<vmem>>, %arg6: memref<288x1xf32, #tpu.memory_space<vmem>>, %arg7: memref<80x1xf32, #tpu.memory_space<vmem>>, %arg8: memref<24x1xf32, #tpu.memory_space<vmem>>, %arg9: memref<1x1x128xf32, #tpu.memory_space<vmem>>, %arg10: memref<326x128xbf16, #tpu.memory_space<vmem>>, %arg11: memref<326x128xbf16, #tpu.memory_space<vmem>>, %arg12: memref<288x128xf32, #tpu.memory_space<vmem>>) attributes {dimension_semantics = [#tpu.dimension_semantics<parallel>], iteration_bounds = array<i64: 2>, scalar_prefetch = 0 : i64, scratch_operands = 3 : i64, tpu.core_type = #tpu.core_type<tc>, window_params = [{transform_indices = @transform_0, window_bounds = array<i64: 1, 326, 128>}, {pipeline_mode = #tpu.pipeline_mode<synchronous>, transform_indices = @transform_1, window_bounds = array<i64: 45, 128, 128>}, {pipeline_mode = #tpu.pipeline_mode<synchronous>, transform_indices = @transform_2, window_bounds = array<i64: 5, 1, 128>}, {pipeline_mode = #tpu.pipeline_mode<synchronous>, transform_indices = @transform_3, window_bounds = array<i64: 128, 128>}, {pipeline_mode = #tpu.pipeline_mode<synchronous>, transform_indices = @transform_4, window_bounds = array<i64: 1, 128>}, {pipeline_mode = #tpu.pipeline_mode<synchronous>, transform_indices = @transform_5, window_bounds = array<i64: 288, 1>}, {pipeline_mode = #tpu.pipeline_mode<synchronous>, transform_indices = @transform_6, window_bounds = array<i64: 80, 1>}, {pipeline_mode = #tpu.pipeline_mode<synchronous>, transform_indices = @transform_7, window_bounds = array<i64: 24, 1>}, {transform_indices = @transform_8, window_bounds = array<i64: 1, 1, 128>}]} {
    %c0 = arith.constant 0 : index
    %c0_0 = arith.constant 0 : index
    %c0_1 = arith.constant 0 : index
    %0 = vector.load %arg1[%c0, %c0_0, %c0_1] : memref<1x326x128xbf16, #tpu.memory_space<vmem>>, vector<1x288x128xbf16>
    %1 = vector.shape_cast %0 : vector<1x288x128xbf16> to vector<288x128xbf16>
    %c0_2 = arith.constant 0 : index
    %c0_3 = arith.constant 0 : index
    %c0_4 = arith.constant 0 : index
    %2 = vector.load %arg2[%c0_2, %c0_3, %c0_4] : memref<45x128x128xbf16, #tpu.memory_space<vmem>>, vector<1x128x128xbf16>
    %3 = vector.shape_cast %2 : vector<1x128x128xbf16> to vector<128x128xbf16>
    %cst = arith.constant dense<0.000000e+00> : vector<288x128xf32>
    %4 = tpu.matmul %1, %3, %cst {dimension_numbers = #tpu.dot_dimension_numbers<[1], [0], [0], [1], [0, 0, 1, 1], [], []>} : vector<288x128xbf16>, vector<128x128xbf16>, vector<288x128xf32> -> vector<288x128xf32>
    %c0_5 = arith.constant 0 : index
    %c1 = arith.constant 1 : index
    %c0_6 = arith.constant 0 : index
    %5 = vector.load %arg1[%c0_5, %c1, %c0_6] : memref<1x326x128xbf16, #tpu.memory_space<vmem>>, vector<1x288x128xbf16>
    %6 = vector.shape_cast %5 : vector<1x288x128xbf16> to vector<288x128xbf16>
    %c1_7 = arith.constant 1 : index
    %c0_8 = arith.constant 0 : index
    %c0_9 = arith.constant 0 : index
    %7 = vector.load %arg2[%c1_7, %c0_8, %c0_9] : memref<45x128x128xbf16, #tpu.memory_space<vmem>>, vector<1x128x128xbf16>
    %8 = vector.shape_cast %7 : vector<1x128x128xbf16> to vector<128x128xbf16>
    %cst_10 = arith.constant dense<0.000000e+00> : vector<288x128xf32>
    %9 = tpu.matmul %6, %8, %cst_10 {dimension_numbers = #tpu.dot_dimension_numbers<[1], [0], [0], [1], [0, 0, 1, 1], [], []>} : vector<288x128xbf16>, vector<128x128xbf16>, vector<288x128xf32> -> vector<288x128xf32>
    %10 = arith.addf %4, %9 : vector<288x128xf32>
    %c0_11 = arith.constant 0 : index
    %c2 = arith.constant 2 : index
    %c0_12 = arith.constant 0 : index
    %11 = vector.load %arg1[%c0_11, %c2, %c0_12] : memref<1x326x128xbf16, #tpu.memory_space<vmem>>, vector<1x288x128xbf16>
    %12 = vector.shape_cast %11 : vector<1x288x128xbf16> to vector<288x128xbf16>
    %c2_13 = arith.constant 2 : index
    %c0_14 = arith.constant 0 : index
    %c0_15 = arith.constant 0 : index
    %13 = vector.load %arg2[%c2_13, %c0_14, %c0_15] : memref<45x128x128xbf16, #tpu.memory_space<vmem>>, vector<1x128x128xbf16>
    %14 = vector.shape_cast %13 : vector<1x128x128xbf16> to vector<128x128xbf16>
    %cst_16 = arith.constant dense<0.000000e+00> : vector<288x128xf32>
    %15 = tpu.matmul %12, %14, %cst_16 {dimension_numbers = #tpu.dot_dimension_numbers<[1], [0], [0], [1], [0, 0, 1, 1], [], []>} : vector<288x128xbf16>, vector<128x128xbf16>, vector<288x128xf32> -> vector<288x128xf32>
    %16 = arith.addf %10, %15 : vector<288x128xf32>
    %c0_17 = arith.constant 0 : index
    %c18 = arith.constant 18 : index
    %c0_18 = arith.constant 0 : index
    %17 = vector.load %arg1[%c0_17, %c18, %c0_18] : memref<1x326x128xbf16, #tpu.memory_space<vmem>>, vector<1x288x128xbf16>
    %18 = vector.shape_cast %17 : vector<1x288x128xbf16> to vector<288x128xbf16>
    %c3 = arith.constant 3 : index
    %c0_19 = arith.constant 0 : index
    %c0_20 = arith.constant 0 : index
    %19 = vector.load %arg2[%c3, %c0_19, %c0_20] : memref<45x128x128xbf16, #tpu.memory_space<vmem>>, vector<1x128x128xbf16>
    %20 = vector.shape_cast %19 : vector<1x128x128xbf16> to vector<128x128xbf16>
    %cst_21 = arith.constant dense<0.000000e+00> : vector<288x128xf32>
    %21 = tpu.matmul %18, %20, %cst_21 {dimension_numbers = #tpu.dot_dimension_numbers<[1], [0], [0], [1], [0, 0, 1, 1], [], []>} : vector<288x128xbf16>, vector<128x128xbf16>, vector<288x128xf32> -> vector<288x128xf32>
    %22 = arith.addf %16, %21 : vector<288x128xf32>
    %c0_22 = arith.constant 0 : index
    %c19 = arith.constant 19 : index
    %c0_23 = arith.constant 0 : index
    %23 = vector.load %arg1[%c0_22, %c19, %c0_23] : memref<1x326x128xbf16, #tpu.memory_space<vmem>>, vector<1x288x128xbf16>
    %24 = vector.shape_cast %23 : vector<1x288x128xbf16> to vector<288x128xbf16>
    %c4 = arith.constant 4 : index
    %c0_24 = arith.constant 0 : index
    %c0_25 = arith.constant 0 : index
    %25 = vector.load %arg2[%c4, %c0_24, %c0_25] : memref<45x128x128xbf16, #tpu.memory_space<vmem>>, vector<1x128x128xbf16>
    %26 = vector.shape_cast %25 : vector<1x128x128xbf16> to vector<128x128xbf16>
    %cst_26 = arith.constant dense<0.000000e+00> : vector<288x128xf32>
    %27 = tpu.matmul %24, %26, %cst_26 {dimension_numbers = #tpu.dot_dimension_numbers<[1], [0], [0], [1], [0, 0, 1, 1], [], []>} : vector<288x128xbf16>, vector<128x128xbf16>, vector<288x128xf32> -> vector<288x128xf32>
    %28 = arith.addf %22, %27 : vector<288x128xf32>
    %c0_27 = arith.constant 0 : index
    %c20 = arith.constant 20 : index
    %c0_28 = arith.constant 0 : index
    %29 = vector.load %arg1[%c0_27, %c20, %c0_28] : memref<1x326x128xbf16, #tpu.memory_space<vmem>>, vector<1x288x128xbf16>
    %30 = vector.shape_cast %29 : vector<1x288x128xbf16> to vector<288x128xbf16>
    %c5 = arith.constant 5 : index
    %c0_29 = arith.constant 0 : index
    %c0_30 = arith.constant 0 : index
    %31 = vector.load %arg2[%c5, %c0_29, %c0_30] : memref<45x128x128xbf16, #tpu.memory_space<vmem>>, vector<1x128x128xbf16>
    %32 = vector.shape_cast %31 : vector<1x128x128xbf16> to vector<128x128xbf16>
    %cst_31 = arith.constant dense<0.000000e+00> : vector<288x128xf32>
    %33 = tpu.matmul %30, %32, %cst_31 {dimension_numbers = #tpu.dot_dimension_numbers<[1], [0], [0], [1], [0, 0, 1, 1], [], []>} : vector<288x128xbf16>, vector<128x128xbf16>, vector<288x128xf32> -> vector<288x128xf32>
    %34 = arith.addf %28, %33 : vector<288x128xf32>
    %c0_32 = arith.constant 0 : index
    %c36 = arith.constant 36 : index
    %c0_33 = arith.constant 0 : index
    %35 = vector.load %arg1[%c0_32, %c36, %c0_33] : memref<1x326x128xbf16, #tpu.memory_space<vmem>>, vector<1x288x128xbf16>
    %36 = vector.shape_cast %35 : vector<1x288x128xbf16> to vector<288x128xbf16>
    %c6 = arith.constant 6 : index
    %c0_34 = arith.constant 0 : index
    %c0_35 = arith.constant 0 : index
    %37 = vector.load %arg2[%c6, %c0_34, %c0_35] : memref<45x128x128xbf16, #tpu.memory_space<vmem>>, vector<1x128x128xbf16>
    %38 = vector.shape_cast %37 : vector<1x128x128xbf16> to vector<128x128xbf16>
    %cst_36 = arith.constant dense<0.000000e+00> : vector<288x128xf32>
    %39 = tpu.matmul %36, %38, %cst_36 {dimension_numbers = #tpu.dot_dimension_numbers<[1], [0], [0], [1], [0, 0, 1, 1], [], []>} : vector<288x128xbf16>, vector<128x128xbf16>, vector<288x128xf32> -> vector<288x128xf32>
    %40 = arith.addf %34, %39 : vector<288x128xf32>
    %c0_37 = arith.constant 0 : index
    %c37 = arith.constant 37 : index
    %c0_38 = arith.constant 0 : index
    %41 = vector.load %arg1[%c0_37, %c37, %c0_38] : memref<1x326x128xbf16, #tpu.memory_space<vmem>>, vector<1x288x128xbf16>
    %42 = vector.shape_cast %41 : vector<1x288x128xbf16> to vector<288x128xbf16>
    %c7 = arith.constant 7 : index
    %c0_39 = arith.constant 0 : index
    %c0_40 = arith.constant 0 : index
    %43 = vector.load %arg2[%c7, %c0_39, %c0_40] : memref<45x128x128xbf16, #tpu.memory_space<vmem>>, vector<1x128x128xbf16>
    %44 = vector.shape_cast %43 : vector<1x128x128xbf16> to vector<128x128xbf16>
    %cst_41 = arith.constant dense<0.000000e+00> : vector<288x128xf32>
    %45 = tpu.matmul %42, %44, %cst_41 {dimension_numbers = #tpu.dot_dimension_numbers<[1], [0], [0], [1], [0, 0, 1, 1], [], []>} : vector<288x128xbf16>, vector<128x128xbf16>, vector<288x128xf32> -> vector<288x128xf32>
    %46 = arith.addf %40, %45 : vector<288x128xf32>
    %c0_42 = arith.constant 0 : index
    %c38 = arith.constant 38 : index
    %c0_43 = arith.constant 0 : index
    %47 = vector.load %arg1[%c0_42, %c38, %c0_43] : memref<1x326x128xbf16, #tpu.memory_space<vmem>>, vector<1x288x128xbf16>
    %48 = vector.shape_cast %47 : vector<1x288x128xbf16> to vector<288x128xbf16>
    %c8 = arith.constant 8 : index
    %c0_44 = arith.constant 0 : index
    %c0_45 = arith.constant 0 : index
    %49 = vector.load %arg2[%c8, %c0_44, %c0_45] : memref<45x128x128xbf16, #tpu.memory_space<vmem>>, vector<1x128x128xbf16>
    %50 = vector.shape_cast %49 : vector<1x128x128xbf16> to vector<128x128xbf16>
    %cst_46 = arith.constant dense<0.000000e+00> : vector<288x128xf32>
    %51 = tpu.matmul %48, %50, %cst_46 {dimension_numbers = #tpu.dot_dimension_numbers<[1], [0], [0], [1], [0, 0, 1, 1], [], []>} : vector<288x128xbf16>, vector<128x128xbf16>, vector<288x128xf32> -> vector<288x128xf32>
    %52 = arith.addf %46, %51 : vector<288x128xf32>
    %c0_47 = arith.constant 0 : index
    %c0_48 = arith.constant 0 : index
    %c0_49 = arith.constant 0 : index
    %53 = vector.load %arg3[%c0_47, %c0_48, %c0_49] : memref<5x1x128xf32, #tpu.memory_space<vmem>>, vector<1x1x128xf32>
    %54 = vector.shape_cast %53 : vector<1x1x128xf32> to vector<1x128xf32>
    %55 = vector.broadcast %54 : vector<1x128xf32> to vector<288x128xf32>
    %56 = arith.addf %52, %55 : vector<288x128xf32>
    %cst_50 = arith.constant 0.000000e+00 : f32
    %57 = vector.broadcast %cst_50 : f32 to vector<288x128xf32>
    %58 = arith.maximumf %56, %57 : vector<288x128xf32>
    %c0_51 = arith.constant 0 : index
    %c0_52 = arith.constant 0 : index
    %59 = vector.load %arg6[%c0_51, %c0_52] : memref<288x1xf32, #tpu.memory_space<vmem>>, vector<288x1xf32>
    %cst_53 = arith.constant 0.000000e+00 : bf16
    %60 = vector.broadcast %cst_53 : bf16 to vector<326x128xbf16>
    %c0_54 = arith.constant 0 : index
    %c0_55 = arith.constant 0 : index
    %61 = vector.load %arg11[%c0_54, %c0_55] : memref<326x128xbf16, #tpu.memory_space<vmem>>, vector<326x128xbf16>
    tpu.vector_store %arg11[%c0_54, %c0_55], %60 {strides = array<i32>} : memref<326x128xbf16, #tpu.memory_space<vmem>>, vector<326x128xbf16>,
    %62 = vector.broadcast %59 : vector<288x1xf32> to vector<288x128xf32>
    %63 = arith.mulf %58, %62 : vector<288x128xf32>
    %64 = arith.truncf %63 : vector<288x128xf32> to vector<288x128xbf16>
    %c19_56 = arith.constant 19 : index
    %c0_57 = arith.constant 0 : index
    %65 = vector.load %arg11[%c19_56, %c0_57] : memref<326x128xbf16, #tpu.memory_space<vmem>>, vector<288x128xbf16>
    tpu.vector_store %arg11[%c19_56, %c0_57], %64 {strides = array<i32>} : memref<326x128xbf16, #tpu.memory_space<vmem>>, vector<288x128xbf16>,
    %c0_58 = arith.constant 0 : index
    %c0_59 = arith.constant 0 : index
    %66 = vector.load %arg11[%c0_58, %c0_59] : memref<326x128xbf16, #tpu.memory_space<vmem>>, vector<288x128xbf16>
    %c9 = arith.constant 9 : index
    %c0_60 = arith.constant 0 : index
    %c0_61 = arith.constant 0 : index
    %67 = vector.load %arg2[%c9, %c0_60, %c0_61] : memref<45x128x128xbf16, #tpu.memory_space<vmem>>, vector<1x128x128xbf16>
    %68 = vector.shape_cast %67 : vector<1x128x128xbf16> to vector<128x128xbf16>
    %cst_62 = arith.constant dense<0.000000e+00> : vector<288x128xf32>
    %69 = tpu.matmul %66, %68, %cst_62 {dimension_numbers = #tpu.dot_dimension_numbers<[1], [0], [0], [1], [0, 0, 1, 1], [], []>} : vector<288x128xbf16>, vector<128x128xbf16>, vector<288x128xf32> -> vector<288x128xf32>
    %c1_63 = arith.constant 1 : index
    %c0_64 = arith.constant 0 : index
    %70 = vector.load %arg11[%c1_63, %c0_64] : memref<326x128xbf16, #tpu.memory_space<vmem>>, vector<288x128xbf16>
    %c10 = arith.constant 10 : index
    %c0_65 = arith.constant 0 : index
    %c0_66 = arith.constant 0 : index
    %71 = vector.load %arg2[%c10, %c0_65, %c0_66] : memref<45x128x128xbf16, #tpu.memory_space<vmem>>, vector<1x128x128xbf16>
    %72 = vector.shape_cast %71 : vector<1x128x128xbf16> to vector<128x128xbf16>
    %cst_67 = arith.constant dense<0.000000e+00> : vector<288x128xf32>
    %73 = tpu.matmul %70, %72, %cst_67 {dimension_numbers = #tpu.dot_dimension_numbers<[1], [0], [0], [1], [0, 0, 1, 1], [], []>} : vector<288x128xbf16>, vector<128x128xbf16>, vector<288x128xf32> -> vector<288x128xf32>
    %74 = arith.addf %69, %73 : vector<288x128xf32>
    %c2_68 = arith.constant 2 : index
    %c0_69 = arith.constant 0 : index
    %75 = vector.load %arg11[%c2_68, %c0_69] : memref<326x128xbf16, #tpu.memory_space<vmem>>, vector<288x128xbf16>
    %c11 = arith.constant 11 : index
    %c0_70 = arith.constant 0 : index
    %c0_71 = arith.constant 0 : index
    %76 = vector.load %arg2[%c11, %c0_70, %c0_71] : memref<45x128x128xbf16, #tpu.memory_space<vmem>>, vector<1x128x128xbf16>
    %77 = vector.shape_cast %76 : vector<1x128x128xbf16> to vector<128x128xbf16>
    %cst_72 = arith.constant dense<0.000000e+00> : vector<288x128xf32>
    %78 = tpu.matmul %75, %77, %cst_72 {dimension_numbers = #tpu.dot_dimension_numbers<[1], [0], [0], [1], [0, 0, 1, 1], [], []>} : vector<288x128xbf16>, vector<128x128xbf16>, vector<288x128xf32> -> vector<288x128xf32>
    %79 = arith.addf %74, %78 : vector<288x128xf32>
    %c18_73 = arith.constant 18 : index
    %c0_74 = arith.constant 0 : index
    %80 = vector.load %arg11[%c18_73, %c0_74] : memref<326x128xbf16, #tpu.memory_space<vmem>>, vector<288x128xbf16>
    %c12 = arith.constant 12 : index
    %c0_75 = arith.constant 0 : index
    %c0_76 = arith.constant 0 : index
    %81 = vector.load %arg2[%c12, %c0_75, %c0_76] : memref<45x128x128xbf16, #tpu.memory_space<vmem>>, vector<1x128x128xbf16>
    %82 = vector.shape_cast %81 : vector<1x128x128xbf16> to vector<128x128xbf16>
    %cst_77 = arith.constant dense<0.000000e+00> : vector<288x128xf32>
    %83 = tpu.matmul %80, %82, %cst_77 {dimension_numbers = #tpu.dot_dimension_numbers<[1], [0], [0], [1], [0, 0, 1, 1], [], []>} : vector<288x128xbf16>, vector<128x128xbf16>, vector<288x128xf32> -> vector<288x128xf32>
    %84 = arith.addf %79, %83 : vector<288x128xf32>
    %c19_78 = arith.constant 19 : index
    %c0_79 = arith.constant 0 : index
    %85 = vector.load %arg11[%c19_78, %c0_79] : memref<326x128xbf16, #tpu.memory_space<vmem>>, vector<288x128xbf16>
    %c13 = arith.constant 13 : index
    %c0_80 = arith.constant 0 : index
    %c0_81 = arith.constant 0 : index
    %86 = vector.load %arg2[%c13, %c0_80, %c0_81] : memref<45x128x128xbf16, #tpu.memory_space<vmem>>, vector<1x128x128xbf16>
    %87 = vector.shape_cast %86 : vector<1x128x128xbf16> to vector<128x128xbf16>
    %cst_82 = arith.constant dense<0.000000e+00> : vector<288x128xf32>
    %88 = tpu.matmul %85, %87, %cst_82 {dimension_numbers = #tpu.dot_dimension_numbers<[1], [0], [0], [1], [0, 0, 1, 1], [], []>} : vector<288x128xbf16>, vector<128x128xbf16>, vector<288x128xf32> -> vector<288x128xf32>
    %89 = arith.addf %84, %88 : vector<288x128xf32>
    %c20_83 = arith.constant 20 : index
    %c0_84 = arith.constant 0 : index
    %90 = vector.load %arg11[%c20_83, %c0_84] : memref<326x128xbf16, #tpu.memory_space<vmem>>, vector<288x128xbf16>
    %c14 = arith.constant 14 : index
    %c0_85 = arith.constant 0 : index
    %c0_86 = arith.constant 0 : index
    %91 = vector.load %arg2[%c14, %c0_85, %c0_86] : memref<45x128x128xbf16, #tpu.memory_space<vmem>>, vector<1x128x128xbf16>
    %92 = vector.shape_cast %91 : vector<1x128x128xbf16> to vector<128x128xbf16>
    %cst_87 = arith.constant dense<0.000000e+00> : vector<288x128xf32>
    %93 = tpu.matmul %90, %92, %cst_87 {dimension_numbers = #tpu.dot_dimension_numbers<[1], [0], [0], [1], [0, 0, 1, 1], [], []>} : vector<288x128xbf16>, vector<128x128xbf16>, vector<288x128xf32> -> vector<288x128xf32>
    %94 = arith.addf %89, %93 : vector<288x128xf32>
    %c36_88 = arith.constant 36 : index
    %c0_89 = arith.constant 0 : index
    %95 = vector.load %arg11[%c36_88, %c0_89] : memref<326x128xbf16, #tpu.memory_space<vmem>>, vector<288x128xbf16>
    %c15 = arith.constant 15 : index
    %c0_90 = arith.constant 0 : index
    %c0_91 = arith.constant 0 : index
    %96 = vector.load %arg2[%c15, %c0_90, %c0_91] : memref<45x128x128xbf16, #tpu.memory_space<vmem>>, vector<1x128x128xbf16>
    %97 = vector.shape_cast %96 : vector<1x128x128xbf16> to vector<128x128xbf16>
    %cst_92 = arith.constant dense<0.000000e+00> : vector<288x128xf32>
    %98 = tpu.matmul %95, %97, %cst_92 {dimension_numbers = #tpu.dot_dimension_numbers<[1], [0], [0], [1], [0, 0, 1, 1], [], []>} : vector<288x128xbf16>, vector<128x128xbf16>, vector<288x128xf32> -> vector<288x128xf32>
    %99 = arith.addf %94, %98 : vector<288x128xf32>
    %c37_93 = arith.constant 37 : index
    %c0_94 = arith.constant 0 : index
    %100 = vector.load %arg11[%c37_93, %c0_94] : memref<326x128xbf16, #tpu.memory_space<vmem>>, vector<288x128xbf16>
    %c16 = arith.constant 16 : index
    %c0_95 = arith.constant 0 : index
    %c0_96 = arith.constant 0 : index
    %101 = vector.load %arg2[%c16, %c0_95, %c0_96] : memref<45x128x128xbf16, #tpu.memory_space<vmem>>, vector<1x128x128xbf16>
    %102 = vector.shape_cast %101 : vector<1x128x128xbf16> to vector<128x128xbf16>
    %cst_97 = arith.constant dense<0.000000e+00> : vector<288x128xf32>
    %103 = tpu.matmul %100, %102, %cst_97 {dimension_numbers = #tpu.dot_dimension_numbers<[1], [0], [0], [1], [0, 0, 1, 1], [], []>} : vector<288x128xbf16>, vector<128x128xbf16>, vector<288x128xf32> -> vector<288x128xf32>
    %104 = arith.addf %99, %103 : vector<288x128xf32>
    %c38_98 = arith.constant 38 : index
    %c0_99 = arith.constant 0 : index
    %105 = vector.load %arg11[%c38_98, %c0_99] : memref<326x128xbf16, #tpu.memory_space<vmem>>, vector<288x128xbf16>
    %c17 = arith.constant 17 : index
    %c0_100 = arith.constant 0 : index
    %c0_101 = arith.constant 0 : index
    %106 = vector.load %arg2[%c17, %c0_100, %c0_101] : memref<45x128x128xbf16, #tpu.memory_space<vmem>>, vector<1x128x128xbf16>
    %107 = vector.shape_cast %106 : vector<1x128x128xbf16> to vector<128x128xbf16>
    %cst_102 = arith.constant dense<0.000000e+00> : vector<288x128xf32>
    %108 = tpu.matmul %105, %107, %cst_102 {dimension_numbers = #tpu.dot_dimension_numbers<[1], [0], [0], [1], [0, 0, 1, 1], [], []>} : vector<288x128xbf16>, vector<128x128xbf16>, vector<288x128xf32> -> vector<288x128xf32>
    %109 = arith.addf %104, %108 : vector<288x128xf32>
    %c1_103 = arith.constant 1 : index
    %c0_104 = arith.constant 0 : index
    %c0_105 = arith.constant 0 : index
    %110 = vector.load %arg3[%c1_103, %c0_104, %c0_105] : memref<5x1x128xf32, #tpu.memory_space<vmem>>, vector<1x1x128xf32>
    %111 = vector.shape_cast %110 : vector<1x1x128xf32> to vector<1x128xf32>
    %112 = vector.broadcast %111 : vector<1x128xf32> to vector<288x128xf32>
    %113 = arith.addf %109, %112 : vector<288x128xf32>
    %cst_106 = arith.constant 0.000000e+00 : f32
    %114 = vector.broadcast %cst_106 : f32 to vector<288x128xf32>
    %115 = arith.maximumf %113, %114 : vector<288x128xf32>
    %c0_107 = arith.constant 0 : index
    %c0_108 = arith.constant 0 : index
    %116 = vector.load %arg12[%c0_107, %c0_108] : memref<288x128xf32, #tpu.memory_space<vmem>>, vector<288x128xf32>
    tpu.vector_store %arg12[%c0_107, %c0_108], %115 {strides = array<i32>} : memref<288x128xf32, #tpu.memory_space<vmem>>, vector<288x128xf32>,
    %cst_109 = arith.constant 0.000000e+00 : bf16
    %117 = vector.broadcast %cst_109 : bf16 to vector<326x128xbf16>
    %c0_110 = arith.constant 0 : index
    %c0_111 = arith.constant 0 : index
    %118 = vector.load %arg10[%c0_110, %c0_111] : memref<326x128xbf16, #tpu.memory_space<vmem>>, vector<326x128xbf16>
    tpu.vector_store %arg10[%c0_110, %c0_111], %117 {strides = array<i32>} : memref<326x128xbf16, #tpu.memory_space<vmem>>, vector<326x128xbf16>,
    %c0_112 = arith.constant 0 : index
    %c0_113 = arith.constant 0 : index
    %119 = tpu.strided_load %arg12[%c0_112, %c0_113] {strides = array<i32: 2, 1>} : memref<288x128xf32, #tpu.memory_space<vmem>>, vector<8x128xf32>
    %c1_114 = arith.constant 1 : index
    %c0_115 = arith.constant 0 : index
    %120 = tpu.strided_load %arg12[%c1_114, %c0_115] {strides = array<i32: 2, 1>} : memref<288x128xf32, #tpu.memory_space<vmem>>, vector<8x128xf32>
    %121 = arith.maximumf %119, %120 : vector<8x128xf32>
    %c18_116 = arith.constant 18 : index
    %c0_117 = arith.constant 0 : index
    %122 = tpu.strided_load %arg12[%c18_116, %c0_117] {strides = array<i32: 2, 1>} : memref<288x128xf32, #tpu.memory_space<vmem>>, vector<8x128xf32>
    %c19_118 = arith.constant 19 : index
    %c0_119 = arith.constant 0 : index
    %123 = tpu.strided_load %arg12[%c19_118, %c0_119] {strides = array<i32: 2, 1>} : memref<288x128xf32, #tpu.memory_space<vmem>>, vector<8x128xf32>
    %124 = arith.maximumf %122, %123 : vector<8x128xf32>
    %125 = arith.maximumf %121, %124 : vector<8x128xf32>
    %126 = arith.truncf %125 : vector<8x128xf32> to vector<8x128xbf16>
    %c11_120 = arith.constant 11 : index
    %c0_121 = arith.constant 0 : index
    %127 = vector.load %arg10[%c11_120, %c0_121] : memref<326x128xbf16, #tpu.memory_space<vmem>>, vector<8x128xbf16>
    tpu.vector_store %arg10[%c11_120, %c0_121], %126 {strides = array<i32>} : memref<326x128xbf16, #tpu.memory_space<vmem>>, vector<8x128xbf16>,
    %c36_122 = arith.constant 36 : index
    %c0_123 = arith.constant 0 : index
    %128 = tpu.strided_load %arg12[%c36_122, %c0_123] {strides = array<i32: 2, 1>} : memref<288x128xf32, #tpu.memory_space<vmem>>, vector<8x128xf32>
    %c37_124 = arith.constant 37 : index
    %c0_125 = arith.constant 0 : index
    %129 = tpu.strided_load %arg12[%c37_124, %c0_125] {strides = array<i32: 2, 1>} : memref<288x128xf32, #tpu.memory_space<vmem>>, vector<8x128xf32>
    %130 = arith.maximumf %128, %129 : vector<8x128xf32>
    %c54 = arith.constant 54 : index
    %c0_126 = arith.constant 0 : index
    %131 = tpu.strided_load %arg12[%c54, %c0_126] {strides = array<i32: 2, 1>} : memref<288x128xf32, #tpu.memory_space<vmem>>, vector<8x128xf32>
    %c55 = arith.constant 55 : index
    %c0_127 = arith.constant 0 : index
    %132 = tpu.strided_load %arg12[%c55, %c0_127] {strides = array<i32: 2, 1>} : memref<288x128xf32, #tpu.memory_space<vmem>>, vector<8x128xf32>
    %133 = arith.maximumf %131, %132 : vector<8x128xf32>
    %134 = arith.maximumf %130, %133 : vector<8x128xf32>
    %135 = arith.truncf %134 : vector<8x128xf32> to vector<8x128xbf16>
    %c21 = arith.constant 21 : index
    %c0_128 = arith.constant 0 : index
    %136 = vector.load %arg10[%c21, %c0_128] : memref<326x128xbf16, #tpu.memory_space<vmem>>, vector<8x128xbf16>
    tpu.vector_store %arg10[%c21, %c0_128], %135 {strides = array<i32>} : memref<326x128xbf16, #tpu.memory_space<vmem>>, vector<8x128xbf16>,
    %c72 = arith.constant 72 : index
    %c0_129 = arith.constant 0 : index
    %137 = tpu.strided_load %arg12[%c72, %c0_129] {strides = array<i32: 2, 1>} : memref<288x128xf32, #tpu.memory_space<vmem>>, vector<8x128xf32>
    %c73 = arith.constant 73 : index
    %c0_130 = arith.constant 0 : index
    %138 = tpu.strided_load %arg12[%c73, %c0_130] {strides = array<i32: 2, 1>} : memref<288x128xf32, #tpu.memory_space<vmem>>, vector<8x128xf32>
    %139 = arith.maximumf %137, %138 : vector<8x128xf32>
    %c90 = arith.constant 90 : index
    %c0_131 = arith.constant 0 : index
    %140 = tpu.strided_load %arg12[%c90, %c0_131] {strides = array<i32: 2, 1>} : memref<288x128xf32, #tpu.memory_space<vmem>>, vector<8x128xf32>
    %c91 = arith.constant 91 : index
    %c0_132 = arith.constant 0 : index
    %141 = tpu.strided_load %arg12[%c91, %c0_132] {strides = array<i32: 2, 1>} : memref<288x128xf32, #tpu.memory_space<vmem>>, vector<8x128xf32>
    %142 = arith.maximumf %140, %141 : vector<8x128xf32>
    %143 = arith.maximumf %139, %142 : vector<8x128xf32>
    %144 = arith.truncf %143 : vector<8x128xf32> to vector<8x128xbf16>
    %c31 = arith.constant 31 : index
    %c0_133 = arith.constant 0 : index
    %145 = vector.load %arg10[%c31, %c0_133] : memref<326x128xbf16, #tpu.memory_space<vmem>>, vector<8x128xbf16>
    tpu.vector_store %arg10[%c31, %c0_133], %144 {strides = array<i32>} : memref<326x128xbf16, #tpu.memory_space<vmem>>, vector<8x128xbf16>,
    %c108 = arith.constant 108 : index
    %c0_134 = arith.constant 0 : index
    %146 = tpu.strided_load %arg12[%c108, %c0_134] {strides = array<i32: 2, 1>} : memref<288x128xf32, #tpu.memory_space<vmem>>, vector<8x128xf32>
    %c109 = arith.constant 109 : index
    %c0_135 = arith.constant 0 : index
    %147 = tpu.strided_load %arg12[%c109, %c0_135] {strides = array<i32: 2, 1>} : memref<288x128xf32, #tpu.memory_space<vmem>>, vector<8x128xf32>
    %148 = arith.maximumf %146, %147 : vector<8x128xf32>
    %c126 = arith.constant 126 : index
    %c0_136 = arith.constant 0 : index
    %149 = tpu.strided_load %arg12[%c126, %c0_136] {strides = array<i32: 2, 1>} : memref<288x128xf32, #tpu.memory_space<vmem>>, vector<8x128xf32>
    %c127 = arith.constant 127 : index
    %c0_137 = arith.constant 0 : index
    %150 = tpu.strided_load %arg12[%c127, %c0_137] {strides = array<i32: 2, 1>} : memref<288x128xf32, #tpu.memory_space<vmem>>, vector<8x128xf32>
    %151 = arith.maximumf %149, %150 : vector<8x128xf32>
    %152 = arith.maximumf %148, %151 : vector<8x128xf32>
    %153 = arith.truncf %152 : vector<8x128xf32> to vector<8x128xbf16>
    %c41 = arith.constant 41 : index
    %c0_138 = arith.constant 0 : index
    %154 = vector.load %arg10[%c41, %c0_138] : memref<326x128xbf16, #tpu.memory_space<vmem>>, vector<8x128xbf16>
    tpu.vector_store %arg10[%c41, %c0_138], %153 {strides = array<i32>} : memref<326x128xbf16, #tpu.memory_space<vmem>>, vector<8x128xbf16>,
    %c144 = arith.constant 144 : index
    %c0_139 = arith.constant 0 : index
    %155 = tpu.strided_load %arg12[%c144, %c0_139] {strides = array<i32: 2, 1>} : memref<288x128xf32, #tpu.memory_space<vmem>>, vector<8x128xf32>
    %c145 = arith.constant 145 : index
    %c0_140 = arith.constant 0 : index
    %156 = tpu.strided_load %arg12[%c145, %c0_140] {strides = array<i32: 2, 1>} : memref<288x128xf32, #tpu.memory_space<vmem>>, vector<8x128xf32>
    %157 = arith.maximumf %155, %156 : vector<8x128xf32>
    %c162 = arith.constant 162 : index
    %c0_141 = arith.constant 0 : index
    %158 = tpu.strided_load %arg12[%c162, %c0_141] {strides = array<i32: 2, 1>} : memref<288x128xf32, #tpu.memory_space<vmem>>, vector<8x128xf32>
    %c163 = arith.constant 163 : index
    %c0_142 = arith.constant 0 : index
    %159 = tpu.strided_load %arg12[%c163, %c0_142] {strides = array<i32: 2, 1>} : memref<288x128xf32, #tpu.memory_space<vmem>>, vector<8x128xf32>
    %160 = arith.maximumf %158, %159 : vector<8x128xf32>
    %161 = arith.maximumf %157, %160 : vector<8x128xf32>
    %162 = arith.truncf %161 : vector<8x128xf32> to vector<8x128xbf16>
    %c51 = arith.constant 51 : index
    %c0_143 = arith.constant 0 : index
    %163 = vector.load %arg10[%c51, %c0_143] : memref<326x128xbf16, #tpu.memory_space<vmem>>, vector<8x128xbf16>
    tpu.vector_store %arg10[%c51, %c0_143], %162 {strides = array<i32>} : memref<326x128xbf16, #tpu.memory_space<vmem>>, vector<8x128xbf16>,
    %c180 = arith.constant 180 : index
    %c0_144 = arith.constant 0 : index
    %164 = tpu.strided_load %arg12[%c180, %c0_144] {strides = array<i32: 2, 1>} : memref<288x128xf32, #tpu.memory_space<vmem>>, vector<8x128xf32>
    %c181 = arith.constant 181 : index
    %c0_145 = arith.constant 0 : index
    %165 = tpu.strided_load %arg12[%c181, %c0_145] {strides = array<i32: 2, 1>} : memref<288x128xf32, #tpu.memory_space<vmem>>, vector<8x128xf32>
    %166 = arith.maximumf %164, %165 : vector<8x128xf32>
    %c198 = arith.constant 198 : index
    %c0_146 = arith.constant 0 : index
    %167 = tpu.strided_load %arg12[%c198, %c0_146] {strides = array<i32: 2, 1>} : memref<288x128xf32, #tpu.memory_space<vmem>>, vector<8x128xf32>
    %c199 = arith.constant 199 : index
    %c0_147 = arith.constant 0 : index
    %168 = tpu.strided_load %arg12[%c199, %c0_147] {strides = array<i32: 2, 1>} : memref<288x128xf32, #tpu.memory_space<vmem>>, vector<8x128xf32>
    %169 = arith.maximumf %167, %168 : vector<8x128xf32>
    %170 = arith.maximumf %166, %169 : vector<8x128xf32>
    %171 = arith.truncf %170 : vector<8x128xf32> to vector<8x128xbf16>
    %c61 = arith.constant 61 : index
    %c0_148 = arith.constant 0 : index
    %172 = vector.load %arg10[%c61, %c0_148] : memref<326x128xbf16, #tpu.memory_space<vmem>>, vector<8x128xbf16>
    tpu.vector_store %arg10[%c61, %c0_148], %171 {strides = array<i32>} : memref<326x128xbf16, #tpu.memory_space<vmem>>, vector<8x128xbf16>,
    %c216 = arith.constant 216 : index
    %c0_149 = arith.constant 0 : index
    %173 = tpu.strided_load %arg12[%c216, %c0_149] {strides = array<i32: 2, 1>} : memref<288x128xf32, #tpu.memory_space<vmem>>, vector<8x128xf32>
    %c217 = arith.constant 217 : index
    %c0_150 = arith.constant 0 : index
    %174 = tpu.strided_load %arg12[%c217, %c0_150] {strides = array<i32: 2, 1>} : memref<288x128xf32, #tpu.memory_space<vmem>>, vector<8x128xf32>
    %175 = arith.maximumf %173, %174 : vector<8x128xf32>
    %c234 = arith.constant 234 : index
    %c0_151 = arith.constant 0 : index
    %176 = tpu.strided_load %arg12[%c234, %c0_151] {strides = array<i32: 2, 1>} : memref<288x128xf32, #tpu.memory_space<vmem>>, vector<8x128xf32>
    %c235 = arith.constant 235 : index
    %c0_152 = arith.constant 0 : index
    %177 = tpu.strided_load %arg12[%c235, %c0_152] {strides = array<i32: 2, 1>} : memref<288x128xf32, #tpu.memory_space<vmem>>, vector<8x128xf32>
    %178 = arith.maximumf %176, %177 : vector<8x128xf32>
    %179 = arith.maximumf %175, %178 : vector<8x128xf32>
    %180 = arith.truncf %179 : vector<8x128xf32> to vector<8x128xbf16>
    %c71 = arith.constant 71 : index
    %c0_153 = arith.constant 0 : index
    %181 = vector.load %arg10[%c71, %c0_153] : memref<326x128xbf16, #tpu.memory_space<vmem>>, vector<8x128xbf16>
    tpu.vector_store %arg10[%c71, %c0_153], %180 {strides = array<i32>} : memref<326x128xbf16, #tpu.memory_space<vmem>>, vector<8x128xbf16>,
    %c252 = arith.constant 252 : index
    %c0_154 = arith.constant 0 : index
    %182 = tpu.strided_load %arg12[%c252, %c0_154] {strides = array<i32: 2, 1>} : memref<288x128xf32, #tpu.memory_space<vmem>>, vector<8x128xf32>
    %c253 = arith.constant 253 : index
    %c0_155 = arith.constant 0 : index
    %183 = tpu.strided_load %arg12[%c253, %c0_155] {strides = array<i32: 2, 1>} : memref<288x128xf32, #tpu.memory_space<vmem>>, vector<8x128xf32>
    %184 = arith.maximumf %182, %183 : vector<8x128xf32>
    %c270 = arith.constant 270 : index
    %c0_156 = arith.constant 0 : index
    %185 = tpu.strided_load %arg12[%c270, %c0_156] {strides = array<i32: 2, 1>} : memref<288x128xf32, #tpu.memory_space<vmem>>, vector<8x128xf32>
    %c271 = arith.constant 271 : index
    %c0_157 = arith.constant 0 : index
    %186 = tpu.strided_load %arg12[%c271, %c0_157] {strides = array<i32: 2, 1>} : memref<288x128xf32, #tpu.memory_space<vmem>>, vector<8x128xf32>
    %187 = arith.maximumf %185, %186 : vector<8x128xf32>
    %188 = arith.maximumf %184, %187 : vector<8x128xf32>
    %189 = arith.truncf %188 : vector<8x128xf32> to vector<8x128xbf16>
    %c81 = arith.constant 81 : index
    %c0_158 = arith.constant 0 : index
    %190 = vector.load %arg10[%c81, %c0_158] : memref<326x128xbf16, #tpu.memory_space<vmem>>, vector<8x128xbf16>
    tpu.vector_store %arg10[%c81, %c0_158], %189 {strides = array<i32>} : memref<326x128xbf16, #tpu.memory_space<vmem>>, vector<8x128xbf16>,
    %c0_159 = arith.constant 0 : index
    %c0_160 = arith.constant 0 : index
    %191 = vector.load %arg10[%c0_159, %c0_160] : memref<326x128xbf16, #tpu.memory_space<vmem>>, vector<80x128xbf16>
    %c18_161 = arith.constant 18 : index
    %c0_162 = arith.constant 0 : index
    %c0_163 = arith.constant 0 : index
    %192 = vector.load %arg2[%c18_161, %c0_162, %c0_163] : memref<45x128x128xbf16, #tpu.memory_space<vmem>>, vector<1x128x128xbf16>
    %193 = vector.shape_cast %192 : vector<1x128x128xbf16> to vector<128x128xbf16>
    %cst_164 = arith.constant dense<0.000000e+00> : vector<80x128xf32>
    %194 = tpu.matmul %191, %193, %cst_164 {dimension_numbers = #tpu.dot_dimension_numbers<[1], [0], [0], [1], [0, 0, 1, 1], [], []>} : vector<80x128xbf16>, vector<128x128xbf16>, vector<80x128xf32> -> vector<80x128xf32>
    %c1_165 = arith.constant 1 : index
    %c0_166 = arith.constant 0 : index
    %195 = vector.load %arg10[%c1_165, %c0_166] : memref<326x128xbf16, #tpu.memory_space<vmem>>, vector<80x128xbf16>
    %c19_167 = arith.constant 19 : index
    %c0_168 = arith.constant 0 : index
    %c0_169 = arith.constant 0 : index
    %196 = vector.load %arg2[%c19_167, %c0_168, %c0_169] : memref<45x128x128xbf16, #tpu.memory_space<vmem>>, vector<1x128x128xbf16>
    %197 = vector.shape_cast %196 : vector<1x128x128xbf16> to vector<128x128xbf16>
    %cst_170 = arith.constant dense<0.000000e+00> : vector<80x128xf32>
    %198 = tpu.matmul %195, %197, %cst_170 {dimension_numbers = #tpu.dot_dimension_numbers<[1], [0], [0], [1], [0, 0, 1, 1], [], []>} : vector<80x128xbf16>, vector<128x128xbf16>, vector<80x128xf32> -> vector<80x128xf32>
    %199 = arith.addf %194, %198 : vector<80x128xf32>
    %c2_171 = arith.constant 2 : index
    %c0_172 = arith.constant 0 : index
    %200 = vector.load %arg10[%c2_171, %c0_172] : memref<326x128xbf16, #tpu.memory_space<vmem>>, vector<80x128xbf16>
    %c20_173 = arith.constant 20 : index
    %c0_174 = arith.constant 0 : index
    %c0_175 = arith.constant 0 : index
    %201 = vector.load %arg2[%c20_173, %c0_174, %c0_175] : memref<45x128x128xbf16, #tpu.memory_space<vmem>>, vector<1x128x128xbf16>
    %202 = vector.shape_cast %201 : vector<1x128x128xbf16> to vector<128x128xbf16>
    %cst_176 = arith.constant dense<0.000000e+00> : vector<80x128xf32>
    %203 = tpu.matmul %200, %202, %cst_176 {dimension_numbers = #tpu.dot_dimension_numbers<[1], [0], [0], [1], [0, 0, 1, 1], [], []>} : vector<80x128xbf16>, vector<128x128xbf16>, vector<80x128xf32> -> vector<80x128xf32>
    %204 = arith.addf %199, %203 : vector<80x128xf32>
    %c10_177 = arith.constant 10 : index
    %c0_178 = arith.constant 0 : index
    %205 = vector.load %arg10[%c10_177, %c0_178] : memref<326x128xbf16, #tpu.memory_space<vmem>>, vector<80x128xbf16>
    %c21_179 = arith.constant 21 : index
    %c0_180 = arith.constant 0 : index
    %c0_181 = arith.constant 0 : index
    %206 = vector.load %arg2[%c21_179, %c0_180, %c0_181] : memref<45x128x128xbf16, #tpu.memory_space<vmem>>, vector<1x128x128xbf16>
    %207 = vector.shape_cast %206 : vector<1x128x128xbf16> to vector<128x128xbf16>
    %cst_182 = arith.constant dense<0.000000e+00> : vector<80x128xf32>
    %208 = tpu.matmul %205, %207, %cst_182 {dimension_numbers = #tpu.dot_dimension_numbers<[1], [0], [0], [1], [0, 0, 1, 1], [], []>} : vector<80x128xbf16>, vector<128x128xbf16>, vector<80x128xf32> -> vector<80x128xf32>
    %209 = arith.addf %204, %208 : vector<80x128xf32>
    %c11_183 = arith.constant 11 : index
    %c0_184 = arith.constant 0 : index
    %210 = vector.load %arg10[%c11_183, %c0_184] : memref<326x128xbf16, #tpu.memory_space<vmem>>, vector<80x128xbf16>
    %c22 = arith.constant 22 : index
    %c0_185 = arith.constant 0 : index
    %c0_186 = arith.constant 0 : index
    %211 = vector.load %arg2[%c22, %c0_185, %c0_186] : memref<45x128x128xbf16, #tpu.memory_space<vmem>>, vector<1x128x128xbf16>
    %212 = vector.shape_cast %211 : vector<1x128x128xbf16> to vector<128x128xbf16>
    %cst_187 = arith.constant dense<0.000000e+00> : vector<80x128xf32>
    %213 = tpu.matmul %210, %212, %cst_187 {dimension_numbers = #tpu.dot_dimension_numbers<[1], [0], [0], [1], [0, 0, 1, 1], [], []>} : vector<80x128xbf16>, vector<128x128xbf16>, vector<80x128xf32> -> vector<80x128xf32>
    %214 = arith.addf %209, %213 : vector<80x128xf32>
    %c12_188 = arith.constant 12 : index
    %c0_189 = arith.constant 0 : index
    %215 = vector.load %arg10[%c12_188, %c0_189] : memref<326x128xbf16, #tpu.memory_space<vmem>>, vector<80x128xbf16>
    %c23 = arith.constant 23 : index
    %c0_190 = arith.constant 0 : index
    %c0_191 = arith.constant 0 : index
    %216 = vector.load %arg2[%c23, %c0_190, %c0_191] : memref<45x128x128xbf16, #tpu.memory_space<vmem>>, vector<1x128x128xbf16>
    %217 = vector.shape_cast %216 : vector<1x128x128xbf16> to vector<128x128xbf16>
    %cst_192 = arith.constant dense<0.000000e+00> : vector<80x128xf32>
    %218 = tpu.matmul %215, %217, %cst_192 {dimension_numbers = #tpu.dot_dimension_numbers<[1], [0], [0], [1], [0, 0, 1, 1], [], []>} : vector<80x128xbf16>, vector<128x128xbf16>, vector<80x128xf32> -> vector<80x128xf32>
    %219 = arith.addf %214, %218 : vector<80x128xf32>
    %c20_193 = arith.constant 20 : index
    %c0_194 = arith.constant 0 : index
    %220 = vector.load %arg10[%c20_193, %c0_194] : memref<326x128xbf16, #tpu.memory_space<vmem>>, vector<80x128xbf16>
    %c24 = arith.constant 24 : index
    %c0_195 = arith.constant 0 : index
    %c0_196 = arith.constant 0 : index
    %221 = vector.load %arg2[%c24, %c0_195, %c0_196] : memref<45x128x128xbf16, #tpu.memory_space<vmem>>, vector<1x128x128xbf16>
    %222 = vector.shape_cast %221 : vector<1x128x128xbf16> to vector<128x128xbf16>
    %cst_197 = arith.constant dense<0.000000e+00> : vector<80x128xf32>
    %223 = tpu.matmul %220, %222, %cst_197 {dimension_numbers = #tpu.dot_dimension_numbers<[1], [0], [0], [1], [0, 0, 1, 1], [], []>} : vector<80x128xbf16>, vector<128x128xbf16>, vector<80x128xf32> -> vector<80x128xf32>
    %224 = arith.addf %219, %223 : vector<80x128xf32>
    %c21_198 = arith.constant 21 : index
    %c0_199 = arith.constant 0 : index
    %225 = vector.load %arg10[%c21_198, %c0_199] : memref<326x128xbf16, #tpu.memory_space<vmem>>, vector<80x128xbf16>
    %c25 = arith.constant 25 : index
    %c0_200 = arith.constant 0 : index
    %c0_201 = arith.constant 0 : index
    %226 = vector.load %arg2[%c25, %c0_200, %c0_201] : memref<45x128x128xbf16, #tpu.memory_space<vmem>>, vector<1x128x128xbf16>
    %227 = vector.shape_cast %226 : vector<1x128x128xbf16> to vector<128x128xbf16>
    %cst_202 = arith.constant dense<0.000000e+00> : vector<80x128xf32>
    %228 = tpu.matmul %225, %227, %cst_202 {dimension_numbers = #tpu.dot_dimension_numbers<[1], [0], [0], [1], [0, 0, 1, 1], [], []>} : vector<80x128xbf16>, vector<128x128xbf16>, vector<80x128xf32> -> vector<80x128xf32>
    %229 = arith.addf %224, %228 : vector<80x128xf32>
    %c22_203 = arith.constant 22 : index
    %c0_204 = arith.constant 0 : index
    %230 = vector.load %arg10[%c22_203, %c0_204] : memref<326x128xbf16, #tpu.memory_space<vmem>>, vector<80x128xbf16>
    %c26 = arith.constant 26 : index
    %c0_205 = arith.constant 0 : index
    %c0_206 = arith.constant 0 : index
    %231 = vector.load %arg2[%c26, %c0_205, %c0_206] : memref<45x128x128xbf16, #tpu.memory_space<vmem>>, vector<1x128x128xbf16>
    %232 = vector.shape_cast %231 : vector<1x128x128xbf16> to vector<128x128xbf16>
    %cst_207 = arith.constant dense<0.000000e+00> : vector<80x128xf32>
    %233 = tpu.matmul %230, %232, %cst_207 {dimension_numbers = #tpu.dot_dimension_numbers<[1], [0], [0], [1], [0, 0, 1, 1], [], []>} : vector<80x128xbf16>, vector<128x128xbf16>, vector<80x128xf32> -> vector<80x128xf32>
    %234 = arith.addf %229, %233 : vector<80x128xf32>
    %c2_208 = arith.constant 2 : index
    %c0_209 = arith.constant 0 : index
    %c0_210 = arith.constant 0 : index
    %235 = vector.load %arg3[%c2_208, %c0_209, %c0_210] : memref<5x1x128xf32, #tpu.memory_space<vmem>>, vector<1x1x128xf32>
    %236 = vector.shape_cast %235 : vector<1x1x128xf32> to vector<1x128xf32>
    %237 = vector.broadcast %236 : vector<1x128xf32> to vector<80x128xf32>
    %238 = arith.addf %234, %237 : vector<80x128xf32>
    %cst_211 = arith.constant 0.000000e+00 : f32
    %239 = vector.broadcast %cst_211 : f32 to vector<80x128xf32>
    %240 = arith.maximumf %238, %239 : vector<80x128xf32>
    %c0_212 = arith.constant 0 : index
    %c0_213 = arith.constant 0 : index
    %241 = vector.load %arg7[%c0_212, %c0_213] : memref<80x1xf32, #tpu.memory_space<vmem>>, vector<80x1xf32>
    %cst_214 = arith.constant 0.000000e+00 : bf16
    %242 = vector.broadcast %cst_214 : bf16 to vector<326x128xbf16>
    %c0_215 = arith.constant 0 : index
    %c0_216 = arith.constant 0 : index
    %243 = vector.load %arg11[%c0_215, %c0_216] : memref<326x128xbf16, #tpu.memory_space<vmem>>, vector<326x128xbf16>
    tpu.vector_store %arg11[%c0_215, %c0_216], %242 {strides = array<i32>} : memref<326x128xbf16, #tpu.memory_space<vmem>>, vector<326x128xbf16>,
    %244 = vector.broadcast %241 : vector<80x1xf32> to vector<80x128xf32>
    %245 = arith.mulf %240, %244 : vector<80x128xf32>
    %246 = arith.truncf %245 : vector<80x128xf32> to vector<80x128xbf16>
    %c11_217 = arith.constant 11 : index
    %c0_218 = arith.constant 0 : index
    %247 = vector.load %arg11[%c11_217, %c0_218] : memref<326x128xbf16, #tpu.memory_space<vmem>>, vector<80x128xbf16>
    tpu.vector_store %arg11[%c11_217, %c0_218], %246 {strides = array<i32>} : memref<326x128xbf16, #tpu.memory_space<vmem>>, vector<80x128xbf16>,
    %c0_219 = arith.constant 0 : index
    %c0_220 = arith.constant 0 : index
    %248 = vector.load %arg11[%c0_219, %c0_220] : memref<326x128xbf16, #tpu.memory_space<vmem>>, vector<80x128xbf16>
    %c27 = arith.constant 27 : index
    %c0_221 = arith.constant 0 : index
    %c0_222 = arith.constant 0 : index
    %249 = vector.load %arg2[%c27, %c0_221, %c0_222] : memref<45x128x128xbf16, #tpu.memory_space<vmem>>, vector<1x128x128xbf16>
    %250 = vector.shape_cast %249 : vector<1x128x128xbf16> to vector<128x128xbf16>
    %cst_223 = arith.constant dense<0.000000e+00> : vector<80x128xf32>
    %251 = tpu.matmul %248, %250, %cst_223 {dimension_numbers = #tpu.dot_dimension_numbers<[1], [0], [0], [1], [0, 0, 1, 1], [], []>} : vector<80x128xbf16>, vector<128x128xbf16>, vector<80x128xf32> -> vector<80x128xf32>
    %c1_224 = arith.constant 1 : index
    %c0_225 = arith.constant 0 : index
    %252 = vector.load %arg11[%c1_224, %c0_225] : memref<326x128xbf16, #tpu.memory_space<vmem>>, vector<80x128xbf16>
    %c28 = arith.constant 28 : index
    %c0_226 = arith.constant 0 : index
    %c0_227 = arith.constant 0 : index
    %253 = vector.load %arg2[%c28, %c0_226, %c0_227] : memref<45x128x128xbf16, #tpu.memory_space<vmem>>, vector<1x128x128xbf16>
    %254 = vector.shape_cast %253 : vector<1x128x128xbf16> to vector<128x128xbf16>
    %cst_228 = arith.constant dense<0.000000e+00> : vector<80x128xf32>
    %255 = tpu.matmul %252, %254, %cst_228 {dimension_numbers = #tpu.dot_dimension_numbers<[1], [0], [0], [1], [0, 0, 1, 1], [], []>} : vector<80x128xbf16>, vector<128x128xbf16>, vector<80x128xf32> -> vector<80x128xf32>
    %256 = arith.addf %251, %255 : vector<80x128xf32>
    %c2_229 = arith.constant 2 : index
    %c0_230 = arith.constant 0 : index
    %257 = vector.load %arg11[%c2_229, %c0_230] : memref<326x128xbf16, #tpu.memory_space<vmem>>, vector<80x128xbf16>
    %c29 = arith.constant 29 : index
    %c0_231 = arith.constant 0 : index
    %c0_232 = arith.constant 0 : index
    %258 = vector.load %arg2[%c29, %c0_231, %c0_232] : memref<45x128x128xbf16, #tpu.memory_space<vmem>>, vector<1x128x128xbf16>
    %259 = vector.shape_cast %258 : vector<1x128x128xbf16> to vector<128x128xbf16>
    %cst_233 = arith.constant dense<0.000000e+00> : vector<80x128xf32>
    %260 = tpu.matmul %257, %259, %cst_233 {dimension_numbers = #tpu.dot_dimension_numbers<[1], [0], [0], [1], [0, 0, 1, 1], [], []>} : vector<80x128xbf16>, vector<128x128xbf16>, vector<80x128xf32> -> vector<80x128xf32>
    %261 = arith.addf %256, %260 : vector<80x128xf32>
    %c10_234 = arith.constant 10 : index
    %c0_235 = arith.constant 0 : index
    %262 = vector.load %arg11[%c10_234, %c0_235] : memref<326x128xbf16, #tpu.memory_space<vmem>>, vector<80x128xbf16>
    %c30 = arith.constant 30 : index
    %c0_236 = arith.constant 0 : index
    %c0_237 = arith.constant 0 : index
    %263 = vector.load %arg2[%c30, %c0_236, %c0_237] : memref<45x128x128xbf16, #tpu.memory_space<vmem>>, vector<1x128x128xbf16>
    %264 = vector.shape_cast %263 : vector<1x128x128xbf16> to vector<128x128xbf16>
    %cst_238 = arith.constant dense<0.000000e+00> : vector<80x128xf32>
    %265 = tpu.matmul %262, %264, %cst_238 {dimension_numbers = #tpu.dot_dimension_numbers<[1], [0], [0], [1], [0, 0, 1, 1], [], []>} : vector<80x128xbf16>, vector<128x128xbf16>, vector<80x128xf32> -> vector<80x128xf32>
    %266 = arith.addf %261, %265 : vector<80x128xf32>
    %c11_239 = arith.constant 11 : index
    %c0_240 = arith.constant 0 : index
    %267 = vector.load %arg11[%c11_239, %c0_240] : memref<326x128xbf16, #tpu.memory_space<vmem>>, vector<80x128xbf16>
    %c31_241 = arith.constant 31 : index
    %c0_242 = arith.constant 0 : index
    %c0_243 = arith.constant 0 : index
    %268 = vector.load %arg2[%c31_241, %c0_242, %c0_243] : memref<45x128x128xbf16, #tpu.memory_space<vmem>>, vector<1x128x128xbf16>
    %269 = vector.shape_cast %268 : vector<1x128x128xbf16> to vector<128x128xbf16>
    %cst_244 = arith.constant dense<0.000000e+00> : vector<80x128xf32>
    %270 = tpu.matmul %267, %269, %cst_244 {dimension_numbers = #tpu.dot_dimension_numbers<[1], [0], [0], [1], [0, 0, 1, 1], [], []>} : vector<80x128xbf16>, vector<128x128xbf16>, vector<80x128xf32> -> vector<80x128xf32>
    %271 = arith.addf %266, %270 : vector<80x128xf32>
    %c12_245 = arith.constant 12 : index
    %c0_246 = arith.constant 0 : index
    %272 = vector.load %arg11[%c12_245, %c0_246] : memref<326x128xbf16, #tpu.memory_space<vmem>>, vector<80x128xbf16>
    %c32 = arith.constant 32 : index
    %c0_247 = arith.constant 0 : index
    %c0_248 = arith.constant 0 : index
    %273 = vector.load %arg2[%c32, %c0_247, %c0_248] : memref<45x128x128xbf16, #tpu.memory_space<vmem>>, vector<1x128x128xbf16>
    %274 = vector.shape_cast %273 : vector<1x128x128xbf16> to vector<128x128xbf16>
    %cst_249 = arith.constant dense<0.000000e+00> : vector<80x128xf32>
    %275 = tpu.matmul %272, %274, %cst_249 {dimension_numbers = #tpu.dot_dimension_numbers<[1], [0], [0], [1], [0, 0, 1, 1], [], []>} : vector<80x128xbf16>, vector<128x128xbf16>, vector<80x128xf32> -> vector<80x128xf32>
    %276 = arith.addf %271, %275 : vector<80x128xf32>
    %c20_250 = arith.constant 20 : index
    %c0_251 = arith.constant 0 : index
    %277 = vector.load %arg11[%c20_250, %c0_251] : memref<326x128xbf16, #tpu.memory_space<vmem>>, vector<80x128xbf16>
    %c33 = arith.constant 33 : index
    %c0_252 = arith.constant 0 : index
    %c0_253 = arith.constant 0 : index
    %278 = vector.load %arg2[%c33, %c0_252, %c0_253] : memref<45x128x128xbf16, #tpu.memory_space<vmem>>, vector<1x128x128xbf16>
    %279 = vector.shape_cast %278 : vector<1x128x128xbf16> to vector<128x128xbf16>
    %cst_254 = arith.constant dense<0.000000e+00> : vector<80x128xf32>
    %280 = tpu.matmul %277, %279, %cst_254 {dimension_numbers = #tpu.dot_dimension_numbers<[1], [0], [0], [1], [0, 0, 1, 1], [], []>} : vector<80x128xbf16>, vector<128x128xbf16>, vector<80x128xf32> -> vector<80x128xf32>
    %281 = arith.addf %276, %280 : vector<80x128xf32>
    %c21_255 = arith.constant 21 : index
    %c0_256 = arith.constant 0 : index
    %282 = vector.load %arg11[%c21_255, %c0_256] : memref<326x128xbf16, #tpu.memory_space<vmem>>, vector<80x128xbf16>
    %c34 = arith.constant 34 : index
    %c0_257 = arith.constant 0 : index
    %c0_258 = arith.constant 0 : index
    %283 = vector.load %arg2[%c34, %c0_257, %c0_258] : memref<45x128x128xbf16, #tpu.memory_space<vmem>>, vector<1x128x128xbf16>
    %284 = vector.shape_cast %283 : vector<1x128x128xbf16> to vector<128x128xbf16>
    %cst_259 = arith.constant dense<0.000000e+00> : vector<80x128xf32>
    %285 = tpu.matmul %282, %284, %cst_259 {dimension_numbers = #tpu.dot_dimension_numbers<[1], [0], [0], [1], [0, 0, 1, 1], [], []>} : vector<80x128xbf16>, vector<128x128xbf16>, vector<80x128xf32> -> vector<80x128xf32>
    %286 = arith.addf %281, %285 : vector<80x128xf32>
    %c22_260 = arith.constant 22 : index
    %c0_261 = arith.constant 0 : index
    %287 = vector.load %arg11[%c22_260, %c0_261] : memref<326x128xbf16, #tpu.memory_space<vmem>>, vector<80x128xbf16>
    %c35 = arith.constant 35 : index
    %c0_262 = arith.constant 0 : index
    %c0_263 = arith.constant 0 : index
    %288 = vector.load %arg2[%c35, %c0_262, %c0_263] : memref<45x128x128xbf16, #tpu.memory_space<vmem>>, vector<1x128x128xbf16>
    %289 = vector.shape_cast %288 : vector<1x128x128xbf16> to vector<128x128xbf16>
    %cst_264 = arith.constant dense<0.000000e+00> : vector<80x128xf32>
    %290 = tpu.matmul %287, %289, %cst_264 {dimension_numbers = #tpu.dot_dimension_numbers<[1], [0], [0], [1], [0, 0, 1, 1], [], []>} : vector<80x128xbf16>, vector<128x128xbf16>, vector<80x128xf32> -> vector<80x128xf32>
    %291 = arith.addf %286, %290 : vector<80x128xf32>
    %c3_265 = arith.constant 3 : index
    %c0_266 = arith.constant 0 : index
    %c0_267 = arith.constant 0 : index
    %292 = vector.load %arg3[%c3_265, %c0_266, %c0_267] : memref<5x1x128xf32, #tpu.memory_space<vmem>>, vector<1x1x128xf32>
    %293 = vector.shape_cast %292 : vector<1x1x128xf32> to vector<1x128xf32>
    %294 = vector.broadcast %293 : vector<1x128xf32> to vector<80x128xf32>
    %295 = arith.addf %291, %294 : vector<80x128xf32>
    %cst_268 = arith.constant 0.000000e+00 : f32
    %296 = vector.broadcast %cst_268 : f32 to vector<80x128xf32>
    %297 = arith.maximumf %295, %296 : vector<80x128xf32>
    %c0_269 = arith.constant 0 : index
    %c0_270 = arith.constant 0 : index
    %298 = vector.load %arg12[%c0_269, %c0_270] : memref<288x128xf32, #tpu.memory_space<vmem>>, vector<80x128xf32>
    tpu.vector_store %arg12[%c0_269, %c0_270], %297 {strides = array<i32>} : memref<288x128xf32, #tpu.memory_space<vmem>>, vector<80x128xf32>,
    %cst_271 = arith.constant 0.000000e+00 : bf16
    %299 = vector.broadcast %cst_271 : bf16 to vector<326x128xbf16>
    %c0_272 = arith.constant 0 : index
    %c0_273 = arith.constant 0 : index
    %300 = vector.load %arg10[%c0_272, %c0_273] : memref<326x128xbf16, #tpu.memory_space<vmem>>, vector<326x128xbf16>
    tpu.vector_store %arg10[%c0_272, %c0_273], %299 {strides = array<i32>} : memref<326x128xbf16, #tpu.memory_space<vmem>>, vector<326x128xbf16>,
    %c0_274 = arith.constant 0 : index
    %c0_275 = arith.constant 0 : index
    %301 = tpu.strided_load %arg12[%c0_274, %c0_275] {strides = array<i32: 2, 1>} : memref<288x128xf32, #tpu.memory_space<vmem>>, vector<4x128xf32>
    %c1_276 = arith.constant 1 : index
    %c0_277 = arith.constant 0 : index
    %302 = tpu.strided_load %arg12[%c1_276, %c0_277] {strides = array<i32: 2, 1>} : memref<288x128xf32, #tpu.memory_space<vmem>>, vector<4x128xf32>
    %303 = arith.maximumf %301, %302 : vector<4x128xf32>
    %c10_278 = arith.constant 10 : index
    %c0_279 = arith.constant 0 : index
    %304 = tpu.strided_load %arg12[%c10_278, %c0_279] {strides = array<i32: 2, 1>} : memref<288x128xf32, #tpu.memory_space<vmem>>, vector<4x128xf32>
    %c11_280 = arith.constant 11 : index
    %c0_281 = arith.constant 0 : index
    %305 = tpu.strided_load %arg12[%c11_280, %c0_281] {strides = array<i32: 2, 1>} : memref<288x128xf32, #tpu.memory_space<vmem>>, vector<4x128xf32>
    %306 = arith.maximumf %304, %305 : vector<4x128xf32>
    %307 = arith.maximumf %303, %306 : vector<4x128xf32>
    %308 = arith.truncf %307 : vector<4x128xf32> to vector<4x128xbf16>
    %c7_282 = arith.constant 7 : index
    %c0_283 = arith.constant 0 : index
    %309 = vector.load %arg10[%c7_282, %c0_283] : memref<326x128xbf16, #tpu.memory_space<vmem>>, vector<4x128xbf16>
    tpu.vector_store %arg10[%c7_282, %c0_283], %308 {strides = array<i32>} : memref<326x128xbf16, #tpu.memory_space<vmem>>, vector<4x128xbf16>,
    %c20_284 = arith.constant 20 : index
    %c0_285 = arith.constant 0 : index
    %310 = tpu.strided_load %arg12[%c20_284, %c0_285] {strides = array<i32: 2, 1>} : memref<288x128xf32, #tpu.memory_space<vmem>>, vector<4x128xf32>
    %c21_286 = arith.constant 21 : index
    %c0_287 = arith.constant 0 : index
    %311 = tpu.strided_load %arg12[%c21_286, %c0_287] {strides = array<i32: 2, 1>} : memref<288x128xf32, #tpu.memory_space<vmem>>, vector<4x128xf32>
    %312 = arith.maximumf %310, %311 : vector<4x128xf32>
    %c30_288 = arith.constant 30 : index
    %c0_289 = arith.constant 0 : index
    %313 = tpu.strided_load %arg12[%c30_288, %c0_289] {strides = array<i32: 2, 1>} : memref<288x128xf32, #tpu.memory_space<vmem>>, vector<4x128xf32>
    %c31_290 = arith.constant 31 : index
    %c0_291 = arith.constant 0 : index
    %314 = tpu.strided_load %arg12[%c31_290, %c0_291] {strides = array<i32: 2, 1>} : memref<288x128xf32, #tpu.memory_space<vmem>>, vector<4x128xf32>
    %315 = arith.maximumf %313, %314 : vector<4x128xf32>
    %316 = arith.maximumf %312, %315 : vector<4x128xf32>
    %317 = arith.truncf %316 : vector<4x128xf32> to vector<4x128xbf16>
    %c13_292 = arith.constant 13 : index
    %c0_293 = arith.constant 0 : index
    %318 = vector.load %arg10[%c13_292, %c0_293] : memref<326x128xbf16, #tpu.memory_space<vmem>>, vector<4x128xbf16>
    tpu.vector_store %arg10[%c13_292, %c0_293], %317 {strides = array<i32>} : memref<326x128xbf16, #tpu.memory_space<vmem>>, vector<4x128xbf16>,
    %c40 = arith.constant 40 : index
    %c0_294 = arith.constant 0 : index
    %319 = tpu.strided_load %arg12[%c40, %c0_294] {strides = array<i32: 2, 1>} : memref<288x128xf32, #tpu.memory_space<vmem>>, vector<4x128xf32>
    %c41_295 = arith.constant 41 : index
    %c0_296 = arith.constant 0 : index
    %320 = tpu.strided_load %arg12[%c41_295, %c0_296] {strides = array<i32: 2, 1>} : memref<288x128xf32, #tpu.memory_space<vmem>>, vector<4x128xf32>
    %321 = arith.maximumf %319, %320 : vector<4x128xf32>
    %c50 = arith.constant 50 : index
    %c0_297 = arith.constant 0 : index
    %322 = tpu.strided_load %arg12[%c50, %c0_297] {strides = array<i32: 2, 1>} : memref<288x128xf32, #tpu.memory_space<vmem>>, vector<4x128xf32>
    %c51_298 = arith.constant 51 : index
    %c0_299 = arith.constant 0 : index
    %323 = tpu.strided_load %arg12[%c51_298, %c0_299] {strides = array<i32: 2, 1>} : memref<288x128xf32, #tpu.memory_space<vmem>>, vector<4x128xf32>
    %324 = arith.maximumf %322, %323 : vector<4x128xf32>
    %325 = arith.maximumf %321, %324 : vector<4x128xf32>
    %326 = arith.truncf %325 : vector<4x128xf32> to vector<4x128xbf16>
    %c19_300 = arith.constant 19 : index
    %c0_301 = arith.constant 0 : index
    %327 = vector.load %arg10[%c19_300, %c0_301] : memref<326x128xbf16, #tpu.memory_space<vmem>>, vector<4x128xbf16>
    tpu.vector_store %arg10[%c19_300, %c0_301], %326 {strides = array<i32>} : memref<326x128xbf16, #tpu.memory_space<vmem>>, vector<4x128xbf16>,
    %c60 = arith.constant 60 : index
    %c0_302 = arith.constant 0 : index
    %328 = tpu.strided_load %arg12[%c60, %c0_302] {strides = array<i32: 2, 1>} : memref<288x128xf32, #tpu.memory_space<vmem>>, vector<4x128xf32>
    %c61_303 = arith.constant 61 : index
    %c0_304 = arith.constant 0 : index
    %329 = tpu.strided_load %arg12[%c61_303, %c0_304] {strides = array<i32: 2, 1>} : memref<288x128xf32, #tpu.memory_space<vmem>>, vector<4x128xf32>
    %330 = arith.maximumf %328, %329 : vector<4x128xf32>
    %c70 = arith.constant 70 : index
    %c0_305 = arith.constant 0 : index
    %331 = tpu.strided_load %arg12[%c70, %c0_305] {strides = array<i32: 2, 1>} : memref<288x128xf32, #tpu.memory_space<vmem>>, vector<4x128xf32>
    %c71_306 = arith.constant 71 : index
    %c0_307 = arith.constant 0 : index
    %332 = tpu.strided_load %arg12[%c71_306, %c0_307] {strides = array<i32: 2, 1>} : memref<288x128xf32, #tpu.memory_space<vmem>>, vector<4x128xf32>
    %333 = arith.maximumf %331, %332 : vector<4x128xf32>
    %334 = arith.maximumf %330, %333 : vector<4x128xf32>
    %335 = arith.truncf %334 : vector<4x128xf32> to vector<4x128xbf16>
    %c25_308 = arith.constant 25 : index
    %c0_309 = arith.constant 0 : index
    %336 = vector.load %arg10[%c25_308, %c0_309] : memref<326x128xbf16, #tpu.memory_space<vmem>>, vector<4x128xbf16>
    tpu.vector_store %arg10[%c25_308, %c0_309], %335 {strides = array<i32>} : memref<326x128xbf16, #tpu.memory_space<vmem>>, vector<4x128xbf16>,
    %c0_310 = arith.constant 0 : index
    %c0_311 = arith.constant 0 : index
    %337 = vector.load %arg10[%c0_310, %c0_311] : memref<326x128xbf16, #tpu.memory_space<vmem>>, vector<24x128xbf16>
    %c36_312 = arith.constant 36 : index
    %c0_313 = arith.constant 0 : index
    %c0_314 = arith.constant 0 : index
    %338 = vector.load %arg2[%c36_312, %c0_313, %c0_314] : memref<45x128x128xbf16, #tpu.memory_space<vmem>>, vector<1x128x128xbf16>
    %339 = vector.shape_cast %338 : vector<1x128x128xbf16> to vector<128x128xbf16>
    %cst_315 = arith.constant dense<0.000000e+00> : vector<24x128xf32>
    %340 = tpu.matmul %337, %339, %cst_315 {dimension_numbers = #tpu.dot_dimension_numbers<[1], [0], [0], [1], [0, 0, 1, 1], [], []>} : vector<24x128xbf16>, vector<128x128xbf16>, vector<24x128xf32> -> vector<24x128xf32>
    %c1_316 = arith.constant 1 : index
    %c0_317 = arith.constant 0 : index
    %341 = vector.load %arg10[%c1_316, %c0_317] : memref<326x128xbf16, #tpu.memory_space<vmem>>, vector<24x128xbf16>
    %c37_318 = arith.constant 37 : index
    %c0_319 = arith.constant 0 : index
    %c0_320 = arith.constant 0 : index
    %342 = vector.load %arg2[%c37_318, %c0_319, %c0_320] : memref<45x128x128xbf16, #tpu.memory_space<vmem>>, vector<1x128x128xbf16>
    %343 = vector.shape_cast %342 : vector<1x128x128xbf16> to vector<128x128xbf16>
    %cst_321 = arith.constant dense<0.000000e+00> : vector<24x128xf32>
    %344 = tpu.matmul %341, %343, %cst_321 {dimension_numbers = #tpu.dot_dimension_numbers<[1], [0], [0], [1], [0, 0, 1, 1], [], []>} : vector<24x128xbf16>, vector<128x128xbf16>, vector<24x128xf32> -> vector<24x128xf32>
    %345 = arith.addf %340, %344 : vector<24x128xf32>
    %c2_322 = arith.constant 2 : index
    %c0_323 = arith.constant 0 : index
    %346 = vector.load %arg10[%c2_322, %c0_323] : memref<326x128xbf16, #tpu.memory_space<vmem>>, vector<24x128xbf16>
    %c38_324 = arith.constant 38 : index
    %c0_325 = arith.constant 0 : index
    %c0_326 = arith.constant 0 : index
    %347 = vector.load %arg2[%c38_324, %c0_325, %c0_326] : memref<45x128x128xbf16, #tpu.memory_space<vmem>>, vector<1x128x128xbf16>
    %348 = vector.shape_cast %347 : vector<1x128x128xbf16> to vector<128x128xbf16>
    %cst_327 = arith.constant dense<0.000000e+00> : vector<24x128xf32>
    %349 = tpu.matmul %346, %348, %cst_327 {dimension_numbers = #tpu.dot_dimension_numbers<[1], [0], [0], [1], [0, 0, 1, 1], [], []>} : vector<24x128xbf16>, vector<128x128xbf16>, vector<24x128xf32> -> vector<24x128xf32>
    %350 = arith.addf %345, %349 : vector<24x128xf32>
    %c6_328 = arith.constant 6 : index
    %c0_329 = arith.constant 0 : index
    %351 = vector.load %arg10[%c6_328, %c0_329] : memref<326x128xbf16, #tpu.memory_space<vmem>>, vector<24x128xbf16>
    %c39 = arith.constant 39 : index
    %c0_330 = arith.constant 0 : index
    %c0_331 = arith.constant 0 : index
    %352 = vector.load %arg2[%c39, %c0_330, %c0_331] : memref<45x128x128xbf16, #tpu.memory_space<vmem>>, vector<1x128x128xbf16>
    %353 = vector.shape_cast %352 : vector<1x128x128xbf16> to vector<128x128xbf16>
    %cst_332 = arith.constant dense<0.000000e+00> : vector<24x128xf32>
    %354 = tpu.matmul %351, %353, %cst_332 {dimension_numbers = #tpu.dot_dimension_numbers<[1], [0], [0], [1], [0, 0, 1, 1], [], []>} : vector<24x128xbf16>, vector<128x128xbf16>, vector<24x128xf32> -> vector<24x128xf32>
    %355 = arith.addf %350, %354 : vector<24x128xf32>
    %c7_333 = arith.constant 7 : index
    %c0_334 = arith.constant 0 : index
    %356 = vector.load %arg10[%c7_333, %c0_334] : memref<326x128xbf16, #tpu.memory_space<vmem>>, vector<24x128xbf16>
    %c40_335 = arith.constant 40 : index
    %c0_336 = arith.constant 0 : index
    %c0_337 = arith.constant 0 : index
    %357 = vector.load %arg2[%c40_335, %c0_336, %c0_337] : memref<45x128x128xbf16, #tpu.memory_space<vmem>>, vector<1x128x128xbf16>
    %358 = vector.shape_cast %357 : vector<1x128x128xbf16> to vector<128x128xbf16>
    %cst_338 = arith.constant dense<0.000000e+00> : vector<24x128xf32>
    %359 = tpu.matmul %356, %358, %cst_338 {dimension_numbers = #tpu.dot_dimension_numbers<[1], [0], [0], [1], [0, 0, 1, 1], [], []>} : vector<24x128xbf16>, vector<128x128xbf16>, vector<24x128xf32> -> vector<24x128xf32>
    %360 = arith.addf %355, %359 : vector<24x128xf32>
    %c8_339 = arith.constant 8 : index
    %c0_340 = arith.constant 0 : index
    %361 = vector.load %arg10[%c8_339, %c0_340] : memref<326x128xbf16, #tpu.memory_space<vmem>>, vector<24x128xbf16>
    %c41_341 = arith.constant 41 : index
    %c0_342 = arith.constant 0 : index
    %c0_343 = arith.constant 0 : index
    %362 = vector.load %arg2[%c41_341, %c0_342, %c0_343] : memref<45x128x128xbf16, #tpu.memory_space<vmem>>, vector<1x128x128xbf16>
    %363 = vector.shape_cast %362 : vector<1x128x128xbf16> to vector<128x128xbf16>
    %cst_344 = arith.constant dense<0.000000e+00> : vector<24x128xf32>
    %364 = tpu.matmul %361, %363, %cst_344 {dimension_numbers = #tpu.dot_dimension_numbers<[1], [0], [0], [1], [0, 0, 1, 1], [], []>} : vector<24x128xbf16>, vector<128x128xbf16>, vector<24x128xf32> -> vector<24x128xf32>
    %365 = arith.addf %360, %364 : vector<24x128xf32>
    %c12_345 = arith.constant 12 : index
    %c0_346 = arith.constant 0 : index
    %366 = vector.load %arg10[%c12_345, %c0_346] : memref<326x128xbf16, #tpu.memory_space<vmem>>, vector<24x128xbf16>
    %c42 = arith.constant 42 : index
    %c0_347 = arith.constant 0 : index
    %c0_348 = arith.constant 0 : index
    %367 = vector.load %arg2[%c42, %c0_347, %c0_348] : memref<45x128x128xbf16, #tpu.memory_space<vmem>>, vector<1x128x128xbf16>
    %368 = vector.shape_cast %367 : vector<1x128x128xbf16> to vector<128x128xbf16>
    %cst_349 = arith.constant dense<0.000000e+00> : vector<24x128xf32>
    %369 = tpu.matmul %366, %368, %cst_349 {dimension_numbers = #tpu.dot_dimension_numbers<[1], [0], [0], [1], [0, 0, 1, 1], [], []>} : vector<24x128xbf16>, vector<128x128xbf16>, vector<24x128xf32> -> vector<24x128xf32>
    %370 = arith.addf %365, %369 : vector<24x128xf32>
    %c13_350 = arith.constant 13 : index
    %c0_351 = arith.constant 0 : index
    %371 = vector.load %arg10[%c13_350, %c0_351] : memref<326x128xbf16, #tpu.memory_space<vmem>>, vector<24x128xbf16>
    %c43 = arith.constant 43 : index
    %c0_352 = arith.constant 0 : index
    %c0_353 = arith.constant 0 : index
    %372 = vector.load %arg2[%c43, %c0_352, %c0_353] : memref<45x128x128xbf16, #tpu.memory_space<vmem>>, vector<1x128x128xbf16>
    %373 = vector.shape_cast %372 : vector<1x128x128xbf16> to vector<128x128xbf16>
    %cst_354 = arith.constant dense<0.000000e+00> : vector<24x128xf32>
    %374 = tpu.matmul %371, %373, %cst_354 {dimension_numbers = #tpu.dot_dimension_numbers<[1], [0], [0], [1], [0, 0, 1, 1], [], []>} : vector<24x128xbf16>, vector<128x128xbf16>, vector<24x128xf32> -> vector<24x128xf32>
    %375 = arith.addf %370, %374 : vector<24x128xf32>
    %c14_355 = arith.constant 14 : index
    %c0_356 = arith.constant 0 : index
    %376 = vector.load %arg10[%c14_355, %c0_356] : memref<326x128xbf16, #tpu.memory_space<vmem>>, vector<24x128xbf16>
    %c44 = arith.constant 44 : index
    %c0_357 = arith.constant 0 : index
    %c0_358 = arith.constant 0 : index
    %377 = vector.load %arg2[%c44, %c0_357, %c0_358] : memref<45x128x128xbf16, #tpu.memory_space<vmem>>, vector<1x128x128xbf16>
    %378 = vector.shape_cast %377 : vector<1x128x128xbf16> to vector<128x128xbf16>
    %cst_359 = arith.constant dense<0.000000e+00> : vector<24x128xf32>
    %379 = tpu.matmul %376, %378, %cst_359 {dimension_numbers = #tpu.dot_dimension_numbers<[1], [0], [0], [1], [0, 0, 1, 1], [], []>} : vector<24x128xbf16>, vector<128x128xbf16>, vector<24x128xf32> -> vector<24x128xf32>
    %380 = arith.addf %375, %379 : vector<24x128xf32>
    %c4_360 = arith.constant 4 : index
    %c0_361 = arith.constant 0 : index
    %c0_362 = arith.constant 0 : index
    %381 = vector.load %arg3[%c4_360, %c0_361, %c0_362] : memref<5x1x128xf32, #tpu.memory_space<vmem>>, vector<1x1x128xf32>
    %382 = vector.shape_cast %381 : vector<1x1x128xf32> to vector<1x128xf32>
    %383 = vector.broadcast %382 : vector<1x128xf32> to vector<24x128xf32>
    %384 = arith.addf %380, %383 : vector<24x128xf32>
    %cst_363 = arith.constant 0.000000e+00 : f32
    %385 = vector.broadcast %cst_363 : f32 to vector<24x128xf32>
    %386 = arith.maximumf %384, %385 : vector<24x128xf32>
    %c0_364 = arith.constant 0 : index
    %c0_365 = arith.constant 0 : index
    %387 = vector.load %arg8[%c0_364, %c0_365] : memref<24x1xf32, #tpu.memory_space<vmem>>, vector<24x1xf32>
    %388 = vector.broadcast %387 : vector<24x1xf32> to vector<24x128xf32>
    %389 = arith.mulf %386, %388 : vector<24x128xf32>
    %cst_366 = arith.constant dense<0.000000e+00> : vector<128xf32>
    %390 = vector.multi_reduction <add>, %389, %cst_366 [0] : vector<24x128xf32> to vector<128xf32>
    %391 = vector.shape_cast %390 : vector<128xf32> to vector<1x128xf32>
    %392 = arith.truncf %391 : vector<1x128xf32> to vector<1x128xbf16>
    %c0_367 = arith.constant 0 : index
    %c0_368 = arith.constant 0 : index
    %393 = vector.load %arg4[%c0_367, %c0_368] : memref<128x128xbf16, #tpu.memory_space<vmem>>, vector<128x128xbf16>
    %cst_369 = arith.constant dense<0.000000e+00> : vector<1x128xf32>
    %394 = tpu.matmul %392, %393, %cst_369 {dimension_numbers = #tpu.dot_dimension_numbers<[1], [0], [0], [1], [0, 0, 1, 1], [], []>} : vector<1x128xbf16>, vector<128x128xbf16>, vector<1x128xf32> -> vector<1x128xf32>
    %c0_370 = arith.constant 0 : index
    %c0_371 = arith.constant 0 : index
    %395 = vector.load %arg5[%c0_370, %c0_371] : memref<1x128xf32, #tpu.memory_space<vmem>>, vector<1x128xf32>
    %396 = arith.addf %394, %395 : vector<1x128xf32>
    %c0_372 = arith.constant 0 : index
    %c0_373 = arith.constant 0 : index
    %c0_374 = arith.constant 0 : index
    %397 = vector.load %arg9[%c0_372, %c0_373, %c0_374] : memref<1x1x128xf32, #tpu.memory_space<vmem>>, vector<1x1x128xf32>
    %398 = vector.shape_cast %397 : vector<1x1x128xf32> to vector<1x128xf32>
    %399 = vector.shape_cast %396 : vector<1x128xf32> to vector<1x1x128xf32>
    tpu.vector_store %arg9[%c0_372, %c0_373, %c0_374], %399 {strides = array<i32>} : memref<1x1x128xf32, #tpu.memory_space<vmem>>, vector<1x1x128xf32>,
    return
  }
  func.func @transform_0(%arg0: i32) -> (i32, i32, i32) {
    %c0_i32 = arith.constant 0 : i32
    %c0_i32_0 = arith.constant 0 : i32
    %c0_i32_1 = arith.constant 0 : i32
    return %arg0, %c0_i32, %c0_i32_0 : i32, i32, i32
  }
  func.func @transform_1(%arg0: i32) -> (i32, i32, i32) {
    %c0_i32 = arith.constant 0 : i32
    %c0_i32_0 = arith.constant 0 : i32
    %c0_i32_1 = arith.constant 0 : i32
    %c0_i32_2 = arith.constant 0 : i32
    return %c0_i32, %c0_i32_0, %c0_i32_1 : i32, i32, i32
  }
  func.func @transform_2(%arg0: i32) -> (i32, i32, i32) {
    %c0_i32 = arith.constant 0 : i32
    %c0_i32_0 = arith.constant 0 : i32
    %c0_i32_1 = arith.constant 0 : i32
    %c0_i32_2 = arith.constant 0 : i32
    return %c0_i32, %c0_i32_0, %c0_i32_1 : i32, i32, i32
  }
  func.func @transform_3(%arg0: i32) -> (i32, i32) {
    %c0_i32 = arith.constant 0 : i32
    %c0_i32_0 = arith.constant 0 : i32
    %c0_i32_1 = arith.constant 0 : i32
    return %c0_i32, %c0_i32_0 : i32, i32
  }
  func.func @transform_4(%arg0: i32) -> (i32, i32) {
    %c0_i32 = arith.constant 0 : i32
    %c0_i32_0 = arith.constant 0 : i32
    %c0_i32_1 = arith.constant 0 : i32
    return %c0_i32, %c0_i32_0 : i32, i32
  }
  func.func @transform_5(%arg0: i32) -> (i32, i32) {
    %c0_i32 = arith.constant 0 : i32
    %c0_i32_0 = arith.constant 0 : i32
    %c0_i32_1 = arith.constant 0 : i32
    return %c0_i32, %c0_i32_0 : i32, i32
  }
  func.func @transform_6(%arg0: i32) -> (i32, i32) {
    %c0_i32 = arith.constant 0 : i32
    %c0_i32_0 = arith.constant 0 : i32
    %c0_i32_1 = arith.constant 0 : i32
    return %c0_i32, %c0_i32_0 : i32, i32
  }
  func.func @transform_7(%arg0: i32) -> (i32, i32) {
    %c0_i32 = arith.constant 0 : i32
    %c0_i32_0 = arith.constant 0 : i32
    %c0_i32_1 = arith.constant 0 : i32
    return %c0_i32, %c0_i32_0 : i32, i32
  }
  func.func @transform_8(%arg0: i32) -> (i32, i32, i32) {
    %c0_i32 = arith.constant 0 : i32
    %c0_i32_0 = arith.constant 0 : i32
    %c0_i32_1 = arith.constant 0 : i32
    return %arg0, %c0_i32, %c0_i32_0 : i32, i32, i32
  }
}

</mosaic_0001>

<llo_original>
// kernel: my_convnet_forward.1
$region0: #{my_convnet_forward.1}
  #allocation0 [shape = 'u32[]', space=smem, size = 0x4, offset = 0x4, fixed_abs, tag = 'smem constant byte address 0x4 - core index']
  #allocation1 [shape = 'u32[72,128]{1,0:T(1,128)}', space=vmem, size = 0x9000, scoped, tag = 'internal scratch']
  #allocation2 [shape = 'bf16[326,128]{1,0:T(8,128)(2,1)}', space=vmem, size = 0x14800, scoped, tag = 'scratch operand']
  #allocation3 [shape = 'bf16[326,128]{1,0:T(8,128)(2,1)}', space=vmem, size = 0x14800, scoped, tag = 'scratch operand']
  #allocation4 [shape = 'f32[288,128]{1,0:T(8,128)}', space=vmem, size = 0x24000, scoped, tag = 'scratch operand']
  %s0 = inlined_call_operand.vmem [shape: bf16[2,326,128], index: 0, kind: input, shape index: {}]
  %s1 = inlined_call_operand.hbm [shape: bf16[45,128,128], index: 1, kind: input, shape index: {}]
  %s2 = inlined_call_operand.hbm [shape: f32[5,1,128], index: 2, kind: input, shape index: {}]
  %s3 = inlined_call_operand.hbm [shape: bf16[128,128], index: 3, kind: input, shape index: {}]
  %s4 = inlined_call_operand.hbm [shape: f32[1,128], index: 4, kind: input, shape index: {}]
  %s5 = inlined_call_operand.hbm [shape: f32[288,1], index: 5, kind: input, shape index: {}]
  %s6 = inlined_call_operand.hbm [shape: f32[80,1], index: 6, kind: input, shape index: {}]
  %s7 = inlined_call_operand.hbm [shape: f32[24,1], index: 7, kind: input, shape index: {}]
  %s8 = inlined_call_operand.hbm [shape: f32[2,1,128], index: 8, kind: output, shape index: {}]
  %s9 = sld [smem:[#allocation0]]
  $region93: #{my_convnet_forward.1} parent=0
    _
  %s11 = ssub.s32 1, %s9
  %s12 = scalar_select 0, %s11, %s9
  $region1: #{my_convnet_forward.1} parent=0
    #allocation5 [shape = 'u8[1474560]{0}', space=vmem, size = 0x168000, scoped, tag = 'input window, operand 1, single buffered']
    #allocation6 [shape = 's32[2]{0}', space=sflag, size = 0x8, scoped, tag = 'scoped memory for my_convnet_forward.1']
    #allocation7 [shape = 's32[2]{0}', space=sflag, size = 0x8, scoped, tag = 'scoped memory for my_convnet_forward.1']
    #allocation8 [shape = 'u8[2560]{0}', space=vmem, size = 0xc00, scoped, tag = 'input window, operand 2, single buffered']
    #allocation9 [shape = 's32[1]{0}', space=sflag, size = 0x4, scoped, tag = 'scoped memory for my_convnet_forward.1']
    #allocation10 [shape = 'u8[32768]{0}', space=vmem, size = 0x8000, scoped, tag = 'input window, operand 3, single buffered']
    #allocation11 [shape = 'u8[512]{0}', space=vmem, size = 0x400, scoped, tag = 'input window, operand 4, single buffered']
    #allocation12 [shape = 's32[1]{0}', space=sflag, size = 0x4, scoped, tag = 'scoped memory for my_convnet_forward.1']
    #allocation13 [shape = 'u8[147456]{0}', space=vmem, size = 0x24000, scoped, tag = 'input window, operand 5, single buffered']
    #allocation14 [shape = 'u8[40960]{0}', space=vmem, size = 0xa000, scoped, tag = 'input window, operand 6, single buffered']
    #allocation15 [shape = 's32[1]{0}', space=sflag, size = 0x4, scoped, tag = 'scoped memory for my_convnet_forward.1']
    #allocation16 [shape = 'u8[12288]{0}', space=vmem, size = 0x3000, scoped, tag = 'input window, operand 7, single buffered']
    #allocation17 [shape = 'u8[1024]{0}', space=vmem, size = 0x400, scoped, tag = 'output window, operand 0']
    %13 = vsyncpa [#allocation6], 0
    %14 = vsyncpa [#allocation9], 0
    %15 = vsyncpa [#allocation12], 0
    %16 = vsyncpa [#allocation15], 0
    %17 = vsyncpa [#allocation7], 0
    %s18 = scalar_lea.sflag [#allocation7], 1
    %19 = vsyncpa %s18, 0
    loop: start=0, step=1, limit=4
    $region2: #{my_convnet_forward.1} parent=1 // loop_pre_header
      _
    $region3: #{my_convnet_forward.1} parent=1 // loop_header
      %s21 = sphi 0, %s25
      %p22 = scmp.ge.s32.totalorder %s21, 4
      %s31 = sphi 0, %s33
      %s34 = sphi 0, %s31
      %s35 = sphi 0, %s34
      %s51 = sphi 0, %s35
      %s55 = sphi 0, %s55
      %s57 = sphi 0, %s55
      %s58 = sphi 0, %s57
      %s72 = sphi 0, %s58
      %s76 = sphi 0, %s76
      %s78 = sphi 0, %s76
      %s79 = sphi 0, %s78
      %s93 = sphi 0, %s79
      %s97 = sphi 0, %s97
      %s99 = sphi 0, %s97
      %s100 = sphi 0, %s99
      %s114 = sphi 0, %s100
      %s118 = sphi 0, %s118
      %s120 = sphi 0, %s118
      %s121 = sphi 0, %s120
      %s135 = sphi 0, %s121
      %s139 = sphi 0, %s139
      %s141 = sphi 0, %s139
      %s142 = sphi 0, %s141
      %s156 = sphi 0, %s142
      %s160 = sphi 0, %s160
      %s162 = sphi 0, %s160
      %s163 = sphi 0, %s162
      %s177 = sphi 0, %s163
      %s181 = sphi 0, %s181
      %s183 = sphi 0, %s181
      %s184 = sphi 0, %s183
      %s198 = sphi 0, %s184
      %s204 = sphi 0, %s206
      %s207 = sphi 0, %s204
      %s208 = sphi 0, %s207
      %s224 = sphi 0, %s208
    $region4: #{my_convnet_forward.1} parent=1 // loop_header_branch
      %24 = sbr.rel (%p22) target = $region8
    $region5: #{my_convnet_forward.1} parent=1 // loop_body
      %s26 = ssub.s32 %s21, 1
      %s27 = ssub.s32 %s21, 2
      %s28 = sadd.s32 %s21, 1
      %s29 = ssub.s32 %s21, %s28
      %p30 = scmp.eq.s32.totalorder %s29, 0
      %s32 = sadd.s32 %s31, 1
      %s33 = scalar_select %p30, %s31, %s32
      %p36 = pneg %p30
      %p37 = scmp.eq.s32.totalorder %s21, 1
      %p38 = por %p36, %p37
      %p39 = scmp.ne.s32.totalorder %s31, %s34
      %p40 = scmp.eq.s32.totalorder %s21, 0
      %p41 = por %p39, %p40
      %p42 = scmp.ne.s32.totalorder %s31, %s34
      %p43 = scmp.eq.s32.totalorder %s26, 1
      %p44 = por %p42, %p43
      %p45 = scmp.ne.s32.totalorder %s34, %s35
      %p46 = scmp.eq.s32.totalorder %s26, 0
      %p47 = por %p45, %p46
      %p48 = scmp.ne.s32.totalorder %s34, %s35
      %p49 = scmp.eq.s32.totalorder %s27, 1
      %p50 = por %p48, %p49
      %p52 = scmp.ne.s32.totalorder %s35, %s51
      %p53 = scmp.eq.s32.totalorder %s27, 0
      %p54 = por %p52, %p53
      %s56 = sadd.s32 %s55, 1
      %p59 = scmp.eq.s32.totalorder %s21, 1
      %p60 = scmp.ne.s32.totalorder %s55, %s57
      %p61 = scmp.eq.s32.totalorder %s21, 0
      %p62 = por %p60, %p61
      %p63 = scmp.ne.s32.totalorder %s55, %s57
      %p64 = scmp.eq.s32.totalorder %s26, 1
      %p65 = por %p63, %p64
      %p66 = scmp.ne.s32.totalorder %s57, %s58
      %p67 = scmp.eq.s32.totalorder %s26, 0
      %p68 = por %p66, %p67
      %p69 = scmp.ne.s32.totalorder %s57, %s58
      %p70 = scmp.eq.s32.totalorder %s27, 1
      %p71 = por %p69, %p70
      %p73 = scmp.ne.s32.totalorder %s58, %s72
      %p74 = scmp.eq.s32.totalorder %s27, 0
      %p75 = por %p73, %p74
      %s77 = sadd.s32 %s76, 1
      %p80 = scmp.eq.s32.totalorder %s21, 1
      %p81 = scmp.ne.s32.totalorder %s76, %s78
      %p82 = scmp.eq.s32.totalorder %s21, 0
      %p83 = por %p81, %p82
      %p84 = scmp.ne.s32.totalorder %s76, %s78
      %p85 = scmp.eq.s32.totalorder %s26, 1
      %p86 = por %p84, %p85
      %p87 = scmp.ne.s32.totalorder %s78, %s79
      %p88 = scmp.eq.s32.totalorder %s26, 0
      %p89 = por %p87, %p88
      %p90 = scmp.ne.s32.totalorder %s78, %s79
      %p91 = scmp.eq.s32.totalorder %s27, 1
      %p92 = por %p90, %p91
      %p94 = scmp.ne.s32.totalorder %s79, %s93
      %p95 = scmp.eq.s32.totalorder %s27, 0
      %p96 = por %p94, %p95
      %s98 = sadd.s32 %s97, 1
      %p101 = scmp.eq.s32.totalorder %s21, 1
      %p102 = scmp.ne.s32.totalorder %s97, %s99
      %p103 = scmp.eq.s32.totalorder %s21, 0
      %p104 = por %p102, %p103
      %p105 = scmp.ne.s32.totalorder %s97, %s99
      %p106 = scmp.eq.s32.totalorder %s26, 1
      %p107 = por %p105, %p106
      %p108 = scmp.ne.s32.totalorder %s99, %s100
      %p109 = scmp.eq.s32.totalorder %s26, 0
      %p110 = por %p108, %p109
      %p111 = scmp.ne.s32.totalorder %s99, %s100
      %p112 = scmp.eq.s32.totalorder %s27, 1
      %p113 = por %p111, %p112
      %p115 = scmp.ne.s32.totalorder %s100, %s114
      %p116 = scmp.eq.s32.totalorder %s27, 0
      %p117 = por %p115, %p116
      %s119 = sadd.s32 %s118, 1
      %p122 = scmp.eq.s32.totalorder %s21, 1
      %p123 = scmp.ne.s32.totalorder %s118, %s120
      %p124 = scmp.eq.s32.totalorder %s21, 0
      %p125 = por %p123, %p124
      %p126 = scmp.ne.s32.totalorder %s118, %s120
      %p127 = scmp.eq.s32.totalorder %s26, 1
      %p128 = por %p126, %p127
      %p129 = scmp.ne.s32.totalorder %s120, %s121
      %p130 = scmp.eq.s32.totalorder %s26, 0
      %p131 = por %p129, %p130
      %p132 = scmp.ne.s32.totalorder %s120, %s121
      %p133 = scmp.eq.s32.totalorder %s27, 1
      %p134 = por %p132, %p133
      %p136 = scmp.ne.s32.totalorder %s121, %s135
      %p137 = scmp.eq.s32.totalorder %s27, 0
      %p138 = por %p136, %p137
      %s140 = sadd.s32 %s139, 1
      %p143 = scmp.eq.s32.totalorder %s21, 1
      %p144 = scmp.ne.s32.totalorder %s139, %s141
      %p145 = scmp.eq.s32.totalorder %s21, 0
      %p146 = por %p144, %p145
      %p147 = scmp.ne.s32.totalorder %s139, %s141
      %p148 = scmp.eq.s32.totalorder %s26, 1
      %p149 = por %p147, %p148
      %p150 = scmp.ne.s32.totalorder %s141, %s142
      %p151 = scmp.eq.s32.totalorder %s26, 0
      %p152 = por %p150, %p151
      %p153 = scmp.ne.s32.totalorder %s141, %s142
      %p154 = scmp.eq.s32.totalorder %s27, 1
      %p155 = por %p153, %p154
      %p157 = scmp.ne.s32.totalorder %s142, %s156
      %p158 = scmp.eq.s32.totalorder %s27, 0
      %p159 = por %p157, %p158
      %s161 = sadd.s32 %s160, 1
      %p164 = scmp.eq.s32.totalorder %s21, 1
      %p165 = scmp.ne.s32.totalorder %s160, %s162
      %p166 = scmp.eq.s32.totalorder %s21, 0
      %p167 = por %p165, %p166
      %p168 = scmp.ne.s32.totalorder %s160, %s162
      %p169 = scmp.eq.s32.totalorder %s26, 1
      %p170 = por %p168, %p169
      %p171 = scmp.ne.s32.totalorder %s162, %s163
      %p172 = scmp.eq.s32.totalorder %s26, 0
      %p173 = por %p171, %p172
      %p174 = scmp.ne.s32.totalorder %s162, %s163
      %p175 = scmp.eq.s32.totalorder %s27, 1
      %p176 = por %p174, %p175
      %p178 = scmp.ne.s32.totalorder %s163, %s177
      %p179 = scmp.eq.s32.totalorder %s27, 0
      %p180 = por %p178, %p179
      %s182 = sadd.s32 %s181, 1
      %p185 = scmp.eq.s32.totalorder %s21, 1
      %p186 = scmp.ne.s32.totalorder %s181, %s183
      %p187 = scmp.eq.s32.totalorder %s21, 0
      %p188 = por %p186, %p187
      %p189 = scmp.ne.s32.totalorder %s181, %s183
      %p190 = scmp.eq.s32.totalorder %s26, 1
      %p191 = por %p189, %p190
      %p192 = scmp.ne.s32.totalorder %s183, %s184
      %p193 = scmp.eq.s32.totalorder %s26, 0
      %p194 = por %p192, %p193
      %p195 = scmp.ne.s32.totalorder %s183, %s184
      %p196 = scmp.eq.s32.totalorder %s27, 1
      %p197 = por %p195, %p196
      %p199 = scmp.ne.s32.totalorder %s184, %s198
      %p200 = scmp.eq.s32.totalorder %s27, 0
      %p201 = por %p199, %p200
      %s202 = ssub.s32 %s21, %s28
      %p203 = scmp.eq.s32.totalorder %s202, 0
      %s205 = sadd.s32 %s204, 1
      %s206 = scalar_select %p203, %s204, %s205
      %p209 = pneg %p203
      %p210 = scmp.eq.s32.totalorder %s21, 1
      %p211 = por %p209, %p210
      %p212 = scmp.ne.s32.totalorder %s204, %s207
      %p213 = scmp.eq.s32.totalorder %s21, 0
      %p214 = por %p212, %p213
      %p215 = scmp.ne.s32.totalorder %s204, %s207
      %p216 = scmp.eq.s32.totalorder %s26, 1
      %p217 = por %p215, %p216
      %p218 = scmp.ne.s32.totalorder %s207, %s208
      %p219 = scmp.eq.s32.totalorder %s26, 0
      %p220 = por %p218, %p219
      %p221 = scmp.ne.s32.totalorder %s207, %s208
      %p222 = scmp.eq.s32.totalorder %s27, 1
      %p223 = por %p221, %p222
      %p225 = scmp.ne.s32.totalorder %s208, %s224
      %p226 = scmp.eq.s32.totalorder %s27, 0
      %p227 = por %p225, %p226
      %p228 = scmp.le.s32.totalorder 1, %s21
      %p229 = scmp.lt.s32.totalorder %s21, 3
      %p230 = pnand %p228, %p229
      %p231 = pneg %p230
      // Predicated region
      $region9: #{my_convnet_forward.1} parent=5 // pred_check
        _
      $region10: #{my_convnet_forward.1} parent=5 // pred_check_branch
        %233 = sbr.rel (%p230) target = $region12
      $region11: #{my_convnet_forward.1} parent=5 // pred_region
        %s234 = ssub.s32 %s21, 1
        // Predicated region
        $region13: #{my_convnet_forward.1} parent=11 // pred_check
          %p235 = pneg %p68
        $region14: #{my_convnet_forward.1} parent=11 // pred_check_branch
          %237 = sbr.rel (%p235) target = $region16
        $region15: #{my_convnet_forward.1} parent=11 // pred_region
          %239 = vsyncadd [#allocation6], 0
          %s240 = sshll.u32 %s1, 4
          %s241 = int_to_ptr.hbm [resolvable:$true] %s240
          %s242 = sshll.u32 [#allocation5], 4
          %s243 = int_to_ptr.vmem [resolvable:$true] %s242
          %248 = dma.hbm_to_vmem [thread:$0]  %s241, 46080, %s243, [#allocation6], 64, 64, 4
        $region16: #{my_convnet_forward.1} parent=11 // pred_fallthru
          _
        // Predicated region
        $region17: #{my_convnet_forward.1} parent=11 // pred_check
          %p249 = pneg %p89
        $region18: #{my_convnet_forward.1} parent=11 // pred_check_branch
          %251 = sbr.rel (%p249) target = $region20
        $region19: #{my_convnet_forward.1} parent=11 // pred_region
          %253 = vsyncadd [#allocation9], 0
          %s254 = sshll.u32 %s2, 4
          %s255 = int_to_ptr.hbm [resolvable:$true] %s254
          %s256 = sshll.u32 [#allocation8], 4
          %s257 = int_to_ptr.vmem [resolvable:$true] %s256
          %262 = dma.hbm_to_vmem [thread:$0]  %s255, 80, %s257, [#allocation9], 16, 16, 1
        $region20: #{my_convnet_forward.1} parent=11 // pred_fallthru
          _
        // Predicated region
        $region21: #{my_convnet_forward.1} parent=11 // pred_check
          %p263 = pneg %p110
        $region22: #{my_convnet_forward.1} parent=11 // pred_check_branch
          %265 = sbr.rel (%p263) target = $region24
        $region23: #{my_convnet_forward.1} parent=11 // pred_region
          %267 = vsyncadd [#allocation9], 0
          %s268 = sshll.u32 %s3, 4
          %s269 = int_to_ptr.hbm [resolvable:$true] %s268
          %s270 = sshll.u32 [#allocation10], 4
          %s271 = int_to_ptr.vmem [resolvable:$true] %s270
          %276 = dma.hbm_to_vmem [thread:$0]  %s269, 1024, %s271, [#allocation9], 64, 64, 4
        $region24: #{my_convnet_forward.1} parent=11 // pred_fallthru
          _
        // Predicated region
        $region25: #{my_convnet_forward.1} parent=11 // pred_check
          %p277 = pneg %p131
        $region26: #{my_convnet_forward.1} parent=11 // pred_check_branch
          %279 = sbr.rel (%p277) target = $region28
        $region27: #{my_convnet_forward.1} parent=11 // pred_region
          %281 = vsyncadd [#allocation12], 0
          %s283 = sshll.u32 %s4, 4
          %s284 = int_to_ptr.hbm [resolvable:$true] %s283
          %s285 = sshll.u32 [#allocation11], 4
          %s286 = int_to_ptr.vmem [resolvable:$true] %s285
          %288 = dma.hbm_to_vmem [thread:$0]  %s284, 16, %s286, [#allocation12]
        $region28: #{my_convnet_forward.1} parent=11 // pred_fallthru
          _
        // Predicated region
        $region29: #{my_convnet_forward.1} parent=11 // pred_check
          %p289 = pneg %p152
        $region30: #{my_convnet_forward.1} parent=11 // pred_check_branch
          %291 = sbr.rel (%p289) target = $region32
        $region31: #{my_convnet_forward.1} parent=11 // pred_region
          %293 = vsyncadd [#allocation12], 0
          %s294 = sshll.u32 %s5, 4
          %s295 = int_to_ptr.hbm [resolvable:$true] %s294
          %s296 = sshll.u32 [#allocation13], 4
          %s297 = int_to_ptr.vmem [resolvable:$true] %s296
          %302 = dma.hbm_to_vmem [thread:$0]  %s295, 4608, %s297, [#allocation12], 128, 128, 8
        $region32: #{my_convnet_forward.1} parent=11 // pred_fallthru
          _
        // Predicated region
        $region33: #{my_convnet_forward.1} parent=11 // pred_check
          %p303 = pneg %p173
        $region34: #{my_convnet_forward.1} parent=11 // pred_check_branch
          %305 = sbr.rel (%p303) target = $region36
        $region35: #{my_convnet_forward.1} parent=11 // pred_region
          %307 = vsyncadd [#allocation15], 0
          %s308 = sshll.u32 %s6, 4
          %s309 = int_to_ptr.hbm [resolvable:$true] %s308
          %s310 = sshll.u32 [#allocation14], 4
          %s311 = int_to_ptr.vmem [resolvable:$true] %s310
          %316 = dma.hbm_to_vmem [thread:$0]  %s309, 1280, %s311, [#allocation15], 128, 128, 8
        $region36: #{my_convnet_forward.1} parent=11 // pred_fallthru
          _
        // Predicated region
        $region37: #{my_convnet_forward.1} parent=11 // pred_check
          %p317 = pneg %p194
        $region38: #{my_convnet_forward.1} parent=11 // pred_check_branch
          %319 = sbr.rel (%p317) target = $region40
        $region39: #{my_convnet_forward.1} parent=11 // pred_region
          %321 = vsyncadd [#allocation15], 0
          %s322 = sshll.u32 %s7, 4
          %s323 = int_to_ptr.hbm [resolvable:$true] %s322
          %s324 = sshll.u32 [#allocation16], 4
          %s325 = int_to_ptr.vmem [resolvable:$true] %s324
          %330 = dma.hbm_to_vmem [thread:$0]  %s323, 384, %s325, [#allocation15], 128, 128, 8
        $region40: #{my_convnet_forward.1} parent=11 // pred_fallthru
          _
      $region12: #{my_convnet_forward.1} parent=5 // pred_fallthru
        _
      %p331 = scmp.lt.s32.totalorder %s21, 2
      // Predicated region
      $region41: #{my_convnet_forward.1} parent=5 // pred_check
        %p332 = pneg %p331
      $region42: #{my_convnet_forward.1} parent=5 // pred_check_branch
        %334 = sbr.rel (%p332) target = $region44
      $region43: #{my_convnet_forward.1} parent=5 // pred_region
        // Predicated region
        $region45: #{my_convnet_forward.1} parent=43 // pred_check
          %p335 = pneg %p41
        $region46: #{my_convnet_forward.1} parent=43 // pred_check_branch
          %337 = sbr.rel (%p335) target = $region48
        $region47: #{my_convnet_forward.1} parent=43 // pred_region
          %p338 = scmp.lt.s32.totalorder %s21, 1
          %s339 = scalar_select %p338, %s21, 1
          %s340 = smul.addr %s339, 41
          %s341 = smul.addr %s340, 4
          %s342 = scalar_lea.vmem %s0, %s341
        $region48: #{my_convnet_forward.1} parent=43 // pred_fallthru
          _
      $region44: #{my_convnet_forward.1} parent=5 // pred_fallthru
        _
      %p343 = scmp.le.s32.totalorder 1, %s21
      %p344 = scmp.lt.s32.totalorder %s21, 3
      %p345 = pnand %p343, %p344
      %p346 = pneg %p345
      // Predicated region
      $region49: #{my_convnet_forward.1} parent=5 // pred_check
        _
      $region50: #{my_convnet_forward.1} parent=5 // pred_check_branch
        %348 = sbr.rel (%p345) target = $region52
      $region51: #{my_convnet_forward.1} parent=5 // pred_region
        %s349 = ssub.s32 %s21, 1
        // Predicated region
        $region53: #{my_convnet_forward.1} parent=51 // pred_check
          %p350 = pneg %p68
        $region54: #{my_convnet_forward.1} parent=51 // pred_check_branch
          %352 = sbr.rel (%p350) target = $region56
        $region55: #{my_convnet_forward.1} parent=51 // pred_region
          %354 = dma.done [#allocation6], 46080
        $region56: #{my_convnet_forward.1} parent=51 // pred_fallthru
          _
        // Predicated region
        $region57: #{my_convnet_forward.1} parent=51 // pred_check
          %p355 = pneg %p89
        $region58: #{my_convnet_forward.1} parent=51 // pred_check_branch
          %357 = sbr.rel (%p355) target = $region60
        $region59: #{my_convnet_forward.1} parent=51 // pred_region
          %359 = dma.done [#allocation9], 80
        $region60: #{my_convnet_forward.1} parent=51 // pred_fallthru
          _
        // Predicated region
        $region61: #{my_convnet_forward.1} parent=51 // pred_check
          %p360 = pneg %p110
        $region62: #{my_convnet_forward.1} parent=51 // pred_check_branch
          %362 = sbr.rel (%p360) target = $region64
        $region63: #{my_convnet_forward.1} parent=51 // pred_region
          %364 = dma.done [#allocation9], 1024
        $region64: #{my_convnet_forward.1} parent=51 // pred_fallthru
          _
        // Predicated region
        $region65: #{my_convnet_forward.1} parent=51 // pred_check
          %p365 = pneg %p131
        $region66: #{my_convnet_forward.1} parent=51 // pred_check_branch
          %367 = sbr.rel (%p365) target = $region68
        $region67: #{my_convnet_forward.1} parent=51 // pred_region
          %369 = dma.done [#allocation12], 16
        $region68: #{my_convnet_forward.1} parent=51 // pred_fallthru
          _
        // Predicated region
        $region69: #{my_convnet_forward.1} parent=51 // pred_check
          %p370 = pneg %p152
        $region70: #{my_convnet_forward.1} parent=51 // pred_check_branch
          %372 = sbr.rel (%p370) target = $region72
        $region71: #{my_convnet_forward.1} parent=51 // pred_region
          %374 = dma.done [#allocation12], 4608
        $region72: #{my_convnet_forward.1} parent=51 // pred_fallthru
          _
        // Predicated region
        $region73: #{my_convnet_forward.1} parent=51 // pred_check
          %p375 = pneg %p173
        $region74: #{my_convnet_forward.1} parent=51 // pred_check_branch
          %377 = sbr.rel (%p375) target = $region76
        $region75: #{my_convnet_forward.1} parent=51 // pred_region
          %379 = dma.done [#allocation15], 1280
        $region76: #{my_convnet_forward.1} parent=51 // pred_fallthru
          _
        // Predicated region
        $region77: #{my_convnet_forward.1} parent=51 // pred_check
          %p380 = pneg %p194
        $region78: #{my_convnet_forward.1} parent=51 // pred_check_branch
          %382 = sbr.rel (%p380) target = $region80
        $region79: #{my_convnet_forward.1} parent=51 // pred_region
          %384 = dma.done [#allocation15], 384
        $region80: #{my_convnet_forward.1} parent=51 // pred_fallthru
          _
        %p385 = scmp.lt.s32.totalorder %s26, 1
        %s386 = scalar_select %p385, %s26, 1
        %s387 = smul.addr %s386, 41
        %s388 = smul.addr %s387, 4
        %s389 = scalar_lea.vmem %s0, %s388
        %p390 = pneg %p47
        %p391 = pneg %p44
        %p392 = pneg %p68
        %p393 = pneg %p65
        %p394 = pneg %p89
        %p395 = pneg %p86
        %p396 = pneg %p110
        %p397 = pneg %p107
        %p398 = pneg %p131
        %p399 = pneg %p128
        %p400 = pneg %p152
        %p401 = pneg %p149
        %p402 = pneg %p173
        %p403 = pneg %p170
        %p404 = pneg %p194
        %p405 = pneg %p191
        %p406 = pneg %p220
        %p407 = pneg %p217
        %s408 = sand.u32 %s207, 1
        %s409 = scalar_lea.sflag [#allocation7], %s408
        %s410 = sand.u32 %s207, 1
        %s411 = scalar_lea.vmem [#allocation17], %s410
        %p412 = scmp.lt.s32.totalorder %s26, 1
        %s413 = scalar_select %p412, %s26, 1
        %s414 = smul.addr %s413, 41
        %s415 = smul.addr %s414, 4
        %s416 = scalar_lea.vmem %s0, %s415
        %v418 = vld [vmem:[%s416] sm:$0xf]
        %v419 = vld [vmem:[%s416 + $0x4] sm:$0xf]
        %v420 = vld [vmem:[%s416 + $0x8] sm:$0xf]
        %v421 = vld [vmem:[%s416 + $0xc] sm:$0xf]
        %v422 = vld [vmem:[%s416 + $0x10] sm:$0xf]
        %v423 = vld [vmem:[%s416 + $0x14] sm:$0xf]
        %v424 = vld [vmem:[%s416 + $0x18] sm:$0xf]
        %v425 = vld [vmem:[%s416 + $0x1c] sm:$0xf]
        %v426 = vld [vmem:[%s416 + $0x20] sm:$0xf]
        %v427 = vld [vmem:[%s416 + $0x24] sm:$0xf]
        %v428 = vld [vmem:[%s416 + $0x28] sm:$0xf]
        %v429 = vld [vmem:[%s416 + $0x2c] sm:$0xf]
        %v430 = vld [vmem:[%s416 + $0x30] sm:$0xf]
        %v431 = vld [vmem:[%s416 + $0x34] sm:$0xf]
        %v432 = vld [vmem:[%s416 + $0x38] sm:$0xf]
        %v433 = vld [vmem:[%s416 + $0x3c] sm:$0xf]
        %v434 = vld [vmem:[%s416 + $0x40] sm:$0xf]
        %v435 = vld [vmem:[%s416 + $0x44] sm:$0xf]
        %v436 = vld [vmem:[%s416 + $0x48] sm:$0xf]
        %v437 = vld [vmem:[%s416 + $0x4c] sm:$0xf]
        %v438 = vld [vmem:[%s416 + $0x50] sm:$0xf]
        %v439 = vld [vmem:[%s416 + $0x54] sm:$0xf]
        %v440 = vld [vmem:[%s416 + $0x58] sm:$0xf]
        %v441 = vld [vmem:[%s416 + $0x5c] sm:$0xf]
        %v442 = vld [vmem:[%s416 + $0x60] sm:$0xf]
        %v443 = vld [vmem:[%s416 + $0x64] sm:$0xf]
        %v444 = vld [vmem:[%s416 + $0x68] sm:$0xf]
        %v445 = vld [vmem:[%s416 + $0x6c] sm:$0xf]
        %v446 = vld [vmem:[%s416 + $0x70] sm:$0xf]
        %v447 = vld [vmem:[%s416 + $0x74] sm:$0xf]
        %v448 = vld [vmem:[%s416 + $0x78] sm:$0xf]
        %v449 = vld [vmem:[%s416 + $0x7c] sm:$0xf]
        %v450 = vld [vmem:[%s416 + $0x80] sm:$0xf]
        %v451 = vld [vmem:[%s416 + $0x84] sm:$0xf]
        %v452 = vld [vmem:[%s416 + $0x88] sm:$0xf]
        %v453 = vld [vmem:[%s416 + $0x8c] sm:$0xf]
        %v454 = vld [vmem:[#allocation5] sm:$0xf]
        %v455 = vld [vmem:[#allocation5 + $0x4] sm:$0xf]
        %v456 = vld [vmem:[#allocation5 + $0x8] sm:$0xf]
        %v457 = vld [vmem:[#allocation5 + $0xc] sm:$0xf]
        %v458 = vld [vmem:[#allocation5 + $0x10] sm:$0xf]
        %v459 = vld [vmem:[#allocation5 + $0x14] sm:$0xf]
        %v460 = vld [vmem:[#allocation5 + $0x18] sm:$0xf]
        %v461 = vld [vmem:[#allocation5 + $0x1c] sm:$0xf]
        %v462 = vld [vmem:[#allocation5 + $0x20] sm:$0xf]
        %v463 = vld [vmem:[#allocation5 + $0x24] sm:$0xf]
        %v464 = vld [vmem:[#allocation5 + $0x28] sm:$0xf]
        %v465 = vld [vmem:[#allocation5 + $0x2c] sm:$0xf]
        %v466 = vld [vmem:[#allocation5 + $0x30] sm:$0xf]
        %v467 = vld [vmem:[#allocation5 + $0x34] sm:$0xf]
        %v468 = vld [vmem:[#allocation5 + $0x38] sm:$0xf]
        %v469 = vld [vmem:[#allocation5 + $0x3c] sm:$0xf]
        %v470 = vld [vmem:[%s416 + $0x90] sm:$0x1]
        %s471 = scalar_lea.vmem [#allocation5], 64
        %v472 = vld [vmem:[%s471] sm:$0xf]
        %v473 = vld [vmem:[%s471 + $0x4] sm:$0xf]
        %v474 = vld [vmem:[%s471 + $0x8] sm:$0xf]
        %v475 = vld [vmem:[%s471 + $0xc] sm:$0xf]
        %v476 = vld [vmem:[%s471 + $0x10] sm:$0xf]
        %v477 = vld [vmem:[%s471 + $0x14] sm:$0xf]
        %v478 = vld [vmem:[%s471 + $0x18] sm:$0xf]
        %v479 = vld [vmem:[%s471 + $0x1c] sm:$0xf]
        %v480 = vld [vmem:[%s471 + $0x20] sm:$0xf]
        %v481 = vld [vmem:[%s471 + $0x24] sm:$0xf]
        %v482 = vld [vmem:[%s471 + $0x28] sm:$0xf]
        %v483 = vld [vmem:[%s471 + $0x2c] sm:$0xf]
        %v484 = vld [vmem:[%s471 + $0x30] sm:$0xf]
        %v485 = vld [vmem:[%s471 + $0x34] sm:$0xf]
        %v486 = vld [vmem:[%s471 + $0x38] sm:$0xf]
        %v487 = vld [vmem:[%s471 + $0x3c] sm:$0xf]
        %v525 = vunpack.c.l.b16 %v418
        %v526 = vunpack.c.l.b16 %v419
        %v527 = vunpack.c.l.b16 %v420
        %v528 = vunpack.c.l.b16 %v421
        %v529 = vunpack.c.l.b16 %v422
        %v530 = vunpack.c.l.b16 %v423
        %v531 = vunpack.c.l.b16 %v424
        %v532 = vunpack.c.l.b16 %v425
        %v533 = vunpack.c.l.b16 %v426
        %v534 = vunpack.c.l.b16 %v427
        %v535 = vunpack.c.l.b16 %v428
        %v536 = vunpack.c.l.b16 %v429
        %v537 = vunpack.c.l.b16 %v430
        %v538 = vunpack.c.l.b16 %v431
        %v539 = vunpack.c.l.b16 %v432
        %v540 = vunpack.c.l.b16 %v433
        %v541 = vunpack.c.l.b16 %v434
        %v542 = vunpack.c.l.b16 %v435
        %v543 = vunpack.c.l.b16 %v436
        %v544 = vunpack.c.l.b16 %v437
        %v545 = vunpack.c.l.b16 %v438
        %v546 = vunpack.c.l.b16 %v439
        %v547 = vunpack.c.l.b16 %v440
        %v548 = vunpack.c.l.b16 %v441
        %v549 = vunpack.c.l.b16 %v442
        %v550 = vunpack.c.l.b16 %v443
        %v551 = vunpack.c.l.b16 %v444
        %v552 = vunpack.c.l.b16 %v445
        %v553 = vunpack.c.l.b16 %v446
        %v554 = vunpack.c.l.b16 %v447
        %v555 = vunpack.c.l.b16 %v448
        %v556 = vunpack.c.l.b16 %v449
        %v557 = vunpack.c.l.b16 %v450
        %v558 = vunpack.c.l.b16 %v451
        %v559 = vunpack.c.l.b16 %v452
        %v560 = vunpack.c.l.b16 %v453
        %v561 = vunpack.c.l.b16 %v470
        %v562 = vpack.c.b16 %v526, %v525
        %v563 = vpack.c.b16 %v528, %v527
        %v564 = vpack.c.b16 %v530, %v529
        %v565 = vpack.c.b16 %v532, %v531
        %v566 = vpack.c.b16 %v534, %v533
        %v567 = vpack.c.b16 %v536, %v535
        %v568 = vpack.c.b16 %v538, %v537
        %v569 = vpack.c.b16 %v540, %v539
        %v570 = vpack.c.b16 %v542, %v541
        %v571 = vpack.c.b16 %v544, %v543
        %v572 = vpack.c.b16 %v546, %v545
        %v573 = vpack.c.b16 %v548, %v547
        %v574 = vpack.c.b16 %v550, %v549
        %v575 = vpack.c.b16 %v552, %v551
        %v576 = vpack.c.b16 %v554, %v553
        %v577 = vpack.c.b16 %v556, %v555
        %v578 = vpack.c.b16 %v558, %v557
        %v579 = vpack.c.b16 %v560, %v559
        %v580 = vpack.c.b16 %v561, %v561
        %vm581 = vsmask.f32 7424
        %v583 = vshrl.u32 %v562, 16
        %v585 = vshll.u32 %v562, 16
        %v587 = vrot.slane %v585, 1
        %v588 = vor.u32 %v583, %v587
        %v590 = vshll.u32 %v563, 16
        %v592 = vrot.slane %v590, 1
        %v593 = vsel %vm581, %v588, %v592
        %v594 = vshrl.u32 %v563, 16
        %v596 = vor.u32 %v594, %v592
        %v598 = vshll.u32 %v564, 16
        %v600 = vrot.slane %v598, 1
        %v601 = vsel %vm581, %v596, %v600
        %v602 = vshrl.u32 %v564, 16
        %v604 = vor.u32 %v602, %v600
        %v606 = vshll.u32 %v565, 16
        %v608 = vrot.slane %v606, 1
        %v609 = vsel %vm581, %v604, %v608
        %v610 = vshrl.u32 %v565, 16
        %v612 = vor.u32 %v610, %v608
        %v614 = vshll.u32 %v566, 16
        %v616 = vrot.slane %v614, 1
        %v617 = vsel %vm581, %v612, %v616
        %v618 = vshrl.u32 %v566, 16
        %v620 = vor.u32 %v618, %v616
        %v622 = vshll.u32 %v567, 16
        %v624 = vrot.slane %v622, 1
        %v625 = vsel %vm581, %v620, %v624
        %v626 = vshrl.u32 %v567, 16
        %v628 = vor.u32 %v626, %v624
        %v630 = vshll.u32 %v568, 16
        %v632 = vrot.slane %v630, 1
        %v633 = vsel %vm581, %v628, %v632
        %v634 = vshrl.u32 %v568, 16
        %v636 = vor.u32 %v634, %v632
        %v638 = vshll.u32 %v569, 16
        %v640 = vrot.slane %v638, 1
        %v641 = vsel %vm581, %v636, %v640
        %v642 = vshrl.u32 %v569, 16
        %v644 = vor.u32 %v642, %v640
        %v646 = vshll.u32 %v570, 16
        %v648 = vrot.slane %v646, 1
        %v649 = vsel %vm581, %v644, %v648
        %v650 = vshrl.u32 %v570, 16
        %v652 = vor.u32 %v650, %v648
        %v654 = vshll.u32 %v571, 16
        %v656 = vrot.slane %v654, 1
        %v657 = vsel %vm581, %v652, %v656
        %v658 = vshrl.u32 %v571, 16
        %v660 = vor.u32 %v658, %v656
        %v662 = vshll.u32 %v572, 16
        %v664 = vrot.slane %v662, 1
        %v665 = vsel %vm581, %v660, %v664
        %v666 = vshrl.u32 %v572, 16
        %v668 = vor.u32 %v666, %v664
        %v670 = vshll.u32 %v573, 16
        %v672 = vrot.slane %v670, 1
        %v673 = vsel %vm581, %v668, %v672
        %v674 = vshrl.u32 %v573, 16
        %v676 = vor.u32 %v674, %v672
        %v678 = vshll.u32 %v574, 16
        %v680 = vrot.slane %v678, 1
        %v681 = vsel %vm581, %v676, %v680
        %v682 = vshrl.u32 %v574, 16
        %v684 = vor.u32 %v682, %v680
        %v686 = vshll.u32 %v575, 16
        %v688 = vrot.slane %v686, 1
        %v689 = vsel %vm581, %v684, %v688
        %v690 = vshrl.u32 %v575, 16
        %v692 = vor.u32 %v690, %v688
        %v694 = vshll.u32 %v576, 16
        %v696 = vrot.slane %v694, 1
        %v697 = vsel %vm581, %v692, %v696
        %v698 = vshrl.u32 %v576, 16
        %v700 = vor.u32 %v698, %v696
        %v702 = vshll.u32 %v577, 16
        %v704 = vrot.slane %v702, 1
        %v705 = vsel %vm581, %v700, %v704
        %v706 = vshrl.u32 %v577, 16
        %v708 = vor.u32 %v706, %v704
        %v710 = vshll.u32 %v578, 16
        %v712 = vrot.slane %v710, 1
        %v713 = vsel %vm581, %v708, %v712
        %v714 = vshrl.u32 %v578, 16
        %v716 = vor.u32 %v714, %v712
        %v718 = vshll.u32 %v579, 16
        %v720 = vrot.slane %v718, 1
        %v721 = vsel %vm581, %v716, %v720
        %v722 = vshrl.u32 %v579, 16
        %v724 = vor.u32 %v722, %v720
        %v726 = vshll.u32 %v580, 16
        %v728 = vrot.slane %v726, 1
        %v729 = vsel %vm581, %v724, %v728
        %v764 = vunpack.c.l.b16 %v472
        %v765 = vunpack.c.l.b16 %v473
        %v766 = vunpack.c.l.b16 %v474
        %v767 = vunpack.c.l.b16 %v475
        %v768 = vunpack.c.l.b16 %v476
        %v769 = vunpack.c.l.b16 %v477
        %v770 = vunpack.c.l.b16 %v478
        %v771 = vunpack.c.l.b16 %v479
        %v772 = vunpack.c.l.b16 %v480
        %v773 = vunpack.c.l.b16 %v481
        %v774 = vunpack.c.l.b16 %v482
        %v775 = vunpack.c.l.b16 %v483
        %v776 = vunpack.c.l.b16 %v484
        %v777 = vunpack.c.l.b16 %v485
        %v778 = vunpack.c.l.b16 %v486
        %v779 = vunpack.c.l.b16 %v487
        %v780 = vpack.c.b16 %v765, %v764
        %v781 = vpack.c.b16 %v767, %v766
        %v782 = vpack.c.b16 %v769, %v768
        %v783 = vpack.c.b16 %v771, %v770
        %v784 = vpack.c.b16 %v773, %v772
        %v785 = vpack.c.b16 %v775, %v774
        %v786 = vpack.c.b16 %v777, %v776
        %v787 = vpack.c.b16 %v779, %v778
        %796 = vmatpush.bf16.msra.mxu0 %v787
        %797 = vmatpush.bf16.msra.mxu0 %v786
        %798 = vmatpush.bf16.msra.mxu0 %v785
        %799 = vmatpush.bf16.msra.mxu0 %v784
        %800 = vmatpush.bf16.msra.mxu0 %v783
        %801 = vmatpush.bf16.msra.mxu0 %v782
        %802 = vmatpush.bf16.msra.mxu0 %v781
        %803 = vmatpush.bf16.msra.mxu0 %v780
        %804 = vmatmul.bf16.gmra.mxu0 %v593
        %v805 = vpop.f32.mrf.mxu0
        %v806 = vadd.f32 0.0, %v805
        %v807 = vpop.f32.mrf.mxu0
        %v808 = vadd.f32 0.0, %v807
        %809 = vmatmul.bf16.gmra.mxu0 %v601
        %v810 = vpop.f32.mrf.mxu0
        %v811 = vadd.f32 0.0, %v810
        %v812 = vpop.f32.mrf.mxu0
        %v813 = vadd.f32 0.0, %v812
        %814 = vmatmul.bf16.gmra.mxu0 %v609
        %v815 = vpop.f32.mrf.mxu0
        %v816 = vadd.f32 0.0, %v815
        %v817 = vpop.f32.mrf.mxu0
        %v818 = vadd.f32 0.0, %v817
        %819 = vmatmul.bf16.gmra.mxu0 %v617
        %v820 = vpop.f32.mrf.mxu0
        %v821 = vadd.f32 0.0, %v820
        %v822 = vpop.f32.mrf.mxu0
        %v823 = vadd.f32 0.0, %v822
        %824 = vmatmul.bf16.gmra.mxu0 %v625
        %v825 = vpop.f32.mrf.mxu0
        %v826 = vadd.f32 0.0, %v825
        %v827 = vpop.f32.mrf.mxu0
        %v828 = vadd.f32 0.0, %v827
        %829 = vmatmul.bf16.gmra.mxu0 %v633
        %v830 = vpop.f32.mrf.mxu0
        %v831 = vadd.f32 0.0, %v830
        %v832 = vpop.f32.mrf.mxu0
        %v833 = vadd.f32 0.0, %v832
        %834 = vmatmul.bf16.gmra.mxu0 %v641
        %v835 = vpop.f32.mrf.mxu0
        %v836 = vadd.f32 0.0, %v835
        %v837 = vpop.f32.mrf.mxu0
        %v838 = vadd.f32 0.0, %v837
        %839 = vmatmul.bf16.gmra.mxu0 %v649
        %v840 = vpop.f32.mrf.mxu0
        %v841 = vadd.f32 0.0, %v840
        %v842 = vpop.f32.mrf.mxu0
        %v843 = vadd.f32 0.0, %v842
        %844 = vmatmul.bf16.gmra.mxu0 %v657
        %v845 = vpop.f32.mrf.mxu0
        %v846 = vadd.f32 0.0, %v845
        %v847 = vpop.f32.mrf.mxu0
        %v848 = vadd.f32 0.0, %v847
        %849 = vmatmul.bf16.gmra.mxu0 %v665
        %v850 = vpop.f32.mrf.mxu0
        %v851 = vadd.f32 0.0, %v850
        %v852 = vpop.f32.mrf.mxu0
        %v853 = vadd.f32 0.0, %v852
        %854 = vmatmul.bf16.gmra.mxu0 %v673
        %v855 = vpop.f32.mrf.mxu0
        %v856 = vadd.f32 0.0, %v855
        %v857 = vpop.f32.mrf.mxu0
        %v858 = vadd.f32 0.0, %v857
        %859 = vmatmul.bf16.gmra.mxu0 %v681
        %v860 = vpop.f32.mrf.mxu0
        %v861 = vadd.f32 0.0, %v860
        %v862 = vpop.f32.mrf.mxu0
        %v863 = vadd.f32 0.0, %v862
        %864 = vmatmul.bf16.gmra.mxu0 %v689
        %v865 = vpop.f32.mrf.mxu0
        %v866 = vadd.f32 0.0, %v865
        %v867 = vpop.f32.mrf.mxu0
        %v868 = vadd.f32 0.0, %v867
        %869 = vmatmul.bf16.gmra.mxu0 %v697
        %v870 = vpop.f32.mrf.mxu0
        %v871 = vadd.f32 0.0, %v870
        %v872 = vpop.f32.mrf.mxu0
        %v873 = vadd.f32 0.0, %v872
        %874 = vmatmul.bf16.gmra.mxu0 %v705
        %v875 = vpop.f32.mrf.mxu0
        %v876 = vadd.f32 0.0, %v875
        %v877 = vpop.f32.mrf.mxu0
        %v878 = vadd.f32 0.0, %v877
        %879 = vmatmul.bf16.gmra.mxu0 %v713
        %v880 = vpop.f32.mrf.mxu0
        %v881 = vadd.f32 0.0, %v880
        %v882 = vpop.f32.mrf.mxu0
        %v883 = vadd.f32 0.0, %v882
        %884 = vmatmul.bf16.gmra.mxu0 %v721
        %v885 = vpop.f32.mrf.mxu0
        %v886 = vadd.f32 0.0, %v885
        %v887 = vpop.f32.mrf.mxu0
        %v888 = vadd.f32 0.0, %v887
        %889 = vmatmul.bf16.gmra.mxu0 %v729
        %v890 = vpop.f32.mrf.mxu0
        %v891 = vadd.f32 0.0, %v890
        %v892 = vpop.f32.mrf.mxu0
        %v893 = vadd.f32 0.0, %v892
        %894 = vdwg.mxu0
        %v929 = vunpack.c.l.b16 %v454
        %v930 = vunpack.c.l.b16 %v455
        %v931 = vunpack.c.l.b16 %v456
        %v932 = vunpack.c.l.b16 %v457
        %v933 = vunpack.c.l.b16 %v458
        %v934 = vunpack.c.l.b16 %v459
        %v935 = vunpack.c.l.b16 %v460
        %v936 = vunpack.c.l.b16 %v461
        %v937 = vunpack.c.l.b16 %v462
        %v938 = vunpack.c.l.b16 %v463
        %v939 = vunpack.c.l.b16 %v464
        %v940 = vunpack.c.l.b16 %v465
        %v941 = vunpack.c.l.b16 %v466
        %v942 = vunpack.c.l.b16 %v467
        %v943 = vunpack.c.l.b16 %v468
        %v944 = vunpack.c.l.b16 %v469
        %v945 = vpack.c.b16 %v930, %v929
        %v946 = vpack.c.b16 %v932, %v931
        %v947 = vpack.c.b16 %v934, %v933
        %v948 = vpack.c.b16 %v936, %v935
        %v949 = vpack.c.b16 %v938, %v937
        %v950 = vpack.c.b16 %v940, %v939
        %v951 = vpack.c.b16 %v942, %v941
        %v952 = vpack.c.b16 %v944, %v943
        %961 = vmatpush.bf16.msra.mxu0 %v952
        %962 = vmatpush.bf16.msra.mxu0 %v951
        %963 = vmatpush.bf16.msra.mxu0 %v950
        %964 = vmatpush.bf16.msra.mxu0 %v949
        %965 = vmatpush.bf16.msra.mxu0 %v948
        %966 = vmatpush.bf16.msra.mxu0 %v947
        %967 = vmatpush.bf16.msra.mxu0 %v946
        %968 = vmatpush.bf16.msra.mxu0 %v945
        %969 = vmatmul.bf16.gmra.mxu0 %v562
        %v970 = vpop.f32.mrf.mxu0
        %v971 = vadd.f32 %v806, %v970
        %v972 = vpop.f32.mrf.mxu0
        %v973 = vadd.f32 %v808, %v972
        %974 = vmatmul.bf16.gmra.mxu0 %v563
        %v975 = vpop.f32.mrf.mxu0
        %v976 = vadd.f32 %v811, %v975
        %v977 = vpop.f32.mrf.mxu0
        %v978 = vadd.f32 %v813, %v977
        %979 = vmatmul.bf16.gmra.mxu0 %v564
        %v980 = vpop.f32.mrf.mxu0
        %v981 = vadd.f32 %v816, %v980
        %v982 = vpop.f32.mrf.mxu0
        %v983 = vadd.f32 %v818, %v982
        %984 = vmatmul.bf16.gmra.mxu0 %v565
        %v985 = vpop.f32.mrf.mxu0
        %v986 = vadd.f32 %v821, %v985
        %v987 = vpop.f32.mrf.mxu0
        %v988 = vadd.f32 %v823, %v987
        %989 = vmatmul.bf16.gmra.mxu0 %v566
        %v990 = vpop.f32.mrf.mxu0
        %v991 = vadd.f32 %v826, %v990
        %v992 = vpop.f32.mrf.mxu0
        %v993 = vadd.f32 %v828, %v992
        %994 = vmatmul.bf16.gmra.mxu0 %v567
        %v995 = vpop.f32.mrf.mxu0
        %v996 = vadd.f32 %v831, %v995
        %v997 = vpop.f32.mrf.mxu0
        %v998 = vadd.f32 %v833, %v997
        %999 = vmatmul.bf16.gmra.mxu0 %v568
        %v1000 = vpop.f32.mrf.mxu0
        %v1001 = vadd.f32 %v836, %v1000
        %v1002 = vpop.f32.mrf.mxu0
        %v1003 = vadd.f32 %v838, %v1002
        %1004 = vmatmul.bf16.gmra.mxu0 %v569
        %v1005 = vpop.f32.mrf.mxu0
        %v1006 = vadd.f32 %v841, %v1005
        %v1007 = vpop.f32.mrf.mxu0
        %v1008 = vadd.f32 %v843, %v1007
        %1009 = vmatmul.bf16.gmra.mxu0 %v570
        %v1010 = vpop.f32.mrf.mxu0
        %v1011 = vadd.f32 %v846, %v1010
        %v1012 = vpop.f32.mrf.mxu0
        %v1013 = vadd.f32 %v848, %v1012
        %1014 = vmatmul.bf16.gmra.mxu0 %v571
        %v1015 = vpop.f32.mrf.mxu0
        %v1016 = vadd.f32 %v851, %v1015
        %v1017 = vpop.f32.mrf.mxu0
        %v1018 = vadd.f32 %v853, %v1017
        %1019 = vmatmul.bf16.gmra.mxu0 %v572
        %v1020 = vpop.f32.mrf.mxu0
        %v1021 = vadd.f32 %v856, %v1020
        %v1022 = vpop.f32.mrf.mxu0
        %v1023 = vadd.f32 %v858, %v1022
        %1024 = vmatmul.bf16.gmra.mxu0 %v573
        %v1025 = vpop.f32.mrf.mxu0
        %v1026 = vadd.f32 %v861, %v1025
        %v1027 = vpop.f32.mrf.mxu0
        %v1028 = vadd.f32 %v863, %v1027
        %1029 = vmatmul.bf16.gmra.mxu0 %v574
        %v1030 = vpop.f32.mrf.mxu0
        %v1031 = vadd.f32 %v866, %v1030
        %v1032 = vpop.f32.mrf.mxu0
        %v1033 = vadd.f32 %v868, %v1032
        %1034 = vmatmul.bf16.gmra.mxu0 %v575
        %v1035 = vpop.f32.mrf.mxu0
        %v1036 = vadd.f32 %v871, %v1035
        %v1037 = vpop.f32.mrf.mxu0
        %v1038 = vadd.f32 %v873, %v1037
        %1039 = vmatmul.bf16.gmra.mxu0 %v576
        %v1040 = vpop.f32.mrf.mxu0
        %v1041 = vadd.f32 %v876, %v1040
        %v1042 = vpop.f32.mrf.mxu0
        %v1043 = vadd.f32 %v878, %v1042
        %1044 = vmatmul.bf16.gmra.mxu0 %v577
        %v1045 = vpop.f32.mrf.mxu0
        %v1046 = vadd.f32 %v881, %v1045
        %v1047 = vpop.f32.mrf.mxu0
        %v1048 = vadd.f32 %v883, %v1047
        %1049 = vmatmul.bf16.gmra.mxu0 %v578
        %v1050 = vpop.f32.mrf.mxu0
        %v1051 = vadd.f32 %v886, %v1050
        %v1052 = vpop.f32.mrf.mxu0
        %v1053 = vadd.f32 %v888, %v1052
        %1054 = vmatmul.bf16.gmra.mxu0 %v579
        %v1055 = vpop.f32.mrf.mxu0
        %v1056 = vadd.f32 %v891, %v1055
        %v1057 = vpop.f32.mrf.mxu0
        %v1058 = vadd.f32 %v893, %v1057
        %1059 = vdwg.mxu0
        %v1060 = vld [vmem:[%s416] sm:$0xe]
        %s1061 = scalar_lea.vmem [#allocation5], 128
        %v1062 = vld [vmem:[%s1061] sm:$0xf]
        %v1063 = vld [vmem:[%s1061 + $0x4] sm:$0xf]
        %v1064 = vld [vmem:[%s1061 + $0x8] sm:$0xf]
        %v1065 = vld [vmem:[%s1061 + $0xc] sm:$0xf]
        %v1066 = vld [vmem:[%s1061 + $0x10] sm:$0xf]
        %v1067 = vld [vmem:[%s1061 + $0x14] sm:$0xf]
        %v1068 = vld [vmem:[%s1061 + $0x18] sm:$0xf]
        %v1069 = vld [vmem:[%s1061 + $0x1c] sm:$0xf]
        %v1070 = vld [vmem:[%s1061 + $0x20] sm:$0xf]
        %v1071 = vld [vmem:[%s1061 + $0x24] sm:$0xf]
        %v1072 = vld [vmem:[%s1061 + $0x28] sm:$0xf]
        %v1073 = vld [vmem:[%s1061 + $0x2c] sm:$0xf]
        %v1074 = vld [vmem:[%s1061 + $0x30] sm:$0xf]
        %v1075 = vld [vmem:[%s1061 + $0x34] sm:$0xf]
        %v1076 = vld [vmem:[%s1061 + $0x38] sm:$0xf]
        %v1077 = vld [vmem:[%s1061 + $0x3c] sm:$0xf]
        %v1079 = vunpack.c.l.b16 %v1060
        %v1080 = vpack.c.b16 %v526, %v1079
        %vm1081 = vcmask 1046528
        %v1082 = vrot.slane %v1080, 1
        %v1083 = vrot.slane %v563, 1
        %v1084 = vsel %vm1081, %v1082, %v1083
        %v1085 = vrot.slane %v564, 1
        %v1086 = vsel %vm1081, %v1083, %v1085
        %v1087 = vrot.slane %v565, 1
        %v1088 = vsel %vm1081, %v1085, %v1087
        %v1089 = vrot.slane %v566, 1
        %v1090 = vsel %vm1081, %v1087, %v1089
        %v1091 = vrot.slane %v567, 1
        %v1092 = vsel %vm1081, %v1089, %v1091
        %v1093 = vrot.slane %v568, 1
        %v1094 = vsel %vm1081, %v1091, %v1093
        %v1095 = vrot.slane %v569, 1
        %v1096 = vsel %vm1081, %v1093, %v1095
        %v1097 = vrot.slane %v570, 1
        %v1098 = vsel %vm1081, %v1095, %v1097
        %v1099 = vrot.slane %v571, 1
        %v1100 = vsel %vm1081, %v1097, %v1099
        %v1101 = vrot.slane %v572, 1
        %v1102 = vsel %vm1081, %v1099, %v1101
        %v1103 = vrot.slane %v573, 1
        %v1104 = vsel %vm1081, %v1101, %v1103
        %v1105 = vrot.slane %v574, 1
        %v1106 = vsel %vm1081, %v1103, %v1105
        %v1107 = vrot.slane %v575, 1
        %v1108 = vsel %vm1081, %v1105, %v1107
        %v1109 = vrot.slane %v576, 1
        %v1110 = vsel %vm1081, %v1107, %v1109
        %v1111 = vrot.slane %v577, 1
        %v1112 = vsel %vm1081, %v1109, %v1111
        %v1113 = vrot.slane %v578, 1
        %v1114 = vsel %vm1081, %v1111, %v1113
        %v1115 = vrot.slane %v579, 1
        %v1116 = vsel %vm1081, %v1113, %v1115
        %v1117 = vrot.slane %v580, 1
        %v1118 = vsel %vm1081, %v1115, %v1117
        %v1153 = vunpack.c.l.b16 %v1062
        %v1154 = vunpack.c.l.b16 %v1063
        %v1155 = vunpack.c.l.b16 %v1064
        %v1156 = vunpack.c.l.b16 %v1065
        %v1157 = vunpack.c.l.b16 %v1066
        %v1158 = vunpack.c.l.b16 %v1067
        %v1159 = vunpack.c.l.b16 %v1068
        %v1160 = vunpack.c.l.b16 %v1069
        %v1161 = vunpack.c.l.b16 %v1070
        %v1162 = vunpack.c.l.b16 %v1071
        %v1163 = vunpack.c.l.b16 %v1072
        %v1164 = vunpack.c.l.b16 %v1073
        %v1165 = vunpack.c.l.b16 %v1074
        %v1166 = vunpack.c.l.b16 %v1075
        %v1167 = vunpack.c.l.b16 %v1076
        %v1168 = vunpack.c.l.b16 %v1077
        %v1169 = vpack.c.b16 %v1154, %v1153
        %v1170 = vpack.c.b16 %v1156, %v1155
        %v1171 = vpack.c.b16 %v1158, %v1157
        %v1172 = vpack.c.b16 %v1160, %v1159
        %v1173 = vpack.c.b16 %v1162, %v1161
        %v1174 = vpack.c.b16 %v1164, %v1163
        %v1175 = vpack.c.b16 %v1166, %v1165
        %v1176 = vpack.c.b16 %v1168, %v1167
        %1185 = vmatpush.bf16.msra.mxu0 %v1176
        %1186 = vmatpush.bf16.msra.mxu0 %v1175
        %1187 = vmatpush.bf16.msra.mxu0 %v1174
        %1188 = vmatpush.bf16.msra.mxu0 %v1173
        %1189 = vmatpush.bf16.msra.mxu0 %v1172
        %1190 = vmatpush.bf16.msra.mxu0 %v1171
        %1191 = vmatpush.bf16.msra.mxu0 %v1170
        %1192 = vmatpush.bf16.msra.mxu0 %v1169
        %1193 = vmatmul.bf16.gmra.mxu0 %v1084
        %v1194 = vpop.f32.mrf.mxu0
        %v1195 = vadd.f32 0.0, %v1194
        %v1196 = vpop.f32.mrf.mxu0
        %v1197 = vadd.f32 0.0, %v1196
        %1198 = vmatmul.bf16.gmra.mxu0 %v1086
        %v1199 = vpop.f32.mrf.mxu0
        %v1200 = vadd.f32 0.0, %v1199
        %v1201 = vpop.f32.mrf.mxu0
        %v1202 = vadd.f32 0.0, %v1201
        %1203 = vmatmul.bf16.gmra.mxu0 %v1088
        %v1204 = vpop.f32.mrf.mxu0
        %v1205 = vadd.f32 0.0, %v1204
        %v1206 = vpop.f32.mrf.mxu0
        %v1207 = vadd.f32 0.0, %v1206
        %1208 = vmatmul.bf16.gmra.mxu0 %v1090
        %v1209 = vpop.f32.mrf.mxu0
        %v1210 = vadd.f32 0.0, %v1209
        %v1211 = vpop.f32.mrf.mxu0
        %v1212 = vadd.f32 0.0, %v1211
        %1213 = vmatmul.bf16.gmra.mxu0 %v1092
        %v1214 = vpop.f32.mrf.mxu0
        %v1215 = vadd.f32 0.0, %v1214
        %v1216 = vpop.f32.mrf.mxu0
        %v1217 = vadd.f32 0.0, %v1216
        %1218 = vmatmul.bf16.gmra.mxu0 %v1094
        %v1219 = vpop.f32.mrf.mxu0
        %v1220 = vadd.f32 0.0, %v1219
        %v1221 = vpop.f32.mrf.mxu0
        %v1222 = vadd.f32 0.0, %v1221
        %1223 = vmatmul.bf16.gmra.mxu0 %v1096
        %v1224 = vpop.f32.mrf.mxu0
        %v1225 = vadd.f32 0.0, %v1224
        %v1226 = vpop.f32.mrf.mxu0
        %v1227 = vadd.f32 0.0, %v1226
        %1228 = vmatmul.bf16.gmra.mxu0 %v1098
        %v1229 = vpop.f32.mrf.mxu0
        %v1230 = vadd.f32 0.0, %v1229
        %v1231 = vpop.f32.mrf.mxu0
        %v1232 = vadd.f32 0.0, %v1231
        %1233 = vmatmul.bf16.gmra.mxu0 %v1100
        %v1234 = vpop.f32.mrf.mxu0
        %v1235 = vadd.f32 0.0, %v1234
        %v1236 = vpop.f32.mrf.mxu0
        %v1237 = vadd.f32 0.0, %v1236
        %1238 = vmatmul.bf16.gmra.mxu0 %v1102
        %v1239 = vpop.f32.mrf.mxu0
        %v1240 = vadd.f32 0.0, %v1239
        %v1241 = vpop.f32.mrf.mxu0
        %v1242 = vadd.f32 0.0, %v1241
        %1243 = vmatmul.bf16.gmra.mxu0 %v1104
        %v1244 = vpop.f32.mrf.mxu0
        %v1245 = vadd.f32 0.0, %v1244
        %v1246 = vpop.f32.mrf.mxu0
        %v1247 = vadd.f32 0.0, %v1246
        %1248 = vmatmul.bf16.gmra.mxu0 %v1106
        %v1249 = vpop.f32.mrf.mxu0
        %v1250 = vadd.f32 0.0, %v1249
        %v1251 = vpop.f32.mrf.mxu0
        %v1252 = vadd.f32 0.0, %v1251
        %1253 = vmatmul.bf16.gmra.mxu0 %v1108
        %v1254 = vpop.f32.mrf.mxu0
        %v1255 = vadd.f32 0.0, %v1254
        %v1256 = vpop.f32.mrf.mxu0
        %v1257 = vadd.f32 0.0, %v1256
        %1258 = vmatmul.bf16.gmra.mxu0 %v1110
        %v1259 = vpop.f32.mrf.mxu0
        %v1260 = vadd.f32 0.0, %v1259
        %v1261 = vpop.f32.mrf.mxu0
        %v1262 = vadd.f32 0.0, %v1261
        %1263 = vmatmul.bf16.gmra.mxu0 %v1112
        %v1264 = vpop.f32.mrf.mxu0
        %v1265 = vadd.f32 0.0, %v1264
        %v1266 = vpop.f32.mrf.mxu0
        %v1267 = vadd.f32 0.0, %v1266
        %1268 = vmatmul.bf16.gmra.mxu0 %v1114
        %v1269 = vpop.f32.mrf.mxu0
        %v1270 = vadd.f32 0.0, %v1269
        %v1271 = vpop.f32.mrf.mxu0
        %v1272 = vadd.f32 0.0, %v1271
        %1273 = vmatmul.bf16.gmra.mxu0 %v1116
        %v1274 = vpop.f32.mrf.mxu0
        %v1275 = vadd.f32 0.0, %v1274
        %v1276 = vpop.f32.mrf.mxu0
        %v1277 = vadd.f32 0.0, %v1276
        %1278 = vmatmul.bf16.gmra.mxu0 %v1118
        %v1279 = vpop.f32.mrf.mxu0
        %v1280 = vadd.f32 0.0, %v1279
        %v1281 = vpop.f32.mrf.mxu0
        %v1282 = vadd.f32 0.0, %v1281
        %1283 = vdwg.mxu0
        %v1284 = vadd.f32 %v971, %v1195
        %v1285 = vadd.f32 %v973, %v1197
        %v1286 = vadd.f32 %v976, %v1200
        %v1287 = vadd.f32 %v978, %v1202
        %v1288 = vadd.f32 %v981, %v1205
        %v1289 = vadd.f32 %v983, %v1207
        %v1290 = vadd.f32 %v986, %v1210
        %v1291 = vadd.f32 %v988, %v1212
        %v1292 = vadd.f32 %v991, %v1215
        %v1293 = vadd.f32 %v993, %v1217
        %v1294 = vadd.f32 %v996, %v1220
        %v1295 = vadd.f32 %v998, %v1222
        %v1296 = vadd.f32 %v1001, %v1225
        %v1297 = vadd.f32 %v1003, %v1227
        %v1298 = vadd.f32 %v1006, %v1230
        %v1299 = vadd.f32 %v1008, %v1232
        %v1300 = vadd.f32 %v1011, %v1235
        %v1301 = vadd.f32 %v1013, %v1237
        %v1302 = vadd.f32 %v1016, %v1240
        %v1303 = vadd.f32 %v1018, %v1242
        %v1304 = vadd.f32 %v1021, %v1245
        %v1305 = vadd.f32 %v1023, %v1247
        %v1306 = vadd.f32 %v1026, %v1250
        %v1307 = vadd.f32 %v1028, %v1252
        %v1308 = vadd.f32 %v1031, %v1255
        %v1309 = vadd.f32 %v1033, %v1257
        %v1310 = vadd.f32 %v1036, %v1260
        %v1311 = vadd.f32 %v1038, %v1262
        %v1312 = vadd.f32 %v1041, %v1265
        %v1313 = vadd.f32 %v1043, %v1267
        %v1314 = vadd.f32 %v1046, %v1270
        %v1315 = vadd.f32 %v1048, %v1272
        %v1316 = vadd.f32 %v1051, %v1275
        %v1317 = vadd.f32 %v1053, %v1277
        %v1318 = vadd.f32 %v1056, %v1280
        %v1319 = vadd.f32 %v1058, %v1282
        %v1320 = vld [vmem:[%s416 + $0x8] sm:$0xe]
        %v1321 = vld [vmem:[%s416 + $0xc] sm:$0xf]
        %v1322 = vld [vmem:[%s416 + $0x10] sm:$0xf]
        %v1323 = vld [vmem:[%s416 + $0x14] sm:$0xf]
        %v1324 = vld [vmem:[%s416 + $0x18] sm:$0xf]
        %v1325 = vld [vmem:[%s416 + $0x1c] sm:$0xf]
        %v1326 = vld [vmem:[%s416 + $0x20] sm:$0xf]
        %v1327 = vld [vmem:[%s416 + $0x24] sm:$0xf]
        %v1328 = vld [vmem:[%s416 + $0x28] sm:$0xf]
        %v1329 = vld [vmem:[%s416 + $0x2c] sm:$0xf]
        %v1330 = vld [vmem:[%s416 + $0x30] sm:$0xf]
        %v1331 = vld [vmem:[%s416 + $0x34] sm:$0xf]
        %v1332 = vld [vmem:[%s416 + $0x38] sm:$0xf]
        %v1333 = vld [vmem:[%s416 + $0x3c] sm:$0xf]
        %v1334 = vld [vmem:[%s416 + $0x40] sm:$0xf]
        %v1335 = vld [vmem:[%s416 + $0x44] sm:$0xf]
        %v1336 = vld [vmem:[%s416 + $0x48] sm:$0xf]
        %v1337 = vld [vmem:[%s416 + $0x4c] sm:$0xf]
        %v1338 = vld [vmem:[%s416 + $0x50] sm:$0xf]
        %v1339 = vld [vmem:[%s416 + $0x54] sm:$0xf]
        %v1340 = vld [vmem:[%s416 + $0x58] sm:$0xf]
        %v1341 = vld [vmem:[%s416 + $0x5c] sm:$0xf]
        %v1342 = vld [vmem:[%s416 + $0x60] sm:$0xf]
        %v1343 = vld [vmem:[%s416 + $0x64] sm:$0xf]
        %v1344 = vld [vmem:[%s416 + $0x68] sm:$0xf]
        %v1345 = vld [vmem:[%s416 + $0x6c] sm:$0xf]
        %v1346 = vld [vmem:[%s416 + $0x70] sm:$0xf]
        %v1347 = vld [vmem:[%s416 + $0x74] sm:$0xf]
        %v1348 = vld [vmem:[%s416 + $0x78] sm:$0xf]
        %v1349 = vld [vmem:[%s416 + $0x7c] sm:$0xf]
        %v1350 = vld [vmem:[%s416 + $0x80] sm:$0xf]
        %v1351 = vld [vmem:[%s416 + $0x84] sm:$0xf]
        %v1352 = vld [vmem:[%s416 + $0x88] sm:$0xf]
        %v1353 = vld [vmem:[%s416 + $0x8c] sm:$0xf]
        %v1354 = vld [vmem:[%s416 + $0x90] sm:$0xf]
        %v1355 = vld [vmem:[%s416 + $0x94] sm:$0xf]
        %v1356 = vld [vmem:[%s416 + $0x98] sm:$0x1]
        %s1357 = scalar_lea.vmem [#allocation5], 192
        %v1358 = vld [vmem:[%s1357] sm:$0xf]
        %v1359 = vld [vmem:[%s1357 + $0x4] sm:$0xf]
        %v1360 = vld [vmem:[%s1357 + $0x8] sm:$0xf]
        %v1361 = vld [vmem:[%s1357 + $0xc] sm:$0xf]
        %v1362 = vld [vmem:[%s1357 + $0x10] sm:$0xf]
        %v1363 = vld [vmem:[%s1357 + $0x14] sm:$0xf]
        %v1364 = vld [vmem:[%s1357 + $0x18] sm:$0xf]
        %v1365 = vld [vmem:[%s1357 + $0x1c] sm:$0xf]
        %v1366 = vld [vmem:[%s1357 + $0x20] sm:$0xf]
        %v1367 = vld [vmem:[%s1357 + $0x24] sm:$0xf]
        %v1368 = vld [vmem:[%s1357 + $0x28] sm:$0xf]
        %v1369 = vld [vmem:[%s1357 + $0x2c] sm:$0xf]
        %v1370 = vld [vmem:[%s1357 + $0x30] sm:$0xf]
        %v1371 = vld [vmem:[%s1357 + $0x34] sm:$0xf]
        %v1372 = vld [vmem:[%s1357 + $0x38] sm:$0xf]
        %v1373 = vld [vmem:[%s1357 + $0x3c] sm:$0xf]
        %v1411 = vunpack.c.l.b16 %v1320
        %v1412 = vunpack.c.l.b16 %v1321
        %v1413 = vunpack.c.l.b16 %v1322
        %v1414 = vunpack.c.l.b16 %v1323
        %v1415 = vunpack.c.l.b16 %v1324
        %v1416 = vunpack.c.l.b16 %v1325
        %v1417 = vunpack.c.l.b16 %v1326
        %v1418 = vunpack.c.l.b16 %v1327
        %v1419 = vunpack.c.l.b16 %v1328
        %v1420 = vunpack.c.l.b16 %v1329
        %v1421 = vunpack.c.l.b16 %v1330
        %v1422 = vunpack.c.l.b16 %v1331
        %v1423 = vunpack.c.l.b16 %v1332
        %v1424 = vunpack.c.l.b16 %v1333
        %v1425 = vunpack.c.l.b16 %v1334
        %v1426 = vunpack.c.l.b16 %v1335
        %v1427 = vunpack.c.l.b16 %v1336
        %v1428 = vunpack.c.l.b16 %v1337
        %v1429 = vunpack.c.l.b16 %v1338
        %v1430 = vunpack.c.l.b16 %v1339
        %v1431 = vunpack.c.l.b16 %v1340
        %v1432 = vunpack.c.l.b16 %v1341
        %v1433 = vunpack.c.l.b16 %v1342
        %v1434 = vunpack.c.l.b16 %v1343
        %v1435 = vunpack.c.l.b16 %v1344
        %v1436 = vunpack.c.l.b16 %v1345
        %v1437 = vunpack.c.l.b16 %v1346
        %v1438 = vunpack.c.l.b16 %v1347
        %v1439 = vunpack.c.l.b16 %v1348
        %v1440 = vunpack.c.l.b16 %v1349
        %v1441 = vunpack.c.l.b16 %v1350
        %v1442 = vunpack.c.l.b16 %v1351
        %v1443 = vunpack.c.l.b16 %v1352
        %v1444 = vunpack.c.l.b16 %v1353
        %v1445 = vunpack.c.l.b16 %v1354
        %v1446 = vunpack.c.l.b16 %v1355
        %v1447 = vunpack.c.l.b16 %v1356
        %v1448 = vpack.c.b16 %v1412, %v1411
        %v1449 = vpack.c.b16 %v1414, %v1413
        %v1450 = vpack.c.b16 %v1416, %v1415
        %v1451 = vpack.c.b16 %v1418, %v1417
        %v1452 = vpack.c.b16 %v1420, %v1419
        %v1453 = vpack.c.b16 %v1422, %v1421
        %v1454 = vpack.c.b16 %v1424, %v1423
        %v1455 = vpack.c.b16 %v1426, %v1425
        %v1456 = vpack.c.b16 %v1428, %v1427
        %v1457 = vpack.c.b16 %v1430, %v1429
        %v1458 = vpack.c.b16 %v1432, %v1431
        %v1459 = vpack.c.b16 %v1434, %v1433
        %v1460 = vpack.c.b16 %v1436, %v1435
        %v1461 = vpack.c.b16 %v1438, %v1437
        %v1462 = vpack.c.b16 %v1440, %v1439
        %v1463 = vpack.c.b16 %v1442, %v1441
        %v1464 = vpack.c.b16 %v1444, %v1443
        %v1465 = vpack.c.b16 %v1446, %v1445
        %v1466 = vpack.c.b16 %v1447, %v1447
        %v1467 = vrot.slane %v1448, 1
        %v1468 = vrot.slane %v1449, 1
        %v1469 = vsel %vm1081, %v1467, %v1468
        %v1470 = vrot.slane %v1450, 1
        %v1471 = vsel %vm1081, %v1468, %v1470
        %v1472 = vrot.slane %v1451, 1
        %v1473 = vsel %vm1081, %v1470, %v1472
        %v1474 = vrot.slane %v1452, 1
        %v1475 = vsel %vm1081, %v1472, %v1474
        %v1476 = vrot.slane %v1453, 1
        %v1477 = vsel %vm1081, %v1474, %v1476
        %v1478 = vrot.slane %v1454, 1
        %v1479 = vsel %vm1081, %v1476, %v1478
        %v1480 = vrot.slane %v1455, 1
        %v1481 = vsel %vm1081, %v1478, %v1480
        %v1482 = vrot.slane %v1456, 1
        %v1483 = vsel %vm1081, %v1480, %v1482
        %v1484 = vrot.slane %v1457, 1
        %v1485 = vsel %vm1081, %v1482, %v1484
        %v1486 = vrot.slane %v1458, 1
        %v1487 = vsel %vm1081, %v1484, %v1486
        %v1488 = vrot.slane %v1459, 1
        %v1489 = vsel %vm1081, %v1486, %v1488
        %v1490 = vrot.slane %v1460, 1
        %v1491 = vsel %vm1081, %v1488, %v1490
        %v1492 = vrot.slane %v1461, 1
        %v1493 = vsel %vm1081, %v1490, %v1492
        %v1494 = vrot.slane %v1462, 1
        %v1495 = vsel %vm1081, %v1492, %v1494
        %v1496 = vrot.slane %v1463, 1
        %v1497 = vsel %vm1081, %v1494, %v1496
        %v1498 = vrot.slane %v1464, 1
        %v1499 = vsel %vm1081, %v1496, %v1498
        %v1500 = vrot.slane %v1465, 1
        %v1501 = vsel %vm1081, %v1498, %v1500
        %v1502 = vrot.slane %v1466, 1
        %v1503 = vsel %vm1081, %v1500, %v1502
        %v1538 = vunpack.c.l.b16 %v1358
        %v1539 = vunpack.c.l.b16 %v1359
        %v1540 = vunpack.c.l.b16 %v1360
        %v1541 = vunpack.c.l.b16 %v1361
        %v1542 = vunpack.c.l.b16 %v1362
        %v1543 = vunpack.c.l.b16 %v1363
        %v1544 = vunpack.c.l.b16 %v1364
        %v1545 = vunpack.c.l.b16 %v1365
        %v1546 = vunpack.c.l.b16 %v1366
        %v1547 = vunpack.c.l.b16 %v1367
        %v1548 = vunpack.c.l.b16 %v1368
        %v1549 = vunpack.c.l.b16 %v1369
        %v1550 = vunpack.c.l.b16 %v1370
        %v1551 = vunpack.c.l.b16 %v1371
        %v1552 = vunpack.c.l.b16 %v1372
        %v1553 = vunpack.c.l.b16 %v1373
        %v1554 = vpack.c.b16 %v1539, %v1538
        %v1555 = vpack.c.b16 %v1541, %v1540
        %v1556 = vpack.c.b16 %v1543, %v1542
        %v1557 = vpack.c.b16 %v1545, %v1544
        %v1558 = vpack.c.b16 %v1547, %v1546
        %v1559 = vpack.c.b16 %v1549, %v1548
        %v1560 = vpack.c.b16 %v1551, %v1550
        %v1561 = vpack.c.b16 %v1553, %v1552
        %1570 = vmatpush.bf16.msra.mxu0 %v1561
        %1571 = vmatpush.bf16.msra.mxu0 %v1560
        %1572 = vmatpush.bf16.msra.mxu0 %v1559
        %1573 = vmatpush.bf16.msra.mxu0 %v1558
        %1574 = vmatpush.bf16.msra.mxu0 %v1557
        %1575 = vmatpush.bf16.msra.mxu0 %v1556
        %1576 = vmatpush.bf16.msra.mxu0 %v1555
        %1577 = vmatpush.bf16.msra.mxu0 %v1554
        %1578 = vmatmul.bf16.gmra.mxu0 %v1469
        %v1579 = vpop.f32.mrf.mxu0
        %v1580 = vadd.f32 0.0, %v1579
        %v1581 = vpop.f32.mrf.mxu0
        %v1582 = vadd.f32 0.0, %v1581
        %1583 = vmatmul.bf16.gmra.mxu0 %v1471
        %v1584 = vpop.f32.mrf.mxu0
        %v1585 = vadd.f32 0.0, %v1584
        %v1586 = vpop.f32.mrf.mxu0
        %v1587 = vadd.f32 0.0, %v1586
        %1588 = vmatmul.bf16.gmra.mxu0 %v1473
        %v1589 = vpop.f32.mrf.mxu0
        %v1590 = vadd.f32 0.0, %v1589
        %v1591 = vpop.f32.mrf.mxu0
        %v1592 = vadd.f32 0.0, %v1591
        %1593 = vmatmul.bf16.gmra.mxu0 %v1475
        %v1594 = vpop.f32.mrf.mxu0
        %v1595 = vadd.f32 0.0, %v1594
        %v1596 = vpop.f32.mrf.mxu0
        %v1597 = vadd.f32 0.0, %v1596
        %1598 = vmatmul.bf16.gmra.mxu0 %v1477
        %v1599 = vpop.f32.mrf.mxu0
        %v1600 = vadd.f32 0.0, %v1599
        %v1601 = vpop.f32.mrf.mxu0
        %v1602 = vadd.f32 0.0, %v1601
        %1603 = vmatmul.bf16.gmra.mxu0 %v1479
        %v1604 = vpop.f32.mrf.mxu0
        %v1605 = vadd.f32 0.0, %v1604
        %v1606 = vpop.f32.mrf.mxu0
        %v1607 = vadd.f32 0.0, %v1606
        %1608 = vmatmul.bf16.gmra.mxu0 %v1481
        %v1609 = vpop.f32.mrf.mxu0
        %v1610 = vadd.f32 0.0, %v1609
        %v1611 = vpop.f32.mrf.mxu0
        %v1612 = vadd.f32 0.0, %v1611
        %1613 = vmatmul.bf16.gmra.mxu0 %v1483
        %v1614 = vpop.f32.mrf.mxu0
        %v1615 = vadd.f32 0.0, %v1614
        %v1616 = vpop.f32.mrf.mxu0
        %v1617 = vadd.f32 0.0, %v1616
        %1618 = vmatmul.bf16.gmra.mxu0 %v1485
        %v1619 = vpop.f32.mrf.mxu0
        %v1620 = vadd.f32 0.0, %v1619
        %v1621 = vpop.f32.mrf.mxu0
        %v1622 = vadd.f32 0.0, %v1621
        %1623 = vmatmul.bf16.gmra.mxu0 %v1487
        %v1624 = vpop.f32.mrf.mxu0
        %v1625 = vadd.f32 0.0, %v1624
        %v1626 = vpop.f32.mrf.mxu0
        %v1627 = vadd.f32 0.0, %v1626
        %1628 = vmatmul.bf16.gmra.mxu0 %v1489
        %v1629 = vpop.f32.mrf.mxu0
        %v1630 = vadd.f32 0.0, %v1629
        %v1631 = vpop.f32.mrf.mxu0
        %v1632 = vadd.f32 0.0, %v1631
        %1633 = vmatmul.bf16.gmra.mxu0 %v1491
        %v1634 = vpop.f32.mrf.mxu0
        %v1635 = vadd.f32 0.0, %v1634
        %v1636 = vpop.f32.mrf.mxu0
        %v1637 = vadd.f32 0.0, %v1636
        %1638 = vmatmul.bf16.gmra.mxu0 %v1493
        %v1639 = vpop.f32.mrf.mxu0
        %v1640 = vadd.f32 0.0, %v1639
        %v1641 = vpop.f32.mrf.mxu0
        %v1642 = vadd.f32 0.0, %v1641
        %1643 = vmatmul.bf16.gmra.mxu0 %v1495
        %v1644 = vpop.f32.mrf.mxu0
        %v1645 = vadd.f32 0.0, %v1644
        %v1646 = vpop.f32.mrf.mxu0
        %v1647 = vadd.f32 0.0, %v1646
        %1648 = vmatmul.bf16.gmra.mxu0 %v1497
        %v1649 = vpop.f32.mrf.mxu0
        %v1650 = vadd.f32 0.0, %v1649
        %v1651 = vpop.f32.mrf.mxu0
        %v1652 = vadd.f32 0.0, %v1651
        %1653 = vmatmul.bf16.gmra.mxu0 %v1499
        %v1654 = vpop.f32.mrf.mxu0
        %v1655 = vadd.f32 0.0, %v1654
        %v1656 = vpop.f32.mrf.mxu0
        %v1657 = vadd.f32 0.0, %v1656
        %1658 = vmatmul.bf16.gmra.mxu0 %v1501
        %v1659 = vpop.f32.mrf.mxu0
        %v1660 = vadd.f32 0.0, %v1659
        %v1661 = vpop.f32.mrf.mxu0
        %v1662 = vadd.f32 0.0, %v1661
        %1663 = vmatmul.bf16.gmra.mxu0 %v1503
        %v1664 = vpop.f32.mrf.mxu0
        %v1665 = vadd.f32 0.0, %v1664
        %v1666 = vpop.f32.mrf.mxu0
        %v1667 = vadd.f32 0.0, %v1666
        %1668 = vdwg.mxu0
        %v1669 = vadd.f32 %v1284, %v1580
        %v1670 = vadd.f32 %v1285, %v1582
        %v1671 = vadd.f32 %v1286, %v1585
        %v1672 = vadd.f32 %v1287, %v1587
        %v1673 = vadd.f32 %v1288, %v1590
        %v1674 = vadd.f32 %v1289, %v1592
        %v1675 = vadd.f32 %v1290, %v1595
        %v1676 = vadd.f32 %v1291, %v1597
        %v1677 = vadd.f32 %v1292, %v1600
        %v1678 = vadd.f32 %v1293, %v1602
        %v1679 = vadd.f32 %v1294, %v1605
        %v1680 = vadd.f32 %v1295, %v1607
        %v1681 = vadd.f32 %v1296, %v1610
        %v1682 = vadd.f32 %v1297, %v1612
        %v1683 = vadd.f32 %v1298, %v1615
        %v1684 = vadd.f32 %v1299, %v1617
        %v1685 = vadd.f32 %v1300, %v1620
        %v1686 = vadd.f32 %v1301, %v1622
        %v1687 = vadd.f32 %v1302, %v1625
        %v1688 = vadd.f32 %v1303, %v1627
        %v1689 = vadd.f32 %v1304, %v1630
        %v1690 = vadd.f32 %v1305, %v1632
        %v1691 = vadd.f32 %v1306, %v1635
        %v1692 = vadd.f32 %v1307, %v1637
        %v1693 = vadd.f32 %v1308, %v1640
        %v1694 = vadd.f32 %v1309, %v1642
        %v1695 = vadd.f32 %v1310, %v1645
        %v1696 = vadd.f32 %v1311, %v1647
        %v1697 = vadd.f32 %v1312, %v1650
        %v1698 = vadd.f32 %v1313, %v1652
        %v1699 = vadd.f32 %v1314, %v1655
        %v1700 = vadd.f32 %v1315, %v1657
        %v1701 = vadd.f32 %v1316, %v1660
        %v1702 = vadd.f32 %v1317, %v1662
        %v1703 = vadd.f32 %v1318, %v1665
        %v1704 = vadd.f32 %v1319, %v1667
        %v1705 = vld [vmem:[%s416 + $0x98] sm:$0x3]
        %s1706 = scalar_lea.vmem [#allocation5], 256
        %v1707 = vld [vmem:[%s1706] sm:$0xf]
        %v1708 = vld [vmem:[%s1706 + $0x4] sm:$0xf]
        %v1709 = vld [vmem:[%s1706 + $0x8] sm:$0xf]
        %v1710 = vld [vmem:[%s1706 + $0xc] sm:$0xf]
        %v1711 = vld [vmem:[%s1706 + $0x10] sm:$0xf]
        %v1712 = vld [vmem:[%s1706 + $0x14] sm:$0xf]
        %v1713 = vld [vmem:[%s1706 + $0x18] sm:$0xf]
        %v1714 = vld [vmem:[%s1706 + $0x1c] sm:$0xf]
        %v1715 = vld [vmem:[%s1706 + $0x20] sm:$0xf]
        %v1716 = vld [vmem:[%s1706 + $0x24] sm:$0xf]
        %v1717 = vld [vmem:[%s1706 + $0x28] sm:$0xf]
        %v1718 = vld [vmem:[%s1706 + $0x2c] sm:$0xf]
        %v1719 = vld [vmem:[%s1706 + $0x30] sm:$0xf]
        %v1720 = vld [vmem:[%s1706 + $0x34] sm:$0xf]
        %v1721 = vld [vmem:[%s1706 + $0x38] sm:$0xf]
        %v1722 = vld [vmem:[%s1706 + $0x3c] sm:$0xf]
        %v1724 = vunpack.c.l.b16 %v1705
        %v1725 = vpack.c.b16 %v1724, %v1724
        %vm1726 = vsmask.f32 6400
        %v1728 = vshrl.u32 %v1448, 16
        %v1730 = vrot.slane %v1728, 1
        %v1731 = vshll.u32 %v1448, 16
        %v1733 = vrot.slane %v1731, 2
        %v1734 = vor.u32 %v1730, %v1733
        %v1736 = vshrl.u32 %v1449, 16
        %v1738 = vrot.slane %v1736, 1
        %v1739 = vshll.u32 %v1449, 16
        %v1741 = vrot.slane %v1739, 2
        %v1742 = vor.u32 %v1738, %v1741
        %v1743 = vsel %vm1726, %v1734, %v1742
        %v1745 = vshrl.u32 %v1450, 16
        %v1747 = vrot.slane %v1745, 1
        %v1748 = vshll.u32 %v1450, 16
        %v1750 = vrot.slane %v1748, 2
        %v1751 = vor.u32 %v1747, %v1750
        %v1752 = vsel %vm1726, %v1742, %v1751
        %v1754 = vshrl.u32 %v1451, 16
        %v1756 = vrot.slane %v1754, 1
        %v1757 = vshll.u32 %v1451, 16
        %v1759 = vrot.slane %v1757, 2
        %v1760 = vor.u32 %v1756, %v1759
        %v1761 = vsel %vm1726, %v1751, %v1760
        %v1763 = vshrl.u32 %v1452, 16
        %v1765 = vrot.slane %v1763, 1
        %v1766 = vshll.u32 %v1452, 16
        %v1768 = vrot.slane %v1766, 2
        %v1769 = vor.u32 %v1765, %v1768
        %v1770 = vsel %vm1726, %v1760, %v1769
        %v1772 = vshrl.u32 %v1453, 16
        %v1774 = vrot.slane %v1772, 1
        %v1775 = vshll.u32 %v1453, 16
        %v1777 = vrot.slane %v1775, 2
        %v1778 = vor.u32 %v1774, %v1777
        %v1779 = vsel %vm1726, %v1769, %v1778
        %v1781 = vshrl.u32 %v1454, 16
        %v1783 = vrot.slane %v1781, 1
        %v1784 = vshll.u32 %v1454, 16
        %v1786 = vrot.slane %v1784, 2
        %v1787 = vor.u32 %v1783, %v1786
        %v1788 = vsel %vm1726, %v1778, %v1787
        %v1790 = vshrl.u32 %v1455, 16
        %v1792 = vrot.slane %v1790, 1
        %v1793 = vshll.u32 %v1455, 16
        %v1795 = vrot.slane %v1793, 2
        %v1796 = vor.u32 %v1792, %v1795
        %v1797 = vsel %vm1726, %v1787, %v1796
        %v1799 = vshrl.u32 %v1456, 16
        %v1801 = vrot.slane %v1799, 1
        %v1802 = vshll.u32 %v1456, 16
        %v1804 = vrot.slane %v1802, 2
        %v1805 = vor.u32 %v1801, %v1804
        %v1806 = vsel %vm1726, %v1796, %v1805
        %v1808 = vshrl.u32 %v1457, 16
        %v1810 = vrot.slane %v1808, 1
        %v1811 = vshll.u32 %v1457, 16
        %v1813 = vrot.slane %v1811, 2
        %v1814 = vor.u32 %v1810, %v1813
        %v1815 = vsel %vm1726, %v1805, %v1814
        %v1817 = vshrl.u32 %v1458, 16
        %v1819 = vrot.slane %v1817, 1
        %v1820 = vshll.u32 %v1458, 16
        %v1822 = vrot.slane %v1820, 2
        %v1823 = vor.u32 %v1819, %v1822
        %v1824 = vsel %vm1726, %v1814, %v1823
        %v1826 = vshrl.u32 %v1459, 16
        %v1828 = vrot.slane %v1826, 1
        %v1829 = vshll.u32 %v1459, 16
        %v1831 = vrot.slane %v1829, 2
        %v1832 = vor.u32 %v1828, %v1831
        %v1833 = vsel %vm1726, %v1823, %v1832
        %v1835 = vshrl.u32 %v1460, 16
        %v1837 = vrot.slane %v1835, 1
        %v1838 = vshll.u32 %v1460, 16
        %v1840 = vrot.slane %v1838, 2
        %v1841 = vor.u32 %v1837, %v1840
        %v1842 = vsel %vm1726, %v1832, %v1841
        %v1844 = vshrl.u32 %v1461, 16
        %v1846 = vrot.slane %v1844, 1
        %v1847 = vshll.u32 %v1461, 16
        %v1849 = vrot.slane %v1847, 2
        %v1850 = vor.u32 %v1846, %v1849
        %v1851 = vsel %vm1726, %v1841, %v1850
        %v1853 = vshrl.u32 %v1462, 16
        %v1855 = vrot.slane %v1853, 1
        %v1856 = vshll.u32 %v1462, 16
        %v1858 = vrot.slane %v1856, 2
        %v1859 = vor.u32 %v1855, %v1858
        %v1860 = vsel %vm1726, %v1850, %v1859
        %v1862 = vshrl.u32 %v1463, 16
        %v1864 = vrot.slane %v1862, 1
        %v1865 = vshll.u32 %v1463, 16
        %v1867 = vrot.slane %v1865, 2
        %v1868 = vor.u32 %v1864, %v1867
        %v1869 = vsel %vm1726, %v1859, %v1868
        %v1871 = vshrl.u32 %v1464, 16
        %v1873 = vrot.slane %v1871, 1
        %v1874 = vshll.u32 %v1464, 16
        %v1876 = vrot.slane %v1874, 2
        %v1877 = vor.u32 %v1873, %v1876
        %v1878 = vsel %vm1726, %v1868, %v1877
        %v1880 = vshrl.u32 %v1465, 16
        %v1882 = vrot.slane %v1880, 1
        %v1883 = vshll.u32 %v1465, 16
        %v1885 = vrot.slane %v1883, 2
        %v1886 = vor.u32 %v1882, %v1885
        %v1887 = vsel %vm1726, %v1877, %v1886
        %v1889 = vshrl.u32 %v1725, 16
        %v1891 = vrot.slane %v1889, 1
        %v1892 = vshll.u32 %v1725, 16
        %v1894 = vrot.slane %v1892, 2
        %v1895 = vor.u32 %v1891, %v1894
        %v1896 = vsel %vm1726, %v1886, %v1895
        %v1931 = vunpack.c.l.b16 %v1707
        %v1932 = vunpack.c.l.b16 %v1708
        %v1933 = vunpack.c.l.b16 %v1709
        %v1934 = vunpack.c.l.b16 %v1710
        %v1935 = vunpack.c.l.b16 %v1711
        %v1936 = vunpack.c.l.b16 %v1712
        %v1937 = vunpack.c.l.b16 %v1713
        %v1938 = vunpack.c.l.b16 %v1714
        %v1939 = vunpack.c.l.b16 %v1715
        %v1940 = vunpack.c.l.b16 %v1716
        %v1941 = vunpack.c.l.b16 %v1717
        %v1942 = vunpack.c.l.b16 %v1718
        %v1943 = vunpack.c.l.b16 %v1719
        %v1944 = vunpack.c.l.b16 %v1720
        %v1945 = vunpack.c.l.b16 %v1721
        %v1946 = vunpack.c.l.b16 %v1722
        %v1947 = vpack.c.b16 %v1932, %v1931
        %v1948 = vpack.c.b16 %v1934, %v1933
        %v1949 = vpack.c.b16 %v1936, %v1935
        %v1950 = vpack.c.b16 %v1938, %v1937
        %v1951 = vpack.c.b16 %v1940, %v1939
        %v1952 = vpack.c.b16 %v1942, %v1941
        %v1953 = vpack.c.b16 %v1944, %v1943
        %v1954 = vpack.c.b16 %v1946, %v1945
        %1963 = vmatpush.bf16.msra.mxu0 %v1954
        %1964 = vmatpush.bf16.msra.mxu0 %v1953
        %1965 = vmatpush.bf16.msra.mxu0 %v1952
        %1966 = vmatpush.bf16.msra.mxu0 %v1951
        %1967 = vmatpush.bf16.msra.mxu0 %v1950
        %1968 = vmatpush.bf16.msra.mxu0 %v1949
        %1969 = vmatpush.bf16.msra.mxu0 %v1948
        %1970 = vmatpush.bf16.msra.mxu0 %v1947
        %1971 = vmatmul.bf16.gmra.mxu0 %v1743
        %v1972 = vpop.f32.mrf.mxu0
        %v1973 = vadd.f32 0.0, %v1972
        %v1974 = vpop.f32.mrf.mxu0
        %v1975 = vadd.f32 0.0, %v1974
        %1976 = vmatmul.bf16.gmra.mxu0 %v1752
        %v1977 = vpop.f32.mrf.mxu0
        %v1978 = vadd.f32 0.0, %v1977
        %v1979 = vpop.f32.mrf.mxu0
        %v1980 = vadd.f32 0.0, %v1979
        %1981 = vmatmul.bf16.gmra.mxu0 %v1761
        %v1982 = vpop.f32.mrf.mxu0
        %v1983 = vadd.f32 0.0, %v1982
        %v1984 = vpop.f32.mrf.mxu0
        %v1985 = vadd.f32 0.0, %v1984
        %1986 = vmatmul.bf16.gmra.mxu0 %v1770
        %v1987 = vpop.f32.mrf.mxu0
        %v1988 = vadd.f32 0.0, %v1987
        %v1989 = vpop.f32.mrf.mxu0
        %v1990 = vadd.f32 0.0, %v1989
        %1991 = vmatmul.bf16.gmra.mxu0 %v1779
        %v1992 = vpop.f32.mrf.mxu0
        %v1993 = vadd.f32 0.0, %v1992
        %v1994 = vpop.f32.mrf.mxu0
        %v1995 = vadd.f32 0.0, %v1994
        %1996 = vmatmul.bf16.gmra.mxu0 %v1788
        %v1997 = vpop.f32.mrf.mxu0
        %v1998 = vadd.f32 0.0, %v1997
        %v1999 = vpop.f32.mrf.mxu0
        %v2000 = vadd.f32 0.0, %v1999
        %2001 = vmatmul.bf16.gmra.mxu0 %v1797
        %v2002 = vpop.f32.mrf.mxu0
        %v2003 = vadd.f32 0.0, %v2002
        %v2004 = vpop.f32.mrf.mxu0
        %v2005 = vadd.f32 0.0, %v2004
        %2006 = vmatmul.bf16.gmra.mxu0 %v1806
        %v2007 = vpop.f32.mrf.mxu0
        %v2008 = vadd.f32 0.0, %v2007
        %v2009 = vpop.f32.mrf.mxu0
        %v2010 = vadd.f32 0.0, %v2009
        %2011 = vmatmul.bf16.gmra.mxu0 %v1815
        %v2012 = vpop.f32.mrf.mxu0
        %v2013 = vadd.f32 0.0, %v2012
        %v2014 = vpop.f32.mrf.mxu0
        %v2015 = vadd.f32 0.0, %v2014
        %2016 = vmatmul.bf16.gmra.mxu0 %v1824
        %v2017 = vpop.f32.mrf.mxu0
        %v2018 = vadd.f32 0.0, %v2017
        %v2019 = vpop.f32.mrf.mxu0
        %v2020 = vadd.f32 0.0, %v2019
        %2021 = vmatmul.bf16.gmra.mxu0 %v1833
        %v2022 = vpop.f32.mrf.mxu0
        %v2023 = vadd.f32 0.0, %v2022
        %v2024 = vpop.f32.mrf.mxu0
        %v2025 = vadd.f32 0.0, %v2024
        %2026 = vmatmul.bf16.gmra.mxu0 %v1842
        %v2027 = vpop.f32.mrf.mxu0
        %v2028 = vadd.f32 0.0, %v2027
        %v2029 = vpop.f32.mrf.mxu0
        %v2030 = vadd.f32 0.0, %v2029
        %2031 = vmatmul.bf16.gmra.mxu0 %v1851
        %v2032 = vpop.f32.mrf.mxu0
        %v2033 = vadd.f32 0.0, %v2032
        %v2034 = vpop.f32.mrf.mxu0
        %v2035 = vadd.f32 0.0, %v2034
        %2036 = vmatmul.bf16.gmra.mxu0 %v1860
        %v2037 = vpop.f32.mrf.mxu0
        %v2038 = vadd.f32 0.0, %v2037
        %v2039 = vpop.f32.mrf.mxu0
        %v2040 = vadd.f32 0.0, %v2039
        %2041 = vmatmul.bf16.gmra.mxu0 %v1869
        %v2042 = vpop.f32.mrf.mxu0
        %v2043 = vadd.f32 0.0, %v2042
        %v2044 = vpop.f32.mrf.mxu0
        %v2045 = vadd.f32 0.0, %v2044
        %2046 = vmatmul.bf16.gmra.mxu0 %v1878
        %v2047 = vpop.f32.mrf.mxu0
        %v2048 = vadd.f32 0.0, %v2047
        %v2049 = vpop.f32.mrf.mxu0
        %v2050 = vadd.f32 0.0, %v2049
        %2051 = vmatmul.bf16.gmra.mxu0 %v1887
        %v2052 = vpop.f32.mrf.mxu0
        %v2053 = vadd.f32 0.0, %v2052
        %v2054 = vpop.f32.mrf.mxu0
        %v2055 = vadd.f32 0.0, %v2054
        %2056 = vmatmul.bf16.gmra.mxu0 %v1896
        %v2057 = vpop.f32.mrf.mxu0
        %v2058 = vadd.f32 0.0, %v2057
        %v2059 = vpop.f32.mrf.mxu0
        %v2060 = vadd.f32 0.0, %v2059
        %2061 = vdwg.mxu0
        %v2062 = vadd.f32 %v1669, %v1973
        %v2063 = vadd.f32 %v1670, %v1975
        %v2064 = vadd.f32 %v1671, %v1978
        %v2065 = vadd.f32 %v1672, %v1980
        %v2066 = vadd.f32 %v1673, %v1983
        %v2067 = vadd.f32 %v1674, %v1985
        %v2068 = vadd.f32 %v1675, %v1988
        %v2069 = vadd.f32 %v1676, %v1990
        %v2070 = vadd.f32 %v1677, %v1993
        %v2071 = vadd.f32 %v1678, %v1995
        %v2072 = vadd.f32 %v1679, %v1998
        %v2073 = vadd.f32 %v1680, %v2000
        %v2074 = vadd.f32 %v1681, %v2003
        %v2075 = vadd.f32 %v1682, %v2005
        %v2076 = vadd.f32 %v1683, %v2008
        %v2077 = vadd.f32 %v1684, %v2010
        %v2078 = vadd.f32 %v1685, %v2013
        %v2079 = vadd.f32 %v1686, %v2015
        %v2080 = vadd.f32 %v1687, %v2018
        %v2081 = vadd.f32 %v1688, %v2020
        %v2082 = vadd.f32 %v1689, %v2023
        %v2083 = vadd.f32 %v1690, %v2025
        %v2084 = vadd.f32 %v1691, %v2028
        %v2085 = vadd.f32 %v1692, %v2030
        %v2086 = vadd.f32 %v1693, %v2033
        %v2087 = vadd.f32 %v1694, %v2035
        %v2088 = vadd.f32 %v1695, %v2038
        %v2089 = vadd.f32 %v1696, %v2040
        %v2090 = vadd.f32 %v1697, %v2043
        %v2091 = vadd.f32 %v1698, %v2045
        %v2092 = vadd.f32 %v1699, %v2048
        %v2093 = vadd.f32 %v1700, %v2050
        %v2094 = vadd.f32 %v1701, %v2053
        %v2095 = vadd.f32 %v1702, %v2055
        %v2096 = vadd.f32 %v1703, %v2058
        %v2097 = vadd.f32 %v1704, %v2060
        %v2098 = vld [vmem:[%s416 + $0x8] sm:$0xc]
        %s2099 = scalar_lea.vmem [#allocation5], 320
        %v2100 = vld [vmem:[%s2099] sm:$0xf]
        %v2101 = vld [vmem:[%s2099 + $0x4] sm:$0xf]
        %v2102 = vld [vmem:[%s2099 + $0x8] sm:$0xf]
        %v2103 = vld [vmem:[%s2099 + $0xc] sm:$0xf]
        %v2104 = vld [vmem:[%s2099 + $0x10] sm:$0xf]
        %v2105 = vld [vmem:[%s2099 + $0x14] sm:$0xf]
        %v2106 = vld [vmem:[%s2099 + $0x18] sm:$0xf]
        %v2107 = vld [vmem:[%s2099 + $0x1c] sm:$0xf]
        %v2108 = vld [vmem:[%s2099 + $0x20] sm:$0xf]
        %v2109 = vld [vmem:[%s2099 + $0x24] sm:$0xf]
        %v2110 = vld [vmem:[%s2099 + $0x28] sm:$0xf]
        %v2111 = vld [vmem:[%s2099 + $0x2c] sm:$0xf]
        %v2112 = vld [vmem:[%s2099 + $0x30] sm:$0xf]
        %v2113 = vld [vmem:[%s2099 + $0x34] sm:$0xf]
        %v2114 = vld [vmem:[%s2099 + $0x38] sm:$0xf]
        %v2115 = vld [vmem:[%s2099 + $0x3c] sm:$0xf]
        %v2117 = vunpack.c.l.b16 %v2098
        %v2118 = vpack.c.b16 %v1412, %v2117
        %vm2119 = vcmask 1045504
        %v2120 = vrot.slane %v2118, 2
        %v2121 = vrot.slane %v1449, 2
        %v2122 = vsel %vm2119, %v2120, %v2121
        %v2123 = vrot.slane %v1450, 2
        %v2124 = vsel %vm2119, %v2121, %v2123
        %v2125 = vrot.slane %v1451, 2
        %v2126 = vsel %vm2119, %v2123, %v2125
        %v2127 = vrot.slane %v1452, 2
        %v2128 = vsel %vm2119, %v2125, %v2127
        %v2129 = vrot.slane %v1453, 2
        %v2130 = vsel %vm2119, %v2127, %v2129
        %v2131 = vrot.slane %v1454, 2
        %v2132 = vsel %vm2119, %v2129, %v2131
        %v2133 = vrot.slane %v1455, 2
        %v2134 = vsel %vm2119, %v2131, %v2133
        %v2135 = vrot.slane %v1456, 2
        %v2136 = vsel %vm2119, %v2133, %v2135
        %v2137 = vrot.slane %v1457, 2
        %v2138 = vsel %vm2119, %v2135, %v2137
        %v2139 = vrot.slane %v1458, 2
        %v2140 = vsel %vm2119, %v2137, %v2139
        %v2141 = vrot.slane %v1459, 2
        %v2142 = vsel %vm2119, %v2139, %v2141
        %v2143 = vrot.slane %v1460, 2
        %v2144 = vsel %vm2119, %v2141, %v2143
        %v2145 = vrot.slane %v1461, 2
        %v2146 = vsel %vm2119, %v2143, %v2145
        %v2147 = vrot.slane %v1462, 2
        %v2148 = vsel %vm2119, %v2145, %v2147
        %v2149 = vrot.slane %v1463, 2
        %v2150 = vsel %vm2119, %v2147, %v2149
        %v2151 = vrot.slane %v1464, 2
        %v2152 = vsel %vm2119, %v2149, %v2151
        %v2153 = vrot.slane %v1465, 2
        %v2154 = vsel %vm2119, %v2151, %v2153
        %v2155 = vrot.slane %v1725, 2
        %v2156 = vsel %vm2119, %v2153, %v2155
        %v2191 = vunpack.c.l.b16 %v2100
        %v2192 = vunpack.c.l.b16 %v2101
        %v2193 = vunpack.c.l.b16 %v2102
        %v2194 = vunpack.c.l.b16 %v2103
        %v2195 = vunpack.c.l.b16 %v2104
        %v2196 = vunpack.c.l.b16 %v2105
        %v2197 = vunpack.c.l.b16 %v2106
        %v2198 = vunpack.c.l.b16 %v2107
        %v2199 = vunpack.c.l.b16 %v2108
        %v2200 = vunpack.c.l.b16 %v2109
        %v2201 = vunpack.c.l.b16 %v2110
        %v2202 = vunpack.c.l.b16 %v2111
        %v2203 = vunpack.c.l.b16 %v2112
        %v2204 = vunpack.c.l.b16 %v2113
        %v2205 = vunpack.c.l.b16 %v2114
        %v2206 = vunpack.c.l.b16 %v2115
        %v2207 = vpack.c.b16 %v2192, %v2191
        %v2208 = vpack.c.b16 %v2194, %v2193
        %v2209 = vpack.c.b16 %v2196, %v2195
        %v2210 = vpack.c.b16 %v2198, %v2197
        %v2211 = vpack.c.b16 %v2200, %v2199
        %v2212 = vpack.c.b16 %v2202, %v2201
        %v2213 = vpack.c.b16 %v2204, %v2203
        %v2214 = vpack.c.b16 %v2206, %v2205
        %2223 = vmatpush.bf16.msra.mxu0 %v2214
        %2224 = vmatpush.bf16.msra.mxu0 %v2213
        %2225 = vmatpush.bf16.msra.mxu0 %v2212
        %2226 = vmatpush.bf16.msra.mxu0 %v2211
        %2227 = vmatpush.bf16.msra.mxu0 %v2210
        %2228 = vmatpush.bf16.msra.mxu0 %v2209
        %2229 = vmatpush.bf16.msra.mxu0 %v2208
        %2230 = vmatpush.bf16.msra.mxu0 %v2207
        %2231 = vmatmul.bf16.gmra.mxu0 %v2122
        %v2232 = vpop.f32.mrf.mxu0
        %v2233 = vadd.f32 0.0, %v2232
        %v2234 = vpop.f32.mrf.mxu0
        %v2235 = vadd.f32 0.0, %v2234
        %2236 = vmatmul.bf16.gmra.mxu0 %v2124
        %v2237 = vpop.f32.mrf.mxu0
        %v2238 = vadd.f32 0.0, %v2237
        %v2239 = vpop.f32.mrf.mxu0
        %v2240 = vadd.f32 0.0, %v2239
        %2241 = vmatmul.bf16.gmra.mxu0 %v2126
        %v2242 = vpop.f32.mrf.mxu0
        %v2243 = vadd.f32 0.0, %v2242
        %v2244 = vpop.f32.mrf.mxu0
        %v2245 = vadd.f32 0.0, %v2244
        %2246 = vmatmul.bf16.gmra.mxu0 %v2128
        %v2247 = vpop.f32.mrf.mxu0
        %v2248 = vadd.f32 0.0, %v2247
        %v2249 = vpop.f32.mrf.mxu0
        %v2250 = vadd.f32 0.0, %v2249
        %2251 = vmatmul.bf16.gmra.mxu0 %v2130
        %v2252 = vpop.f32.mrf.mxu0
        %v2253 = vadd.f32 0.0, %v2252
        %v2254 = vpop.f32.mrf.mxu0
        %v2255 = vadd.f32 0.0, %v2254
        %2256 = vmatmul.bf16.gmra.mxu0 %v2132
        %v2257 = vpop.f32.mrf.mxu0
        %v2258 = vadd.f32 0.0, %v2257
        %v2259 = vpop.f32.mrf.mxu0
        %v2260 = vadd.f32 0.0, %v2259
        %2261 = vmatmul.bf16.gmra.mxu0 %v2134
        %v2262 = vpop.f32.mrf.mxu0
        %v2263 = vadd.f32 0.0, %v2262
        %v2264 = vpop.f32.mrf.mxu0
        %v2265 = vadd.f32 0.0, %v2264
        %2266 = vmatmul.bf16.gmra.mxu0 %v2136
        %v2267 = vpop.f32.mrf.mxu0
        %v2268 = vadd.f32 0.0, %v2267
        %v2269 = vpop.f32.mrf.mxu0
        %v2270 = vadd.f32 0.0, %v2269
        %2271 = vmatmul.bf16.gmra.mxu0 %v2138
        %v2272 = vpop.f32.mrf.mxu0
        %v2273 = vadd.f32 0.0, %v2272
        %v2274 = vpop.f32.mrf.mxu0
        %v2275 = vadd.f32 0.0, %v2274
        %2276 = vmatmul.bf16.gmra.mxu0 %v2140
        %v2277 = vpop.f32.mrf.mxu0
        %v2278 = vadd.f32 0.0, %v2277
        %v2279 = vpop.f32.mrf.mxu0
        %v2280 = vadd.f32 0.0, %v2279
        %2281 = vmatmul.bf16.gmra.mxu0 %v2142
        %v2282 = vpop.f32.mrf.mxu0
        %v2283 = vadd.f32 0.0, %v2282
        %v2284 = vpop.f32.mrf.mxu0
        %v2285 = vadd.f32 0.0, %v2284
        %2286 = vmatmul.bf16.gmra.mxu0 %v2144
        %v2287 = vpop.f32.mrf.mxu0
        %v2288 = vadd.f32 0.0, %v2287
        %v2289 = vpop.f32.mrf.mxu0
        %v2290 = vadd.f32 0.0, %v2289
        %2291 = vmatmul.bf16.gmra.mxu0 %v2146
        %v2292 = vpop.f32.mrf.mxu0
        %v2293 = vadd.f32 0.0, %v2292
        %v2294 = vpop.f32.mrf.mxu0
        %v2295 = vadd.f32 0.0, %v2294
        %2296 = vmatmul.bf16.gmra.mxu0 %v2148
        %v2297 = vpop.f32.mrf.mxu0
        %v2298 = vadd.f32 0.0, %v2297
        %v2299 = vpop.f32.mrf.mxu0
        %v2300 = vadd.f32 0.0, %v2299
        %2301 = vmatmul.bf16.gmra.mxu0 %v2150
        %v2302 = vpop.f32.mrf.mxu0
        %v2303 = vadd.f32 0.0, %v2302
        %v2304 = vpop.f32.mrf.mxu0
        %v2305 = vadd.f32 0.0, %v2304
        %2306 = vmatmul.bf16.gmra.mxu0 %v2152
        %v2307 = vpop.f32.mrf.mxu0
        %v2308 = vadd.f32 0.0, %v2307
        %v2309 = vpop.f32.mrf.mxu0
        %v2310 = vadd.f32 0.0, %v2309
        %2311 = vmatmul.bf16.gmra.mxu0 %v2154
        %v2312 = vpop.f32.mrf.mxu0
        %v2313 = vadd.f32 0.0, %v2312
        %v2314 = vpop.f32.mrf.mxu0
        %v2315 = vadd.f32 0.0, %v2314
        %2316 = vmatmul.bf16.gmra.mxu0 %v2156
        %v2317 = vpop.f32.mrf.mxu0
        %v2318 = vadd.f32 0.0, %v2317
        %v2319 = vpop.f32.mrf.mxu0
        %v2320 = vadd.f32 0.0, %v2319
        %2321 = vdwg.mxu0
        %v2322 = vadd.f32 %v2062, %v2233
        %v2323 = vadd.f32 %v2063, %v2235
        %v2324 = vadd.f32 %v2064, %v2238
        %v2325 = vadd.f32 %v2065, %v2240
        %v2326 = vadd.f32 %v2066, %v2243
        %v2327 = vadd.f32 %v2067, %v2245
        %v2328 = vadd.f32 %v2068, %v2248
        %v2329 = vadd.f32 %v2069, %v2250
        %v2330 = vadd.f32 %v2070, %v2253
        %v2331 = vadd.f32 %v2071, %v2255
        %v2332 = vadd.f32 %v2072, %v2258
        %v2333 = vadd.f32 %v2073, %v2260
        %v2334 = vadd.f32 %v2074, %v2263
        %v2335 = vadd.f32 %v2075, %v2265
        %v2336 = vadd.f32 %v2076, %v2268
        %v2337 = vadd.f32 %v2077, %v2270
        %v2338 = vadd.f32 %v2078, %v2273
        %v2339 = vadd.f32 %v2079, %v2275
        %v2340 = vadd.f32 %v2080, %v2278
        %v2341 = vadd.f32 %v2081, %v2280
        %v2342 = vadd.f32 %v2082, %v2283
        %v2343 = vadd.f32 %v2083, %v2285
        %v2344 = vadd.f32 %v2084, %v2288
        %v2345 = vadd.f32 %v2085, %v2290
        %v2346 = vadd.f32 %v2086, %v2293
        %v2347 = vadd.f32 %v2087, %v2295
        %v2348 = vadd.f32 %v2088, %v2298
        %v2349 = vadd.f32 %v2089, %v2300
        %v2350 = vadd.f32 %v2090, %v2303
        %v2351 = vadd.f32 %v2091, %v2305
        %v2352 = vadd.f32 %v2092, %v2308
        %v2353 = vadd.f32 %v2093, %v2310
        %v2354 = vadd.f32 %v2094, %v2313
        %v2355 = vadd.f32 %v2095, %v2315
        %v2356 = vadd.f32 %v2096, %v2318
        %v2357 = vadd.f32 %v2097, %v2320
        %v2358 = vld [vmem:[%s416 + $0x10] sm:$0xc]
        %v2359 = vld [vmem:[%s416 + $0x14] sm:$0xf]
        %v2360 = vld [vmem:[%s416 + $0x18] sm:$0xf]
        %v2361 = vld [vmem:[%s416 + $0x1c] sm:$0xf]
        %v2362 = vld [vmem:[%s416 + $0x20] sm:$0xf]
        %v2363 = vld [vmem:[%s416 + $0x24] sm:$0xf]
        %v2364 = vld [vmem:[%s416 + $0x28] sm:$0xf]
        %v2365 = vld [vmem:[%s416 + $0x2c] sm:$0xf]
        %v2366 = vld [vmem:[%s416 + $0x30] sm:$0xf]
        %v2367 = vld [vmem:[%s416 + $0x34] sm:$0xf]
        %v2368 = vld [vmem:[%s416 + $0x38] sm:$0xf]
        %v2369 = vld [vmem:[%s416 + $0x3c] sm:$0xf]
        %v2370 = vld [vmem:[%s416 + $0x40] sm:$0xf]
        %v2371 = vld [vmem:[%s416 + $0x44] sm:$0xf]
        %v2372 = vld [vmem:[%s416 + $0x48] sm:$0xf]
        %v2373 = vld [vmem:[%s416 + $0x4c] sm:$0xf]
        %v2374 = vld [vmem:[%s416 + $0x50] sm:$0xf]
        %v2375 = vld [vmem:[%s416 + $0x54] sm:$0xf]
        %v2376 = vld [vmem:[%s416 + $0x58] sm:$0xf]
        %v2377 = vld [vmem:[%s416 + $0x5c] sm:$0xf]
        %v2378 = vld [vmem:[%s416 + $0x60] sm:$0xf]
        %v2379 = vld [vmem:[%s416 + $0x64] sm:$0xf]
        %v2380 = vld [vmem:[%s416 + $0x68] sm:$0xf]
        %v2381 = vld [vmem:[%s416 + $0x6c] sm:$0xf]
        %v2382 = vld [vmem:[%s416 + $0x70] sm:$0xf]
        %v2383 = vld [vmem:[%s416 + $0x74] sm:$0xf]
        %v2384 = vld [vmem:[%s416 + $0x78] sm:$0xf]
        %v2385 = vld [vmem:[%s416 + $0x7c] sm:$0xf]
        %v2386 = vld [vmem:[%s416 + $0x80] sm:$0xf]
        %v2387 = vld [vmem:[%s416 + $0x84] sm:$0xf]
        %v2388 = vld [vmem:[%s416 + $0x88] sm:$0xf]
        %v2389 = vld [vmem:[%s416 + $0x8c] sm:$0xf]
        %v2390 = vld [vmem:[%s416 + $0x90] sm:$0xf]
        %v2391 = vld [vmem:[%s416 + $0x94] sm:$0xf]
        %v2392 = vld [vmem:[%s416 + $0x98] sm:$0xf]
        %v2393 = vld [vmem:[%s416 + $0x9c] sm:$0xf]
        %v2394 = vld [vmem:[%s416 + $0xa0] sm:$0x3]
        %s2395 = scalar_lea.vmem [#allocation5], 384
        %v2396 = vld [vmem:[%s2395] sm:$0xf]
        %v2397 = vld [vmem:[%s2395 + $0x4] sm:$0xf]
        %v2398 = vld [vmem:[%s2395 + $0x8] sm:$0xf]
        %v2399 = vld [vmem:[%s2395 + $0xc] sm:$0xf]
        %v2400 = vld [vmem:[%s2395 + $0x10] sm:$0xf]
        %v2401 = vld [vmem:[%s2395 + $0x14] sm:$0xf]
        %v2402 = vld [vmem:[%s2395 + $0x18] sm:$0xf]
        %v2403 = vld [vmem:[%s2395 + $0x1c] sm:$0xf]
        %v2404 = vld [vmem:[%s2395 + $0x20] sm:$0xf]
        %v2405 = vld [vmem:[%s2395 + $0x24] sm:$0xf]
        %v2406 = vld [vmem:[%s2395 + $0x28] sm:$0xf]
        %v2407 = vld [vmem:[%s2395 + $0x2c] sm:$0xf]
        %v2408 = vld [vmem:[%s2395 + $0x30] sm:$0xf]
        %v2409 = vld [vmem:[%s2395 + $0x34] sm:$0xf]
        %v2410 = vld [vmem:[%s2395 + $0x38] sm:$0xf]
        %v2411 = vld [vmem:[%s2395 + $0x3c] sm:$0xf]
        %v2449 = vunpack.c.l.b16 %v2358
        %v2450 = vunpack.c.l.b16 %v2359
        %v2451 = vunpack.c.l.b16 %v2360
        %v2452 = vunpack.c.l.b16 %v2361
        %v2453 = vunpack.c.l.b16 %v2362
        %v2454 = vunpack.c.l.b16 %v2363
        %v2455 = vunpack.c.l.b16 %v2364
        %v2456 = vunpack.c.l.b16 %v2365
        %v2457 = vunpack.c.l.b16 %v2366
        %v2458 = vunpack.c.l.b16 %v2367
        %v2459 = vunpack.c.l.b16 %v2368
        %v2460 = vunpack.c.l.b16 %v2369
        %v2461 = vunpack.c.l.b16 %v2370
        %v2462 = vunpack.c.l.b16 %v2371
        %v2463 = vunpack.c.l.b16 %v2372
        %v2464 = vunpack.c.l.b16 %v2373
        %v2465 = vunpack.c.l.b16 %v2374
        %v2466 = vunpack.c.l.b16 %v2375
        %v2467 = vunpack.c.l.b16 %v2376
        %v2468 = vunpack.c.l.b16 %v2377
        %v2469 = vunpack.c.l.b16 %v2378
        %v2470 = vunpack.c.l.b16 %v2379
        %v2471 = vunpack.c.l.b16 %v2380
        %v2472 = vunpack.c.l.b16 %v2381
        %v2473 = vunpack.c.l.b16 %v2382
        %v2474 = vunpack.c.l.b16 %v2383
        %v2475 = vunpack.c.l.b16 %v2384
        %v2476 = vunpack.c.l.b16 %v2385
        %v2477 = vunpack.c.l.b16 %v2386
        %v2478 = vunpack.c.l.b16 %v2387
        %v2479 = vunpack.c.l.b16 %v2388
        %v2480 = vunpack.c.l.b16 %v2389
        %v2481 = vunpack.c.l.b16 %v2390
        %v2482 = vunpack.c.l.b16 %v2391
        %v2483 = vunpack.c.l.b16 %v2392
        %v2484 = vunpack.c.l.b16 %v2393
        %v2485 = vunpack.c.l.b16 %v2394
        %v2486 = vpack.c.b16 %v2450, %v2449
        %v2487 = vpack.c.b16 %v2452, %v2451
        %v2488 = vpack.c.b16 %v2454, %v2453
        %v2489 = vpack.c.b16 %v2456, %v2455
        %v2490 = vpack.c.b16 %v2458, %v2457
        %v2491 = vpack.c.b16 %v2460, %v2459
        %v2492 = vpack.c.b16 %v2462, %v2461
        %v2493 = vpack.c.b16 %v2464, %v2463
        %v2494 = vpack.c.b16 %v2466, %v2465
        %v2495 = vpack.c.b16 %v2468, %v2467
        %v2496 = vpack.c.b16 %v2470, %v2469
        %v2497 = vpack.c.b16 %v2472, %v2471
        %v2498 = vpack.c.b16 %v2474, %v2473
        %v2499 = vpack.c.b16 %v2476, %v2475
        %v2500 = vpack.c.b16 %v2478, %v2477
        %v2501 = vpack.c.b16 %v2480, %v2479
        %v2502 = vpack.c.b16 %v2482, %v2481
        %v2503 = vpack.c.b16 %v2484, %v2483
        %v2504 = vpack.c.b16 %v2485, %v2485
        %v2505 = vrot.slane %v2486, 2
        %v2506 = vrot.slane %v2487, 2
        %v2507 = vsel %vm2119, %v2505, %v2506
        %v2508 = vrot.slane %v2488, 2
        %v2509 = vsel %vm2119, %v2506, %v2508
        %v2510 = vrot.slane %v2489, 2
        %v2511 = vsel %vm2119, %v2508, %v2510
        %v2512 = vrot.slane %v2490, 2
        %v2513 = vsel %vm2119, %v2510, %v2512
        %v2514 = vrot.slane %v2491, 2
        %v2515 = vsel %vm2119, %v2512, %v2514
        %v2516 = vrot.slane %v2492, 2
        %v2517 = vsel %vm2119, %v2514, %v2516
        %v2518 = vrot.slane %v2493, 2
        %v2519 = vsel %vm2119, %v2516, %v2518
        %v2520 = vrot.slane %v2494, 2
        %v2521 = vsel %vm2119, %v2518, %v2520
        %v2522 = vrot.slane %v2495, 2
        %v2523 = vsel %vm2119, %v2520, %v2522
        %v2524 = vrot.slane %v2496, 2
        %v2525 = vsel %vm2119, %v2522, %v2524
        %v2526 = vrot.slane %v2497, 2
        %v2527 = vsel %vm2119, %v2524, %v2526
        %v2528 = vrot.slane %v2498, 2
        %v2529 = vsel %vm2119, %v2526, %v2528
        %v2530 = vrot.slane %v2499, 2
        %v2531 = vsel %vm2119, %v2528, %v2530
        %v2532 = vrot.slane %v2500, 2
        %v2533 = vsel %vm2119, %v2530, %v2532
        %v2534 = vrot.slane %v2501, 2
        %v2535 = vsel %vm2119, %v2532, %v2534
        %v2536 = vrot.slane %v2502, 2
        %v2537 = vsel %vm2119, %v2534, %v2536
        %v2538 = vrot.slane %v2503, 2
        %v2539 = vsel %vm2119, %v2536, %v2538
        %v2540 = vrot.slane %v2504, 2
        %v2541 = vsel %vm2119, %v2538, %v2540
        %v2576 = vunpack.c.l.b16 %v2396
        %v2577 = vunpack.c.l.b16 %v2397
        %v2578 = vunpack.c.l.b16 %v2398
        %v2579 = vunpack.c.l.b16 %v2399
        %v2580 = vunpack.c.l.b16 %v2400
        %v2581 = vunpack.c.l.b16 %v2401
        %v2582 = vunpack.c.l.b16 %v2402
        %v2583 = vunpack.c.l.b16 %v2403
        %v2584 = vunpack.c.l.b16 %v2404
        %v2585 = vunpack.c.l.b16 %v2405
        %v2586 = vunpack.c.l.b16 %v2406
        %v2587 = vunpack.c.l.b16 %v2407
        %v2588 = vunpack.c.l.b16 %v2408
        %v2589 = vunpack.c.l.b16 %v2409
        %v2590 = vunpack.c.l.b16 %v2410
        %v2591 = vunpack.c.l.b16 %v2411
        %v2592 = vpack.c.b16 %v2577, %v2576
        %v2593 = vpack.c.b16 %v2579, %v2578
        %v2594 = vpack.c.b16 %v2581, %v2580
        %v2595 = vpack.c.b16 %v2583, %v2582
        %v2596 = vpack.c.b16 %v2585, %v2584
        %v2597 = vpack.c.b16 %v2587, %v2586
        %v2598 = vpack.c.b16 %v2589, %v2588
        %v2599 = vpack.c.b16 %v2591, %v2590
        %2608 = vmatpush.bf16.msra.mxu0 %v2599
        %2609 = vmatpush.bf16.msra.mxu0 %v2598
        %2610 = vmatpush.bf16.msra.mxu0 %v2597
        %2611 = vmatpush.bf16.msra.mxu0 %v2596
        %2612 = vmatpush.bf16.msra.mxu0 %v2595
        %2613 = vmatpush.bf16.msra.mxu0 %v2594
        %2614 = vmatpush.bf16.msra.mxu0 %v2593
        %2615 = vmatpush.bf16.msra.mxu0 %v2592
        %2616 = vmatmul.bf16.gmra.mxu0 %v2507
        %v2617 = vpop.f32.mrf.mxu0
        %v2618 = vadd.f32 0.0, %v2617
        %v2619 = vpop.f32.mrf.mxu0
        %v2620 = vadd.f32 0.0, %v2619
        %2621 = vmatmul.bf16.gmra.mxu0 %v2509
        %v2622 = vpop.f32.mrf.mxu0
        %v2623 = vadd.f32 0.0, %v2622
        %v2624 = vpop.f32.mrf.mxu0
        %v2625 = vadd.f32 0.0, %v2624
        %2626 = vmatmul.bf16.gmra.mxu0 %v2511
        %v2627 = vpop.f32.mrf.mxu0
        %v2628 = vadd.f32 0.0, %v2627
        %v2629 = vpop.f32.mrf.mxu0
        %v2630 = vadd.f32 0.0, %v2629
        %2631 = vmatmul.bf16.gmra.mxu0 %v2513
        %v2632 = vpop.f32.mrf.mxu0
        %v2633 = vadd.f32 0.0, %v2632
        %v2634 = vpop.f32.mrf.mxu0
        %v2635 = vadd.f32 0.0, %v2634
        %2636 = vmatmul.bf16.gmra.mxu0 %v2515
        %v2637 = vpop.f32.mrf.mxu0
        %v2638 = vadd.f32 0.0, %v2637
        %v2639 = vpop.f32.mrf.mxu0
        %v2640 = vadd.f32 0.0, %v2639
        %2641 = vmatmul.bf16.gmra.mxu0 %v2517
        %v2642 = vpop.f32.mrf.mxu0
        %v2643 = vadd.f32 0.0, %v2642
        %v2644 = vpop.f32.mrf.mxu0
        %v2645 = vadd.f32 0.0, %v2644
        %2646 = vmatmul.bf16.gmra.mxu0 %v2519
        %v2647 = vpop.f32.mrf.mxu0
        %v2648 = vadd.f32 0.0, %v2647
        %v2649 = vpop.f32.mrf.mxu0
        %v2650 = vadd.f32 0.0, %v2649
        %2651 = vmatmul.bf16.gmra.mxu0 %v2521
        %v2652 = vpop.f32.mrf.mxu0
        %v2653 = vadd.f32 0.0, %v2652
        %v2654 = vpop.f32.mrf.mxu0
        %v2655 = vadd.f32 0.0, %v2654
        %2656 = vmatmul.bf16.gmra.mxu0 %v2523
        %v2657 = vpop.f32.mrf.mxu0
        %v2658 = vadd.f32 0.0, %v2657
        %v2659 = vpop.f32.mrf.mxu0
        %v2660 = vadd.f32 0.0, %v2659
        %2661 = vmatmul.bf16.gmra.mxu0 %v2525
        %v2662 = vpop.f32.mrf.mxu0
        %v2663 = vadd.f32 0.0, %v2662
        %v2664 = vpop.f32.mrf.mxu0
        %v2665 = vadd.f32 0.0, %v2664
        %2666 = vmatmul.bf16.gmra.mxu0 %v2527
        %v2667 = vpop.f32.mrf.mxu0
        %v2668 = vadd.f32 0.0, %v2667
        %v2669 = vpop.f32.mrf.mxu0
        %v2670 = vadd.f32 0.0, %v2669
        %2671 = vmatmul.bf16.gmra.mxu0 %v2529
        %v2672 = vpop.f32.mrf.mxu0
        %v2673 = vadd.f32 0.0, %v2672
        %v2674 = vpop.f32.mrf.mxu0
        %v2675 = vadd.f32 0.0, %v2674
        %2676 = vmatmul.bf16.gmra.mxu0 %v2531
        %v2677 = vpop.f32.mrf.mxu0
        %v2678 = vadd.f32 0.0, %v2677
        %v2679 = vpop.f32.mrf.mxu0
        %v2680 = vadd.f32 0.0, %v2679
        %2681 = vmatmul.bf16.gmra.mxu0 %v2533
        %v2682 = vpop.f32.mrf.mxu0
        %v2683 = vadd.f32 0.0, %v2682
        %v2684 = vpop.f32.mrf.mxu0
        %v2685 = vadd.f32 0.0, %v2684
        %2686 = vmatmul.bf16.gmra.mxu0 %v2535
        %v2687 = vpop.f32.mrf.mxu0
        %v2688 = vadd.f32 0.0, %v2687
        %v2689 = vpop.f32.mrf.mxu0
        %v2690 = vadd.f32 0.0, %v2689
        %2691 = vmatmul.bf16.gmra.mxu0 %v2537
        %v2692 = vpop.f32.mrf.mxu0
        %v2693 = vadd.f32 0.0, %v2692
        %v2694 = vpop.f32.mrf.mxu0
        %v2695 = vadd.f32 0.0, %v2694
        %2696 = vmatmul.bf16.gmra.mxu0 %v2539
        %v2697 = vpop.f32.mrf.mxu0
        %v2698 = vadd.f32 0.0, %v2697
        %v2699 = vpop.f32.mrf.mxu0
        %v2700 = vadd.f32 0.0, %v2699
        %2701 = vmatmul.bf16.gmra.mxu0 %v2541
        %v2702 = vpop.f32.mrf.mxu0
        %v2703 = vadd.f32 0.0, %v2702
        %v2704 = vpop.f32.mrf.mxu0
        %v2705 = vadd.f32 0.0, %v2704
        %2706 = vdwg.mxu0
        %v2707 = vadd.f32 %v2322, %v2618
        %v2708 = vadd.f32 %v2323, %v2620
        %v2709 = vadd.f32 %v2324, %v2623
        %v2710 = vadd.f32 %v2325, %v2625
        %v2711 = vadd.f32 %v2326, %v2628
        %v2712 = vadd.f32 %v2327, %v2630
        %v2713 = vadd.f32 %v2328, %v2633
        %v2714 = vadd.f32 %v2329, %v2635
        %v2715 = vadd.f32 %v2330, %v2638
        %v2716 = vadd.f32 %v2331, %v2640
        %v2717 = vadd.f32 %v2332, %v2643
        %v2718 = vadd.f32 %v2333, %v2645
        %v2719 = vadd.f32 %v2334, %v2648
        %v2720 = vadd.f32 %v2335, %v2650
        %v2721 = vadd.f32 %v2336, %v2653
        %v2722 = vadd.f32 %v2337, %v2655
        %v2723 = vadd.f32 %v2338, %v2658
        %v2724 = vadd.f32 %v2339, %v2660
        %v2725 = vadd.f32 %v2340, %v2663
        %v2726 = vadd.f32 %v2341, %v2665
        %v2727 = vadd.f32 %v2342, %v2668
        %v2728 = vadd.f32 %v2343, %v2670
        %v2729 = vadd.f32 %v2344, %v2673
        %v2730 = vadd.f32 %v2345, %v2675
        %v2731 = vadd.f32 %v2346, %v2678
        %v2732 = vadd.f32 %v2347, %v2680
        %v2733 = vadd.f32 %v2348, %v2683
        %v2734 = vadd.f32 %v2349, %v2685
        %v2735 = vadd.f32 %v2350, %v2688
        %v2736 = vadd.f32 %v2351, %v2690
        %v2737 = vadd.f32 %v2352, %v2693
        %v2738 = vadd.f32 %v2353, %v2695
        %v2739 = vadd.f32 %v2354, %v2698
        %v2740 = vadd.f32 %v2355, %v2700
        %v2741 = vadd.f32 %v2356, %v2703
        %v2742 = vadd.f32 %v2357, %v2705
        %v2743 = vld [vmem:[%s416 + $0xa0] sm:$0x7]
        %s2744 = scalar_lea.vmem [#allocation5], 448
        %v2745 = vld [vmem:[%s2744] sm:$0xf]
        %v2746 = vld [vmem:[%s2744 + $0x4] sm:$0xf]
        %v2747 = vld [vmem:[%s2744 + $0x8] sm:$0xf]
        %v2748 = vld [vmem:[%s2744 + $0xc] sm:$0xf]
        %v2749 = vld [vmem:[%s2744 + $0x10] sm:$0xf]
        %v2750 = vld [vmem:[%s2744 + $0x14] sm:$0xf]
        %v2751 = vld [vmem:[%s2744 + $0x18] sm:$0xf]
        %v2752 = vld [vmem:[%s2744 + $0x1c] sm:$0xf]
        %v2753 = vld [vmem:[%s2744 + $0x20] sm:$0xf]
        %v2754 = vld [vmem:[%s2744 + $0x24] sm:$0xf]
        %v2755 = vld [vmem:[%s2744 + $0x28] sm:$0xf]
        %v2756 = vld [vmem:[%s2744 + $0x2c] sm:$0xf]
        %v2757 = vld [vmem:[%s2744 + $0x30] sm:$0xf]
        %v2758 = vld [vmem:[%s2744 + $0x34] sm:$0xf]
        %v2759 = vld [vmem:[%s2744 + $0x38] sm:$0xf]
        %v2760 = vld [vmem:[%s2744 + $0x3c] sm:$0xf]
        %v2762 = vunpack.c.l.b16 %v2743
        %v2763 = vpack.c.b16 %v2762, %v2762
        %vm2764 = vsmask.f32 5376
        %v2766 = vshrl.u32 %v2486, 16
        %v2768 = vrot.slane %v2766, 2
        %v2769 = vshll.u32 %v2486, 16
        %v2771 = vrot.slane %v2769, 3
        %v2772 = vor.u32 %v2768, %v2771
        %v2774 = vshrl.u32 %v2487, 16
        %v2776 = vrot.slane %v2774, 2
        %v2777 = vshll.u32 %v2487, 16
        %v2779 = vrot.slane %v2777, 3
        %v2780 = vor.u32 %v2776, %v2779
        %v2781 = vsel %vm2764, %v2772, %v2780
        %v2783 = vshrl.u32 %v2488, 16
        %v2785 = vrot.slane %v2783, 2
        %v2786 = vshll.u32 %v2488, 16
        %v2788 = vrot.slane %v2786, 3
        %v2789 = vor.u32 %v2785, %v2788
        %v2790 = vsel %vm2764, %v2780, %v2789
        %v2792 = vshrl.u32 %v2489, 16
        %v2794 = vrot.slane %v2792, 2
        %v2795 = vshll.u32 %v2489, 16
        %v2797 = vrot.slane %v2795, 3
        %v2798 = vor.u32 %v2794, %v2797
        %v2799 = vsel %vm2764, %v2789, %v2798
        %v2801 = vshrl.u32 %v2490, 16
        %v2803 = vrot.slane %v2801, 2
        %v2804 = vshll.u32 %v2490, 16
        %v2806 = vrot.slane %v2804, 3
        %v2807 = vor.u32 %v2803, %v2806
        %v2808 = vsel %vm2764, %v2798, %v2807
        %v2810 = vshrl.u32 %v2491, 16
        %v2812 = vrot.slane %v2810, 2
        %v2813 = vshll.u32 %v2491, 16
        %v2815 = vrot.slane %v2813, 3
        %v2816 = vor.u32 %v2812, %v2815
        %v2817 = vsel %vm2764, %v2807, %v2816
        %v2819 = vshrl.u32 %v2492, 16
        %v2821 = vrot.slane %v2819, 2
        %v2822 = vshll.u32 %v2492, 16
        %v2824 = vrot.slane %v2822, 3
        %v2825 = vor.u32 %v2821, %v2824
        %v2826 = vsel %vm2764, %v2816, %v2825
        %v2828 = vshrl.u32 %v2493, 16
        %v2830 = vrot.slane %v2828, 2
        %v2831 = vshll.u32 %v2493, 16
        %v2833 = vrot.slane %v2831, 3
        %v2834 = vor.u32 %v2830, %v2833
        %v2835 = vsel %vm2764, %v2825, %v2834
        %v2837 = vshrl.u32 %v2494, 16
        %v2839 = vrot.slane %v2837, 2
        %v2840 = vshll.u32 %v2494, 16
        %v2842 = vrot.slane %v2840, 3
        %v2843 = vor.u32 %v2839, %v2842
        %v2844 = vsel %vm2764, %v2834, %v2843
        %v2846 = vshrl.u32 %v2495, 16
        %v2848 = vrot.slane %v2846, 2
        %v2849 = vshll.u32 %v2495, 16
        %v2851 = vrot.slane %v2849, 3
        %v2852 = vor.u32 %v2848, %v2851
        %v2853 = vsel %vm2764, %v2843, %v2852
        %v2855 = vshrl.u32 %v2496, 16
        %v2857 = vrot.slane %v2855, 2
        %v2858 = vshll.u32 %v2496, 16
        %v2860 = vrot.slane %v2858, 3
        %v2861 = vor.u32 %v2857, %v2860
        %v2862 = vsel %vm2764, %v2852, %v2861
        %v2864 = vshrl.u32 %v2497, 16
        %v2866 = vrot.slane %v2864, 2
        %v2867 = vshll.u32 %v2497, 16
        %v2869 = vrot.slane %v2867, 3
        %v2870 = vor.u32 %v2866, %v2869
        %v2871 = vsel %vm2764, %v2861, %v2870
        %v2873 = vshrl.u32 %v2498, 16
        %v2875 = vrot.slane %v2873, 2
        %v2876 = vshll.u32 %v2498, 16
        %v2878 = vrot.slane %v2876, 3
        %v2879 = vor.u32 %v2875, %v2878
        %v2880 = vsel %vm2764, %v2870, %v2879
        %v2882 = vshrl.u32 %v2499, 16
        %v2884 = vrot.slane %v2882, 2
        %v2885 = vshll.u32 %v2499, 16
        %v2887 = vrot.slane %v2885, 3
        %v2888 = vor.u32 %v2884, %v2887
        %v2889 = vsel %vm2764, %v2879, %v2888
        %v2891 = vshrl.u32 %v2500, 16
        %v2893 = vrot.slane %v2891, 2
        %v2894 = vshll.u32 %v2500, 16
        %v2896 = vrot.slane %v2894, 3
        %v2897 = vor.u32 %v2893, %v2896
        %v2898 = vsel %vm2764, %v2888, %v2897
        %v2900 = vshrl.u32 %v2501, 16
        %v2902 = vrot.slane %v2900, 2
        %v2903 = vshll.u32 %v2501, 16
        %v2905 = vrot.slane %v2903, 3
        %v2906 = vor.u32 %v2902, %v2905
        %v2907 = vsel %vm2764, %v2897, %v2906
        %v2909 = vshrl.u32 %v2502, 16
        %v2911 = vrot.slane %v2909, 2
        %v2912 = vshll.u32 %v2502, 16
        %v2914 = vrot.slane %v2912, 3
        %v2915 = vor.u32 %v2911, %v2914
        %v2916 = vsel %vm2764, %v2906, %v2915
        %v2918 = vshrl.u32 %v2503, 16
        %v2920 = vrot.slane %v2918, 2
        %v2921 = vshll.u32 %v2503, 16
        %v2923 = vrot.slane %v2921, 3
        %v2924 = vor.u32 %v2920, %v2923
        %v2925 = vsel %vm2764, %v2915, %v2924
        %v2927 = vshrl.u32 %v2763, 16
        %v2929 = vrot.slane %v2927, 2
        %v2930 = vshll.u32 %v2763, 16
        %v2932 = vrot.slane %v2930, 3
        %v2933 = vor.u32 %v2929, %v2932
        %v2934 = vsel %vm2764, %v2924, %v2933
        %v2969 = vunpack.c.l.b16 %v2745
        %v2970 = vunpack.c.l.b16 %v2746
        %v2971 = vunpack.c.l.b16 %v2747
        %v2972 = vunpack.c.l.b16 %v2748
        %v2973 = vunpack.c.l.b16 %v2749
        %v2974 = vunpack.c.l.b16 %v2750
        %v2975 = vunpack.c.l.b16 %v2751
        %v2976 = vunpack.c.l.b16 %v2752
        %v2977 = vunpack.c.l.b16 %v2753
        %v2978 = vunpack.c.l.b16 %v2754
        %v2979 = vunpack.c.l.b16 %v2755
        %v2980 = vunpack.c.l.b16 %v2756
        %v2981 = vunpack.c.l.b16 %v2757
        %v2982 = vunpack.c.l.b16 %v2758
        %v2983 = vunpack.c.l.b16 %v2759
        %v2984 = vunpack.c.l.b16 %v2760
        %v2985 = vpack.c.b16 %v2970, %v2969
        %v2986 = vpack.c.b16 %v2972, %v2971
        %v2987 = vpack.c.b16 %v2974, %v2973
        %v2988 = vpack.c.b16 %v2976, %v2975
        %v2989 = vpack.c.b16 %v2978, %v2977
        %v2990 = vpack.c.b16 %v2980, %v2979
        %v2991 = vpack.c.b16 %v2982, %v2981
        %v2992 = vpack.c.b16 %v2984, %v2983
        %3001 = vmatpush.bf16.msra.mxu0 %v2992
        %3002 = vmatpush.bf16.msra.mxu0 %v2991
        %3003 = vmatpush.bf16.msra.mxu0 %v2990
        %3004 = vmatpush.bf16.msra.mxu0 %v2989
        %3005 = vmatpush.bf16.msra.mxu0 %v2988
        %3006 = vmatpush.bf16.msra.mxu0 %v2987
        %3007 = vmatpush.bf16.msra.mxu0 %v2986
        %3008 = vmatpush.bf16.msra.mxu0 %v2985
        %3009 = vmatmul.bf16.gmra.mxu0 %v2781
        %v3010 = vpop.f32.mrf.mxu0
        %v3011 = vadd.f32 0.0, %v3010
        %v3012 = vpop.f32.mrf.mxu0
        %v3013 = vadd.f32 0.0, %v3012
        %3014 = vmatmul.bf16.gmra.mxu0 %v2790
        %v3015 = vpop.f32.mrf.mxu0
        %v3016 = vadd.f32 0.0, %v3015
        %v3017 = vpop.f32.mrf.mxu0
        %v3018 = vadd.f32 0.0, %v3017
        %3019 = vmatmul.bf16.gmra.mxu0 %v2799
        %v3020 = vpop.f32.mrf.mxu0
        %v3021 = vadd.f32 0.0, %v3020
        %v3022 = vpop.f32.mrf.mxu0
        %v3023 = vadd.f32 0.0, %v3022
        %3024 = vmatmul.bf16.gmra.mxu0 %v2808
        %v3025 = vpop.f32.mrf.mxu0
        %v3026 = vadd.f32 0.0, %v3025
        %v3027 = vpop.f32.mrf.mxu0
        %v3028 = vadd.f32 0.0, %v3027
        %3029 = vmatmul.bf16.gmra.mxu0 %v2817
        %v3030 = vpop.f32.mrf.mxu0
        %v3031 = vadd.f32 0.0, %v3030
        %v3032 = vpop.f32.mrf.mxu0
        %v3033 = vadd.f32 0.0, %v3032
        %3034 = vmatmul.bf16.gmra.mxu0 %v2826
        %v3035 = vpop.f32.mrf.mxu0
        %v3036 = vadd.f32 0.0, %v3035
        %v3037 = vpop.f32.mrf.mxu0
        %v3038 = vadd.f32 0.0, %v3037
        %3039 = vmatmul.bf16.gmra.mxu0 %v2835
        %v3040 = vpop.f32.mrf.mxu0
        %v3041 = vadd.f32 0.0, %v3040
        %v3042 = vpop.f32.mrf.mxu0
        %v3043 = vadd.f32 0.0, %v3042
        %3044 = vmatmul.bf16.gmra.mxu0 %v2844
        %v3045 = vpop.f32.mrf.mxu0
        %v3046 = vadd.f32 0.0, %v3045
        %v3047 = vpop.f32.mrf.mxu0
        %v3048 = vadd.f32 0.0, %v3047
        %3049 = vmatmul.bf16.gmra.mxu0 %v2853
        %v3050 = vpop.f32.mrf.mxu0
        %v3051 = vadd.f32 0.0, %v3050
        %v3052 = vpop.f32.mrf.mxu0
        %v3053 = vadd.f32 0.0, %v3052
        %3054 = vmatmul.bf16.gmra.mxu0 %v2862
        %v3055 = vpop.f32.mrf.mxu0
        %v3056 = vadd.f32 0.0, %v3055
        %v3057 = vpop.f32.mrf.mxu0
        %v3058 = vadd.f32 0.0, %v3057
        %3059 = vmatmul.bf16.gmra.mxu0 %v2871
        %v3060 = vpop.f32.mrf.mxu0
        %v3061 = vadd.f32 0.0, %v3060
        %v3062 = vpop.f32.mrf.mxu0
        %v3063 = vadd.f32 0.0, %v3062
        %3064 = vmatmul.bf16.gmra.mxu0 %v2880
        %v3065 = vpop.f32.mrf.mxu0
        %v3066 = vadd.f32 0.0, %v3065
        %v3067 = vpop.f32.mrf.mxu0
        %v3068 = vadd.f32 0.0, %v3067
        %3069 = vmatmul.bf16.gmra.mxu0 %v2889
        %v3070 = vpop.f32.mrf.mxu0
        %v3071 = vadd.f32 0.0, %v3070
        %v3072 = vpop.f32.mrf.mxu0
        %v3073 = vadd.f32 0.0, %v3072
        %3074 = vmatmul.bf16.gmra.mxu0 %v2898
        %v3075 = vpop.f32.mrf.mxu0
        %v3076 = vadd.f32 0.0, %v3075
        %v3077 = vpop.f32.mrf.mxu0
        %v3078 = vadd.f32 0.0, %v3077
        %3079 = vmatmul.bf16.gmra.mxu0 %v2907
        %v3080 = vpop.f32.mrf.mxu0
        %v3081 = vadd.f32 0.0, %v3080
        %v3082 = vpop.f32.mrf.mxu0
        %v3083 = vadd.f32 0.0, %v3082
        %3084 = vmatmul.bf16.gmra.mxu0 %v2916
        %v3085 = vpop.f32.mrf.mxu0
        %v3086 = vadd.f32 0.0, %v3085
        %v3087 = vpop.f32.mrf.mxu0
        %v3088 = vadd.f32 0.0, %v3087
        %3089 = vmatmul.bf16.gmra.mxu0 %v2925
        %v3090 = vpop.f32.mrf.mxu0
        %v3091 = vadd.f32 0.0, %v3090
        %v3092 = vpop.f32.mrf.mxu0
        %v3093 = vadd.f32 0.0, %v3092
        %3094 = vmatmul.bf16.gmra.mxu0 %v2934
        %v3095 = vpop.f32.mrf.mxu0
        %v3096 = vadd.f32 0.0, %v3095
        %v3097 = vpop.f32.mrf.mxu0
        %v3098 = vadd.f32 0.0, %v3097
        %3099 = vdwg.mxu0
        %v3100 = vadd.f32 %v2707, %v3011
        %v3101 = vadd.f32 %v2708, %v3013
        %v3102 = vadd.f32 %v2709, %v3016
        %v3103 = vadd.f32 %v2710, %v3018
        %v3104 = vadd.f32 %v2711, %v3021
        %v3105 = vadd.f32 %v2712, %v3023
        %v3106 = vadd.f32 %v2713, %v3026
        %v3107 = vadd.f32 %v2714, %v3028
        %v3108 = vadd.f32 %v2715, %v3031
        %v3109 = vadd.f32 %v2716, %v3033
        %v3110 = vadd.f32 %v2717, %v3036
        %v3111 = vadd.f32 %v2718, %v3038
        %v3112 = vadd.f32 %v2719, %v3041
        %v3113 = vadd.f32 %v2720, %v3043
        %v3114 = vadd.f32 %v2721, %v3046
        %v3115 = vadd.f32 %v2722, %v3048
        %v3116 = vadd.f32 %v2723, %v3051
        %v3117 = vadd.f32 %v2724, %v3053
        %v3118 = vadd.f32 %v2725, %v3056
        %v3119 = vadd.f32 %v2726, %v3058
        %v3120 = vadd.f32 %v2727, %v3061
        %v3121 = vadd.f32 %v2728, %v3063
        %v3122 = vadd.f32 %v2729, %v3066
        %v3123 = vadd.f32 %v2730, %v3068
        %v3124 = vadd.f32 %v2731, %v3071
        %v3125 = vadd.f32 %v2732, %v3073
        %v3126 = vadd.f32 %v2733, %v3076
        %v3127 = vadd.f32 %v2734, %v3078
        %v3128 = vadd.f32 %v2735, %v3081
        %v3129 = vadd.f32 %v2736, %v3083
        %v3130 = vadd.f32 %v2737, %v3086
        %v3131 = vadd.f32 %v2738, %v3088
        %v3132 = vadd.f32 %v2739, %v3091
        %v3133 = vadd.f32 %v2740, %v3093
        %v3134 = vadd.f32 %v2741, %v3096
        %v3135 = vadd.f32 %v2742, %v3098
        %v3136 = vld [vmem:[%s416 + $0x10] sm:$0x8]
        %s3137 = scalar_lea.vmem [#allocation5], 512
        %v3138 = vld [vmem:[%s3137] sm:$0xf]
        %v3139 = vld [vmem:[%s3137 + $0x4] sm:$0xf]
        %v3140 = vld [vmem:[%s3137 + $0x8] sm:$0xf]
        %v3141 = vld [vmem:[%s3137 + $0xc] sm:$0xf]
        %v3142 = vld [vmem:[%s3137 + $0x10] sm:$0xf]
        %v3143 = vld [vmem:[%s3137 + $0x14] sm:$0xf]
        %v3144 = vld [vmem:[%s3137 + $0x18] sm:$0xf]
        %v3145 = vld [vmem:[%s3137 + $0x1c] sm:$0xf]
        %v3146 = vld [vmem:[%s3137 + $0x20] sm:$0xf]
        %v3147 = vld [vmem:[%s3137 + $0x24] sm:$0xf]
        %v3148 = vld [vmem:[%s3137 + $0x28] sm:$0xf]
        %v3149 = vld [vmem:[%s3137 + $0x2c] sm:$0xf]
        %v3150 = vld [vmem:[%s3137 + $0x30] sm:$0xf]
        %v3151 = vld [vmem:[%s3137 + $0x34] sm:$0xf]
        %v3152 = vld [vmem:[%s3137 + $0x38] sm:$0xf]
        %v3153 = vld [vmem:[%s3137 + $0x3c] sm:$0xf]
        %v3155 = vunpack.c.l.b16 %v3136
        %v3156 = vpack.c.b16 %v2450, %v3155
        %vm3157 = vcmask 1044480
        %v3158 = vrot.slane %v3156, 3
        %v3159 = vrot.slane %v2487, 3
        %v3160 = vsel %vm3157, %v3158, %v3159
        %v3161 = vrot.slane %v2488, 3
        %v3162 = vsel %vm3157, %v3159, %v3161
        %v3163 = vrot.slane %v2489, 3
        %v3164 = vsel %vm3157, %v3161, %v3163
        %v3165 = vrot.slane %v2490, 3
        %v3166 = vsel %vm3157, %v3163, %v3165
        %v3167 = vrot.slane %v2491, 3
        %v3168 = vsel %vm3157, %v3165, %v3167
        %v3169 = vrot.slane %v2492, 3
        %v3170 = vsel %vm3157, %v3167, %v3169
        %v3171 = vrot.slane %v2493, 3
        %v3172 = vsel %vm3157, %v3169, %v3171
        %v3173 = vrot.slane %v2494, 3
        %v3174 = vsel %vm3157, %v3171, %v3173
        %v3175 = vrot.slane %v2495, 3
        %v3176 = vsel %vm3157, %v3173, %v3175
        %v3177 = vrot.slane %v2496, 3
        %v3178 = vsel %vm3157, %v3175, %v3177
        %v3179 = vrot.slane %v2497, 3
        %v3180 = vsel %vm3157, %v3177, %v3179
        %v3181 = vrot.slane %v2498, 3
        %v3182 = vsel %vm3157, %v3179, %v3181
        %v3183 = vrot.slane %v2499, 3
        %v3184 = vsel %vm3157, %v3181, %v3183
        %v3185 = vrot.slane %v2500, 3
        %v3186 = vsel %vm3157, %v3183, %v3185
        %v3187 = vrot.slane %v2501, 3
        %v3188 = vsel %vm3157, %v3185, %v3187
        %v3189 = vrot.slane %v2502, 3
        %v3190 = vsel %vm3157, %v3187, %v3189
        %v3191 = vrot.slane %v2503, 3
        %v3192 = vsel %vm3157, %v3189, %v3191
        %v3193 = vrot.slane %v2763, 3
        %v3194 = vsel %vm3157, %v3191, %v3193
        %v3229 = vunpack.c.l.b16 %v3138
        %v3230 = vunpack.c.l.b16 %v3139
        %v3231 = vunpack.c.l.b16 %v3140
        %v3232 = vunpack.c.l.b16 %v3141
        %v3233 = vunpack.c.l.b16 %v3142
        %v3234 = vunpack.c.l.b16 %v3143
        %v3235 = vunpack.c.l.b16 %v3144
        %v3236 = vunpack.c.l.b16 %v3145
        %v3237 = vunpack.c.l.b16 %v3146
        %v3238 = vunpack.c.l.b16 %v3147
        %v3239 = vunpack.c.l.b16 %v3148
        %v3240 = vunpack.c.l.b16 %v3149
        %v3241 = vunpack.c.l.b16 %v3150
        %v3242 = vunpack.c.l.b16 %v3151
        %v3243 = vunpack.c.l.b16 %v3152
        %v3244 = vunpack.c.l.b16 %v3153
        %v3245 = vpack.c.b16 %v3230, %v3229
        %v3246 = vpack.c.b16 %v3232, %v3231
        %v3247 = vpack.c.b16 %v3234, %v3233
        %v3248 = vpack.c.b16 %v3236, %v3235
        %v3249 = vpack.c.b16 %v3238, %v3237
        %v3250 = vpack.c.b16 %v3240, %v3239
        %v3251 = vpack.c.b16 %v3242, %v3241
        %v3252 = vpack.c.b16 %v3244, %v3243
        %3261 = vmatpush.bf16.msra.mxu0 %v3252
        %3262 = vmatpush.bf16.msra.mxu0 %v3251
        %3263 = vmatpush.bf16.msra.mxu0 %v3250
        %3264 = vmatpush.bf16.msra.mxu0 %v3249
        %3265 = vmatpush.bf16.msra.mxu0 %v3248
        %3266 = vmatpush.bf16.msra.mxu0 %v3247
        %3267 = vmatpush.bf16.msra.mxu0 %v3246
        %3268 = vmatpush.bf16.msra.mxu0 %v3245
        %3269 = vmatmul.bf16.gmra.mxu0 %v3160
        %v3270 = vpop.f32.mrf.mxu0
        %v3271 = vadd.f32 0.0, %v3270
        %v3272 = vpop.f32.mrf.mxu0
        %v3273 = vadd.f32 0.0, %v3272
        %3274 = vmatmul.bf16.gmra.mxu0 %v3162
        %v3275 = vpop.f32.mrf.mxu0
        %v3276 = vadd.f32 0.0, %v3275
        %v3277 = vpop.f32.mrf.mxu0
        %v3278 = vadd.f32 0.0, %v3277
        %3279 = vmatmul.bf16.gmra.mxu0 %v3164
        %v3280 = vpop.f32.mrf.mxu0
        %v3281 = vadd.f32 0.0, %v3280
        %v3282 = vpop.f32.mrf.mxu0
        %v3283 = vadd.f32 0.0, %v3282
        %3284 = vmatmul.bf16.gmra.mxu0 %v3166
        %v3285 = vpop.f32.mrf.mxu0
        %v3286 = vadd.f32 0.0, %v3285
        %v3287 = vpop.f32.mrf.mxu0
        %v3288 = vadd.f32 0.0, %v3287
        %3289 = vmatmul.bf16.gmra.mxu0 %v3168
        %v3290 = vpop.f32.mrf.mxu0
        %v3291 = vadd.f32 0.0, %v3290
        %v3292 = vpop.f32.mrf.mxu0
        %v3293 = vadd.f32 0.0, %v3292
        %3294 = vmatmul.bf16.gmra.mxu0 %v3170
        %v3295 = vpop.f32.mrf.mxu0
        %v3296 = vadd.f32 0.0, %v3295
        %v3297 = vpop.f32.mrf.mxu0
        %v3298 = vadd.f32 0.0, %v3297
        %3299 = vmatmul.bf16.gmra.mxu0 %v3172
        %v3300 = vpop.f32.mrf.mxu0
        %v3301 = vadd.f32 0.0, %v3300
        %v3302 = vpop.f32.mrf.mxu0
        %v3303 = vadd.f32 0.0, %v3302
        %3304 = vmatmul.bf16.gmra.mxu0 %v3174
        %v3305 = vpop.f32.mrf.mxu0
        %v3306 = vadd.f32 0.0, %v3305
        %v3307 = vpop.f32.mrf.mxu0
        %v3308 = vadd.f32 0.0, %v3307
        %3309 = vmatmul.bf16.gmra.mxu0 %v3176
        %v3310 = vpop.f32.mrf.mxu0
        %v3311 = vadd.f32 0.0, %v3310
        %v3312 = vpop.f32.mrf.mxu0
        %v3313 = vadd.f32 0.0, %v3312
        %3314 = vmatmul.bf16.gmra.mxu0 %v3178
        %v3315 = vpop.f32.mrf.mxu0
        %v3316 = vadd.f32 0.0, %v3315
        %v3317 = vpop.f32.mrf.mxu0
        %v3318 = vadd.f32 0.0, %v3317
        %3319 = vmatmul.bf16.gmra.mxu0 %v3180
        %v3320 = vpop.f32.mrf.mxu0
        %v3321 = vadd.f32 0.0, %v3320
        %v3322 = vpop.f32.mrf.mxu0
        %v3323 = vadd.f32 0.0, %v3322
        %3324 = vmatmul.bf16.gmra.mxu0 %v3182
        %v3325 = vpop.f32.mrf.mxu0
        %v3326 = vadd.f32 0.0, %v3325
        %v3327 = vpop.f32.mrf.mxu0
        %v3328 = vadd.f32 0.0, %v3327
        %3329 = vmatmul.bf16.gmra.mxu0 %v3184
        %v3330 = vpop.f32.mrf.mxu0
        %v3331 = vadd.f32 0.0, %v3330
        %v3332 = vpop.f32.mrf.mxu0
        %v3333 = vadd.f32 0.0, %v3332
        %3334 = vmatmul.bf16.gmra.mxu0 %v3186
        %v3335 = vpop.f32.mrf.mxu0
        %v3336 = vadd.f32 0.0, %v3335
        %v3337 = vpop.f32.mrf.mxu0
        %v3338 = vadd.f32 0.0, %v3337
        %3339 = vmatmul.bf16.gmra.mxu0 %v3188
        %v3340 = vpop.f32.mrf.mxu0
        %v3341 = vadd.f32 0.0, %v3340
        %v3342 = vpop.f32.mrf.mxu0
        %v3343 = vadd.f32 0.0, %v3342
        %3344 = vmatmul.bf16.gmra.mxu0 %v3190
        %v3345 = vpop.f32.mrf.mxu0
        %v3346 = vadd.f32 0.0, %v3345
        %v3347 = vpop.f32.mrf.mxu0
        %v3348 = vadd.f32 0.0, %v3347
        %3349 = vmatmul.bf16.gmra.mxu0 %v3192
        %v3350 = vpop.f32.mrf.mxu0
        %v3351 = vadd.f32 0.0, %v3350
        %v3352 = vpop.f32.mrf.mxu0
        %v3353 = vadd.f32 0.0, %v3352
        %3354 = vmatmul.bf16.gmra.mxu0 %v3194
        %v3355 = vpop.f32.mrf.mxu0
        %v3356 = vadd.f32 0.0, %v3355
        %v3357 = vpop.f32.mrf.mxu0
        %v3358 = vadd.f32 0.0, %v3357
        %3359 = vdwg.mxu0
        %v3360 = vadd.f32 %v3100, %v3271
        %v3361 = vadd.f32 %v3101, %v3273
        %v3362 = vadd.f32 %v3102, %v3276
        %v3363 = vadd.f32 %v3103, %v3278
        %v3364 = vadd.f32 %v3104, %v3281
        %v3365 = vadd.f32 %v3105, %v3283
        %v3366 = vadd.f32 %v3106, %v3286
        %v3367 = vadd.f32 %v3107, %v3288
        %v3368 = vadd.f32 %v3108, %v3291
        %v3369 = vadd.f32 %v3109, %v3293
        %v3370 = vadd.f32 %v3110, %v3296
        %v3371 = vadd.f32 %v3111, %v3298
        %v3372 = vadd.f32 %v3112, %v3301
        %v3373 = vadd.f32 %v3113, %v3303
        %v3374 = vadd.f32 %v3114, %v3306
        %v3375 = vadd.f32 %v3115, %v3308
        %v3376 = vadd.f32 %v3116, %v3311
        %v3377 = vadd.f32 %v3117, %v3313
        %v3378 = vadd.f32 %v3118, %v3316
        %v3379 = vadd.f32 %v3119, %v3318
        %v3380 = vadd.f32 %v3120, %v3321
        %v3381 = vadd.f32 %v3121, %v3323
        %v3382 = vadd.f32 %v3122, %v3326
        %v3383 = vadd.f32 %v3123, %v3328
        %v3384 = vadd.f32 %v3124, %v3331
        %v3385 = vadd.f32 %v3125, %v3333
        %v3386 = vadd.f32 %v3126, %v3336
        %v3387 = vadd.f32 %v3127, %v3338
        %v3388 = vadd.f32 %v3128, %v3341
        %v3389 = vadd.f32 %v3129, %v3343
        %v3390 = vadd.f32 %v3130, %v3346
        %v3391 = vadd.f32 %v3131, %v3348
        %v3392 = vadd.f32 %v3132, %v3351
        %v3393 = vadd.f32 %v3133, %v3353
        %v3394 = vadd.f32 %v3134, %v3356
        %v3395 = vadd.f32 %v3135, %v3358
        %v3396 = vld [vmem:[#allocation8] sm:$0x1]
        %v3398 = vperm.slane %v3396, 0
        %v3400 = vadd.f32 %v3360, %v3398
        %v3401 = vadd.f32 %v3361, %v3398
        %v3402 = vadd.f32 %v3362, %v3398
        %v3403 = vadd.f32 %v3363, %v3398
        %v3404 = vadd.f32 %v3364, %v3398
        %v3405 = vadd.f32 %v3365, %v3398
        %v3406 = vadd.f32 %v3366, %v3398
        %v3407 = vadd.f32 %v3367, %v3398
        %v3408 = vadd.f32 %v3368, %v3398
        %v3409 = vadd.f32 %v3369, %v3398
        %v3410 = vadd.f32 %v3370, %v3398
        %v3411 = vadd.f32 %v3371, %v3398
        %v3412 = vadd.f32 %v3372, %v3398
        %v3413 = vadd.f32 %v3373, %v3398
        %v3414 = vadd.f32 %v3374, %v3398
        %v3415 = vadd.f32 %v3375, %v3398
        %v3416 = vadd.f32 %v3376, %v3398
        %v3417 = vadd.f32 %v3377, %v3398
        %v3418 = vadd.f32 %v3378, %v3398
        %v3419 = vadd.f32 %v3379, %v3398
        %v3420 = vadd.f32 %v3380, %v3398
        %v3421 = vadd.f32 %v3381, %v3398
        %v3422 = vadd.f32 %v3382, %v3398
        %v3423 = vadd.f32 %v3383, %v3398
        %v3424 = vadd.f32 %v3384, %v3398
        %v3425 = vadd.f32 %v3385, %v3398
        %v3426 = vadd.f32 %v3386, %v3398
        %v3427 = vadd.f32 %v3387, %v3398
        %v3428 = vadd.f32 %v3388, %v3398
        %v3429 = vadd.f32 %v3389, %v3398
        %v3430 = vadd.f32 %v3390, %v3398
        %v3431 = vadd.f32 %v3391, %v3398
        %v3432 = vadd.f32 %v3392, %v3398
        %v3433 = vadd.f32 %v3393, %v3398
        %v3434 = vadd.f32 %v3394, %v3398
        %v3435 = vadd.f32 %v3395, %v3398
        %v3436 = vmax.f32 %v3400, 0.0
        %v3437 = vmax.f32 %v3401, 0.0
        %v3438 = vmax.f32 %v3402, 0.0
        %v3439 = vmax.f32 %v3403, 0.0
        %v3440 = vmax.f32 %v3404, 0.0
        %v3441 = vmax.f32 %v3405, 0.0
        %v3442 = vmax.f32 %v3406, 0.0
        %v3443 = vmax.f32 %v3407, 0.0
        %v3444 = vmax.f32 %v3408, 0.0
        %v3445 = vmax.f32 %v3409, 0.0
        %v3446 = vmax.f32 %v3410, 0.0
        %v3447 = vmax.f32 %v3411, 0.0
        %v3448 = vmax.f32 %v3412, 0.0
        %v3449 = vmax.f32 %v3413, 0.0
        %v3450 = vmax.f32 %v3414, 0.0
        %v3451 = vmax.f32 %v3415, 0.0
        %v3452 = vmax.f32 %v3416, 0.0
        %v3453 = vmax.f32 %v3417, 0.0
        %v3454 = vmax.f32 %v3418, 0.0
        %v3455 = vmax.f32 %v3419, 0.0
        %v3456 = vmax.f32 %v3420, 0.0
        %v3457 = vmax.f32 %v3421, 0.0
        %v3458 = vmax.f32 %v3422, 0.0
        %v3459 = vmax.f32 %v3423, 0.0
        %v3460 = vmax.f32 %v3424, 0.0
        %v3461 = vmax.f32 %v3425, 0.0
        %v3462 = vmax.f32 %v3426, 0.0
        %v3463 = vmax.f32 %v3427, 0.0
        %v3464 = vmax.f32 %v3428, 0.0
        %v3465 = vmax.f32 %v3429, 0.0
        %v3466 = vmax.f32 %v3430, 0.0
        %v3467 = vmax.f32 %v3431, 0.0
        %v3468 = vmax.f32 %v3432, 0.0
        %v3469 = vmax.f32 %v3433, 0.0
        %v3470 = vmax.f32 %v3434, 0.0
        %v3471 = vmax.f32 %v3435, 0.0
        %v3472 = vld [vmem:[#allocation13] sm:$0xff]
        %v3473 = vld [vmem:[#allocation13 + $0x8] sm:$0xff]
        %v3474 = vld [vmem:[#allocation13 + $0x10] sm:$0xff]
        %v3475 = vld [vmem:[#allocation13 + $0x18] sm:$0xff]
        %v3476 = vld [vmem:[#allocation13 + $0x20] sm:$0xff]
        %v3477 = vld [vmem:[#allocation13 + $0x28] sm:$0xff]
        %v3478 = vld [vmem:[#allocation13 + $0x30] sm:$0xff]
        %v3479 = vld [vmem:[#allocation13 + $0x38] sm:$0xff]
        %v3480 = vld [vmem:[#allocation13 + $0x40] sm:$0xff]
        %v3481 = vld [vmem:[#allocation13 + $0x48] sm:$0xff]
        %v3482 = vld [vmem:[#allocation13 + $0x50] sm:$0xff]
        %v3483 = vld [vmem:[#allocation13 + $0x58] sm:$0xff]
        %v3484 = vld [vmem:[#allocation13 + $0x60] sm:$0xff]
        %v3485 = vld [vmem:[#allocation13 + $0x68] sm:$0xff]
        %v3486 = vld [vmem:[#allocation13 + $0x70] sm:$0xff]
        %v3487 = vld [vmem:[#allocation13 + $0x78] sm:$0xff]
        %v3488 = vld [vmem:[#allocation13 + $0x80] sm:$0xff]
        %v3489 = vld [vmem:[#allocation13 + $0x88] sm:$0xff]
        %v3490 = vld [vmem:[#allocation13 + $0x90] sm:$0xff]
        %v3491 = vld [vmem:[#allocation13 + $0x98] sm:$0xff]
        %v3492 = vld [vmem:[#allocation13 + $0xa0] sm:$0xff]
        %v3493 = vld [vmem:[#allocation13 + $0xa8] sm:$0xff]
        %v3494 = vld [vmem:[#allocation13 + $0xb0] sm:$0xff]
        %v3495 = vld [vmem:[#allocation13 + $0xb8] sm:$0xff]
        %v3496 = vld [vmem:[#allocation13 + $0xc0] sm:$0xff]
        %v3497 = vld [vmem:[#allocation13 + $0xc8] sm:$0xff]
        %v3498 = vld [vmem:[#allocation13 + $0xd0] sm:$0xff]
        %v3499 = vld [vmem:[#allocation13 + $0xd8] sm:$0xff]
        %v3500 = vld [vmem:[#allocation13 + $0xe0] sm:$0xff]
        %v3501 = vld [vmem:[#allocation13 + $0xe8] sm:$0xff]
        %v3502 = vld [vmem:[#allocation13 + $0xf0] sm:$0xff]
        %v3503 = vld [vmem:[#allocation13 + $0xf8] sm:$0xff]
        %v3504 = vld [vmem:[#allocation13 + $0x100] sm:$0xff]
        %v3505 = vld [vmem:[#allocation13 + $0x108] sm:$0xff]
        %v3506 = vld [vmem:[#allocation13 + $0x110] sm:$0xff]
        %v3507 = vld [vmem:[#allocation13 + $0x118] sm:$0xff]
        %3508 = vst [vmem:[#allocation3] sm:$0xf] 0
        %3509 = vst [vmem:[#allocation3 + $0x4] sm:$0xf] 0
        %3510 = vst [vmem:[#allocation3 + $0x8] sm:$0xf] 0
        %3511 = vst [vmem:[#allocation3 + $0xc] sm:$0xf] 0
        %3512 = vst [vmem:[#allocation3 + $0x10] sm:$0xf] 0
        %3513 = vst [vmem:[#allocation3 + $0x14] sm:$0xf] 0
        %3514 = vst [vmem:[#allocation3 + $0x18] sm:$0xf] 0
        %3515 = vst [vmem:[#allocation3 + $0x1c] sm:$0xf] 0
        %3516 = vst [vmem:[#allocation3 + $0x20] sm:$0xf] 0
        %3517 = vst [vmem:[#allocation3 + $0x24] sm:$0xf] 0
        %3518 = vst [vmem:[#allocation3 + $0x28] sm:$0xf] 0
        %3519 = vst [vmem:[#allocation3 + $0x2c] sm:$0xf] 0
        %3520 = vst [vmem:[#allocation3 + $0x30] sm:$0xf] 0
        %3521 = vst [vmem:[#allocation3 + $0x34] sm:$0xf] 0
        %3522 = vst [vmem:[#allocation3 + $0x38] sm:$0xf] 0
        %3523 = vst [vmem:[#allocation3 + $0x3c] sm:$0xf] 0
        %3524 = vst [vmem:[#allocation3 + $0x40] sm:$0xf] 0
        %3525 = vst [vmem:[#allocation3 + $0x44] sm:$0xf] 0
        %3526 = vst [vmem:[#allocation3 + $0x48] sm:$0xf] 0
        %3527 = vst [vmem:[#allocation3 + $0x4c] sm:$0xf] 0
        %3528 = vst [vmem:[#allocation3 + $0x50] sm:$0xf] 0
        %3529 = vst [vmem:[#allocation3 + $0x54] sm:$0xf] 0
        %3530 = vst [vmem:[#allocation3 + $0x58] sm:$0xf] 0
        %3531 = vst [vmem:[#allocation3 + $0x5c] sm:$0xf] 0
        %3532 = vst [vmem:[#allocation3 + $0x60] sm:$0xf] 0
        %3533 = vst [vmem:[#allocation3 + $0x64] sm:$0xf] 0
        %3534 = vst [vmem:[#allocation3 + $0x68] sm:$0xf] 0
        %3535 = vst [vmem:[#allocation3 + $0x6c] sm:$0xf] 0
        %3536 = vst [vmem:[#allocation3 + $0x70] sm:$0xf] 0
        %3537 = vst [vmem:[#allocation3 + $0x74] sm:$0xf] 0
        %3538 = vst [vmem:[#allocation3 + $0x78] sm:$0xf] 0
        %3539 = vst [vmem:[#allocation3 + $0x7c] sm:$0xf] 0
        %3540 = vst [vmem:[#allocation3 + $0x80] sm:$0xf] 0
        %3541 = vst [vmem:[#allocation3 + $0x84] sm:$0xf] 0
        %3542 = vst [vmem:[#allocation3 + $0x88] sm:$0xf] 0
        %3543 = vst [vmem:[#allocation3 + $0x8c] sm:$0xf] 0
        %3544 = vst [vmem:[#allocation3 + $0x90] sm:$0xf] 0
        %3545 = vst [vmem:[#allocation3 + $0x94] sm:$0xf] 0
        %3546 = vst [vmem:[#allocation3 + $0x98] sm:$0xf] 0
        %3547 = vst [vmem:[#allocation3 + $0x9c] sm:$0xf] 0
        %3548 = vst [vmem:[#allocation3 + $0xa0] sm:$0x7] 0
        %3550 = vset.pattern.permute.xlu0 0
        %3551 = vperm.xlu0 %3550, %v3472
        %v3552 = vpop.permute.xlu0 %3551
        %3555 = vset.pattern.permute.xlu0 0
        %3556 = vperm.xlu0 %3555, %v3473
        %v3557 = vpop.permute.xlu0 %3556
        %3560 = vset.pattern.permute.xlu0 0
        %3561 = vperm.xlu0 %3560, %v3474
        %v3562 = vpop.permute.xlu0 %3561
        %3565 = vset.pattern.permute.xlu0 0
        %3566 = vperm.xlu0 %3565, %v3475
        %v3567 = vpop.permute.xlu0 %3566
        %3570 = vset.pattern.permute.xlu0 0
        %3571 = vperm.xlu0 %3570, %v3476
        %v3572 = vpop.permute.xlu0 %3571
        %3575 = vset.pattern.permute.xlu0 0
        %3576 = vperm.xlu0 %3575, %v3477
        %v3577 = vpop.permute.xlu0 %3576
        %3580 = vset.pattern.permute.xlu0 0
        %3581 = vperm.xlu0 %3580, %v3478
        %v3582 = vpop.permute.xlu0 %3581
        %3585 = vset.pattern.permute.xlu0 0
        %3586 = vperm.xlu0 %3585, %v3479
        %v3587 = vpop.permute.xlu0 %3586
        %3590 = vset.pattern.permute.xlu0 0
        %3591 = vperm.xlu0 %3590, %v3480
        %v3592 = vpop.permute.xlu0 %3591
        %3595 = vset.pattern.permute.xlu0 0
        %3596 = vperm.xlu0 %3595, %v3481
        %v3597 = vpop.permute.xlu0 %3596
        %3600 = vset.pattern.permute.xlu0 0
        %3601 = vperm.xlu0 %3600, %v3482
        %v3602 = vpop.permute.xlu0 %3601
        %3605 = vset.pattern.permute.xlu0 0
        %3606 = vperm.xlu0 %3605, %v3483
        %v3607 = vpop.permute.xlu0 %3606
        %3610 = vset.pattern.permute.xlu0 0
        %3611 = vperm.xlu0 %3610, %v3484
        %v3612 = vpop.permute.xlu0 %3611
        %3615 = vset.pattern.permute.xlu0 0
        %3616 = vperm.xlu0 %3615, %v3485
        %v3617 = vpop.permute.xlu0 %3616
        %3620 = vset.pattern.permute.xlu0 0
        %3621 = vperm.xlu0 %3620, %v3486
        %v3622 = vpop.permute.xlu0 %3621
        %3625 = vset.pattern.permute.xlu0 0
        %3626 = vperm.xlu0 %3625, %v3487
        %v3627 = vpop.permute.xlu0 %3626
        %3630 = vset.pattern.permute.xlu0 0
        %3631 = vperm.xlu0 %3630, %v3488
        %v3632 = vpop.permute.xlu0 %3631
        %3635 = vset.pattern.permute.xlu0 0
        %3636 = vperm.xlu0 %3635, %v3489
        %v3637 = vpop.permute.xlu0 %3636
        %3640 = vset.pattern.permute.xlu0 0
        %3641 = vperm.xlu0 %3640, %v3490
        %v3642 = vpop.permute.xlu0 %3641
        %3645 = vset.pattern.permute.xlu0 0
        %3646 = vperm.xlu0 %3645, %v3491
        %v3647 = vpop.permute.xlu0 %3646
        %3650 = vset.pattern.permute.xlu0 0
        %3651 = vperm.xlu0 %3650, %v3492
        %v3652 = vpop.permute.xlu0 %3651
        %3655 = vset.pattern.permute.xlu0 0
        %3656 = vperm.xlu0 %3655, %v3493
        %v3657 = vpop.permute.xlu0 %3656
        %3660 = vset.pattern.permute.xlu0 0
        %3661 = vperm.xlu0 %3660, %v3494
        %v3662 = vpop.permute.xlu0 %3661
        %3665 = vset.pattern.permute.xlu0 0
        %3666 = vperm.xlu0 %3665, %v3495
        %v3667 = vpop.permute.xlu0 %3666
        %3670 = vset.pattern.permute.xlu0 0
        %3671 = vperm.xlu0 %3670, %v3496
        %v3672 = vpop.permute.xlu0 %3671
        %3675 = vset.pattern.permute.xlu0 0
        %3676 = vperm.xlu0 %3675, %v3497
        %v3677 = vpop.permute.xlu0 %3676
        %3680 = vset.pattern.permute.xlu0 0
        %3681 = vperm.xlu0 %3680, %v3498
        %v3682 = vpop.permute.xlu0 %3681
        %3685 = vset.pattern.permute.xlu0 0
        %3686 = vperm.xlu0 %3685, %v3499
        %v3687 = vpop.permute.xlu0 %3686
        %3690 = vset.pattern.permute.xlu0 0
        %3691 = vperm.xlu0 %3690, %v3500
        %v3692 = vpop.permute.xlu0 %3691
        %3695 = vset.pattern.permute.xlu0 0
        %3696 = vperm.xlu0 %3695, %v3501
        %v3697 = vpop.permute.xlu0 %3696
        %3700 = vset.pattern.permute.xlu0 0
        %3701 = vperm.xlu0 %3700, %v3502
        %v3702 = vpop.permute.xlu0 %3701
        %3705 = vset.pattern.permute.xlu0 0
        %3706 = vperm.xlu0 %3705, %v3503
        %v3707 = vpop.permute.xlu0 %3706
        %3710 = vset.pattern.permute.xlu0 0
        %3711 = vperm.xlu0 %3710, %v3504
        %v3712 = vpop.permute.xlu0 %3711
        %3715 = vset.pattern.permute.xlu0 0
        %3716 = vperm.xlu0 %3715, %v3505
        %v3717 = vpop.permute.xlu0 %3716
        %3720 = vset.pattern.permute.xlu0 0
        %3721 = vperm.xlu0 %3720, %v3506
        %v3722 = vpop.permute.xlu0 %3721
        %3725 = vset.pattern.permute.xlu0 0
        %3726 = vperm.xlu0 %3725, %v3507
        %v3727 = vpop.permute.xlu0 %3726
        %v3729 = vmul.f32 %v3436, %v3552
        %v3730 = vmul.f32 %v3437, %v3557
        %v3731 = vmul.f32 %v3438, %v3562
        %v3732 = vmul.f32 %v3439, %v3567
        %v3733 = vmul.f32 %v3440, %v3572
        %v3734 = vmul.f32 %v3441, %v3577
        %v3735 = vmul.f32 %v3442, %v3582
        %v3736 = vmul.f32 %v3443, %v3587
        %v3737 = vmul.f32 %v3444, %v3592
        %v3738 = vmul.f32 %v3445, %v3597
        %v3739 = vmul.f32 %v3446, %v3602
        %v3740 = vmul.f32 %v3447, %v3607
        %v3741 = vmul.f32 %v3448, %v3612
        %v3742 = vmul.f32 %v3449, %v3617
        %v3743 = vmul.f32 %v3450, %v3622
        %v3744 = vmul.f32 %v3451, %v3627
        %v3745 = vmul.f32 %v3452, %v3632
        %v3746 = vmul.f32 %v3453, %v3637
        %v3747 = vmul.f32 %v3454, %v3642
        %v3748 = vmul.f32 %v3455, %v3647
        %v3749 = vmul.f32 %v3456, %v3652
        %v3750 = vmul.f32 %v3457, %v3657
        %v3751 = vmul.f32 %v3458, %v3662
        %v3752 = vmul.f32 %v3459, %v3667
        %v3753 = vmul.f32 %v3460, %v3672
        %v3754 = vmul.f32 %v3461, %v3677
        %v3755 = vmul.f32 %v3462, %v3682
        %v3756 = vmul.f32 %v3463, %v3687
        %v3757 = vmul.f32 %v3464, %v3692
        %v3758 = vmul.f32 %v3465, %v3697
        %v3759 = vmul.f32 %v3466, %v3702
        %v3760 = vmul.f32 %v3467, %v3707
        %v3761 = vmul.f32 %v3468, %v3712
        %v3762 = vmul.f32 %v3469, %v3717
        %v3763 = vmul.f32 %v3470, %v3722
        %v3764 = vmul.f32 %v3471, %v3727
        %v3765 = vpack.c.bf16 %v3729, %v3729
        %v3766 = vpack.c.bf16 %v3730, %v3730
        %v3767 = vpack.c.bf16 %v3731, %v3731
        %v3768 = vpack.c.bf16 %v3732, %v3732
        %v3769 = vpack.c.bf16 %v3733, %v3733
        %v3770 = vpack.c.bf16 %v3734, %v3734
        %v3771 = vpack.c.bf16 %v3735, %v3735
        %v3772 = vpack.c.bf16 %v3736, %v3736
        %v3773 = vpack.c.bf16 %v3737, %v3737
        %v3774 = vpack.c.bf16 %v3738, %v3738
        %v3775 = vpack.c.bf16 %v3739, %v3739
        %v3776 = vpack.c.bf16 %v3740, %v3740
        %v3777 = vpack.c.bf16 %v3741, %v3741
        %v3778 = vpack.c.bf16 %v3742, %v3742
        %v3779 = vpack.c.bf16 %v3743, %v3743
        %v3780 = vpack.c.bf16 %v3744, %v3744
        %v3781 = vpack.c.bf16 %v3745, %v3745
        %v3782 = vpack.c.bf16 %v3746, %v3746
        %v3783 = vpack.c.bf16 %v3747, %v3747
        %v3784 = vpack.c.bf16 %v3748, %v3748
        %v3785 = vpack.c.bf16 %v3749, %v3749
        %v3786 = vpack.c.bf16 %v3750, %v3750
        %v3787 = vpack.c.bf16 %v3751, %v3751
        %v3788 = vpack.c.bf16 %v3752, %v3752
        %v3789 = vpack.c.bf16 %v3753, %v3753
        %v3790 = vpack.c.bf16 %v3754, %v3754
        %v3791 = vpack.c.bf16 %v3755, %v3755
        %v3792 = vpack.c.bf16 %v3756, %v3756
        %v3793 = vpack.c.bf16 %v3757, %v3757
        %v3794 = vpack.c.bf16 %v3758, %v3758
        %v3795 = vpack.c.bf16 %v3759, %v3759
        %v3796 = vpack.c.bf16 %v3760, %v3760
        %v3797 = vpack.c.bf16 %v3761, %v3761
        %v3798 = vpack.c.bf16 %v3762, %v3762
        %v3799 = vpack.c.bf16 %v3763, %v3763
        %v3800 = vpack.c.bf16 %v3764, %v3764
        %vm3801 = vsmask.f32 1280
        %vm3802 = vsmask.f32 5392
        %vm3803 = vmor %vm3801, %vm3802
        %v3805 = vshrl.u32 %v3765, 16
        %v3807 = vrot.slane %v3805, 6
        %v3808 = vshll.u32 %v3765, 16
        %v3810 = vrot.slane %v3808, 7
        %v3811 = vor.u32 %v3807, %v3810
        %v3812 = vrot.slane %v3811, 4
        %v3814 = vshrl.u32 %v3766, 16
        %v3816 = vrot.slane %v3814, 6
        %v3817 = vshll.u32 %v3766, 16
        %v3819 = vrot.slane %v3817, 7
        %v3820 = vor.u32 %v3816, %v3819
        %v3821 = vsel %vm3803, %v3812, %v3820
        %v3822 = vrot.slane %v3820, 4
        %v3824 = vshrl.u32 %v3767, 16
        %v3826 = vrot.slane %v3824, 6
        %v3827 = vshll.u32 %v3767, 16
        %v3829 = vrot.slane %v3827, 7
        %v3830 = vor.u32 %v3826, %v3829
        %v3831 = vsel %vm3803, %v3822, %v3830
        %v3832 = vrot.slane %v3830, 4
        %v3834 = vshrl.u32 %v3768, 16
        %v3836 = vrot.slane %v3834, 6
        %v3837 = vshll.u32 %v3768, 16
        %v3839 = vrot.slane %v3837, 7
        %v3840 = vor.u32 %v3836, %v3839
        %v3841 = vsel %vm3803, %v3832, %v3840
        %v3842 = vrot.slane %v3840, 4
        %v3844 = vshrl.u32 %v3769, 16
        %v3846 = vrot.slane %v3844, 6
        %v3847 = vshll.u32 %v3769, 16
        %v3849 = vrot.slane %v3847, 7
        %v3850 = vor.u32 %v3846, %v3849
        %v3851 = vsel %vm3803, %v3842, %v3850
        %v3852 = vrot.slane %v3850, 4
        %v3854 = vshrl.u32 %v3770, 16
        %v3856 = vrot.slane %v3854, 6
        %v3857 = vshll.u32 %v3770, 16
        %v3859 = vrot.slane %v3857, 7
        %v3860 = vor.u32 %v3856, %v3859
        %v3861 = vsel %vm3803, %v3852, %v3860
        %v3862 = vrot.slane %v3860, 4
        %v3864 = vshrl.u32 %v3771, 16
        %v3866 = vrot.slane %v3864, 6
        %v3867 = vshll.u32 %v3771, 16
        %v3869 = vrot.slane %v3867, 7
        %v3870 = vor.u32 %v3866, %v3869
        %v3871 = vsel %vm3803, %v3862, %v3870
        %v3872 = vrot.slane %v3870, 4
        %v3874 = vshrl.u32 %v3772, 16
        %v3876 = vrot.slane %v3874, 6
        %v3877 = vshll.u32 %v3772, 16
        %v3879 = vrot.slane %v3877, 7
        %v3880 = vor.u32 %v3876, %v3879
        %v3881 = vsel %vm3803, %v3872, %v3880
        %v3882 = vrot.slane %v3880, 4
        %v3884 = vshrl.u32 %v3773, 16
        %v3886 = vrot.slane %v3884, 6
        %v3887 = vshll.u32 %v3773, 16
        %v3889 = vrot.slane %v3887, 7
        %v3890 = vor.u32 %v3886, %v3889
        %v3891 = vsel %vm3803, %v3882, %v3890
        %v3892 = vrot.slane %v3890, 4
        %v3894 = vshrl.u32 %v3774, 16
        %v3896 = vrot.slane %v3894, 6
        %v3897 = vshll.u32 %v3774, 16
        %v3899 = vrot.slane %v3897, 7
        %v3900 = vor.u32 %v3896, %v3899
        %v3901 = vsel %vm3803, %v3892, %v3900
        %v3902 = vrot.slane %v3900, 4
        %v3904 = vshrl.u32 %v3775, 16
        %v3906 = vrot.slane %v3904, 6
        %v3907 = vshll.u32 %v3775, 16
        %v3909 = vrot.slane %v3907, 7
        %v3910 = vor.u32 %v3906, %v3909
        %v3911 = vsel %vm3803, %v3902, %v3910
        %v3912 = vrot.slane %v3910, 4
        %v3914 = vshrl.u32 %v3776, 16
        %v3916 = vrot.slane %v3914, 6
        %v3917 = vshll.u32 %v3776, 16
        %v3919 = vrot.slane %v3917, 7
        %v3920 = vor.u32 %v3916, %v3919
        %v3921 = vsel %vm3803, %v3912, %v3920
        %v3922 = vrot.slane %v3920, 4
        %v3924 = vshrl.u32 %v3777, 16
        %v3926 = vrot.slane %v3924, 6
        %v3927 = vshll.u32 %v3777, 16
        %v3929 = vrot.slane %v3927, 7
        %v3930 = vor.u32 %v3926, %v3929
        %v3931 = vsel %vm3803, %v3922, %v3930
        %v3932 = vrot.slane %v3930, 4
        %v3934 = vshrl.u32 %v3778, 16
        %v3936 = vrot.slane %v3934, 6
        %v3937 = vshll.u32 %v3778, 16
        %v3939 = vrot.slane %v3937, 7
        %v3940 = vor.u32 %v3936, %v3939
        %v3941 = vsel %vm3803, %v3932, %v3940
        %v3942 = vrot.slane %v3940, 4
        %v3944 = vshrl.u32 %v3779, 16
        %v3946 = vrot.slane %v3944, 6
        %v3947 = vshll.u32 %v3779, 16
        %v3949 = vrot.slane %v3947, 7
        %v3950 = vor.u32 %v3946, %v3949
        %v3951 = vsel %vm3803, %v3942, %v3950
        %v3952 = vrot.slane %v3950, 4
        %v3954 = vshrl.u32 %v3780, 16
        %v3956 = vrot.slane %v3954, 6
        %v3957 = vshll.u32 %v3780, 16
        %v3959 = vrot.slane %v3957, 7
        %v3960 = vor.u32 %v3956, %v3959
        %v3961 = vsel %vm3803, %v3952, %v3960
        %v3962 = vrot.slane %v3960, 4
        %v3964 = vshrl.u32 %v3781, 16
        %v3966 = vrot.slane %v3964, 6
        %v3967 = vshll.u32 %v3781, 16
        %v3969 = vrot.slane %v3967, 7
        %v3970 = vor.u32 %v3966, %v3969
        %v3971 = vsel %vm3803, %v3962, %v3970
        %v3972 = vrot.slane %v3970, 4
        %v3974 = vshrl.u32 %v3782, 16
        %v3976 = vrot.slane %v3974, 6
        %v3977 = vshll.u32 %v3782, 16
        %v3979 = vrot.slane %v3977, 7
        %v3980 = vor.u32 %v3976, %v3979
        %v3981 = vsel %vm3803, %v3972, %v3980
        %v3982 = vrot.slane %v3980, 4
        %v3984 = vshrl.u32 %v3783, 16
        %v3986 = vrot.slane %v3984, 6
        %v3987 = vshll.u32 %v3783, 16
        %v3989 = vrot.slane %v3987, 7
        %v3990 = vor.u32 %v3986, %v3989
        %v3991 = vsel %vm3803, %v3982, %v3990
        %v3992 = vrot.slane %v3990, 4
        %v3994 = vshrl.u32 %v3784, 16
        %v3996 = vrot.slane %v3994, 6
        %v3997 = vshll.u32 %v3784, 16
        %v3999 = vrot.slane %v3997, 7
        %v4000 = vor.u32 %v3996, %v3999
        %v4001 = vsel %vm3803, %v3992, %v4000
        %v4002 = vrot.slane %v4000, 4
        %v4004 = vshrl.u32 %v3785, 16
        %v4006 = vrot.slane %v4004, 6
        %v4007 = vshll.u32 %v3785, 16
        %v4009 = vrot.slane %v4007, 7
        %v4010 = vor.u32 %v4006, %v4009
        %v4011 = vsel %vm3803, %v4002, %v4010
        %v4012 = vrot.slane %v4010, 4
        %v4014 = vshrl.u32 %v3786, 16
        %v4016 = vrot.slane %v4014, 6
        %v4017 = vshll.u32 %v3786, 16
        %v4019 = vrot.slane %v4017, 7
        %v4020 = vor.u32 %v4016, %v4019
        %v4021 = vsel %vm3803, %v4012, %v4020
        %v4022 = vrot.slane %v4020, 4
        %v4024 = vshrl.u32 %v3787, 16
        %v4026 = vrot.slane %v4024, 6
        %v4027 = vshll.u32 %v3787, 16
        %v4029 = vrot.slane %v4027, 7
        %v4030 = vor.u32 %v4026, %v4029
        %v4031 = vsel %vm3803, %v4022, %v4030
        %v4032 = vrot.slane %v4030, 4
        %v4034 = vshrl.u32 %v3788, 16
        %v4036 = vrot.slane %v4034, 6
        %v4037 = vshll.u32 %v3788, 16
        %v4039 = vrot.slane %v4037, 7
        %v4040 = vor.u32 %v4036, %v4039
        %v4041 = vsel %vm3803, %v4032, %v4040
        %v4042 = vrot.slane %v4040, 4
        %v4044 = vshrl.u32 %v3789, 16
        %v4046 = vrot.slane %v4044, 6
        %v4047 = vshll.u32 %v3789, 16
        %v4049 = vrot.slane %v4047, 7
        %v4050 = vor.u32 %v4046, %v4049
        %v4051 = vsel %vm3803, %v4042, %v4050
        %v4052 = vrot.slane %v4050, 4
        %v4054 = vshrl.u32 %v3790, 16
        %v4056 = vrot.slane %v4054, 6
        %v4057 = vshll.u32 %v3790, 16
        %v4059 = vrot.slane %v4057, 7
        %v4060 = vor.u32 %v4056, %v4059
        %v4061 = vsel %vm3803, %v4052, %v4060
        %v4062 = vrot.slane %v4060, 4
        %v4064 = vshrl.u32 %v3791, 16
        %v4066 = vrot.slane %v4064, 6
        %v4067 = vshll.u32 %v3791, 16
        %v4069 = vrot.slane %v4067, 7
        %v4070 = vor.u32 %v4066, %v4069
        %v4071 = vsel %vm3803, %v4062, %v4070
        %v4072 = vrot.slane %v4070, 4
        %v4074 = vshrl.u32 %v3792, 16
        %v4076 = vrot.slane %v4074, 6
        %v4077 = vshll.u32 %v3792, 16
        %v4079 = vrot.slane %v4077, 7
        %v4080 = vor.u32 %v4076, %v4079
        %v4081 = vsel %vm3803, %v4072, %v4080
        %v4082 = vrot.slane %v4080, 4
        %v4084 = vshrl.u32 %v3793, 16
        %v4086 = vrot.slane %v4084, 6
        %v4087 = vshll.u32 %v3793, 16
        %v4089 = vrot.slane %v4087, 7
        %v4090 = vor.u32 %v4086, %v4089
        %v4091 = vsel %vm3803, %v4082, %v4090
        %v4092 = vrot.slane %v4090, 4
        %v4094 = vshrl.u32 %v3794, 16
        %v4096 = vrot.slane %v4094, 6
        %v4097 = vshll.u32 %v3794, 16
        %v4099 = vrot.slane %v4097, 7
        %v4100 = vor.u32 %v4096, %v4099
        %v4101 = vsel %vm3803, %v4092, %v4100
        %v4102 = vrot.slane %v4100, 4
        %v4104 = vshrl.u32 %v3795, 16
        %v4106 = vrot.slane %v4104, 6
        %v4107 = vshll.u32 %v3795, 16
        %v4109 = vrot.slane %v4107, 7
        %v4110 = vor.u32 %v4106, %v4109
        %v4111 = vsel %vm3803, %v4102, %v4110
        %v4112 = vrot.slane %v4110, 4
        %v4114 = vshrl.u32 %v3796, 16
        %v4116 = vrot.slane %v4114, 6
        %v4117 = vshll.u32 %v3796, 16
        %v4119 = vrot.slane %v4117, 7
        %v4120 = vor.u32 %v4116, %v4119
        %v4121 = vsel %vm3803, %v4112, %v4120
        %v4122 = vrot.slane %v4120, 4
        %v4124 = vshrl.u32 %v3797, 16
        %v4126 = vrot.slane %v4124, 6
        %v4127 = vshll.u32 %v3797, 16
        %v4129 = vrot.slane %v4127, 7
        %v4130 = vor.u32 %v4126, %v4129
        %v4131 = vsel %vm3803, %v4122, %v4130
        %v4132 = vrot.slane %v4130, 4
        %v4134 = vshrl.u32 %v3798, 16
        %v4136 = vrot.slane %v4134, 6
        %v4137 = vshll.u32 %v3798, 16
        %v4139 = vrot.slane %v4137, 7
        %v4140 = vor.u32 %v4136, %v4139
        %v4141 = vsel %vm3803, %v4132, %v4140
        %v4142 = vrot.slane %v4140, 4
        %v4144 = vshrl.u32 %v3799, 16
        %v4146 = vrot.slane %v4144, 6
        %v4147 = vshll.u32 %v3799, 16
        %v4149 = vrot.slane %v4147, 7
        %v4150 = vor.u32 %v4146, %v4149
        %v4151 = vsel %vm3803, %v4142, %v4150
        %v4152 = vrot.slane %v4150, 4
        %v4154 = vshrl.u32 %v3800, 16
        %v4156 = vrot.slane %v4154, 6
        %v4157 = vshll.u32 %v3800, 16
        %v4159 = vrot.slane %v4157, 7
        %v4160 = vor.u32 %v4156, %v4159
        %v4161 = vsel %vm3803, %v4152, %v4160
        %v4162 = vrot.slane %v4160, 4
        %vm4200 = vcmask 1043457
        %vm4201 = vsmask.f32 7942
        %vm4202 = vmand %vm4200, %vm4201
        %v4203 = vld [vmem:[#allocation3 + $0x8] sm:$0xe]
        %v4204 = vsel %vm4202, %v3811, %v4203
        %4205 = vst [vmem:[#allocation3 + $0x8] sm:$0xe] %v4204
        %4206 = vst [vmem:[#allocation3 + $0xc] sm:$0xf] %v3821
        %4207 = vst [vmem:[#allocation3 + $0x10] sm:$0xf] %v3831
        %4208 = vst [vmem:[#allocation3 + $0x14] sm:$0xf] %v3841
        %4209 = vst [vmem:[#allocation3 + $0x18] sm:$0xf] %v3851
        %4210 = vst [vmem:[#allocation3 + $0x1c] sm:$0xf] %v3861
        %4211 = vst [vmem:[#allocation3 + $0x20] sm:$0xf] %v3871
        %4212 = vst [vmem:[#allocation3 + $0x24] sm:$0xf] %v3881
        %4213 = vst [vmem:[#allocation3 + $0x28] sm:$0xf] %v3891
        %4214 = vst [vmem:[#allocation3 + $0x2c] sm:$0xf] %v3901
        %4215 = vst [vmem:[#allocation3 + $0x30] sm:$0xf] %v3911
        %4216 = vst [vmem:[#allocation3 + $0x34] sm:$0xf] %v3921
        %4217 = vst [vmem:[#allocation3 + $0x38] sm:$0xf] %v3931
        %4218 = vst [vmem:[#allocation3 + $0x3c] sm:$0xf] %v3941
        %4219 = vst [vmem:[#allocation3 + $0x40] sm:$0xf] %v3951
        %4220 = vst [vmem:[#allocation3 + $0x44] sm:$0xf] %v3961
        %4221 = vst [vmem:[#allocation3 + $0x48] sm:$0xf] %v3971
        %4222 = vst [vmem:[#allocation3 + $0x4c] sm:$0xf] %v3981
        %4223 = vst [vmem:[#allocation3 + $0x50] sm:$0xf] %v3991
        %4224 = vst [vmem:[#allocation3 + $0x54] sm:$0xf] %v4001
        %4225 = vst [vmem:[#allocation3 + $0x58] sm:$0xf] %v4011
        %4226 = vst [vmem:[#allocation3 + $0x5c] sm:$0xf] %v4021
        %4227 = vst [vmem:[#allocation3 + $0x60] sm:$0xf] %v4031
        %4228 = vst [vmem:[#allocation3 + $0x64] sm:$0xf] %v4041
        %4229 = vst [vmem:[#allocation3 + $0x68] sm:$0xf] %v4051
        %4230 = vst [vmem:[#allocation3 + $0x6c] sm:$0xf] %v4061
        %4231 = vst [vmem:[#allocation3 + $0x70] sm:$0xf] %v4071
        %4232 = vst [vmem:[#allocation3 + $0x74] sm:$0xf] %v4081
        %4233 = vst [vmem:[#allocation3 + $0x78] sm:$0xf] %v4091
        %4234 = vst [vmem:[#allocation3 + $0x7c] sm:$0xf] %v4101
        %4235 = vst [vmem:[#allocation3 + $0x80] sm:$0xf] %v4111
        %4236 = vst [vmem:[#allocation3 + $0x84] sm:$0xf] %v4121
        %4237 = vst [vmem:[#allocation3 + $0x88] sm:$0xf] %v4131
        %4238 = vst [vmem:[#allocation3 + $0x8c] sm:$0xf] %v4141
        %4239 = vst [vmem:[#allocation3 + $0x90] sm:$0xf] %v4151
        %4240 = vst [vmem:[#allocation3 + $0x94] sm:$0xf] %v4161
        %vm4241 = vcmask 1041408
        %vm4242 = vmand %vm4241, %vm3801
        %v4243 = vld [vmem:[#allocation3 + $0x98] sm:$0x3]
        %v4244 = vsel %vm4242, %v4162, %v4243
        %4245 = vst [vmem:[#allocation3 + $0x98] sm:$0x3] %v4244
        %v4246 = vld [vmem:[#allocation3] sm:$0xf]
        %v4247 = vld [vmem:[#allocation3 + $0x4] sm:$0xf]
        %v4248 = vld [vmem:[#allocation3 + $0x8] sm:$0xf]
        %v4249 = vld [vmem:[#allocation3 + $0xc] sm:$0xf]
        %v4250 = vld [vmem:[#allocation3 + $0x10] sm:$0xf]
        %v4251 = vld [vmem:[#allocation3 + $0x14] sm:$0xf]
        %v4252 = vld [vmem:[#allocation3 + $0x18] sm:$0xf]
        %v4253 = vld [vmem:[#allocation3 + $0x1c] sm:$0xf]
        %v4254 = vld [vmem:[#allocation3 + $0x20] sm:$0xf]
        %v4255 = vld [vmem:[#allocation3 + $0x24] sm:$0xf]
        %v4256 = vld [vmem:[#allocation3 + $0x28] sm:$0xf]
        %v4257 = vld [vmem:[#allocation3 + $0x2c] sm:$0xf]
        %v4258 = vld [vmem:[#allocation3 + $0x30] sm:$0xf]
        %v4259 = vld [vmem:[#allocation3 + $0x34] sm:$0xf]
        %v4260 = vld [vmem:[#allocation3 + $0x38] sm:$0xf]
        %v4261 = vld [vmem:[#allocation3 + $0x3c] sm:$0xf]
        %v4262 = vld [vmem:[#allocation3 + $0x40] sm:$0xf]
        %v4263 = vld [vmem:[#allocation3 + $0x44] sm:$0xf]
        %v4264 = vld [vmem:[#allocation3 + $0x48] sm:$0xf]
        %v4265 = vld [vmem:[#allocation3 + $0x4c] sm:$0xf]
        %v4266 = vld [vmem:[#allocation3 + $0x50] sm:$0xf]
        %v4267 = vld [vmem:[#allocation3 + $0x54] sm:$0xf]
        %v4268 = vld [vmem:[#allocation3 + $0x58] sm:$0xf]
        %v4269 = vld [vmem:[#allocation3 + $0x5c] sm:$0xf]
        %v4270 = vld [vmem:[#allocation3 + $0x60] sm:$0xf]
        %v4271 = vld [vmem:[#allocation3 + $0x64] sm:$0xf]
        %v4272 = vld [vmem:[#allocation3 + $0x68] sm:$0xf]
        %v4273 = vld [vmem:[#allocation3 + $0x6c] sm:$0xf]
        %v4274 = vld [vmem:[#allocation3 + $0x70] sm:$0xf]
        %v4275 = vld [vmem:[#allocation3 + $0x74] sm:$0xf]
        %v4276 = vld [vmem:[#allocation3 + $0x78] sm:$0xf]
        %v4277 = vld [vmem:[#allocation3 + $0x7c] sm:$0xf]
        %v4278 = vld [vmem:[#allocation3 + $0x80] sm:$0xf]
        %v4279 = vld [vmem:[#allocation3 + $0x84] sm:$0xf]
        %v4280 = vld [vmem:[#allocation3 + $0x88] sm:$0xf]
        %v4281 = vld [vmem:[#allocation3 + $0x8c] sm:$0xf]
        %s4282 = scalar_lea.vmem [#allocation5], 576
        %v4283 = vld [vmem:[%s4282] sm:$0xf]
        %v4284 = vld [vmem:[%s4282 + $0x4] sm:$0xf]
        %v4285 = vld [vmem:[%s4282 + $0x8] sm:$0xf]
        %v4286 = vld [vmem:[%s4282 + $0xc] sm:$0xf]
        %v4287 = vld [vmem:[%s4282 + $0x10] sm:$0xf]
        %v4288 = vld [vmem:[%s4282 + $0x14] sm:$0xf]
        %v4289 = vld [vmem:[%s4282 + $0x18] sm:$0xf]
        %v4290 = vld [vmem:[%s4282 + $0x1c] sm:$0xf]
        %v4291 = vld [vmem:[%s4282 + $0x20] sm:$0xf]
        %v4292 = vld [vmem:[%s4282 + $0x24] sm:$0xf]
        %v4293 = vld [vmem:[%s4282 + $0x28] sm:$0xf]
        %v4294 = vld [vmem:[%s4282 + $0x2c] sm:$0xf]
        %v4295 = vld [vmem:[%s4282 + $0x30] sm:$0xf]
        %v4296 = vld [vmem:[%s4282 + $0x34] sm:$0xf]
        %v4297 = vld [vmem:[%s4282 + $0x38] sm:$0xf]
        %v4298 = vld [vmem:[%s4282 + $0x3c] sm:$0xf]
        %v4299 = vld [vmem:[#allocation3 + $0x90] sm:$0x1]
        %s4300 = scalar_lea.vmem [#allocation5], 640
        %v4301 = vld [vmem:[%s4300] sm:$0xf]
        %v4302 = vld [vmem:[%s4300 + $0x4] sm:$0xf]
        %v4303 = vld [vmem:[%s4300 + $0x8] sm:$0xf]
        %v4304 = vld [vmem:[%s4300 + $0xc] sm:$0xf]
        %v4305 = vld [vmem:[%s4300 + $0x10] sm:$0xf]
        %v4306 = vld [vmem:[%s4300 + $0x14] sm:$0xf]
        %v4307 = vld [vmem:[%s4300 + $0x18] sm:$0xf]
        %v4308 = vld [vmem:[%s4300 + $0x1c] sm:$0xf]
        %v4309 = vld [vmem:[%s4300 + $0x20] sm:$0xf]
        %v4310 = vld [vmem:[%s4300 + $0x24] sm:$0xf]
        %v4311 = vld [vmem:[%s4300 + $0x28] sm:$0xf]
        %v4312 = vld [vmem:[%s4300 + $0x2c] sm:$0xf]
        %v4313 = vld [vmem:[%s4300 + $0x30] sm:$0xf]
        %v4314 = vld [vmem:[%s4300 + $0x34] sm:$0xf]
        %v4315 = vld [vmem:[%s4300 + $0x38] sm:$0xf]
        %v4316 = vld [vmem:[%s4300 + $0x3c] sm:$0xf]
        %v4354 = vunpack.c.l.b16 %v4246
        %v4355 = vunpack.c.l.b16 %v4247
        %v4356 = vunpack.c.l.b16 %v4248
        %v4357 = vunpack.c.l.b16 %v4249
        %v4358 = vunpack.c.l.b16 %v4250
        %v4359 = vunpack.c.l.b16 %v4251
        %v4360 = vunpack.c.l.b16 %v4252
        %v4361 = vunpack.c.l.b16 %v4253
        %v4362 = vunpack.c.l.b16 %v4254
        %v4363 = vunpack.c.l.b16 %v4255
        %v4364 = vunpack.c.l.b16 %v4256
        %v4365 = vunpack.c.l.b16 %v4257
        %v4366 = vunpack.c.l.b16 %v4258
        %v4367 = vunpack.c.l.b16 %v4259
        %v4368 = vunpack.c.l.b16 %v4260
        %v4369 = vunpack.c.l.b16 %v4261
        %v4370 = vunpack.c.l.b16 %v4262
        %v4371 = vunpack.c.l.b16 %v4263
        %v4372 = vunpack.c.l.b16 %v4264
        %v4373 = vunpack.c.l.b16 %v4265
        %v4374 = vunpack.c.l.b16 %v4266
        %v4375 = vunpack.c.l.b16 %v4267
        %v4376 = vunpack.c.l.b16 %v4268
        %v4377 = vunpack.c.l.b16 %v4269
        %v4378 = vunpack.c.l.b16 %v4270
        %v4379 = vunpack.c.l.b16 %v4271
        %v4380 = vunpack.c.l.b16 %v4272
        %v4381 = vunpack.c.l.b16 %v4273
        %v4382 = vunpack.c.l.b16 %v4274
        %v4383 = vunpack.c.l.b16 %v4275
        %v4384 = vunpack.c.l.b16 %v4276
        %v4385 = vunpack.c.l.b16 %v4277
        %v4386 = vunpack.c.l.b16 %v4278
        %v4387 = vunpack.c.l.b16 %v4279
        %v4388 = vunpack.c.l.b16 %v4280
        %v4389 = vunpack.c.l.b16 %v4281
        %v4390 = vunpack.c.l.b16 %v4299
        %v4391 = vpack.c.b16 %v4355, %v4354
        %v4392 = vpack.c.b16 %v4357, %v4356
        %v4393 = vpack.c.b16 %v4359, %v4358
        %v4394 = vpack.c.b16 %v4361, %v4360
        %v4395 = vpack.c.b16 %v4363, %v4362
        %v4396 = vpack.c.b16 %v4365, %v4364
        %v4397 = vpack.c.b16 %v4367, %v4366
        %v4398 = vpack.c.b16 %v4369, %v4368
        %v4399 = vpack.c.b16 %v4371, %v4370
        %v4400 = vpack.c.b16 %v4373, %v4372
        %v4401 = vpack.c.b16 %v4375, %v4374
        %v4402 = vpack.c.b16 %v4377, %v4376
        %v4403 = vpack.c.b16 %v4379, %v4378
        %v4404 = vpack.c.b16 %v4381, %v4380
        %v4405 = vpack.c.b16 %v4383, %v4382
        %v4406 = vpack.c.b16 %v4385, %v4384
        %v4407 = vpack.c.b16 %v4387, %v4386
        %v4408 = vpack.c.b16 %v4389, %v4388
        %v4409 = vpack.c.b16 %v4390, %v4390
        %v4411 = vshrl.u32 %v4391, 16
        %v4413 = vshll.u32 %v4391, 16
        %v4415 = vrot.slane %v4413, 1
        %v4416 = vor.u32 %v4411, %v4415
        %v4418 = vshll.u32 %v4392, 16
        %v4420 = vrot.slane %v4418, 1
        %v4421 = vsel %vm581, %v4416, %v4420
        %v4422 = vshrl.u32 %v4392, 16
        %v4424 = vor.u32 %v4422, %v4420
        %v4426 = vshll.u32 %v4393, 16
        %v4428 = vrot.slane %v4426, 1
        %v4429 = vsel %vm581, %v4424, %v4428
        %v4430 = vshrl.u32 %v4393, 16
        %v4432 = vor.u32 %v4430, %v4428
        %v4434 = vshll.u32 %v4394, 16
        %v4436 = vrot.slane %v4434, 1
        %v4437 = vsel %vm581, %v4432, %v4436
        %v4438 = vshrl.u32 %v4394, 16
        %v4440 = vor.u32 %v4438, %v4436
        %v4442 = vshll.u32 %v4395, 16
        %v4444 = vrot.slane %v4442, 1
        %v4445 = vsel %vm581, %v4440, %v4444
        %v4446 = vshrl.u32 %v4395, 16
        %v4448 = vor.u32 %v4446, %v4444
        %v4450 = vshll.u32 %v4396, 16
        %v4452 = vrot.slane %v4450, 1
        %v4453 = vsel %vm581, %v4448, %v4452
        %v4454 = vshrl.u32 %v4396, 16
        %v4456 = vor.u32 %v4454, %v4452
        %v4458 = vshll.u32 %v4397, 16
        %v4460 = vrot.slane %v4458, 1
        %v4461 = vsel %vm581, %v4456, %v4460
        %v4462 = vshrl.u32 %v4397, 16
        %v4464 = vor.u32 %v4462, %v4460
        %v4466 = vshll.u32 %v4398, 16
        %v4468 = vrot.slane %v4466, 1
        %v4469 = vsel %vm581, %v4464, %v4468
        %v4470 = vshrl.u32 %v4398, 16
        %v4472 = vor.u32 %v4470, %v4468
        %v4474 = vshll.u32 %v4399, 16
        %v4476 = vrot.slane %v4474, 1
        %v4477 = vsel %vm581, %v4472, %v4476
        %v4478 = vshrl.u32 %v4399, 16
        %v4480 = vor.u32 %v4478, %v4476
        %v4482 = vshll.u32 %v4400, 16
        %v4484 = vrot.slane %v4482, 1
        %v4485 = vsel %vm581, %v4480, %v4484
        %v4486 = vshrl.u32 %v4400, 16
        %v4488 = vor.u32 %v4486, %v4484
        %v4490 = vshll.u32 %v4401, 16
        %v4492 = vrot.slane %v4490, 1
        %v4493 = vsel %vm581, %v4488, %v4492
        %v4494 = vshrl.u32 %v4401, 16
        %v4496 = vor.u32 %v4494, %v4492
        %v4498 = vshll.u32 %v4402, 16
        %v4500 = vrot.slane %v4498, 1
        %v4501 = vsel %vm581, %v4496, %v4500
        %v4502 = vshrl.u32 %v4402, 16
        %v4504 = vor.u32 %v4502, %v4500
        %v4506 = vshll.u32 %v4403, 16
        %v4508 = vrot.slane %v4506, 1
        %v4509 = vsel %vm581, %v4504, %v4508
        %v4510 = vshrl.u32 %v4403, 16
        %v4512 = vor.u32 %v4510, %v4508
        %v4514 = vshll.u32 %v4404, 16
        %v4516 = vrot.slane %v4514, 1
        %v4517 = vsel %vm581, %v4512, %v4516
        %v4518 = vshrl.u32 %v4404, 16
        %v4520 = vor.u32 %v4518, %v4516
        %v4522 = vshll.u32 %v4405, 16
        %v4524 = vrot.slane %v4522, 1
        %v4525 = vsel %vm581, %v4520, %v4524
        %v4526 = vshrl.u32 %v4405, 16
        %v4528 = vor.u32 %v4526, %v4524
        %v4530 = vshll.u32 %v4406, 16
        %v4532 = vrot.slane %v4530, 1
        %v4533 = vsel %vm581, %v4528, %v4532
        %v4534 = vshrl.u32 %v4406, 16
        %v4536 = vor.u32 %v4534, %v4532
        %v4538 = vshll.u32 %v4407, 16
        %v4540 = vrot.slane %v4538, 1
        %v4541 = vsel %vm581, %v4536, %v4540
        %v4542 = vshrl.u32 %v4407, 16
        %v4544 = vor.u32 %v4542, %v4540
        %v4546 = vshll.u32 %v4408, 16
        %v4548 = vrot.slane %v4546, 1
        %v4549 = vsel %vm581, %v4544, %v4548
        %v4550 = vshrl.u32 %v4408, 16
        %v4552 = vor.u32 %v4550, %v4548
        %v4554 = vshll.u32 %v4409, 16
        %v4556 = vrot.slane %v4554, 1
        %v4557 = vsel %vm581, %v4552, %v4556
        %v4592 = vunpack.c.l.b16 %v4301
        %v4593 = vunpack.c.l.b16 %v4302
        %v4594 = vunpack.c.l.b16 %v4303
        %v4595 = vunpack.c.l.b16 %v4304
        %v4596 = vunpack.c.l.b16 %v4305
        %v4597 = vunpack.c.l.b16 %v4306
        %v4598 = vunpack.c.l.b16 %v4307
        %v4599 = vunpack.c.l.b16 %v4308
        %v4600 = vunpack.c.l.b16 %v4309
        %v4601 = vunpack.c.l.b16 %v4310
        %v4602 = vunpack.c.l.b16 %v4311
        %v4603 = vunpack.c.l.b16 %v4312
        %v4604 = vunpack.c.l.b16 %v4313
        %v4605 = vunpack.c.l.b16 %v4314
        %v4606 = vunpack.c.l.b16 %v4315
        %v4607 = vunpack.c.l.b16 %v4316
        %v4608 = vpack.c.b16 %v4593, %v4592
        %v4609 = vpack.c.b16 %v4595, %v4594
        %v4610 = vpack.c.b16 %v4597, %v4596
        %v4611 = vpack.c.b16 %v4599, %v4598
        %v4612 = vpack.c.b16 %v4601, %v4600
        %v4613 = vpack.c.b16 %v4603, %v4602
        %v4614 = vpack.c.b16 %v4605, %v4604
        %v4615 = vpack.c.b16 %v4607, %v4606
        %4624 = vmatpush.bf16.msra.mxu0 %v4615
        %4625 = vmatpush.bf16.msra.mxu0 %v4614
        %4626 = vmatpush.bf16.msra.mxu0 %v4613
        %4627 = vmatpush.bf16.msra.mxu0 %v4612
        %4628 = vmatpush.bf16.msra.mxu0 %v4611
        %4629 = vmatpush.bf16.msra.mxu0 %v4610
        %4630 = vmatpush.bf16.msra.mxu0 %v4609
        %4631 = vmatpush.bf16.msra.mxu0 %v4608
        %4632 = vmatmul.bf16.gmra.mxu0 %v4421
        %v4633 = vpop.f32.mrf.mxu0
        %v4634 = vadd.f32 0.0, %v4633
        %v4635 = vpop.f32.mrf.mxu0
        %v4636 = vadd.f32 0.0, %v4635
        %4637 = vmatmul.bf16.gmra.mxu0 %v4429
        %v4638 = vpop.f32.mrf.mxu0
        %v4639 = vadd.f32 0.0, %v4638
        %v4640 = vpop.f32.mrf.mxu0
        %v4641 = vadd.f32 0.0, %v4640
        %4642 = vmatmul.bf16.gmra.mxu0 %v4437
        %v4643 = vpop.f32.mrf.mxu0
        %v4644 = vadd.f32 0.0, %v4643
        %v4645 = vpop.f32.mrf.mxu0
        %v4646 = vadd.f32 0.0, %v4645
        %4647 = vmatmul.bf16.gmra.mxu0 %v4445
        %v4648 = vpop.f32.mrf.mxu0
        %v4649 = vadd.f32 0.0, %v4648
        %v4650 = vpop.f32.mrf.mxu0
        %v4651 = vadd.f32 0.0, %v4650
        %4652 = vmatmul.bf16.gmra.mxu0 %v4453
        %v4653 = vpop.f32.mrf.mxu0
        %v4654 = vadd.f32 0.0, %v4653
        %v4655 = vpop.f32.mrf.mxu0
        %v4656 = vadd.f32 0.0, %v4655
        %4657 = vmatmul.bf16.gmra.mxu0 %v4461
        %v4658 = vpop.f32.mrf.mxu0
        %v4659 = vadd.f32 0.0, %v4658
        %v4660 = vpop.f32.mrf.mxu0
        %v4661 = vadd.f32 0.0, %v4660
        %4662 = vmatmul.bf16.gmra.mxu0 %v4469
        %v4663 = vpop.f32.mrf.mxu0
        %v4664 = vadd.f32 0.0, %v4663
        %v4665 = vpop.f32.mrf.mxu0
        %v4666 = vadd.f32 0.0, %v4665
        %4667 = vmatmul.bf16.gmra.mxu0 %v4477
        %v4668 = vpop.f32.mrf.mxu0
        %v4669 = vadd.f32 0.0, %v4668
        %v4670 = vpop.f32.mrf.mxu0
        %v4671 = vadd.f32 0.0, %v4670
        %4672 = vmatmul.bf16.gmra.mxu0 %v4485
        %v4673 = vpop.f32.mrf.mxu0
        %v4674 = vadd.f32 0.0, %v4673
        %v4675 = vpop.f32.mrf.mxu0
        %v4676 = vadd.f32 0.0, %v4675
        %4677 = vmatmul.bf16.gmra.mxu0 %v4493
        %v4678 = vpop.f32.mrf.mxu0
        %v4679 = vadd.f32 0.0, %v4678
        %v4680 = vpop.f32.mrf.mxu0
        %v4681 = vadd.f32 0.0, %v4680
        %4682 = vmatmul.bf16.gmra.mxu0 %v4501
        %v4683 = vpop.f32.mrf.mxu0
        %v4684 = vadd.f32 0.0, %v4683
        %v4685 = vpop.f32.mrf.mxu0
        %v4686 = vadd.f32 0.0, %v4685
        %4687 = vmatmul.bf16.gmra.mxu0 %v4509
        %v4688 = vpop.f32.mrf.mxu0
        %v4689 = vadd.f32 0.0, %v4688
        %v4690 = vpop.f32.mrf.mxu0
        %v4691 = vadd.f32 0.0, %v4690
        %4692 = vmatmul.bf16.gmra.mxu0 %v4517
        %v4693 = vpop.f32.mrf.mxu0
        %v4694 = vadd.f32 0.0, %v4693
        %v4695 = vpop.f32.mrf.mxu0
        %v4696 = vadd.f32 0.0, %v4695
        %4697 = vmatmul.bf16.gmra.mxu0 %v4525
        %v4698 = vpop.f32.mrf.mxu0
        %v4699 = vadd.f32 0.0, %v4698
        %v4700 = vpop.f32.mrf.mxu0
        %v4701 = vadd.f32 0.0, %v4700
        %4702 = vmatmul.bf16.gmra.mxu0 %v4533
        %v4703 = vpop.f32.mrf.mxu0
        %v4704 = vadd.f32 0.0, %v4703
        %v4705 = vpop.f32.mrf.mxu0
        %v4706 = vadd.f32 0.0, %v4705
        %4707 = vmatmul.bf16.gmra.mxu0 %v4541
        %v4708 = vpop.f32.mrf.mxu0
        %v4709 = vadd.f32 0.0, %v4708
        %v4710 = vpop.f32.mrf.mxu0
        %v4711 = vadd.f32 0.0, %v4710
        %4712 = vmatmul.bf16.gmra.mxu0 %v4549
        %v4713 = vpop.f32.mrf.mxu0
        %v4714 = vadd.f32 0.0, %v4713
        %v4715 = vpop.f32.mrf.mxu0
        %v4716 = vadd.f32 0.0, %v4715
        %4717 = vmatmul.bf16.gmra.mxu0 %v4557
        %v4718 = vpop.f32.mrf.mxu0
        %v4719 = vadd.f32 0.0, %v4718
        %v4720 = vpop.f32.mrf.mxu0
        %v4721 = vadd.f32 0.0, %v4720
        %4722 = vdwg.mxu0
        %v4757 = vunpack.c.l.b16 %v4283
        %v4758 = vunpack.c.l.b16 %v4284
        %v4759 = vunpack.c.l.b16 %v4285
        %v4760 = vunpack.c.l.b16 %v4286
        %v4761 = vunpack.c.l.b16 %v4287
        %v4762 = vunpack.c.l.b16 %v4288
        %v4763 = vunpack.c.l.b16 %v4289
        %v4764 = vunpack.c.l.b16 %v4290
        %v4765 = vunpack.c.l.b16 %v4291
        %v4766 = vunpack.c.l.b16 %v4292
        %v4767 = vunpack.c.l.b16 %v4293
        %v4768 = vunpack.c.l.b16 %v4294
        %v4769 = vunpack.c.l.b16 %v4295
        %v4770 = vunpack.c.l.b16 %v4296
        %v4771 = vunpack.c.l.b16 %v4297
        %v4772 = vunpack.c.l.b16 %v4298
        %v4773 = vpack.c.b16 %v4758, %v4757
        %v4774 = vpack.c.b16 %v4760, %v4759
        %v4775 = vpack.c.b16 %v4762, %v4761
        %v4776 = vpack.c.b16 %v4764, %v4763
        %v4777 = vpack.c.b16 %v4766, %v4765
        %v4778 = vpack.c.b16 %v4768, %v4767
        %v4779 = vpack.c.b16 %v4770, %v4769
        %v4780 = vpack.c.b16 %v4772, %v4771
        %4789 = vmatpush.bf16.msra.mxu0 %v4780
        %4790 = vmatpush.bf16.msra.mxu0 %v4779
        %4791 = vmatpush.bf16.msra.mxu0 %v4778
        %4792 = vmatpush.bf16.msra.mxu0 %v4777
        %4793 = vmatpush.bf16.msra.mxu0 %v4776
        %4794 = vmatpush.bf16.msra.mxu0 %v4775
        %4795 = vmatpush.bf16.msra.mxu0 %v4774
        %4796 = vmatpush.bf16.msra.mxu0 %v4773
        %4797 = vmatmul.bf16.gmra.mxu0 %v4391
        %v4798 = vpop.f32.mrf.mxu0
        %v4799 = vadd.f32 %v4634, %v4798
        %v4800 = vpop.f32.mrf.mxu0
        %v4801 = vadd.f32 %v4636, %v4800
        %4802 = vmatmul.bf16.gmra.mxu0 %v4392
        %v4803 = vpop.f32.mrf.mxu0
        %v4804 = vadd.f32 %v4639, %v4803
        %v4805 = vpop.f32.mrf.mxu0
        %v4806 = vadd.f32 %v4641, %v4805
        %4807 = vmatmul.bf16.gmra.mxu0 %v4393
        %v4808 = vpop.f32.mrf.mxu0
        %v4809 = vadd.f32 %v4644, %v4808
        %v4810 = vpop.f32.mrf.mxu0
        %v4811 = vadd.f32 %v4646, %v4810
        %4812 = vmatmul.bf16.gmra.mxu0 %v4394
        %v4813 = vpop.f32.mrf.mxu0
        %v4814 = vadd.f32 %v4649, %v4813
        %v4815 = vpop.f32.mrf.mxu0
        %v4816 = vadd.f32 %v4651, %v4815
        %4817 = vmatmul.bf16.gmra.mxu0 %v4395
        %v4818 = vpop.f32.mrf.mxu0
        %v4819 = vadd.f32 %v4654, %v4818
        %v4820 = vpop.f32.mrf.mxu0
        %v4821 = vadd.f32 %v4656, %v4820
        %4822 = vmatmul.bf16.gmra.mxu0 %v4396
        %v4823 = vpop.f32.mrf.mxu0
        %v4824 = vadd.f32 %v4659, %v4823
        %v4825 = vpop.f32.mrf.mxu0
        %v4826 = vadd.f32 %v4661, %v4825
        %4827 = vmatmul.bf16.gmra.mxu0 %v4397
        %v4828 = vpop.f32.mrf.mxu0
        %v4829 = vadd.f32 %v4664, %v4828
        %v4830 = vpop.f32.mrf.mxu0
        %v4831 = vadd.f32 %v4666, %v4830
        %4832 = vmatmul.bf16.gmra.mxu0 %v4398
        %v4833 = vpop.f32.mrf.mxu0
        %v4834 = vadd.f32 %v4669, %v4833
        %v4835 = vpop.f32.mrf.mxu0
        %v4836 = vadd.f32 %v4671, %v4835
        %4837 = vmatmul.bf16.gmra.mxu0 %v4399
        %v4838 = vpop.f32.mrf.mxu0
        %v4839 = vadd.f32 %v4674, %v4838
        %v4840 = vpop.f32.mrf.mxu0
        %v4841 = vadd.f32 %v4676, %v4840
        %4842 = vmatmul.bf16.gmra.mxu0 %v4400
        %v4843 = vpop.f32.mrf.mxu0
        %v4844 = vadd.f32 %v4679, %v4843
        %v4845 = vpop.f32.mrf.mxu0
        %v4846 = vadd.f32 %v4681, %v4845
        %4847 = vmatmul.bf16.gmra.mxu0 %v4401
        %v4848 = vpop.f32.mrf.mxu0
        %v4849 = vadd.f32 %v4684, %v4848
        %v4850 = vpop.f32.mrf.mxu0
        %v4851 = vadd.f32 %v4686, %v4850
        %4852 = vmatmul.bf16.gmra.mxu0 %v4402
        %v4853 = vpop.f32.mrf.mxu0
        %v4854 = vadd.f32 %v4689, %v4853
        %v4855 = vpop.f32.mrf.mxu0
        %v4856 = vadd.f32 %v4691, %v4855
        %4857 = vmatmul.bf16.gmra.mxu0 %v4403
        %v4858 = vpop.f32.mrf.mxu0
        %v4859 = vadd.f32 %v4694, %v4858
        %v4860 = vpop.f32.mrf.mxu0
        %v4861 = vadd.f32 %v4696, %v4860
        %4862 = vmatmul.bf16.gmra.mxu0 %v4404
        %v4863 = vpop.f32.mrf.mxu0
        %v4864 = vadd.f32 %v4699, %v4863
        %v4865 = vpop.f32.mrf.mxu0
        %v4866 = vadd.f32 %v4701, %v4865
        %4867 = vmatmul.bf16.gmra.mxu0 %v4405
        %v4868 = vpop.f32.mrf.mxu0
        %v4869 = vadd.f32 %v4704, %v4868
        %v4870 = vpop.f32.mrf.mxu0
        %v4871 = vadd.f32 %v4706, %v4870
        %4872 = vmatmul.bf16.gmra.mxu0 %v4406
        %v4873 = vpop.f32.mrf.mxu0
        %v4874 = vadd.f32 %v4709, %v4873
        %v4875 = vpop.f32.mrf.mxu0
        %v4876 = vadd.f32 %v4711, %v4875
        %4877 = vmatmul.bf16.gmra.mxu0 %v4407
        %v4878 = vpop.f32.mrf.mxu0
        %v4879 = vadd.f32 %v4714, %v4878
        %v4880 = vpop.f32.mrf.mxu0
        %v4881 = vadd.f32 %v4716, %v4880
        %4882 = vmatmul.bf16.gmra.mxu0 %v4408
        %v4883 = vpop.f32.mrf.mxu0
        %v4884 = vadd.f32 %v4719, %v4883
        %v4885 = vpop.f32.mrf.mxu0
        %v4886 = vadd.f32 %v4721, %v4885
        %4887 = vdwg.mxu0
        %v4888 = vld [vmem:[#allocation3] sm:$0xe]
        %s4889 = scalar_lea.vmem [#allocation5], 704
        %v4890 = vld [vmem:[%s4889] sm:$0xf]
        %v4891 = vld [vmem:[%s4889 + $0x4] sm:$0xf]
        %v4892 = vld [vmem:[%s4889 + $0x8] sm:$0xf]
        %v4893 = vld [vmem:[%s4889 + $0xc] sm:$0xf]
        %v4894 = vld [vmem:[%s4889 + $0x10] sm:$0xf]
        %v4895 = vld [vmem:[%s4889 + $0x14] sm:$0xf]
        %v4896 = vld [vmem:[%s4889 + $0x18] sm:$0xf]
        %v4897 = vld [vmem:[%s4889 + $0x1c] sm:$0xf]
        %v4898 = vld [vmem:[%s4889 + $0x20] sm:$0xf]
        %v4899 = vld [vmem:[%s4889 + $0x24] sm:$0xf]
        %v4900 = vld [vmem:[%s4889 + $0x28] sm:$0xf]
        %v4901 = vld [vmem:[%s4889 + $0x2c] sm:$0xf]
        %v4902 = vld [vmem:[%s4889 + $0x30] sm:$0xf]
        %v4903 = vld [vmem:[%s4889 + $0x34] sm:$0xf]
        %v4904 = vld [vmem:[%s4889 + $0x38] sm:$0xf]
        %v4905 = vld [vmem:[%s4889 + $0x3c] sm:$0xf]
        %v4907 = vunpack.c.l.b16 %v4888
        %v4908 = vpack.c.b16 %v4355, %v4907
        %v4909 = vrot.slane %v4908, 1
        %v4910 = vrot.slane %v4392, 1
        %v4911 = vsel %vm1081, %v4909, %v4910
        %v4912 = vrot.slane %v4393, 1
        %v4913 = vsel %vm1081, %v4910, %v4912
        %v4914 = vrot.slane %v4394, 1
        %v4915 = vsel %vm1081, %v4912, %v4914
        %v4916 = vrot.slane %v4395, 1
        %v4917 = vsel %vm1081, %v4914, %v4916
        %v4918 = vrot.slane %v4396, 1
        %v4919 = vsel %vm1081, %v4916, %v4918
        %v4920 = vrot.slane %v4397, 1
        %v4921 = vsel %vm1081, %v4918, %v4920
        %v4922 = vrot.slane %v4398, 1
        %v4923 = vsel %vm1081, %v4920, %v4922
        %v4924 = vrot.slane %v4399, 1
        %v4925 = vsel %vm1081, %v4922, %v4924
        %v4926 = vrot.slane %v4400, 1
        %v4927 = vsel %vm1081, %v4924, %v4926
        %v4928 = vrot.slane %v4401, 1
        %v4929 = vsel %vm1081, %v4926, %v4928
        %v4930 = vrot.slane %v4402, 1
        %v4931 = vsel %vm1081, %v4928, %v4930
        %v4932 = vrot.slane %v4403, 1
        %v4933 = vsel %vm1081, %v4930, %v4932
        %v4934 = vrot.slane %v4404, 1
        %v4935 = vsel %vm1081, %v4932, %v4934
        %v4936 = vrot.slane %v4405, 1
        %v4937 = vsel %vm1081, %v4934, %v4936
        %v4938 = vrot.slane %v4406, 1
        %v4939 = vsel %vm1081, %v4936, %v4938
        %v4940 = vrot.slane %v4407, 1
        %v4941 = vsel %vm1081, %v4938, %v4940
        %v4942 = vrot.slane %v4408, 1
        %v4943 = vsel %vm1081, %v4940, %v4942
        %v4944 = vrot.slane %v4409, 1
        %v4945 = vsel %vm1081, %v4942, %v4944
        %v4980 = vunpack.c.l.b16 %v4890
        %v4981 = vunpack.c.l.b16 %v4891
        %v4982 = vunpack.c.l.b16 %v4892
        %v4983 = vunpack.c.l.b16 %v4893
        %v4984 = vunpack.c.l.b16 %v4894
        %v4985 = vunpack.c.l.b16 %v4895
        %v4986 = vunpack.c.l.b16 %v4896
        %v4987 = vunpack.c.l.b16 %v4897
        %v4988 = vunpack.c.l.b16 %v4898
        %v4989 = vunpack.c.l.b16 %v4899
        %v4990 = vunpack.c.l.b16 %v4900
        %v4991 = vunpack.c.l.b16 %v4901
        %v4992 = vunpack.c.l.b16 %v4902
        %v4993 = vunpack.c.l.b16 %v4903
        %v4994 = vunpack.c.l.b16 %v4904
        %v4995 = vunpack.c.l.b16 %v4905
        %v4996 = vpack.c.b16 %v4981, %v4980
        %v4997 = vpack.c.b16 %v4983, %v4982
        %v4998 = vpack.c.b16 %v4985, %v4984
        %v4999 = vpack.c.b16 %v4987, %v4986
        %v5000 = vpack.c.b16 %v4989, %v4988
        %v5001 = vpack.c.b16 %v4991, %v4990
        %v5002 = vpack.c.b16 %v4993, %v4992
        %v5003 = vpack.c.b16 %v4995, %v4994
        %5012 = vmatpush.bf16.msra.mxu0 %v5003
        %5013 = vmatpush.bf16.msra.mxu0 %v5002
        %5014 = vmatpush.bf16.msra.mxu0 %v5001
        %5015 = vmatpush.bf16.msra.mxu0 %v5000
        %5016 = vmatpush.bf16.msra.mxu0 %v4999
        %5017 = vmatpush.bf16.msra.mxu0 %v4998
        %5018 = vmatpush.bf16.msra.mxu0 %v4997
        %5019 = vmatpush.bf16.msra.mxu0 %v4996
        %5020 = vmatmul.bf16.gmra.mxu0 %v4911
        %v5021 = vpop.f32.mrf.mxu0
        %v5022 = vadd.f32 0.0, %v5021
        %v5023 = vpop.f32.mrf.mxu0
        %v5024 = vadd.f32 0.0, %v5023
        %5025 = vmatmul.bf16.gmra.mxu0 %v4913
        %v5026 = vpop.f32.mrf.mxu0
        %v5027 = vadd.f32 0.0, %v5026
        %v5028 = vpop.f32.mrf.mxu0
        %v5029 = vadd.f32 0.0, %v5028
        %5030 = vmatmul.bf16.gmra.mxu0 %v4915
        %v5031 = vpop.f32.mrf.mxu0
        %v5032 = vadd.f32 0.0, %v5031
        %v5033 = vpop.f32.mrf.mxu0
        %v5034 = vadd.f32 0.0, %v5033
        %5035 = vmatmul.bf16.gmra.mxu0 %v4917
        %v5036 = vpop.f32.mrf.mxu0
        %v5037 = vadd.f32 0.0, %v5036
        %v5038 = vpop.f32.mrf.mxu0
        %v5039 = vadd.f32 0.0, %v5038
        %5040 = vmatmul.bf16.gmra.mxu0 %v4919
        %v5041 = vpop.f32.mrf.mxu0
        %v5042 = vadd.f32 0.0, %v5041
        %v5043 = vpop.f32.mrf.mxu0
        %v5044 = vadd.f32 0.0, %v5043
        %5045 = vmatmul.bf16.gmra.mxu0 %v4921
        %v5046 = vpop.f32.mrf.mxu0
        %v5047 = vadd.f32 0.0, %v5046
        %v5048 = vpop.f32.mrf.mxu0
        %v5049 = vadd.f32 0.0, %v5048
        %5050 = vmatmul.bf16.gmra.mxu0 %v4923
        %v5051 = vpop.f32.mrf.mxu0
        %v5052 = vadd.f32 0.0, %v5051
        %v5053 = vpop.f32.mrf.mxu0
        %v5054 = vadd.f32 0.0, %v5053
        %5055 = vmatmul.bf16.gmra.mxu0 %v4925
        %v5056 = vpop.f32.mrf.mxu0
        %v5057 = vadd.f32 0.0, %v5056
        %v5058 = vpop.f32.mrf.mxu0
        %v5059 = vadd.f32 0.0, %v5058
        %5060 = vmatmul.bf16.gmra.mxu0 %v4927
        %v5061 = vpop.f32.mrf.mxu0
        %v5062 = vadd.f32 0.0, %v5061
        %v5063 = vpop.f32.mrf.mxu0
        %v5064 = vadd.f32 0.0, %v5063
        %5065 = vmatmul.bf16.gmra.mxu0 %v4929
        %v5066 = vpop.f32.mrf.mxu0
        %v5067 = vadd.f32 0.0, %v5066
        %v5068 = vpop.f32.mrf.mxu0
        %v5069 = vadd.f32 0.0, %v5068
        %5070 = vmatmul.bf16.gmra.mxu0 %v4931
        %v5071 = vpop.f32.mrf.mxu0
        %v5072 = vadd.f32 0.0, %v5071
        %v5073 = vpop.f32.mrf.mxu0
        %v5074 = vadd.f32 0.0, %v5073
        %5075 = vmatmul.bf16.gmra.mxu0 %v4933
        %v5076 = vpop.f32.mrf.mxu0
        %v5077 = vadd.f32 0.0, %v5076
        %v5078 = vpop.f32.mrf.mxu0
        %v5079 = vadd.f32 0.0, %v5078
        %5080 = vmatmul.bf16.gmra.mxu0 %v4935
        %v5081 = vpop.f32.mrf.mxu0
        %v5082 = vadd.f32 0.0, %v5081
        %v5083 = vpop.f32.mrf.mxu0
        %v5084 = vadd.f32 0.0, %v5083
        %5085 = vmatmul.bf16.gmra.mxu0 %v4937
        %v5086 = vpop.f32.mrf.mxu0
        %v5087 = vadd.f32 0.0, %v5086
        %v5088 = vpop.f32.mrf.mxu0
        %v5089 = vadd.f32 0.0, %v5088
        %5090 = vmatmul.bf16.gmra.mxu0 %v4939
        %v5091 = vpop.f32.mrf.mxu0
        %v5092 = vadd.f32 0.0, %v5091
        %v5093 = vpop.f32.mrf.mxu0
        %v5094 = vadd.f32 0.0, %v5093
        %5095 = vmatmul.bf16.gmra.mxu0 %v4941
        %v5096 = vpop.f32.mrf.mxu0
        %v5097 = vadd.f32 0.0, %v5096
        %v5098 = vpop.f32.mrf.mxu0
        %v5099 = vadd.f32 0.0, %v5098
        %5100 = vmatmul.bf16.gmra.mxu0 %v4943
        %v5101 = vpop.f32.mrf.mxu0
        %v5102 = vadd.f32 0.0, %v5101
        %v5103 = vpop.f32.mrf.mxu0
        %v5104 = vadd.f32 0.0, %v5103
        %5105 = vmatmul.bf16.gmra.mxu0 %v4945
        %v5106 = vpop.f32.mrf.mxu0
        %v5107 = vadd.f32 0.0, %v5106
        %v5108 = vpop.f32.mrf.mxu0
        %v5109 = vadd.f32 0.0, %v5108
        %5110 = vdwg.mxu0
        %v5111 = vadd.f32 %v4799, %v5022
        %v5112 = vadd.f32 %v4801, %v5024
        %v5113 = vadd.f32 %v4804, %v5027
        %v5114 = vadd.f32 %v4806, %v5029
        %v5115 = vadd.f32 %v4809, %v5032
        %v5116 = vadd.f32 %v4811, %v5034
        %v5117 = vadd.f32 %v4814, %v5037
        %v5118 = vadd.f32 %v4816, %v5039
        %v5119 = vadd.f32 %v4819, %v5042
        %v5120 = vadd.f32 %v4821, %v5044
        %v5121 = vadd.f32 %v4824, %v5047
        %v5122 = vadd.f32 %v4826, %v5049
        %v5123 = vadd.f32 %v4829, %v5052
        %v5124 = vadd.f32 %v4831, %v5054
        %v5125 = vadd.f32 %v4834, %v5057
        %v5126 = vadd.f32 %v4836, %v5059
        %v5127 = vadd.f32 %v4839, %v5062
        %v5128 = vadd.f32 %v4841, %v5064
        %v5129 = vadd.f32 %v4844, %v5067
        %v5130 = vadd.f32 %v4846, %v5069
        %v5131 = vadd.f32 %v4849, %v5072
        %v5132 = vadd.f32 %v4851, %v5074
        %v5133 = vadd.f32 %v4854, %v5077
        %v5134 = vadd.f32 %v4856, %v5079
        %v5135 = vadd.f32 %v4859, %v5082
        %v5136 = vadd.f32 %v4861, %v5084
        %v5137 = vadd.f32 %v4864, %v5087
        %v5138 = vadd.f32 %v4866, %v5089
        %v5139 = vadd.f32 %v4869, %v5092
        %v5140 = vadd.f32 %v4871, %v5094
        %v5141 = vadd.f32 %v4874, %v5097
        %v5142 = vadd.f32 %v4876, %v5099
        %v5143 = vadd.f32 %v4879, %v5102
        %v5144 = vadd.f32 %v4881, %v5104
        %v5145 = vadd.f32 %v4884, %v5107
        %v5146 = vadd.f32 %v4886, %v5109
        %v5147 = vld [vmem:[#allocation3 + $0x8] sm:$0xe]
        %v5148 = vld [vmem:[#allocation3 + $0xc] sm:$0xf]
        %v5149 = vld [vmem:[#allocation3 + $0x10] sm:$0xf]
        %v5150 = vld [vmem:[#allocation3 + $0x14] sm:$0xf]
        %v5151 = vld [vmem:[#allocation3 + $0x18] sm:$0xf]
        %v5152 = vld [vmem:[#allocation3 + $0x1c] sm:$0xf]
        %v5153 = vld [vmem:[#allocation3 + $0x20] sm:$0xf]
        %v5154 = vld [vmem:[#allocation3 + $0x24] sm:$0xf]
        %v5155 = vld [vmem:[#allocation3 + $0x28] sm:$0xf]
        %v5156 = vld [vmem:[#allocation3 + $0x2c] sm:$0xf]
        %v5157 = vld [vmem:[#allocation3 + $0x30] sm:$0xf]
        %v5158 = vld [vmem:[#allocation3 + $0x34] sm:$0xf]
        %v5159 = vld [vmem:[#allocation3 + $0x38] sm:$0xf]
        %v5160 = vld [vmem:[#allocation3 + $0x3c] sm:$0xf]
        %v5161 = vld [vmem:[#allocation3 + $0x40] sm:$0xf]
        %v5162 = vld [vmem:[#allocation3 + $0x44] sm:$0xf]
        %v5163 = vld [vmem:[#allocation3 + $0x48] sm:$0xf]
        %v5164 = vld [vmem:[#allocation3 + $0x4c] sm:$0xf]
        %v5165 = vld [vmem:[#allocation3 + $0x50] sm:$0xf]
        %v5166 = vld [vmem:[#allocation3 + $0x54] sm:$0xf]
        %v5167 = vld [vmem:[#allocation3 + $0x58] sm:$0xf]
        %v5168 = vld [vmem:[#allocation3 + $0x5c] sm:$0xf]
        %v5169 = vld [vmem:[#allocation3 + $0x60] sm:$0xf]
        %v5170 = vld [vmem:[#allocation3 + $0x64] sm:$0xf]
        %v5171 = vld [vmem:[#allocation3 + $0x68] sm:$0xf]
        %v5172 = vld [vmem:[#allocation3 + $0x6c] sm:$0xf]
        %v5173 = vld [vmem:[#allocation3 + $0x70] sm:$0xf]
        %v5174 = vld [vmem:[#allocation3 + $0x74] sm:$0xf]
        %v5175 = vld [vmem:[#allocation3 + $0x78] sm:$0xf]
        %v5176 = vld [vmem:[#allocation3 + $0x7c] sm:$0xf]
        %v5177 = vld [vmem:[#allocation3 + $0x80] sm:$0xf]
        %v5178 = vld [vmem:[#allocation3 + $0x84] sm:$0xf]
        %v5179 = vld [vmem:[#allocation3 + $0x88] sm:$0xf]
        %v5180 = vld [vmem:[#allocation3 + $0x8c] sm:$0xf]
        %v5181 = vld [vmem:[#allocation3 + $0x90] sm:$0xf]
        %v5182 = vld [vmem:[#allocation3 + $0x94] sm:$0xf]
        %v5183 = vld [vmem:[#allocation3 + $0x98] sm:$0x1]
        %s5184 = scalar_lea.vmem [#allocation5], 768
        %v5185 = vld [vmem:[%s5184] sm:$0xf]
        %v5186 = vld [vmem:[%s5184 + $0x4] sm:$0xf]
        %v5187 = vld [vmem:[%s5184 + $0x8] sm:$0xf]
        %v5188 = vld [vmem:[%s5184 + $0xc] sm:$0xf]
        %v5189 = vld [vmem:[%s5184 + $0x10] sm:$0xf]
        %v5190 = vld [vmem:[%s5184 + $0x14] sm:$0xf]
        %v5191 = vld [vmem:[%s5184 + $0x18] sm:$0xf]
        %v5192 = vld [vmem:[%s5184 + $0x1c] sm:$0xf]
        %v5193 = vld [vmem:[%s5184 + $0x20] sm:$0xf]
        %v5194 = vld [vmem:[%s5184 + $0x24] sm:$0xf]
        %v5195 = vld [vmem:[%s5184 + $0x28] sm:$0xf]
        %v5196 = vld [vmem:[%s5184 + $0x2c] sm:$0xf]
        %v5197 = vld [vmem:[%s5184 + $0x30] sm:$0xf]
        %v5198 = vld [vmem:[%s5184 + $0x34] sm:$0xf]
        %v5199 = vld [vmem:[%s5184 + $0x38] sm:$0xf]
        %v5200 = vld [vmem:[%s5184 + $0x3c] sm:$0xf]
        %v5238 = vunpack.c.l.b16 %v5147
        %v5239 = vunpack.c.l.b16 %v5148
        %v5240 = vunpack.c.l.b16 %v5149
        %v5241 = vunpack.c.l.b16 %v5150
        %v5242 = vunpack.c.l.b16 %v5151
        %v5243 = vunpack.c.l.b16 %v5152
        %v5244 = vunpack.c.l.b16 %v5153
        %v5245 = vunpack.c.l.b16 %v5154
        %v5246 = vunpack.c.l.b16 %v5155
        %v5247 = vunpack.c.l.b16 %v5156
        %v5248 = vunpack.c.l.b16 %v5157
        %v5249 = vunpack.c.l.b16 %v5158
        %v5250 = vunpack.c.l.b16 %v5159
        %v5251 = vunpack.c.l.b16 %v5160
        %v5252 = vunpack.c.l.b16 %v5161
        %v5253 = vunpack.c.l.b16 %v5162
        %v5254 = vunpack.c.l.b16 %v5163
        %v5255 = vunpack.c.l.b16 %v5164
        %v5256 = vunpack.c.l.b16 %v5165
        %v5257 = vunpack.c.l.b16 %v5166
        %v5258 = vunpack.c.l.b16 %v5167
        %v5259 = vunpack.c.l.b16 %v5168
        %v5260 = vunpack.c.l.b16 %v5169
        %v5261 = vunpack.c.l.b16 %v5170
        %v5262 = vunpack.c.l.b16 %v5171
        %v5263 = vunpack.c.l.b16 %v5172
        %v5264 = vunpack.c.l.b16 %v5173
        %v5265 = vunpack.c.l.b16 %v5174
        %v5266 = vunpack.c.l.b16 %v5175
        %v5267 = vunpack.c.l.b16 %v5176
        %v5268 = vunpack.c.l.b16 %v5177
        %v5269 = vunpack.c.l.b16 %v5178
        %v5270 = vunpack.c.l.b16 %v5179
        %v5271 = vunpack.c.l.b16 %v5180
        %v5272 = vunpack.c.l.b16 %v5181
        %v5273 = vunpack.c.l.b16 %v5182
        %v5274 = vunpack.c.l.b16 %v5183
        %v5275 = vpack.c.b16 %v5239, %v5238
        %v5276 = vpack.c.b16 %v5241, %v5240
        %v5277 = vpack.c.b16 %v5243, %v5242
        %v5278 = vpack.c.b16 %v5245, %v5244
        %v5279 = vpack.c.b16 %v5247, %v5246
        %v5280 = vpack.c.b16 %v5249, %v5248
        %v5281 = vpack.c.b16 %v5251, %v5250
        %v5282 = vpack.c.b16 %v5253, %v5252
        %v5283 = vpack.c.b16 %v5255, %v5254
        %v5284 = vpack.c.b16 %v5257, %v5256
        %v5285 = vpack.c.b16 %v5259, %v5258
        %v5286 = vpack.c.b16 %v5261, %v5260
        %v5287 = vpack.c.b16 %v5263, %v5262
        %v5288 = vpack.c.b16 %v5265, %v5264
        %v5289 = vpack.c.b16 %v5267, %v5266
        %v5290 = vpack.c.b16 %v5269, %v5268
        %v5291 = vpack.c.b16 %v5271, %v5270
        %v5292 = vpack.c.b16 %v5273, %v5272
        %v5293 = vpack.c.b16 %v5274, %v5274
        %v5294 = vrot.slane %v5275, 1
        %v5295 = vrot.slane %v5276, 1
        %v5296 = vsel %vm1081, %v5294, %v5295
        %v5297 = vrot.slane %v5277, 1
        %v5298 = vsel %vm1081, %v5295, %v5297
        %v5299 = vrot.slane %v5278, 1
        %v5300 = vsel %vm1081, %v5297, %v5299
        %v5301 = vrot.slane %v5279, 1
        %v5302 = vsel %vm1081, %v5299, %v5301
        %v5303 = vrot.slane %v5280, 1
        %v5304 = vsel %vm1081, %v5301, %v5303
        %v5305 = vrot.slane %v5281, 1
        %v5306 = vsel %vm1081, %v5303, %v5305
        %v5307 = vrot.slane %v5282, 1
        %v5308 = vsel %vm1081, %v5305, %v5307
        %v5309 = vrot.slane %v5283, 1
        %v5310 = vsel %vm1081, %v5307, %v5309
        %v5311 = vrot.slane %v5284, 1
        %v5312 = vsel %vm1081, %v5309, %v5311
        %v5313 = vrot.slane %v5285, 1
        %v5314 = vsel %vm1081, %v5311, %v5313
        %v5315 = vrot.slane %v5286, 1
        %v5316 = vsel %vm1081, %v5313, %v5315
        %v5317 = vrot.slane %v5287, 1
        %v5318 = vsel %vm1081, %v5315, %v5317
        %v5319 = vrot.slane %v5288, 1
        %v5320 = vsel %vm1081, %v5317, %v5319
        %v5321 = vrot.slane %v5289, 1
        %v5322 = vsel %vm1081, %v5319, %v5321
        %v5323 = vrot.slane %v5290, 1
        %v5324 = vsel %vm1081, %v5321, %v5323
        %v5325 = vrot.slane %v5291, 1
        %v5326 = vsel %vm1081, %v5323, %v5325
        %v5327 = vrot.slane %v5292, 1
        %v5328 = vsel %vm1081, %v5325, %v5327
        %v5329 = vrot.slane %v5293, 1
        %v5330 = vsel %vm1081, %v5327, %v5329
        %v5365 = vunpack.c.l.b16 %v5185
        %v5366 = vunpack.c.l.b16 %v5186
        %v5367 = vunpack.c.l.b16 %v5187
        %v5368 = vunpack.c.l.b16 %v5188
        %v5369 = vunpack.c.l.b16 %v5189
        %v5370 = vunpack.c.l.b16 %v5190
        %v5371 = vunpack.c.l.b16 %v5191
        %v5372 = vunpack.c.l.b16 %v5192
        %v5373 = vunpack.c.l.b16 %v5193
        %v5374 = vunpack.c.l.b16 %v5194
        %v5375 = vunpack.c.l.b16 %v5195
        %v5376 = vunpack.c.l.b16 %v5196
        %v5377 = vunpack.c.l.b16 %v5197
        %v5378 = vunpack.c.l.b16 %v5198
        %v5379 = vunpack.c.l.b16 %v5199
        %v5380 = vunpack.c.l.b16 %v5200
        %v5381 = vpack.c.b16 %v5366, %v5365
        %v5382 = vpack.c.b16 %v5368, %v5367
        %v5383 = vpack.c.b16 %v5370, %v5369
        %v5384 = vpack.c.b16 %v5372, %v5371
        %v5385 = vpack.c.b16 %v5374, %v5373
        %v5386 = vpack.c.b16 %v5376, %v5375
        %v5387 = vpack.c.b16 %v5378, %v5377
        %v5388 = vpack.c.b16 %v5380, %v5379
        %5397 = vmatpush.bf16.msra.mxu0 %v5388
        %5398 = vmatpush.bf16.msra.mxu0 %v5387
        %5399 = vmatpush.bf16.msra.mxu0 %v5386
        %5400 = vmatpush.bf16.msra.mxu0 %v5385
        %5401 = vmatpush.bf16.msra.mxu0 %v5384
        %5402 = vmatpush.bf16.msra.mxu0 %v5383
        %5403 = vmatpush.bf16.msra.mxu0 %v5382
        %5404 = vmatpush.bf16.msra.mxu0 %v5381
        %5405 = vmatmul.bf16.gmra.mxu0 %v5296
        %v5406 = vpop.f32.mrf.mxu0
        %v5407 = vadd.f32 0.0, %v5406
        %v5408 = vpop.f32.mrf.mxu0
        %v5409 = vadd.f32 0.0, %v5408
        %5410 = vmatmul.bf16.gmra.mxu0 %v5298
        %v5411 = vpop.f32.mrf.mxu0
        %v5412 = vadd.f32 0.0, %v5411
        %v5413 = vpop.f32.mrf.mxu0
        %v5414 = vadd.f32 0.0, %v5413
        %5415 = vmatmul.bf16.gmra.mxu0 %v5300
        %v5416 = vpop.f32.mrf.mxu0
        %v5417 = vadd.f32 0.0, %v5416
        %v5418 = vpop.f32.mrf.mxu0
        %v5419 = vadd.f32 0.0, %v5418
        %5420 = vmatmul.bf16.gmra.mxu0 %v5302
        %v5421 = vpop.f32.mrf.mxu0
        %v5422 = vadd.f32 0.0, %v5421
        %v5423 = vpop.f32.mrf.mxu0
        %v5424 = vadd.f32 0.0, %v5423
        %5425 = vmatmul.bf16.gmra.mxu0 %v5304
        %v5426 = vpop.f32.mrf.mxu0
        %v5427 = vadd.f32 0.0, %v5426
        %v5428 = vpop.f32.mrf.mxu0
        %v5429 = vadd.f32 0.0, %v5428
        %5430 = vmatmul.bf16.gmra.mxu0 %v5306
        %v5431 = vpop.f32.mrf.mxu0
        %v5432 = vadd.f32 0.0, %v5431
        %v5433 = vpop.f32.mrf.mxu0
        %v5434 = vadd.f32 0.0, %v5433
        %5435 = vmatmul.bf16.gmra.mxu0 %v5308
        %v5436 = vpop.f32.mrf.mxu0
        %v5437 = vadd.f32 0.0, %v5436
        %v5438 = vpop.f32.mrf.mxu0
        %v5439 = vadd.f32 0.0, %v5438
        %5440 = vmatmul.bf16.gmra.mxu0 %v5310
        %v5441 = vpop.f32.mrf.mxu0
        %v5442 = vadd.f32 0.0, %v5441
        %v5443 = vpop.f32.mrf.mxu0
        %v5444 = vadd.f32 0.0, %v5443
        %5445 = vmatmul.bf16.gmra.mxu0 %v5312
        %v5446 = vpop.f32.mrf.mxu0
        %v5447 = vadd.f32 0.0, %v5446
        %v5448 = vpop.f32.mrf.mxu0
        %v5449 = vadd.f32 0.0, %v5448
        %5450 = vmatmul.bf16.gmra.mxu0 %v5314
        %v5451 = vpop.f32.mrf.mxu0
        %v5452 = vadd.f32 0.0, %v5451
        %v5453 = vpop.f32.mrf.mxu0
        %v5454 = vadd.f32 0.0, %v5453
        %5455 = vmatmul.bf16.gmra.mxu0 %v5316
        %v5456 = vpop.f32.mrf.mxu0
        %v5457 = vadd.f32 0.0, %v5456
        %v5458 = vpop.f32.mrf.mxu0
        %v5459 = vadd.f32 0.0, %v5458
        %5460 = vmatmul.bf16.gmra.mxu0 %v5318
        %v5461 = vpop.f32.mrf.mxu0
        %v5462 = vadd.f32 0.0, %v5461
        %v5463 = vpop.f32.mrf.mxu0
        %v5464 = vadd.f32 0.0, %v5463
        %5465 = vmatmul.bf16.gmra.mxu0 %v5320
        %v5466 = vpop.f32.mrf.mxu0
        %v5467 = vadd.f32 0.0, %v5466
        %v5468 = vpop.f32.mrf.mxu0
        %v5469 = vadd.f32 0.0, %v5468
        %5470 = vmatmul.bf16.gmra.mxu0 %v5322
        %v5471 = vpop.f32.mrf.mxu0
        %v5472 = vadd.f32 0.0, %v5471
        %v5473 = vpop.f32.mrf.mxu0
        %v5474 = vadd.f32 0.0, %v5473
        %5475 = vmatmul.bf16.gmra.mxu0 %v5324
        %v5476 = vpop.f32.mrf.mxu0
        %v5477 = vadd.f32 0.0, %v5476
        %v5478 = vpop.f32.mrf.mxu0
        %v5479 = vadd.f32 0.0, %v5478
        %5480 = vmatmul.bf16.gmra.mxu0 %v5326
        %v5481 = vpop.f32.mrf.mxu0
        %v5482 = vadd.f32 0.0, %v5481
        %v5483 = vpop.f32.mrf.mxu0
        %v5484 = vadd.f32 0.0, %v5483
        %5485 = vmatmul.bf16.gmra.mxu0 %v5328
        %v5486 = vpop.f32.mrf.mxu0
        %v5487 = vadd.f32 0.0, %v5486
        %v5488 = vpop.f32.mrf.mxu0
        %v5489 = vadd.f32 0.0, %v5488
        %5490 = vmatmul.bf16.gmra.mxu0 %v5330
        %v5491 = vpop.f32.mrf.mxu0
        %v5492 = vadd.f32 0.0, %v5491
        %v5493 = vpop.f32.mrf.mxu0
        %v5494 = vadd.f32 0.0, %v5493
        %5495 = vdwg.mxu0
        %v5496 = vadd.f32 %v5111, %v5407
        %v5497 = vadd.f32 %v5112, %v5409
        %v5498 = vadd.f32 %v5113, %v5412
        %v5499 = vadd.f32 %v5114, %v5414
        %v5500 = vadd.f32 %v5115, %v5417
        %v5501 = vadd.f32 %v5116, %v5419
        %v5502 = vadd.f32 %v5117, %v5422
        %v5503 = vadd.f32 %v5118, %v5424
        %v5504 = vadd.f32 %v5119, %v5427
        %v5505 = vadd.f32 %v5120, %v5429
        %v5506 = vadd.f32 %v5121, %v5432
        %v5507 = vadd.f32 %v5122, %v5434
        %v5508 = vadd.f32 %v5123, %v5437
        %v5509 = vadd.f32 %v5124, %v5439
        %v5510 = vadd.f32 %v5125, %v5442
        %v5511 = vadd.f32 %v5126, %v5444
        %v5512 = vadd.f32 %v5127, %v5447
        %v5513 = vadd.f32 %v5128, %v5449
        %v5514 = vadd.f32 %v5129, %v5452
        %v5515 = vadd.f32 %v5130, %v5454
        %v5516 = vadd.f32 %v5131, %v5457
        %v5517 = vadd.f32 %v5132, %v5459
        %v5518 = vadd.f32 %v5133, %v5462
        %v5519 = vadd.f32 %v5134, %v5464
        %v5520 = vadd.f32 %v5135, %v5467
        %v5521 = vadd.f32 %v5136, %v5469
        %v5522 = vadd.f32 %v5137, %v5472
        %v5523 = vadd.f32 %v5138, %v5474
        %v5524 = vadd.f32 %v5139, %v5477
        %v5525 = vadd.f32 %v5140, %v5479
        %v5526 = vadd.f32 %v5141, %v5482
        %v5527 = vadd.f32 %v5142, %v5484
        %v5528 = vadd.f32 %v5143, %v5487
        %v5529 = vadd.f32 %v5144, %v5489
        %v5530 = vadd.f32 %v5145, %v5492
        %v5531 = vadd.f32 %v5146, %v5494
        %v5532 = vld [vmem:[#allocation3 + $0x98] sm:$0x3]
        %s5533 = scalar_lea.vmem [#allocation5], 832
        %v5534 = vld [vmem:[%s5533] sm:$0xf]
        %v5535 = vld [vmem:[%s5533 + $0x4] sm:$0xf]
        %v5536 = vld [vmem:[%s5533 + $0x8] sm:$0xf]
        %v5537 = vld [vmem:[%s5533 + $0xc] sm:$0xf]
        %v5538 = vld [vmem:[%s5533 + $0x10] sm:$0xf]
        %v5539 = vld [vmem:[%s5533 + $0x14] sm:$0xf]
        %v5540 = vld [vmem:[%s5533 + $0x18] sm:$0xf]
        %v5541 = vld [vmem:[%s5533 + $0x1c] sm:$0xf]
        %v5542 = vld [vmem:[%s5533 + $0x20] sm:$0xf]
        %v5543 = vld [vmem:[%s5533 + $0x24] sm:$0xf]
        %v5544 = vld [vmem:[%s5533 + $0x28] sm:$0xf]
        %v5545 = vld [vmem:[%s5533 + $0x2c] sm:$0xf]
        %v5546 = vld [vmem:[%s5533 + $0x30] sm:$0xf]
        %v5547 = vld [vmem:[%s5533 + $0x34] sm:$0xf]
        %v5548 = vld [vmem:[%s5533 + $0x38] sm:$0xf]
        %v5549 = vld [vmem:[%s5533 + $0x3c] sm:$0xf]
        %v5551 = vunpack.c.l.b16 %v5532
        %v5552 = vpack.c.b16 %v5551, %v5551
        %v5554 = vshrl.u32 %v5275, 16
        %v5556 = vrot.slane %v5554, 1
        %v5557 = vshll.u32 %v5275, 16
        %v5559 = vrot.slane %v5557, 2
        %v5560 = vor.u32 %v5556, %v5559
        %v5562 = vshrl.u32 %v5276, 16
        %v5564 = vrot.slane %v5562, 1
        %v5565 = vshll.u32 %v5276, 16
        %v5567 = vrot.slane %v5565, 2
        %v5568 = vor.u32 %v5564, %v5567
        %v5569 = vsel %vm1726, %v5560, %v5568
        %v5571 = vshrl.u32 %v5277, 16
        %v5573 = vrot.slane %v5571, 1
        %v5574 = vshll.u32 %v5277, 16
        %v5576 = vrot.slane %v5574, 2
        %v5577 = vor.u32 %v5573, %v5576
        %v5578 = vsel %vm1726, %v5568, %v5577
        %v5580 = vshrl.u32 %v5278, 16
        %v5582 = vrot.slane %v5580, 1
        %v5583 = vshll.u32 %v5278, 16
        %v5585 = vrot.slane %v5583, 2
        %v5586 = vor.u32 %v5582, %v5585
        %v5587 = vsel %vm1726, %v5577, %v5586
        %v5589 = vshrl.u32 %v5279, 16
        %v5591 = vrot.slane %v5589, 1
        %v5592 = vshll.u32 %v5279, 16
        %v5594 = vrot.slane %v5592, 2
        %v5595 = vor.u32 %v5591, %v5594
        %v5596 = vsel %vm1726, %v5586, %v5595
        %v5598 = vshrl.u32 %v5280, 16
        %v5600 = vrot.slane %v5598, 1
        %v5601 = vshll.u32 %v5280, 16
        %v5603 = vrot.slane %v5601, 2
        %v5604 = vor.u32 %v5600, %v5603
        %v5605 = vsel %vm1726, %v5595, %v5604
        %v5607 = vshrl.u32 %v5281, 16
        %v5609 = vrot.slane %v5607, 1
        %v5610 = vshll.u32 %v5281, 16
        %v5612 = vrot.slane %v5610, 2
        %v5613 = vor.u32 %v5609, %v5612
        %v5614 = vsel %vm1726, %v5604, %v5613
        %v5616 = vshrl.u32 %v5282, 16
        %v5618 = vrot.slane %v5616, 1
        %v5619 = vshll.u32 %v5282, 16
        %v5621 = vrot.slane %v5619, 2
        %v5622 = vor.u32 %v5618, %v5621
        %v5623 = vsel %vm1726, %v5613, %v5622
        %v5625 = vshrl.u32 %v5283, 16
        %v5627 = vrot.slane %v5625, 1
        %v5628 = vshll.u32 %v5283, 16
        %v5630 = vrot.slane %v5628, 2
        %v5631 = vor.u32 %v5627, %v5630
        %v5632 = vsel %vm1726, %v5622, %v5631
        %v5634 = vshrl.u32 %v5284, 16
        %v5636 = vrot.slane %v5634, 1
        %v5637 = vshll.u32 %v5284, 16
        %v5639 = vrot.slane %v5637, 2
        %v5640 = vor.u32 %v5636, %v5639
        %v5641 = vsel %vm1726, %v5631, %v5640
        %v5643 = vshrl.u32 %v5285, 16
        %v5645 = vrot.slane %v5643, 1
        %v5646 = vshll.u32 %v5285, 16
        %v5648 = vrot.slane %v5646, 2
        %v5649 = vor.u32 %v5645, %v5648
        %v5650 = vsel %vm1726, %v5640, %v5649
        %v5652 = vshrl.u32 %v5286, 16
        %v5654 = vrot.slane %v5652, 1
        %v5655 = vshll.u32 %v5286, 16
        %v5657 = vrot.slane %v5655, 2
        %v5658 = vor.u32 %v5654, %v5657
        %v5659 = vsel %vm1726, %v5649, %v5658
        %v5661 = vshrl.u32 %v5287, 16
        %v5663 = vrot.slane %v5661, 1
        %v5664 = vshll.u32 %v5287, 16
        %v5666 = vrot.slane %v5664, 2
        %v5667 = vor.u32 %v5663, %v5666
        %v5668 = vsel %vm1726, %v5658, %v5667
        %v5670 = vshrl.u32 %v5288, 16
        %v5672 = vrot.slane %v5670, 1
        %v5673 = vshll.u32 %v5288, 16
        %v5675 = vrot.slane %v5673, 2
        %v5676 = vor.u32 %v5672, %v5675
        %v5677 = vsel %vm1726, %v5667, %v5676
        %v5679 = vshrl.u32 %v5289, 16
        %v5681 = vrot.slane %v5679, 1
        %v5682 = vshll.u32 %v5289, 16
        %v5684 = vrot.slane %v5682, 2
        %v5685 = vor.u32 %v5681, %v5684
        %v5686 = vsel %vm1726, %v5676, %v5685
        %v5688 = vshrl.u32 %v5290, 16
        %v5690 = vrot.slane %v5688, 1
        %v5691 = vshll.u32 %v5290, 16
        %v5693 = vrot.slane %v5691, 2
        %v5694 = vor.u32 %v5690, %v5693
        %v5695 = vsel %vm1726, %v5685, %v5694
        %v5697 = vshrl.u32 %v5291, 16
        %v5699 = vrot.slane %v5697, 1
        %v5700 = vshll.u32 %v5291, 16
        %v5702 = vrot.slane %v5700, 2
        %v5703 = vor.u32 %v5699, %v5702
        %v5704 = vsel %vm1726, %v5694, %v5703
        %v5706 = vshrl.u32 %v5292, 16
        %v5708 = vrot.slane %v5706, 1
        %v5709 = vshll.u32 %v5292, 16
        %v5711 = vrot.slane %v5709, 2
        %v5712 = vor.u32 %v5708, %v5711
        %v5713 = vsel %vm1726, %v5703, %v5712
        %v5715 = vshrl.u32 %v5552, 16
        %v5717 = vrot.slane %v5715, 1
        %v5718 = vshll.u32 %v5552, 16
        %v5720 = vrot.slane %v5718, 2
        %v5721 = vor.u32 %v5717, %v5720
        %v5722 = vsel %vm1726, %v5712, %v5721
        %v5757 = vunpack.c.l.b16 %v5534
        %v5758 = vunpack.c.l.b16 %v5535
        %v5759 = vunpack.c.l.b16 %v5536
        %v5760 = vunpack.c.l.b16 %v5537
        %v5761 = vunpack.c.l.b16 %v5538
        %v5762 = vunpack.c.l.b16 %v5539
        %v5763 = vunpack.c.l.b16 %v5540
        %v5764 = vunpack.c.l.b16 %v5541
        %v5765 = vunpack.c.l.b16 %v5542
        %v5766 = vunpack.c.l.b16 %v5543
        %v5767 = vunpack.c.l.b16 %v5544
        %v5768 = vunpack.c.l.b16 %v5545
        %v5769 = vunpack.c.l.b16 %v5546
        %v5770 = vunpack.c.l.b16 %v5547
        %v5771 = vunpack.c.l.b16 %v5548
        %v5772 = vunpack.c.l.b16 %v5549
        %v5773 = vpack.c.b16 %v5758, %v5757
        %v5774 = vpack.c.b16 %v5760, %v5759
        %v5775 = vpack.c.b16 %v5762, %v5761
        %v5776 = vpack.c.b16 %v5764, %v5763
        %v5777 = vpack.c.b16 %v5766, %v5765
        %v5778 = vpack.c.b16 %v5768, %v5767
        %v5779 = vpack.c.b16 %v5770, %v5769
        %v5780 = vpack.c.b16 %v5772, %v5771
        %5789 = vmatpush.bf16.msra.mxu0 %v5780
        %5790 = vmatpush.bf16.msra.mxu0 %v5779
        %5791 = vmatpush.bf16.msra.mxu0 %v5778
        %5792 = vmatpush.bf16.msra.mxu0 %v5777
        %5793 = vmatpush.bf16.msra.mxu0 %v5776
        %5794 = vmatpush.bf16.msra.mxu0 %v5775
        %5795 = vmatpush.bf16.msra.mxu0 %v5774
        %5796 = vmatpush.bf16.msra.mxu0 %v5773
        %5797 = vmatmul.bf16.gmra.mxu0 %v5569
        %v5798 = vpop.f32.mrf.mxu0
        %v5799 = vadd.f32 0.0, %v5798
        %v5800 = vpop.f32.mrf.mxu0
        %v5801 = vadd.f32 0.0, %v5800
        %5802 = vmatmul.bf16.gmra.mxu0 %v5578
        %v5803 = vpop.f32.mrf.mxu0
        %v5804 = vadd.f32 0.0, %v5803
        %v5805 = vpop.f32.mrf.mxu0
        %v5806 = vadd.f32 0.0, %v5805
        %5807 = vmatmul.bf16.gmra.mxu0 %v5587
        %v5808 = vpop.f32.mrf.mxu0
        %v5809 = vadd.f32 0.0, %v5808
        %v5810 = vpop.f32.mrf.mxu0
        %v5811 = vadd.f32 0.0, %v5810
        %5812 = vmatmul.bf16.gmra.mxu0 %v5596
        %v5813 = vpop.f32.mrf.mxu0
        %v5814 = vadd.f32 0.0, %v5813
        %v5815 = vpop.f32.mrf.mxu0
        %v5816 = vadd.f32 0.0, %v5815
        %5817 = vmatmul.bf16.gmra.mxu0 %v5605
        %v5818 = vpop.f32.mrf.mxu0
        %v5819 = vadd.f32 0.0, %v5818
        %v5820 = vpop.f32.mrf.mxu0
        %v5821 = vadd.f32 0.0, %v5820
        %5822 = vmatmul.bf16.gmra.mxu0 %v5614
        %v5823 = vpop.f32.mrf.mxu0
        %v5824 = vadd.f32 0.0, %v5823
        %v5825 = vpop.f32.mrf.mxu0
        %v5826 = vadd.f32 0.0, %v5825
        %5827 = vmatmul.bf16.gmra.mxu0 %v5623
        %v5828 = vpop.f32.mrf.mxu0
        %v5829 = vadd.f32 0.0, %v5828
        %v5830 = vpop.f32.mrf.mxu0
        %v5831 = vadd.f32 0.0, %v5830
        %5832 = vmatmul.bf16.gmra.mxu0 %v5632
        %v5833 = vpop.f32.mrf.mxu0
        %v5834 = vadd.f32 0.0, %v5833
        %v5835 = vpop.f32.mrf.mxu0
        %v5836 = vadd.f32 0.0, %v5835
        %5837 = vmatmul.bf16.gmra.mxu0 %v5641
        %v5838 = vpop.f32.mrf.mxu0
        %v5839 = vadd.f32 0.0, %v5838
        %v5840 = vpop.f32.mrf.mxu0
        %v5841 = vadd.f32 0.0, %v5840
        %5842 = vmatmul.bf16.gmra.mxu0 %v5650
        %v5843 = vpop.f32.mrf.mxu0
        %v5844 = vadd.f32 0.0, %v5843
        %v5845 = vpop.f32.mrf.mxu0
        %v5846 = vadd.f32 0.0, %v5845
        %5847 = vmatmul.bf16.gmra.mxu0 %v5659
        %v5848 = vpop.f32.mrf.mxu0
        %v5849 = vadd.f32 0.0, %v5848
        %v5850 = vpop.f32.mrf.mxu0
        %v5851 = vadd.f32 0.0, %v5850
        %5852 = vmatmul.bf16.gmra.mxu0 %v5668
        %v5853 = vpop.f32.mrf.mxu0
        %v5854 = vadd.f32 0.0, %v5853
        %v5855 = vpop.f32.mrf.mxu0
        %v5856 = vadd.f32 0.0, %v5855
        %5857 = vmatmul.bf16.gmra.mxu0 %v5677
        %v5858 = vpop.f32.mrf.mxu0
        %v5859 = vadd.f32 0.0, %v5858
        %v5860 = vpop.f32.mrf.mxu0
        %v5861 = vadd.f32 0.0, %v5860
        %5862 = vmatmul.bf16.gmra.mxu0 %v5686
        %v5863 = vpop.f32.mrf.mxu0
        %v5864 = vadd.f32 0.0, %v5863
        %v5865 = vpop.f32.mrf.mxu0
        %v5866 = vadd.f32 0.0, %v5865
        %5867 = vmatmul.bf16.gmra.mxu0 %v5695
        %v5868 = vpop.f32.mrf.mxu0
        %v5869 = vadd.f32 0.0, %v5868
        %v5870 = vpop.f32.mrf.mxu0
        %v5871 = vadd.f32 0.0, %v5870
        %5872 = vmatmul.bf16.gmra.mxu0 %v5704
        %v5873 = vpop.f32.mrf.mxu0
        %v5874 = vadd.f32 0.0, %v5873
        %v5875 = vpop.f32.mrf.mxu0
        %v5876 = vadd.f32 0.0, %v5875
        %5877 = vmatmul.bf16.gmra.mxu0 %v5713
        %v5878 = vpop.f32.mrf.mxu0
        %v5879 = vadd.f32 0.0, %v5878
        %v5880 = vpop.f32.mrf.mxu0
        %v5881 = vadd.f32 0.0, %v5880
        %5882 = vmatmul.bf16.gmra.mxu0 %v5722
        %v5883 = vpop.f32.mrf.mxu0
        %v5884 = vadd.f32 0.0, %v5883
        %v5885 = vpop.f32.mrf.mxu0
        %v5886 = vadd.f32 0.0, %v5885
        %5887 = vdwg.mxu0
        %v5888 = vadd.f32 %v5496, %v5799
        %v5889 = vadd.f32 %v5497, %v5801
        %v5890 = vadd.f32 %v5498, %v5804
        %v5891 = vadd.f32 %v5499, %v5806
        %v5892 = vadd.f32 %v5500, %v5809
        %v5893 = vadd.f32 %v5501, %v5811
        %v5894 = vadd.f32 %v5502, %v5814
        %v5895 = vadd.f32 %v5503, %v5816
        %v5896 = vadd.f32 %v5504, %v5819
        %v5897 = vadd.f32 %v5505, %v5821
        %v5898 = vadd.f32 %v5506, %v5824
        %v5899 = vadd.f32 %v5507, %v5826
        %v5900 = vadd.f32 %v5508, %v5829
        %v5901 = vadd.f32 %v5509, %v5831
        %v5902 = vadd.f32 %v5510, %v5834
        %v5903 = vadd.f32 %v5511, %v5836
        %v5904 = vadd.f32 %v5512, %v5839
        %v5905 = vadd.f32 %v5513, %v5841
        %v5906 = vadd.f32 %v5514, %v5844
        %v5907 = vadd.f32 %v5515, %v5846
        %v5908 = vadd.f32 %v5516, %v5849
        %v5909 = vadd.f32 %v5517, %v5851
        %v5910 = vadd.f32 %v5518, %v5854
        %v5911 = vadd.f32 %v5519, %v5856
        %v5912 = vadd.f32 %v5520, %v5859
        %v5913 = vadd.f32 %v5521, %v5861
        %v5914 = vadd.f32 %v5522, %v5864
        %v5915 = vadd.f32 %v5523, %v5866
        %v5916 = vadd.f32 %v5524, %v5869
        %v5917 = vadd.f32 %v5525, %v5871
        %v5918 = vadd.f32 %v5526, %v5874
        %v5919 = vadd.f32 %v5527, %v5876
        %v5920 = vadd.f32 %v5528, %v5879
        %v5921 = vadd.f32 %v5529, %v5881
        %v5922 = vadd.f32 %v5530, %v5884
        %v5923 = vadd.f32 %v5531, %v5886
        %v5924 = vld [vmem:[#allocation3 + $0x8] sm:$0xc]
        %s5925 = scalar_lea.vmem [#allocation5], 896
        %v5926 = vld [vmem:[%s5925] sm:$0xf]
        %v5927 = vld [vmem:[%s5925 + $0x4] sm:$0xf]
        %v5928 = vld [vmem:[%s5925 + $0x8] sm:$0xf]
        %v5929 = vld [vmem:[%s5925 + $0xc] sm:$0xf]
        %v5930 = vld [vmem:[%s5925 + $0x10] sm:$0xf]
        %v5931 = vld [vmem:[%s5925 + $0x14] sm:$0xf]
        %v5932 = vld [vmem:[%s5925 + $0x18] sm:$0xf]
        %v5933 = vld [vmem:[%s5925 + $0x1c] sm:$0xf]
        %v5934 = vld [vmem:[%s5925 + $0x20] sm:$0xf]
        %v5935 = vld [vmem:[%s5925 + $0x24] sm:$0xf]
        %v5936 = vld [vmem:[%s5925 + $0x28] sm:$0xf]
        %v5937 = vld [vmem:[%s5925 + $0x2c] sm:$0xf]
        %v5938 = vld [vmem:[%s5925 + $0x30] sm:$0xf]
        %v5939 = vld [vmem:[%s5925 + $0x34] sm:$0xf]
        %v5940 = vld [vmem:[%s5925 + $0x38] sm:$0xf]
        %v5941 = vld [vmem:[%s5925 + $0x3c] sm:$0xf]
        %v5943 = vunpack.c.l.b16 %v5924
        %v5944 = vpack.c.b16 %v5239, %v5943
        %v5945 = vrot.slane %v5944, 2
        %v5946 = vrot.slane %v5276, 2
        %v5947 = vsel %vm2119, %v5945, %v5946
        %v5948 = vrot.slane %v5277, 2
        %v5949 = vsel %vm2119, %v5946, %v5948
        %v5950 = vrot.slane %v5278, 2
        %v5951 = vsel %vm2119, %v5948, %v5950
        %v5952 = vrot.slane %v5279, 2
        %v5953 = vsel %vm2119, %v5950, %v5952
        %v5954 = vrot.slane %v5280, 2
        %v5955 = vsel %vm2119, %v5952, %v5954
        %v5956 = vrot.slane %v5281, 2
        %v5957 = vsel %vm2119, %v5954, %v5956
        %v5958 = vrot.slane %v5282, 2
        %v5959 = vsel %vm2119, %v5956, %v5958
        %v5960 = vrot.slane %v5283, 2
        %v5961 = vsel %vm2119, %v5958, %v5960
        %v5962 = vrot.slane %v5284, 2
        %v5963 = vsel %vm2119, %v5960, %v5962
        %v5964 = vrot.slane %v5285, 2
        %v5965 = vsel %vm2119, %v5962, %v5964
        %v5966 = vrot.slane %v5286, 2
        %v5967 = vsel %vm2119, %v5964, %v5966
        %v5968 = vrot.slane %v5287, 2
        %v5969 = vsel %vm2119, %v5966, %v5968
        %v5970 = vrot.slane %v5288, 2
        %v5971 = vsel %vm2119, %v5968, %v5970
        %v5972 = vrot.slane %v5289, 2
        %v5973 = vsel %vm2119, %v5970, %v5972
        %v5974 = vrot.slane %v5290, 2
        %v5975 = vsel %vm2119, %v5972, %v5974
        %v5976 = vrot.slane %v5291, 2
        %v5977 = vsel %vm2119, %v5974, %v5976
        %v5978 = vrot.slane %v5292, 2
        %v5979 = vsel %vm2119, %v5976, %v5978
        %v5980 = vrot.slane %v5552, 2
        %v5981 = vsel %vm2119, %v5978, %v5980
        %v6016 = vunpack.c.l.b16 %v5926
        %v6017 = vunpack.c.l.b16 %v5927
        %v6018 = vunpack.c.l.b16 %v5928
        %v6019 = vunpack.c.l.b16 %v5929
        %v6020 = vunpack.c.l.b16 %v5930
        %v6021 = vunpack.c.l.b16 %v5931
        %v6022 = vunpack.c.l.b16 %v5932
        %v6023 = vunpack.c.l.b16 %v5933
        %v6024 = vunpack.c.l.b16 %v5934
        %v6025 = vunpack.c.l.b16 %v5935
        %v6026 = vunpack.c.l.b16 %v5936
        %v6027 = vunpack.c.l.b16 %v5937
        %v6028 = vunpack.c.l.b16 %v5938
        %v6029 = vunpack.c.l.b16 %v5939
        %v6030 = vunpack.c.l.b16 %v5940
        %v6031 = vunpack.c.l.b16 %v5941
        %v6032 = vpack.c.b16 %v6017, %v6016
        %v6033 = vpack.c.b16 %v6019, %v6018
        %v6034 = vpack.c.b16 %v6021, %v6020
        %v6035 = vpack.c.b16 %v6023, %v6022
        %v6036 = vpack.c.b16 %v6025, %v6024
        %v6037 = vpack.c.b16 %v6027, %v6026
        %v6038 = vpack.c.b16 %v6029, %v6028
        %v6039 = vpack.c.b16 %v6031, %v6030
        %6048 = vmatpush.bf16.msra.mxu0 %v6039
        %6049 = vmatpush.bf16.msra.mxu0 %v6038
        %6050 = vmatpush.bf16.msra.mxu0 %v6037
        %6051 = vmatpush.bf16.msra.mxu0 %v6036
        %6052 = vmatpush.bf16.msra.mxu0 %v6035
        %6053 = vmatpush.bf16.msra.mxu0 %v6034
        %6054 = vmatpush.bf16.msra.mxu0 %v6033
        %6055 = vmatpush.bf16.msra.mxu0 %v6032
        %6056 = vmatmul.bf16.gmra.mxu0 %v5947
        %v6057 = vpop.f32.mrf.mxu0
        %v6058 = vadd.f32 0.0, %v6057
        %v6059 = vpop.f32.mrf.mxu0
        %v6060 = vadd.f32 0.0, %v6059
        %6061 = vmatmul.bf16.gmra.mxu0 %v5949
        %v6062 = vpop.f32.mrf.mxu0
        %v6063 = vadd.f32 0.0, %v6062
        %v6064 = vpop.f32.mrf.mxu0
        %v6065 = vadd.f32 0.0, %v6064
        %6066 = vmatmul.bf16.gmra.mxu0 %v5951
        %v6067 = vpop.f32.mrf.mxu0
        %v6068 = vadd.f32 0.0, %v6067
        %v6069 = vpop.f32.mrf.mxu0
        %v6070 = vadd.f32 0.0, %v6069
        %6071 = vmatmul.bf16.gmra.mxu0 %v5953
        %v6072 = vpop.f32.mrf.mxu0
        %v6073 = vadd.f32 0.0, %v6072
        %v6074 = vpop.f32.mrf.mxu0
        %v6075 = vadd.f32 0.0, %v6074
        %6076 = vmatmul.bf16.gmra.mxu0 %v5955
        %v6077 = vpop.f32.mrf.mxu0
        %v6078 = vadd.f32 0.0, %v6077
        %v6079 = vpop.f32.mrf.mxu0
        %v6080 = vadd.f32 0.0, %v6079
        %6081 = vmatmul.bf16.gmra.mxu0 %v5957
        %v6082 = vpop.f32.mrf.mxu0
        %v6083 = vadd.f32 0.0, %v6082
        %v6084 = vpop.f32.mrf.mxu0
        %v6085 = vadd.f32 0.0, %v6084
        %6086 = vmatmul.bf16.gmra.mxu0 %v5959
        %v6087 = vpop.f32.mrf.mxu0
        %v6088 = vadd.f32 0.0, %v6087
        %v6089 = vpop.f32.mrf.mxu0
        %v6090 = vadd.f32 0.0, %v6089
        %6091 = vmatmul.bf16.gmra.mxu0 %v5961
        %v6092 = vpop.f32.mrf.mxu0
        %v6093 = vadd.f32 0.0, %v6092
        %v6094 = vpop.f32.mrf.mxu0
        %v6095 = vadd.f32 0.0, %v6094
        %6096 = vmatmul.bf16.gmra.mxu0 %v5963
        %v6097 = vpop.f32.mrf.mxu0
        %v6098 = vadd.f32 0.0, %v6097
        %v6099 = vpop.f32.mrf.mxu0
        %v6100 = vadd.f32 0.0, %v6099
        %6101 = vmatmul.bf16.gmra.mxu0 %v5965
        %v6102 = vpop.f32.mrf.mxu0
        %v6103 = vadd.f32 0.0, %v6102
        %v6104 = vpop.f32.mrf.mxu0
        %v6105 = vadd.f32 0.0, %v6104
        %6106 = vmatmul.bf16.gmra.mxu0 %v5967
        %v6107 = vpop.f32.mrf.mxu0
        %v6108 = vadd.f32 0.0, %v6107
        %v6109 = vpop.f32.mrf.mxu0
        %v6110 = vadd.f32 0.0, %v6109
        %6111 = vmatmul.bf16.gmra.mxu0 %v5969
        %v6112 = vpop.f32.mrf.mxu0
        %v6113 = vadd.f32 0.0, %v6112
        %v6114 = vpop.f32.mrf.mxu0
        %v6115 = vadd.f32 0.0, %v6114
        %6116 = vmatmul.bf16.gmra.mxu0 %v5971
        %v6117 = vpop.f32.mrf.mxu0
        %v6118 = vadd.f32 0.0, %v6117
        %v6119 = vpop.f32.mrf.mxu0
        %v6120 = vadd.f32 0.0, %v6119
        %6121 = vmatmul.bf16.gmra.mxu0 %v5973
        %v6122 = vpop.f32.mrf.mxu0
        %v6123 = vadd.f32 0.0, %v6122
        %v6124 = vpop.f32.mrf.mxu0
        %v6125 = vadd.f32 0.0, %v6124
        %6126 = vmatmul.bf16.gmra.mxu0 %v5975
        %v6127 = vpop.f32.mrf.mxu0
        %v6128 = vadd.f32 0.0, %v6127
        %v6129 = vpop.f32.mrf.mxu0
        %v6130 = vadd.f32 0.0, %v6129
        %6131 = vmatmul.bf16.gmra.mxu0 %v5977
        %v6132 = vpop.f32.mrf.mxu0
        %v6133 = vadd.f32 0.0, %v6132
        %v6134 = vpop.f32.mrf.mxu0
        %v6135 = vadd.f32 0.0, %v6134
        %6136 = vmatmul.bf16.gmra.mxu0 %v5979
        %v6137 = vpop.f32.mrf.mxu0
        %v6138 = vadd.f32 0.0, %v6137
        %v6139 = vpop.f32.mrf.mxu0
        %v6140 = vadd.f32 0.0, %v6139
        %6141 = vmatmul.bf16.gmra.mxu0 %v5981
        %v6142 = vpop.f32.mrf.mxu0
        %v6143 = vadd.f32 0.0, %v6142
        %v6144 = vpop.f32.mrf.mxu0
        %v6145 = vadd.f32 0.0, %v6144
        %6146 = vdwg.mxu0
        %v6147 = vadd.f32 %v5888, %v6058
        %v6148 = vadd.f32 %v5889, %v6060
        %v6149 = vadd.f32 %v5890, %v6063
        %v6150 = vadd.f32 %v5891, %v6065
        %v6151 = vadd.f32 %v5892, %v6068
        %v6152 = vadd.f32 %v5893, %v6070
        %v6153 = vadd.f32 %v5894, %v6073
        %v6154 = vadd.f32 %v5895, %v6075
        %v6155 = vadd.f32 %v5896, %v6078
        %v6156 = vadd.f32 %v5897, %v6080
        %v6157 = vadd.f32 %v5898, %v6083
        %v6158 = vadd.f32 %v5899, %v6085
        %v6159 = vadd.f32 %v5900, %v6088
        %v6160 = vadd.f32 %v5901, %v6090
        %v6161 = vadd.f32 %v5902, %v6093
        %v6162 = vadd.f32 %v5903, %v6095
        %v6163 = vadd.f32 %v5904, %v6098
        %v6164 = vadd.f32 %v5905, %v6100
        %v6165 = vadd.f32 %v5906, %v6103
        %v6166 = vadd.f32 %v5907, %v6105
        %v6167 = vadd.f32 %v5908, %v6108
        %v6168 = vadd.f32 %v5909, %v6110
        %v6169 = vadd.f32 %v5910, %v6113
        %v6170 = vadd.f32 %v5911, %v6115
        %v6171 = vadd.f32 %v5912, %v6118
        %v6172 = vadd.f32 %v5913, %v6120
        %v6173 = vadd.f32 %v5914, %v6123
        %v6174 = vadd.f32 %v5915, %v6125
        %v6175 = vadd.f32 %v5916, %v6128
        %v6176 = vadd.f32 %v5917, %v6130
        %v6177 = vadd.f32 %v5918, %v6133
        %v6178 = vadd.f32 %v5919, %v6135
        %v6179 = vadd.f32 %v5920, %v6138
        %v6180 = vadd.f32 %v5921, %v6140
        %v6181 = vadd.f32 %v5922, %v6143
        %v6182 = vadd.f32 %v5923, %v6145
        %v6183 = vld [vmem:[#allocation3 + $0x10] sm:$0xc]
        %v6184 = vld [vmem:[#allocation3 + $0x14] sm:$0xf]
        %v6185 = vld [vmem:[#allocation3 + $0x18] sm:$0xf]
        %v6186 = vld [vmem:[#allocation3 + $0x1c] sm:$0xf]
        %v6187 = vld [vmem:[#allocation3 + $0x20] sm:$0xf]
        %v6188 = vld [vmem:[#allocation3 + $0x24] sm:$0xf]
        %v6189 = vld [vmem:[#allocation3 + $0x28] sm:$0xf]
        %v6190 = vld [vmem:[#allocation3 + $0x2c] sm:$0xf]
        %v6191 = vld [vmem:[#allocation3 + $0x30] sm:$0xf]
        %v6192 = vld [vmem:[#allocation3 + $0x34] sm:$0xf]
        %v6193 = vld [vmem:[#allocation3 + $0x38] sm:$0xf]
        %v6194 = vld [vmem:[#allocation3 + $0x3c] sm:$0xf]
        %v6195 = vld [vmem:[#allocation3 + $0x40] sm:$0xf]
        %v6196 = vld [vmem:[#allocation3 + $0x44] sm:$0xf]
        %v6197 = vld [vmem:[#allocation3 + $0x48] sm:$0xf]
        %v6198 = vld [vmem:[#allocation3 + $0x4c] sm:$0xf]
        %v6199 = vld [vmem:[#allocation3 + $0x50] sm:$0xf]
        %v6200 = vld [vmem:[#allocation3 + $0x54] sm:$0xf]
        %v6201 = vld [vmem:[#allocation3 + $0x58] sm:$0xf]
        %v6202 = vld [vmem:[#allocation3 + $0x5c] sm:$0xf]
        %v6203 = vld [vmem:[#allocation3 + $0x60] sm:$0xf]
        %v6204 = vld [vmem:[#allocation3 + $0x64] sm:$0xf]
        %v6205 = vld [vmem:[#allocation3 + $0x68] sm:$0xf]
        %v6206 = vld [vmem:[#allocation3 + $0x6c] sm:$0xf]
        %v6207 = vld [vmem:[#allocation3 + $0x70] sm:$0xf]
        %v6208 = vld [vmem:[#allocation3 + $0x74] sm:$0xf]
        %v6209 = vld [vmem:[#allocation3 + $0x78] sm:$0xf]
        %v6210 = vld [vmem:[#allocation3 + $0x7c] sm:$0xf]
        %v6211 = vld [vmem:[#allocation3 + $0x80] sm:$0xf]
        %v6212 = vld [vmem:[#allocation3 + $0x84] sm:$0xf]
        %v6213 = vld [vmem:[#allocation3 + $0x88] sm:$0xf]
        %v6214 = vld [vmem:[#allocation3 + $0x8c] sm:$0xf]
        %v6215 = vld [vmem:[#allocation3 + $0x90] sm:$0xf]
        %v6216 = vld [vmem:[#allocation3 + $0x94] sm:$0xf]
        %v6217 = vld [vmem:[#allocation3 + $0x98] sm:$0xf]
        %v6218 = vld [vmem:[#allocation3 + $0x9c] sm:$0xf]
        %v6219 = vld [vmem:[#allocation3 + $0xa0] sm:$0x3]
        %s6220 = scalar_lea.vmem [#allocation5], 960
        %v6221 = vld [vmem:[%s6220] sm:$0xf]
        %v6222 = vld [vmem:[%s6220 + $0x4] sm:$0xf]
        %v6223 = vld [vmem:[%s6220 + $0x8] sm:$0xf]
        %v6224 = vld [vmem:[%s6220 + $0xc] sm:$0xf]
        %v6225 = vld [vmem:[%s6220 + $0x10] sm:$0xf]
        %v6226 = vld [vmem:[%s6220 + $0x14] sm:$0xf]
        %v6227 = vld [vmem:[%s6220 + $0x18] sm:$0xf]
        %v6228 = vld [vmem:[%s6220 + $0x1c] sm:$0xf]
        %v6229 = vld [vmem:[%s6220 + $0x20] sm:$0xf]
        %v6230 = vld [vmem:[%s6220 + $0x24] sm:$0xf]
        %v6231 = vld [vmem:[%s6220 + $0x28] sm:$0xf]
        %v6232 = vld [vmem:[%s6220 + $0x2c] sm:$0xf]
        %v6233 = vld [vmem:[%s6220 + $0x30] sm:$0xf]
        %v6234 = vld [vmem:[%s6220 + $0x34] sm:$0xf]
        %v6235 = vld [vmem:[%s6220 + $0x38] sm:$0xf]
        %v6236 = vld [vmem:[%s6220 + $0x3c] sm:$0xf]
        %v6274 = vunpack.c.l.b16 %v6183
        %v6275 = vunpack.c.l.b16 %v6184
        %v6276 = vunpack.c.l.b16 %v6185
        %v6277 = vunpack.c.l.b16 %v6186
        %v6278 = vunpack.c.l.b16 %v6187
        %v6279 = vunpack.c.l.b16 %v6188
        %v6280 = vunpack.c.l.b16 %v6189
        %v6281 = vunpack.c.l.b16 %v6190
        %v6282 = vunpack.c.l.b16 %v6191
        %v6283 = vunpack.c.l.b16 %v6192
        %v6284 = vunpack.c.l.b16 %v6193
        %v6285 = vunpack.c.l.b16 %v6194
        %v6286 = vunpack.c.l.b16 %v6195
        %v6287 = vunpack.c.l.b16 %v6196
        %v6288 = vunpack.c.l.b16 %v6197
        %v6289 = vunpack.c.l.b16 %v6198
        %v6290 = vunpack.c.l.b16 %v6199
        %v6291 = vunpack.c.l.b16 %v6200
        %v6292 = vunpack.c.l.b16 %v6201
        %v6293 = vunpack.c.l.b16 %v6202
        %v6294 = vunpack.c.l.b16 %v6203
        %v6295 = vunpack.c.l.b16 %v6204
        %v6296 = vunpack.c.l.b16 %v6205
        %v6297 = vunpack.c.l.b16 %v6206
        %v6298 = vunpack.c.l.b16 %v6207
        %v6299 = vunpack.c.l.b16 %v6208
        %v6300 = vunpack.c.l.b16 %v6209
        %v6301 = vunpack.c.l.b16 %v6210
        %v6302 = vunpack.c.l.b16 %v6211
        %v6303 = vunpack.c.l.b16 %v6212
        %v6304 = vunpack.c.l.b16 %v6213
        %v6305 = vunpack.c.l.b16 %v6214
        %v6306 = vunpack.c.l.b16 %v6215
        %v6307 = vunpack.c.l.b16 %v6216
        %v6308 = vunpack.c.l.b16 %v6217
        %v6309 = vunpack.c.l.b16 %v6218
        %v6310 = vunpack.c.l.b16 %v6219
        %v6311 = vpack.c.b16 %v6275, %v6274
        %v6312 = vpack.c.b16 %v6277, %v6276
        %v6313 = vpack.c.b16 %v6279, %v6278
        %v6314 = vpack.c.b16 %v6281, %v6280
        %v6315 = vpack.c.b16 %v6283, %v6282
        %v6316 = vpack.c.b16 %v6285, %v6284
        %v6317 = vpack.c.b16 %v6287, %v6286
        %v6318 = vpack.c.b16 %v6289, %v6288
        %v6319 = vpack.c.b16 %v6291, %v6290
        %v6320 = vpack.c.b16 %v6293, %v6292
        %v6321 = vpack.c.b16 %v6295, %v6294
        %v6322 = vpack.c.b16 %v6297, %v6296
        %v6323 = vpack.c.b16 %v6299, %v6298
        %v6324 = vpack.c.b16 %v6301, %v6300
        %v6325 = vpack.c.b16 %v6303, %v6302
        %v6326 = vpack.c.b16 %v6305, %v6304
        %v6327 = vpack.c.b16 %v6307, %v6306
        %v6328 = vpack.c.b16 %v6309, %v6308
        %v6329 = vpack.c.b16 %v6310, %v6310
        %v6330 = vrot.slane %v6311, 2
        %v6331 = vrot.slane %v6312, 2
        %v6332 = vsel %vm2119, %v6330, %v6331
        %v6333 = vrot.slane %v6313, 2
        %v6334 = vsel %vm2119, %v6331, %v6333
        %v6335 = vrot.slane %v6314, 2
        %v6336 = vsel %vm2119, %v6333, %v6335
        %v6337 = vrot.slane %v6315, 2
        %v6338 = vsel %vm2119, %v6335, %v6337
        %v6339 = vrot.slane %v6316, 2
        %v6340 = vsel %vm2119, %v6337, %v6339
        %v6341 = vrot.slane %v6317, 2
        %v6342 = vsel %vm2119, %v6339, %v6341
        %v6343 = vrot.slane %v6318, 2
        %v6344 = vsel %vm2119, %v6341, %v6343
        %v6345 = vrot.slane %v6319, 2
        %v6346 = vsel %vm2119, %v6343, %v6345
        %v6347 = vrot.slane %v6320, 2
        %v6348 = vsel %vm2119, %v6345, %v6347
        %v6349 = vrot.slane %v6321, 2
        %v6350 = vsel %vm2119, %v6347, %v6349
        %v6351 = vrot.slane %v6322, 2
        %v6352 = vsel %vm2119, %v6349, %v6351
        %v6353 = vrot.slane %v6323, 2
        %v6354 = vsel %vm2119, %v6351, %v6353
        %v6355 = vrot.slane %v6324, 2
        %v6356 = vsel %vm2119, %v6353, %v6355
        %v6357 = vrot.slane %v6325, 2
        %v6358 = vsel %vm2119, %v6355, %v6357
        %v6359 = vrot.slane %v6326, 2
        %v6360 = vsel %vm2119, %v6357, %v6359
        %v6361 = vrot.slane %v6327, 2
        %v6362 = vsel %vm2119, %v6359, %v6361
        %v6363 = vrot.slane %v6328, 2
        %v6364 = vsel %vm2119, %v6361, %v6363
        %v6365 = vrot.slane %v6329, 2
        %v6366 = vsel %vm2119, %v6363, %v6365
        %v6401 = vunpack.c.l.b16 %v6221
        %v6402 = vunpack.c.l.b16 %v6222
        %v6403 = vunpack.c.l.b16 %v6223
        %v6404 = vunpack.c.l.b16 %v6224
        %v6405 = vunpack.c.l.b16 %v6225
        %v6406 = vunpack.c.l.b16 %v6226
        %v6407 = vunpack.c.l.b16 %v6227
        %v6408 = vunpack.c.l.b16 %v6228
        %v6409 = vunpack.c.l.b16 %v6229
        %v6410 = vunpack.c.l.b16 %v6230
        %v6411 = vunpack.c.l.b16 %v6231
        %v6412 = vunpack.c.l.b16 %v6232
        %v6413 = vunpack.c.l.b16 %v6233
        %v6414 = vunpack.c.l.b16 %v6234
        %v6415 = vunpack.c.l.b16 %v6235
        %v6416 = vunpack.c.l.b16 %v6236
        %v6417 = vpack.c.b16 %v6402, %v6401
        %v6418 = vpack.c.b16 %v6404, %v6403
        %v6419 = vpack.c.b16 %v6406, %v6405
        %v6420 = vpack.c.b16 %v6408, %v6407
        %v6421 = vpack.c.b16 %v6410, %v6409
        %v6422 = vpack.c.b16 %v6412, %v6411
        %v6423 = vpack.c.b16 %v6414, %v6413
        %v6424 = vpack.c.b16 %v6416, %v6415
        %6433 = vmatpush.bf16.msra.mxu0 %v6424
        %6434 = vmatpush.bf16.msra.mxu0 %v6423
        %6435 = vmatpush.bf16.msra.mxu0 %v6422
        %6436 = vmatpush.bf16.msra.mxu0 %v6421
        %6437 = vmatpush.bf16.msra.mxu0 %v6420
        %6438 = vmatpush.bf16.msra.mxu0 %v6419
        %6439 = vmatpush.bf16.msra.mxu0 %v6418
        %6440 = vmatpush.bf16.msra.mxu0 %v6417
        %6441 = vmatmul.bf16.gmra.mxu0 %v6332
        %v6442 = vpop.f32.mrf.mxu0
        %v6443 = vadd.f32 0.0, %v6442
        %v6444 = vpop.f32.mrf.mxu0
        %v6445 = vadd.f32 0.0, %v6444
        %6446 = vmatmul.bf16.gmra.mxu0 %v6334
        %v6447 = vpop.f32.mrf.mxu0
        %v6448 = vadd.f32 0.0, %v6447
        %v6449 = vpop.f32.mrf.mxu0
        %v6450 = vadd.f32 0.0, %v6449
        %6451 = vmatmul.bf16.gmra.mxu0 %v6336
        %v6452 = vpop.f32.mrf.mxu0
        %v6453 = vadd.f32 0.0, %v6452
        %v6454 = vpop.f32.mrf.mxu0
        %v6455 = vadd.f32 0.0, %v6454
        %6456 = vmatmul.bf16.gmra.mxu0 %v6338
        %v6457 = vpop.f32.mrf.mxu0
        %v6458 = vadd.f32 0.0, %v6457
        %v6459 = vpop.f32.mrf.mxu0
        %v6460 = vadd.f32 0.0, %v6459
        %6461 = vmatmul.bf16.gmra.mxu0 %v6340
        %v6462 = vpop.f32.mrf.mxu0
        %v6463 = vadd.f32 0.0, %v6462
        %v6464 = vpop.f32.mrf.mxu0
        %v6465 = vadd.f32 0.0, %v6464
        %6466 = vmatmul.bf16.gmra.mxu0 %v6342
        %v6467 = vpop.f32.mrf.mxu0
        %v6468 = vadd.f32 0.0, %v6467
        %v6469 = vpop.f32.mrf.mxu0
        %v6470 = vadd.f32 0.0, %v6469
        %6471 = vmatmul.bf16.gmra.mxu0 %v6344
        %v6472 = vpop.f32.mrf.mxu0
        %v6473 = vadd.f32 0.0, %v6472
        %v6474 = vpop.f32.mrf.mxu0
        %v6475 = vadd.f32 0.0, %v6474
        %6476 = vmatmul.bf16.gmra.mxu0 %v6346
        %v6477 = vpop.f32.mrf.mxu0
        %v6478 = vadd.f32 0.0, %v6477
        %v6479 = vpop.f32.mrf.mxu0
        %v6480 = vadd.f32 0.0, %v6479
        %6481 = vmatmul.bf16.gmra.mxu0 %v6348
        %v6482 = vpop.f32.mrf.mxu0
        %v6483 = vadd.f32 0.0, %v6482
        %v6484 = vpop.f32.mrf.mxu0
        %v6485 = vadd.f32 0.0, %v6484
        %6486 = vmatmul.bf16.gmra.mxu0 %v6350
        %v6487 = vpop.f32.mrf.mxu0
        %v6488 = vadd.f32 0.0, %v6487
        %v6489 = vpop.f32.mrf.mxu0
        %v6490 = vadd.f32 0.0, %v6489
        %6491 = vmatmul.bf16.gmra.mxu0 %v6352
        %v6492 = vpop.f32.mrf.mxu0
        %v6493 = vadd.f32 0.0, %v6492
        %v6494 = vpop.f32.mrf.mxu0
        %v6495 = vadd.f32 0.0, %v6494
        %6496 = vmatmul.bf16.gmra.mxu0 %v6354
        %v6497 = vpop.f32.mrf.mxu0
        %v6498 = vadd.f32 0.0, %v6497
        %v6499 = vpop.f32.mrf.mxu0
        %v6500 = vadd.f32 0.0, %v6499
        %6501 = vmatmul.bf16.gmra.mxu0 %v6356
        %v6502 = vpop.f32.mrf.mxu0
        %v6503 = vadd.f32 0.0, %v6502
        %v6504 = vpop.f32.mrf.mxu0
        %v6505 = vadd.f32 0.0, %v6504
        %6506 = vmatmul.bf16.gmra.mxu0 %v6358
        %v6507 = vpop.f32.mrf.mxu0
        %v6508 = vadd.f32 0.0, %v6507
        %v6509 = vpop.f32.mrf.mxu0
        %v6510 = vadd.f32 0.0, %v6509
        %6511 = vmatmul.bf16.gmra.mxu0 %v6360
        %v6512 = vpop.f32.mrf.mxu0
        %v6513 = vadd.f32 0.0, %v6512
        %v6514 = vpop.f32.mrf.mxu0
        %v6515 = vadd.f32 0.0, %v6514
        %6516 = vmatmul.bf16.gmra.mxu0 %v6362
        %v6517 = vpop.f32.mrf.mxu0
        %v6518 = vadd.f32 0.0, %v6517
        %v6519 = vpop.f32.mrf.mxu0
        %v6520 = vadd.f32 0.0, %v6519
        %6521 = vmatmul.bf16.gmra.mxu0 %v6364
        %v6522 = vpop.f32.mrf.mxu0
        %v6523 = vadd.f32 0.0, %v6522
        %v6524 = vpop.f32.mrf.mxu0
        %v6525 = vadd.f32 0.0, %v6524
        %6526 = vmatmul.bf16.gmra.mxu0 %v6366
        %v6527 = vpop.f32.mrf.mxu0
        %v6528 = vadd.f32 0.0, %v6527
        %v6529 = vpop.f32.mrf.mxu0
        %v6530 = vadd.f32 0.0, %v6529
        %6531 = vdwg.mxu0
        %v6532 = vadd.f32 %v6147, %v6443
        %v6533 = vadd.f32 %v6148, %v6445
        %v6534 = vadd.f32 %v6149, %v6448
        %v6535 = vadd.f32 %v6150, %v6450
        %v6536 = vadd.f32 %v6151, %v6453
        %v6537 = vadd.f32 %v6152, %v6455
        %v6538 = vadd.f32 %v6153, %v6458
        %v6539 = vadd.f32 %v6154, %v6460
        %v6540 = vadd.f32 %v6155, %v6463
        %v6541 = vadd.f32 %v6156, %v6465
        %v6542 = vadd.f32 %v6157, %v6468
        %v6543 = vadd.f32 %v6158, %v6470
        %v6544 = vadd.f32 %v6159, %v6473
        %v6545 = vadd.f32 %v6160, %v6475
        %v6546 = vadd.f32 %v6161, %v6478
        %v6547 = vadd.f32 %v6162, %v6480
        %v6548 = vadd.f32 %v6163, %v6483
        %v6549 = vadd.f32 %v6164, %v6485
        %v6550 = vadd.f32 %v6165, %v6488
        %v6551 = vadd.f32 %v6166, %v6490
        %v6552 = vadd.f32 %v6167, %v6493
        %v6553 = vadd.f32 %v6168, %v6495
        %v6554 = vadd.f32 %v6169, %v6498
        %v6555 = vadd.f32 %v6170, %v6500
        %v6556 = vadd.f32 %v6171, %v6503
        %v6557 = vadd.f32 %v6172, %v6505
        %v6558 = vadd.f32 %v6173, %v6508
        %v6559 = vadd.f32 %v6174, %v6510
        %v6560 = vadd.f32 %v6175, %v6513
        %v6561 = vadd.f32 %v6176, %v6515
        %v6562 = vadd.f32 %v6177, %v6518
        %v6563 = vadd.f32 %v6178, %v6520
        %v6564 = vadd.f32 %v6179, %v6523
        %v6565 = vadd.f32 %v6180, %v6525
        %v6566 = vadd.f32 %v6181, %v6528
        %v6567 = vadd.f32 %v6182, %v6530
        %v6568 = vld [vmem:[#allocation3 + $0xa0] sm:$0x7]
        %s6569 = scalar_lea.vmem [#allocation5], 1024
        %v6570 = vld [vmem:[%s6569] sm:$0xf]
        %v6571 = vld [vmem:[%s6569 + $0x4] sm:$0xf]
        %v6572 = vld [vmem:[%s6569 + $0x8] sm:$0xf]
        %v6573 = vld [vmem:[%s6569 + $0xc] sm:$0xf]
        %v6574 = vld [vmem:[%s6569 + $0x10] sm:$0xf]
        %v6575 = vld [vmem:[%s6569 + $0x14] sm:$0xf]
        %v6576 = vld [vmem:[%s6569 + $0x18] sm:$0xf]
        %v6577 = vld [vmem:[%s6569 + $0x1c] sm:$0xf]
        %v6578 = vld [vmem:[%s6569 + $0x20] sm:$0xf]
        %v6579 = vld [vmem:[%s6569 + $0x24] sm:$0xf]
        %v6580 = vld [vmem:[%s6569 + $0x28] sm:$0xf]
        %v6581 = vld [vmem:[%s6569 + $0x2c] sm:$0xf]
        %v6582 = vld [vmem:[%s6569 + $0x30] sm:$0xf]
        %v6583 = vld [vmem:[%s6569 + $0x34] sm:$0xf]
        %v6584 = vld [vmem:[%s6569 + $0x38] sm:$0xf]
        %v6585 = vld [vmem:[%s6569 + $0x3c] sm:$0xf]
        %v6587 = vunpack.c.l.b16 %v6568
        %v6588 = vpack.c.b16 %v6587, %v6587
        %v6590 = vshrl.u32 %v6311, 16
        %v6592 = vrot.slane %v6590, 2
        %v6593 = vshll.u32 %v6311, 16
        %v6595 = vrot.slane %v6593, 3
        %v6596 = vor.u32 %v6592, %v6595
        %v6598 = vshrl.u32 %v6312, 16
        %v6600 = vrot.slane %v6598, 2
        %v6601 = vshll.u32 %v6312, 16
        %v6603 = vrot.slane %v6601, 3
        %v6604 = vor.u32 %v6600, %v6603
        %v6605 = vsel %vm2764, %v6596, %v6604
        %v6607 = vshrl.u32 %v6313, 16
        %v6609 = vrot.slane %v6607, 2
        %v6610 = vshll.u32 %v6313, 16
        %v6612 = vrot.slane %v6610, 3
        %v6613 = vor.u32 %v6609, %v6612
        %v6614 = vsel %vm2764, %v6604, %v6613
        %v6616 = vshrl.u32 %v6314, 16
        %v6618 = vrot.slane %v6616, 2
        %v6619 = vshll.u32 %v6314, 16
        %v6621 = vrot.slane %v6619, 3
        %v6622 = vor.u32 %v6618, %v6621
        %v6623 = vsel %vm2764, %v6613, %v6622
        %v6625 = vshrl.u32 %v6315, 16
        %v6627 = vrot.slane %v6625, 2
        %v6628 = vshll.u32 %v6315, 16
        %v6630 = vrot.slane %v6628, 3
        %v6631 = vor.u32 %v6627, %v6630
        %v6632 = vsel %vm2764, %v6622, %v6631
        %v6634 = vshrl.u32 %v6316, 16
        %v6636 = vrot.slane %v6634, 2
        %v6637 = vshll.u32 %v6316, 16
        %v6639 = vrot.slane %v6637, 3
        %v6640 = vor.u32 %v6636, %v6639
        %v6641 = vsel %vm2764, %v6631, %v6640
        %v6643 = vshrl.u32 %v6317, 16
        %v6645 = vrot.slane %v6643, 2
        %v6646 = vshll.u32 %v6317, 16
        %v6648 = vrot.slane %v6646, 3
        %v6649 = vor.u32 %v6645, %v6648
        %v6650 = vsel %vm2764, %v6640, %v6649
        %v6652 = vshrl.u32 %v6318, 16
        %v6654 = vrot.slane %v6652, 2
        %v6655 = vshll.u32 %v6318, 16
        %v6657 = vrot.slane %v6655, 3
        %v6658 = vor.u32 %v6654, %v6657
        %v6659 = vsel %vm2764, %v6649, %v6658
        %v6661 = vshrl.u32 %v6319, 16
        %v6663 = vrot.slane %v6661, 2
        %v6664 = vshll.u32 %v6319, 16
        %v6666 = vrot.slane %v6664, 3
        %v6667 = vor.u32 %v6663, %v6666
        %v6668 = vsel %vm2764, %v6658, %v6667
        %v6670 = vshrl.u32 %v6320, 16
        %v6672 = vrot.slane %v6670, 2
        %v6673 = vshll.u32 %v6320, 16
        %v6675 = vrot.slane %v6673, 3
        %v6676 = vor.u32 %v6672, %v6675
        %v6677 = vsel %vm2764, %v6667, %v6676
        %v6679 = vshrl.u32 %v6321, 16
        %v6681 = vrot.slane %v6679, 2
        %v6682 = vshll.u32 %v6321, 16
        %v6684 = vrot.slane %v6682, 3
        %v6685 = vor.u32 %v6681, %v6684
        %v6686 = vsel %vm2764, %v6676, %v6685
        %v6688 = vshrl.u32 %v6322, 16
        %v6690 = vrot.slane %v6688, 2
        %v6691 = vshll.u32 %v6322, 16
        %v6693 = vrot.slane %v6691, 3
        %v6694 = vor.u32 %v6690, %v6693
        %v6695 = vsel %vm2764, %v6685, %v6694
        %v6697 = vshrl.u32 %v6323, 16
        %v6699 = vrot.slane %v6697, 2
        %v6700 = vshll.u32 %v6323, 16
        %v6702 = vrot.slane %v6700, 3
        %v6703 = vor.u32 %v6699, %v6702
        %v6704 = vsel %vm2764, %v6694, %v6703
        %v6706 = vshrl.u32 %v6324, 16
        %v6708 = vrot.slane %v6706, 2
        %v6709 = vshll.u32 %v6324, 16
        %v6711 = vrot.slane %v6709, 3
        %v6712 = vor.u32 %v6708, %v6711
        %v6713 = vsel %vm2764, %v6703, %v6712
        %v6715 = vshrl.u32 %v6325, 16
        %v6717 = vrot.slane %v6715, 2
        %v6718 = vshll.u32 %v6325, 16
        %v6720 = vrot.slane %v6718, 3
        %v6721 = vor.u32 %v6717, %v6720
        %v6722 = vsel %vm2764, %v6712, %v6721
        %v6724 = vshrl.u32 %v6326, 16
        %v6726 = vrot.slane %v6724, 2
        %v6727 = vshll.u32 %v6326, 16
        %v6729 = vrot.slane %v6727, 3
        %v6730 = vor.u32 %v6726, %v6729
        %v6731 = vsel %vm2764, %v6721, %v6730
        %v6733 = vshrl.u32 %v6327, 16
        %v6735 = vrot.slane %v6733, 2
        %v6736 = vshll.u32 %v6327, 16
        %v6738 = vrot.slane %v6736, 3
        %v6739 = vor.u32 %v6735, %v6738
        %v6740 = vsel %vm2764, %v6730, %v6739
        %v6742 = vshrl.u32 %v6328, 16
        %v6744 = vrot.slane %v6742, 2
        %v6745 = vshll.u32 %v6328, 16
        %v6747 = vrot.slane %v6745, 3
        %v6748 = vor.u32 %v6744, %v6747
        %v6749 = vsel %vm2764, %v6739, %v6748
        %v6751 = vshrl.u32 %v6588, 16
        %v6753 = vrot.slane %v6751, 2
        %v6754 = vshll.u32 %v6588, 16
        %v6756 = vrot.slane %v6754, 3
        %v6757 = vor.u32 %v6753, %v6756
        %v6758 = vsel %vm2764, %v6748, %v6757
        %v6793 = vunpack.c.l.b16 %v6570
        %v6794 = vunpack.c.l.b16 %v6571
        %v6795 = vunpack.c.l.b16 %v6572
        %v6796 = vunpack.c.l.b16 %v6573
        %v6797 = vunpack.c.l.b16 %v6574
        %v6798 = vunpack.c.l.b16 %v6575
        %v6799 = vunpack.c.l.b16 %v6576
        %v6800 = vunpack.c.l.b16 %v6577
        %v6801 = vunpack.c.l.b16 %v6578
        %v6802 = vunpack.c.l.b16 %v6579
        %v6803 = vunpack.c.l.b16 %v6580
        %v6804 = vunpack.c.l.b16 %v6581
        %v6805 = vunpack.c.l.b16 %v6582
        %v6806 = vunpack.c.l.b16 %v6583
        %v6807 = vunpack.c.l.b16 %v6584
        %v6808 = vunpack.c.l.b16 %v6585
        %v6809 = vpack.c.b16 %v6794, %v6793
        %v6810 = vpack.c.b16 %v6796, %v6795
        %v6811 = vpack.c.b16 %v6798, %v6797
        %v6812 = vpack.c.b16 %v6800, %v6799
        %v6813 = vpack.c.b16 %v6802, %v6801
        %v6814 = vpack.c.b16 %v6804, %v6803
        %v6815 = vpack.c.b16 %v6806, %v6805
        %v6816 = vpack.c.b16 %v6808, %v6807
        %6825 = vmatpush.bf16.msra.mxu0 %v6816
        %6826 = vmatpush.bf16.msra.mxu0 %v6815
        %6827 = vmatpush.bf16.msra.mxu0 %v6814
        %6828 = vmatpush.bf16.msra.mxu0 %v6813
        %6829 = vmatpush.bf16.msra.mxu0 %v6812
        %6830 = vmatpush.bf16.msra.mxu0 %v6811
        %6831 = vmatpush.bf16.msra.mxu0 %v6810
        %6832 = vmatpush.bf16.msra.mxu0 %v6809
        %6833 = vmatmul.bf16.gmra.mxu0 %v6605
        %v6834 = vpop.f32.mrf.mxu0
        %v6835 = vadd.f32 0.0, %v6834
        %v6836 = vpop.f32.mrf.mxu0
        %v6837 = vadd.f32 0.0, %v6836
        %6838 = vmatmul.bf16.gmra.mxu0 %v6614
        %v6839 = vpop.f32.mrf.mxu0
        %v6840 = vadd.f32 0.0, %v6839
        %v6841 = vpop.f32.mrf.mxu0
        %v6842 = vadd.f32 0.0, %v6841
        %6843 = vmatmul.bf16.gmra.mxu0 %v6623
        %v6844 = vpop.f32.mrf.mxu0
        %v6845 = vadd.f32 0.0, %v6844
        %v6846 = vpop.f32.mrf.mxu0
        %v6847 = vadd.f32 0.0, %v6846
        %6848 = vmatmul.bf16.gmra.mxu0 %v6632
        %v6849 = vpop.f32.mrf.mxu0
        %v6850 = vadd.f32 0.0, %v6849
        %v6851 = vpop.f32.mrf.mxu0
        %v6852 = vadd.f32 0.0, %v6851
        %6853 = vmatmul.bf16.gmra.mxu0 %v6641
        %v6854 = vpop.f32.mrf.mxu0
        %v6855 = vadd.f32 0.0, %v6854
        %v6856 = vpop.f32.mrf.mxu0
        %v6857 = vadd.f32 0.0, %v6856
        %6858 = vmatmul.bf16.gmra.mxu0 %v6650
        %v6859 = vpop.f32.mrf.mxu0
        %v6860 = vadd.f32 0.0, %v6859
        %v6861 = vpop.f32.mrf.mxu0
        %v6862 = vadd.f32 0.0, %v6861
        %6863 = vmatmul.bf16.gmra.mxu0 %v6659
        %v6864 = vpop.f32.mrf.mxu0
        %v6865 = vadd.f32 0.0, %v6864
        %v6866 = vpop.f32.mrf.mxu0
        %v6867 = vadd.f32 0.0, %v6866
        %6868 = vmatmul.bf16.gmra.mxu0 %v6668
        %v6869 = vpop.f32.mrf.mxu0
        %v6870 = vadd.f32 0.0, %v6869
        %v6871 = vpop.f32.mrf.mxu0
        %v6872 = vadd.f32 0.0, %v6871
        %6873 = vmatmul.bf16.gmra.mxu0 %v6677
        %v6874 = vpop.f32.mrf.mxu0
        %v6875 = vadd.f32 0.0, %v6874
        %v6876 = vpop.f32.mrf.mxu0
        %v6877 = vadd.f32 0.0, %v6876
        %6878 = vmatmul.bf16.gmra.mxu0 %v6686
        %v6879 = vpop.f32.mrf.mxu0
        %v6880 = vadd.f32 0.0, %v6879
        %v6881 = vpop.f32.mrf.mxu0
        %v6882 = vadd.f32 0.0, %v6881
        %6883 = vmatmul.bf16.gmra.mxu0 %v6695
        %v6884 = vpop.f32.mrf.mxu0
        %v6885 = vadd.f32 0.0, %v6884
        %v6886 = vpop.f32.mrf.mxu0
        %v6887 = vadd.f32 0.0, %v6886
        %6888 = vmatmul.bf16.gmra.mxu0 %v6704
        %v6889 = vpop.f32.mrf.mxu0
        %v6890 = vadd.f32 0.0, %v6889
        %v6891 = vpop.f32.mrf.mxu0
        %v6892 = vadd.f32 0.0, %v6891
        %6893 = vmatmul.bf16.gmra.mxu0 %v6713
        %v6894 = vpop.f32.mrf.mxu0
        %v6895 = vadd.f32 0.0, %v6894
        %v6896 = vpop.f32.mrf.mxu0
        %v6897 = vadd.f32 0.0, %v6896
        %6898 = vmatmul.bf16.gmra.mxu0 %v6722
        %v6899 = vpop.f32.mrf.mxu0
        %v6900 = vadd.f32 0.0, %v6899
        %v6901 = vpop.f32.mrf.mxu0
        %v6902 = vadd.f32 0.0, %v6901
        %6903 = vmatmul.bf16.gmra.mxu0 %v6731
        %v6904 = vpop.f32.mrf.mxu0
        %v6905 = vadd.f32 0.0, %v6904
        %v6906 = vpop.f32.mrf.mxu0
        %v6907 = vadd.f32 0.0, %v6906
        %6908 = vmatmul.bf16.gmra.mxu0 %v6740
        %v6909 = vpop.f32.mrf.mxu0
        %v6910 = vadd.f32 0.0, %v6909
        %v6911 = vpop.f32.mrf.mxu0
        %v6912 = vadd.f32 0.0, %v6911
        %6913 = vmatmul.bf16.gmra.mxu0 %v6749
        %v6914 = vpop.f32.mrf.mxu0
        %v6915 = vadd.f32 0.0, %v6914
        %v6916 = vpop.f32.mrf.mxu0
        %v6917 = vadd.f32 0.0, %v6916
        %6918 = vmatmul.bf16.gmra.mxu0 %v6758
        %v6919 = vpop.f32.mrf.mxu0
        %v6920 = vadd.f32 0.0, %v6919
        %v6921 = vpop.f32.mrf.mxu0
        %v6922 = vadd.f32 0.0, %v6921
        %6923 = vdwg.mxu0
        %v6924 = vadd.f32 %v6532, %v6835
        %v6925 = vadd.f32 %v6533, %v6837
        %v6926 = vadd.f32 %v6534, %v6840
        %v6927 = vadd.f32 %v6535, %v6842
        %v6928 = vadd.f32 %v6536, %v6845
        %v6929 = vadd.f32 %v6537, %v6847
        %v6930 = vadd.f32 %v6538, %v6850
        %v6931 = vadd.f32 %v6539, %v6852
        %v6932 = vadd.f32 %v6540, %v6855
        %v6933 = vadd.f32 %v6541, %v6857
        %v6934 = vadd.f32 %v6542, %v6860
        %v6935 = vadd.f32 %v6543, %v6862
        %v6936 = vadd.f32 %v6544, %v6865
        %v6937 = vadd.f32 %v6545, %v6867
        %v6938 = vadd.f32 %v6546, %v6870
        %v6939 = vadd.f32 %v6547, %v6872
        %v6940 = vadd.f32 %v6548, %v6875
        %v6941 = vadd.f32 %v6549, %v6877
        %v6942 = vadd.f32 %v6550, %v6880
        %v6943 = vadd.f32 %v6551, %v6882
        %v6944 = vadd.f32 %v6552, %v6885
        %v6945 = vadd.f32 %v6553, %v6887
        %v6946 = vadd.f32 %v6554, %v6890
        %v6947 = vadd.f32 %v6555, %v6892
        %v6948 = vadd.f32 %v6556, %v6895
        %v6949 = vadd.f32 %v6557, %v6897
        %v6950 = vadd.f32 %v6558, %v6900
        %v6951 = vadd.f32 %v6559, %v6902
        %v6952 = vadd.f32 %v6560, %v6905
        %v6953 = vadd.f32 %v6561, %v6907
        %v6954 = vadd.f32 %v6562, %v6910
        %v6955 = vadd.f32 %v6563, %v6912
        %v6956 = vadd.f32 %v6564, %v6915
        %v6957 = vadd.f32 %v6565, %v6917
        %v6958 = vadd.f32 %v6566, %v6920
        %v6959 = vadd.f32 %v6567, %v6922
        %v6960 = vld [vmem:[#allocation3 + $0x10] sm:$0x8]
        %s6961 = scalar_lea.vmem [#allocation5], 1088
        %v6962 = vld [vmem:[%s6961] sm:$0xf]
        %v6963 = vld [vmem:[%s6961 + $0x4] sm:$0xf]
        %v6964 = vld [vmem:[%s6961 + $0x8] sm:$0xf]
        %v6965 = vld [vmem:[%s6961 + $0xc] sm:$0xf]
        %v6966 = vld [vmem:[%s6961 + $0x10] sm:$0xf]
        %v6967 = vld [vmem:[%s6961 + $0x14] sm:$0xf]
        %v6968 = vld [vmem:[%s6961 + $0x18] sm:$0xf]
        %v6969 = vld [vmem:[%s6961 + $0x1c] sm:$0xf]
        %v6970 = vld [vmem:[%s6961 + $0x20] sm:$0xf]
        %v6971 = vld [vmem:[%s6961 + $0x24] sm:$0xf]
        %v6972 = vld [vmem:[%s6961 + $0x28] sm:$0xf]
        %v6973 = vld [vmem:[%s6961 + $0x2c] sm:$0xf]
        %v6974 = vld [vmem:[%s6961 + $0x30] sm:$0xf]
        %v6975 = vld [vmem:[%s6961 + $0x34] sm:$0xf]
        %v6976 = vld [vmem:[%s6961 + $0x38] sm:$0xf]
        %v6977 = vld [vmem:[%s6961 + $0x3c] sm:$0xf]
        %v6979 = vunpack.c.l.b16 %v6960
        %v6980 = vpack.c.b16 %v6275, %v6979
        %v6981 = vrot.slane %v6980, 3
        %v6982 = vrot.slane %v6312, 3
        %v6983 = vsel %vm3157, %v6981, %v6982
        %v6984 = vrot.slane %v6313, 3
        %v6985 = vsel %vm3157, %v6982, %v6984
        %v6986 = vrot.slane %v6314, 3
        %v6987 = vsel %vm3157, %v6984, %v6986
        %v6988 = vrot.slane %v6315, 3
        %v6989 = vsel %vm3157, %v6986, %v6988
        %v6990 = vrot.slane %v6316, 3
        %v6991 = vsel %vm3157, %v6988, %v6990
        %v6992 = vrot.slane %v6317, 3
        %v6993 = vsel %vm3157, %v6990, %v6992
        %v6994 = vrot.slane %v6318, 3
        %v6995 = vsel %vm3157, %v6992, %v6994
        %v6996 = vrot.slane %v6319, 3
        %v6997 = vsel %vm3157, %v6994, %v6996
        %v6998 = vrot.slane %v6320, 3
        %v6999 = vsel %vm3157, %v6996, %v6998
        %v7000 = vrot.slane %v6321, 3
        %v7001 = vsel %vm3157, %v6998, %v7000
        %v7002 = vrot.slane %v6322, 3
        %v7003 = vsel %vm3157, %v7000, %v7002
        %v7004 = vrot.slane %v6323, 3
        %v7005 = vsel %vm3157, %v7002, %v7004
        %v7006 = vrot.slane %v6324, 3
        %v7007 = vsel %vm3157, %v7004, %v7006
        %v7008 = vrot.slane %v6325, 3
        %v7009 = vsel %vm3157, %v7006, %v7008
        %v7010 = vrot.slane %v6326, 3
        %v7011 = vsel %vm3157, %v7008, %v7010
        %v7012 = vrot.slane %v6327, 3
        %v7013 = vsel %vm3157, %v7010, %v7012
        %v7014 = vrot.slane %v6328, 3
        %v7015 = vsel %vm3157, %v7012, %v7014
        %v7016 = vrot.slane %v6588, 3
        %v7017 = vsel %vm3157, %v7014, %v7016
        %v7052 = vunpack.c.l.b16 %v6962
        %v7053 = vunpack.c.l.b16 %v6963
        %v7054 = vunpack.c.l.b16 %v6964
        %v7055 = vunpack.c.l.b16 %v6965
        %v7056 = vunpack.c.l.b16 %v6966
        %v7057 = vunpack.c.l.b16 %v6967
        %v7058 = vunpack.c.l.b16 %v6968
        %v7059 = vunpack.c.l.b16 %v6969
        %v7060 = vunpack.c.l.b16 %v6970
        %v7061 = vunpack.c.l.b16 %v6971
        %v7062 = vunpack.c.l.b16 %v6972
        %v7063 = vunpack.c.l.b16 %v6973
        %v7064 = vunpack.c.l.b16 %v6974
        %v7065 = vunpack.c.l.b16 %v6975
        %v7066 = vunpack.c.l.b16 %v6976
        %v7067 = vunpack.c.l.b16 %v6977
        %v7068 = vpack.c.b16 %v7053, %v7052
        %v7069 = vpack.c.b16 %v7055, %v7054
        %v7070 = vpack.c.b16 %v7057, %v7056
        %v7071 = vpack.c.b16 %v7059, %v7058
        %v7072 = vpack.c.b16 %v7061, %v7060
        %v7073 = vpack.c.b16 %v7063, %v7062
        %v7074 = vpack.c.b16 %v7065, %v7064
        %v7075 = vpack.c.b16 %v7067, %v7066
        %7084 = vmatpush.bf16.msra.mxu0 %v7075
        %7085 = vmatpush.bf16.msra.mxu0 %v7074
        %7086 = vmatpush.bf16.msra.mxu0 %v7073
        %7087 = vmatpush.bf16.msra.mxu0 %v7072
        %7088 = vmatpush.bf16.msra.mxu0 %v7071
        %7089 = vmatpush.bf16.msra.mxu0 %v7070
        %7090 = vmatpush.bf16.msra.mxu0 %v7069
        %7091 = vmatpush.bf16.msra.mxu0 %v7068
        %7092 = vmatmul.bf16.gmra.mxu0 %v6983
        %v7093 = vpop.f32.mrf.mxu0
        %v7094 = vadd.f32 0.0, %v7093
        %v7095 = vpop.f32.mrf.mxu0
        %v7096 = vadd.f32 0.0, %v7095
        %7097 = vmatmul.bf16.gmra.mxu0 %v6985
        %v7098 = vpop.f32.mrf.mxu0
        %v7099 = vadd.f32 0.0, %v7098
        %v7100 = vpop.f32.mrf.mxu0
        %v7101 = vadd.f32 0.0, %v7100
        %7102 = vmatmul.bf16.gmra.mxu0 %v6987
        %v7103 = vpop.f32.mrf.mxu0
        %v7104 = vadd.f32 0.0, %v7103
        %v7105 = vpop.f32.mrf.mxu0
        %v7106 = vadd.f32 0.0, %v7105
        %7107 = vmatmul.bf16.gmra.mxu0 %v6989
        %v7108 = vpop.f32.mrf.mxu0
        %v7109 = vadd.f32 0.0, %v7108
        %v7110 = vpop.f32.mrf.mxu0
        %v7111 = vadd.f32 0.0, %v7110
        %7112 = vmatmul.bf16.gmra.mxu0 %v6991
        %v7113 = vpop.f32.mrf.mxu0
        %v7114 = vadd.f32 0.0, %v7113
        %v7115 = vpop.f32.mrf.mxu0
        %v7116 = vadd.f32 0.0, %v7115
        %7117 = vmatmul.bf16.gmra.mxu0 %v6993
        %v7118 = vpop.f32.mrf.mxu0
        %v7119 = vadd.f32 0.0, %v7118
        %v7120 = vpop.f32.mrf.mxu0
        %v7121 = vadd.f32 0.0, %v7120
        %7122 = vmatmul.bf16.gmra.mxu0 %v6995
        %v7123 = vpop.f32.mrf.mxu0
        %v7124 = vadd.f32 0.0, %v7123
        %v7125 = vpop.f32.mrf.mxu0
        %v7126 = vadd.f32 0.0, %v7125
        %7127 = vmatmul.bf16.gmra.mxu0 %v6997
        %v7128 = vpop.f32.mrf.mxu0
        %v7129 = vadd.f32 0.0, %v7128
        %v7130 = vpop.f32.mrf.mxu0
        %v7131 = vadd.f32 0.0, %v7130
        %7132 = vmatmul.bf16.gmra.mxu0 %v6999
        %v7133 = vpop.f32.mrf.mxu0
        %v7134 = vadd.f32 0.0, %v7133
        %v7135 = vpop.f32.mrf.mxu0
        %v7136 = vadd.f32 0.0, %v7135
        %7137 = vmatmul.bf16.gmra.mxu0 %v7001
        %v7138 = vpop.f32.mrf.mxu0
        %v7139 = vadd.f32 0.0, %v7138
        %v7140 = vpop.f32.mrf.mxu0
        %v7141 = vadd.f32 0.0, %v7140
        %7142 = vmatmul.bf16.gmra.mxu0 %v7003
        %v7143 = vpop.f32.mrf.mxu0
        %v7144 = vadd.f32 0.0, %v7143
        %v7145 = vpop.f32.mrf.mxu0
        %v7146 = vadd.f32 0.0, %v7145
        %7147 = vmatmul.bf16.gmra.mxu0 %v7005
        %v7148 = vpop.f32.mrf.mxu0
        %v7149 = vadd.f32 0.0, %v7148
        %v7150 = vpop.f32.mrf.mxu0
        %v7151 = vadd.f32 0.0, %v7150
        %7152 = vmatmul.bf16.gmra.mxu0 %v7007
        %v7153 = vpop.f32.mrf.mxu0
        %v7154 = vadd.f32 0.0, %v7153
        %v7155 = vpop.f32.mrf.mxu0
        %v7156 = vadd.f32 0.0, %v7155
        %7157 = vmatmul.bf16.gmra.mxu0 %v7009
        %v7158 = vpop.f32.mrf.mxu0
        %v7159 = vadd.f32 0.0, %v7158
        %v7160 = vpop.f32.mrf.mxu0
        %v7161 = vadd.f32 0.0, %v7160
        %7162 = vmatmul.bf16.gmra.mxu0 %v7011
        %v7163 = vpop.f32.mrf.mxu0
        %v7164 = vadd.f32 0.0, %v7163
        %v7165 = vpop.f32.mrf.mxu0
        %v7166 = vadd.f32 0.0, %v7165
        %7167 = vmatmul.bf16.gmra.mxu0 %v7013
        %v7168 = vpop.f32.mrf.mxu0
        %v7169 = vadd.f32 0.0, %v7168
        %v7170 = vpop.f32.mrf.mxu0
        %v7171 = vadd.f32 0.0, %v7170
        %7172 = vmatmul.bf16.gmra.mxu0 %v7015
        %v7173 = vpop.f32.mrf.mxu0
        %v7174 = vadd.f32 0.0, %v7173
        %v7175 = vpop.f32.mrf.mxu0
        %v7176 = vadd.f32 0.0, %v7175
        %7177 = vmatmul.bf16.gmra.mxu0 %v7017
        %v7178 = vpop.f32.mrf.mxu0
        %v7179 = vadd.f32 0.0, %v7178
        %v7180 = vpop.f32.mrf.mxu0
        %v7181 = vadd.f32 0.0, %v7180
        %7182 = vdwg.mxu0
        %v7183 = vadd.f32 %v6924, %v7094
        %v7184 = vadd.f32 %v6925, %v7096
        %v7185 = vadd.f32 %v6926, %v7099
        %v7186 = vadd.f32 %v6927, %v7101
        %v7187 = vadd.f32 %v6928, %v7104
        %v7188 = vadd.f32 %v6929, %v7106
        %v7189 = vadd.f32 %v6930, %v7109
        %v7190 = vadd.f32 %v6931, %v7111
        %v7191 = vadd.f32 %v6932, %v7114
        %v7192 = vadd.f32 %v6933, %v7116
        %v7193 = vadd.f32 %v6934, %v7119
        %v7194 = vadd.f32 %v6935, %v7121
        %v7195 = vadd.f32 %v6936, %v7124
        %v7196 = vadd.f32 %v6937, %v7126
        %v7197 = vadd.f32 %v6938, %v7129
        %v7198 = vadd.f32 %v6939, %v7131
        %v7199 = vadd.f32 %v6940, %v7134
        %v7200 = vadd.f32 %v6941, %v7136
        %v7201 = vadd.f32 %v6942, %v7139
        %v7202 = vadd.f32 %v6943, %v7141
        %v7203 = vadd.f32 %v6944, %v7144
        %v7204 = vadd.f32 %v6945, %v7146
        %v7205 = vadd.f32 %v6946, %v7149
        %v7206 = vadd.f32 %v6947, %v7151
        %v7207 = vadd.f32 %v6948, %v7154
        %v7208 = vadd.f32 %v6949, %v7156
        %v7209 = vadd.f32 %v6950, %v7159
        %v7210 = vadd.f32 %v6951, %v7161
        %v7211 = vadd.f32 %v6952, %v7164
        %v7212 = vadd.f32 %v6953, %v7166
        %v7213 = vadd.f32 %v6954, %v7169
        %v7214 = vadd.f32 %v6955, %v7171
        %v7215 = vadd.f32 %v6956, %v7174
        %v7216 = vadd.f32 %v6957, %v7176
        %v7217 = vadd.f32 %v6958, %v7179
        %v7218 = vadd.f32 %v6959, %v7181
        %s7219 = scalar_lea.vmem [#allocation8], 1
        %v7220 = vld [vmem:[%s7219] sm:$0x1]
        %v7222 = vperm.slane %v7220, 0
        %v7224 = vadd.f32 %v7183, %v7222
        %v7225 = vadd.f32 %v7184, %v7222
        %v7226 = vadd.f32 %v7185, %v7222
        %v7227 = vadd.f32 %v7186, %v7222
        %v7228 = vadd.f32 %v7187, %v7222
        %v7229 = vadd.f32 %v7188, %v7222
        %v7230 = vadd.f32 %v7189, %v7222
        %v7231 = vadd.f32 %v7190, %v7222
        %v7232 = vadd.f32 %v7191, %v7222
        %v7233 = vadd.f32 %v7192, %v7222
        %v7234 = vadd.f32 %v7193, %v7222
        %v7235 = vadd.f32 %v7194, %v7222
        %v7236 = vadd.f32 %v7195, %v7222
        %v7237 = vadd.f32 %v7196, %v7222
        %v7238 = vadd.f32 %v7197, %v7222
        %v7239 = vadd.f32 %v7198, %v7222
        %v7240 = vadd.f32 %v7199, %v7222
        %v7241 = vadd.f32 %v7200, %v7222
        %v7242 = vadd.f32 %v7201, %v7222
        %v7243 = vadd.f32 %v7202, %v7222
        %v7244 = vadd.f32 %v7203, %v7222
        %v7245 = vadd.f32 %v7204, %v7222
        %v7246 = vadd.f32 %v7205, %v7222
        %v7247 = vadd.f32 %v7206, %v7222
        %v7248 = vadd.f32 %v7207, %v7222
        %v7249 = vadd.f32 %v7208, %v7222
        %v7250 = vadd.f32 %v7209, %v7222
        %v7251 = vadd.f32 %v7210, %v7222
        %v7252 = vadd.f32 %v7211, %v7222
        %v7253 = vadd.f32 %v7212, %v7222
        %v7254 = vadd.f32 %v7213, %v7222
        %v7255 = vadd.f32 %v7214, %v7222
        %v7256 = vadd.f32 %v7215, %v7222
        %v7257 = vadd.f32 %v7216, %v7222
        %v7258 = vadd.f32 %v7217, %v7222
        %v7259 = vadd.f32 %v7218, %v7222
        %v7260 = vmax.f32 %v7224, 0.0
        %v7261 = vmax.f32 %v7225, 0.0
        %v7262 = vmax.f32 %v7226, 0.0
        %v7263 = vmax.f32 %v7227, 0.0
        %v7264 = vmax.f32 %v7228, 0.0
        %v7265 = vmax.f32 %v7229, 0.0
        %v7266 = vmax.f32 %v7230, 0.0
        %v7267 = vmax.f32 %v7231, 0.0
        %v7268 = vmax.f32 %v7232, 0.0
        %v7269 = vmax.f32 %v7233, 0.0
        %v7270 = vmax.f32 %v7234, 0.0
        %v7271 = vmax.f32 %v7235, 0.0
        %v7272 = vmax.f32 %v7236, 0.0
        %v7273 = vmax.f32 %v7237, 0.0
        %v7274 = vmax.f32 %v7238, 0.0
        %v7275 = vmax.f32 %v7239, 0.0
        %v7276 = vmax.f32 %v7240, 0.0
        %v7277 = vmax.f32 %v7241, 0.0
        %v7278 = vmax.f32 %v7242, 0.0
        %v7279 = vmax.f32 %v7243, 0.0
        %v7280 = vmax.f32 %v7244, 0.0
        %v7281 = vmax.f32 %v7245, 0.0
        %v7282 = vmax.f32 %v7246, 0.0
        %v7283 = vmax.f32 %v7247, 0.0
        %v7284 = vmax.f32 %v7248, 0.0
        %v7285 = vmax.f32 %v7249, 0.0
        %v7286 = vmax.f32 %v7250, 0.0
        %v7287 = vmax.f32 %v7251, 0.0
        %v7288 = vmax.f32 %v7252, 0.0
        %v7289 = vmax.f32 %v7253, 0.0
        %v7290 = vmax.f32 %v7254, 0.0
        %v7291 = vmax.f32 %v7255, 0.0
        %v7292 = vmax.f32 %v7256, 0.0
        %v7293 = vmax.f32 %v7257, 0.0
        %v7294 = vmax.f32 %v7258, 0.0
        %v7295 = vmax.f32 %v7259, 0.0
        %7296 = vst [vmem:[#allocation4] sm:$0xff] %v7260
        %7297 = vst [vmem:[#allocation4 + $0x8] sm:$0xff] %v7261
        %7298 = vst [vmem:[#allocation4 + $0x10] sm:$0xff] %v7262
        %7299 = vst [vmem:[#allocation4 + $0x18] sm:$0xff] %v7263
        %7300 = vst [vmem:[#allocation4 + $0x20] sm:$0xff] %v7264
        %7301 = vst [vmem:[#allocation4 + $0x28] sm:$0xff] %v7265
        %7302 = vst [vmem:[#allocation4 + $0x30] sm:$0xff] %v7266
        %7303 = vst [vmem:[#allocation4 + $0x38] sm:$0xff] %v7267
        %7304 = vst [vmem:[#allocation4 + $0x40] sm:$0xff] %v7268
        %7305 = vst [vmem:[#allocation4 + $0x48] sm:$0xff] %v7269
        %7306 = vst [vmem:[#allocation4 + $0x50] sm:$0xff] %v7270
        %7307 = vst [vmem:[#allocation4 + $0x58] sm:$0xff] %v7271
        %7308 = vst [vmem:[#allocation4 + $0x60] sm:$0xff] %v7272
        %7309 = vst [vmem:[#allocation4 + $0x68] sm:$0xff] %v7273
        %7310 = vst [vmem:[#allocation4 + $0x70] sm:$0xff] %v7274
        %7311 = vst [vmem:[#allocation4 + $0x78] sm:$0xff] %v7275
        %7312 = vst [vmem:[#allocation4 + $0x80] sm:$0xff] %v7276
        %7313 = vst [vmem:[#allocation4 + $0x88] sm:$0xff] %v7277
        %7314 = vst [vmem:[#allocation4 + $0x90] sm:$0xff] %v7278
        %7315 = vst [vmem:[#allocation4 + $0x98] sm:$0xff] %v7279
        %7316 = vst [vmem:[#allocation4 + $0xa0] sm:$0xff] %v7280
        %7317 = vst [vmem:[#allocation4 + $0xa8] sm:$0xff] %v7281
        %7318 = vst [vmem:[#allocation4 + $0xb0] sm:$0xff] %v7282
        %7319 = vst [vmem:[#allocation4 + $0xb8] sm:$0xff] %v7283
        %7320 = vst [vmem:[#allocation4 + $0xc0] sm:$0xff] %v7284
        %7321 = vst [vmem:[#allocation4 + $0xc8] sm:$0xff] %v7285
        %7322 = vst [vmem:[#allocation4 + $0xd0] sm:$0xff] %v7286
        %7323 = vst [vmem:[#allocation4 + $0xd8] sm:$0xff] %v7287
        %7324 = vst [vmem:[#allocation4 + $0xe0] sm:$0xff] %v7288
        %7325 = vst [vmem:[#allocation4 + $0xe8] sm:$0xff] %v7289
        %7326 = vst [vmem:[#allocation4 + $0xf0] sm:$0xff] %v7290
        %7327 = vst [vmem:[#allocation4 + $0xf8] sm:$0xff] %v7291
        %7328 = vst [vmem:[#allocation4 + $0x100] sm:$0xff] %v7292
        %7329 = vst [vmem:[#allocation4 + $0x108] sm:$0xff] %v7293
        %7330 = vst [vmem:[#allocation4 + $0x110] sm:$0xff] %v7294
        %7331 = vst [vmem:[#allocation4 + $0x118] sm:$0xff] %v7295
        %7332 = vst [vmem:[#allocation2] sm:$0xf] 0
        %7333 = vst [vmem:[#allocation2 + $0x4] sm:$0xf] 0
        %7334 = vst [vmem:[#allocation2 + $0x8] sm:$0xf] 0
        %7335 = vst [vmem:[#allocation2 + $0xc] sm:$0xf] 0
        %7336 = vst [vmem:[#allocation2 + $0x10] sm:$0xf] 0
        %7337 = vst [vmem:[#allocation2 + $0x14] sm:$0xf] 0
        %7338 = vst [vmem:[#allocation2 + $0x18] sm:$0xf] 0
        %7339 = vst [vmem:[#allocation2 + $0x1c] sm:$0xf] 0
        %7340 = vst [vmem:[#allocation2 + $0x20] sm:$0xf] 0
        %7341 = vst [vmem:[#allocation2 + $0x24] sm:$0xf] 0
        %7342 = vst [vmem:[#allocation2 + $0x28] sm:$0xf] 0
        %7343 = vst [vmem:[#allocation2 + $0x2c] sm:$0xf] 0
        %7344 = vst [vmem:[#allocation2 + $0x30] sm:$0xf] 0
        %7345 = vst [vmem:[#allocation2 + $0x34] sm:$0xf] 0
        %7346 = vst [vmem:[#allocation2 + $0x38] sm:$0xf] 0
        %7347 = vst [vmem:[#allocation2 + $0x3c] sm:$0xf] 0
        %7348 = vst [vmem:[#allocation2 + $0x40] sm:$0xf] 0
        %7349 = vst [vmem:[#allocation2 + $0x44] sm:$0xf] 0
        %7350 = vst [vmem:[#allocation2 + $0x48] sm:$0xf] 0
        %7351 = vst [vmem:[#allocation2 + $0x4c] sm:$0xf] 0
        %7352 = vst [vmem:[#allocation2 + $0x50] sm:$0xf] 0
        %7353 = vst [vmem:[#allocation2 + $0x54] sm:$0xf] 0
        %7354 = vst [vmem:[#allocation2 + $0x58] sm:$0xf] 0
        %7355 = vst [vmem:[#allocation2 + $0x5c] sm:$0xf] 0
        %7356 = vst [vmem:[#allocation2 + $0x60] sm:$0xf] 0
        %7357 = vst [vmem:[#allocation2 + $0x64] sm:$0xf] 0
        %7358 = vst [vmem:[#allocation2 + $0x68] sm:$0xf] 0
        %7359 = vst [vmem:[#allocation2 + $0x6c] sm:$0xf] 0
        %7360 = vst [vmem:[#allocation2 + $0x70] sm:$0xf] 0
        %7361 = vst [vmem:[#allocation2 + $0x74] sm:$0xf] 0
        %7362 = vst [vmem:[#allocation2 + $0x78] sm:$0xf] 0
        %7363 = vst [vmem:[#allocation2 + $0x7c] sm:$0xf] 0
        %7364 = vst [vmem:[#allocation2 + $0x80] sm:$0xf] 0
        %7365 = vst [vmem:[#allocation2 + $0x84] sm:$0xf] 0
        %7366 = vst [vmem:[#allocation2 + $0x88] sm:$0xf] 0
        %7367 = vst [vmem:[#allocation2 + $0x8c] sm:$0xf] 0
        %7368 = vst [vmem:[#allocation2 + $0x90] sm:$0xf] 0
        %7369 = vst [vmem:[#allocation2 + $0x94] sm:$0xf] 0
        %7370 = vst [vmem:[#allocation2 + $0x98] sm:$0xf] 0
        %7371 = vst [vmem:[#allocation2 + $0x9c] sm:$0xf] 0
        %7372 = vst [vmem:[#allocation2 + $0xa0] sm:$0x7] 0
        %v7373 = vld [vmem:[#allocation4] ss:$2 sm:$0xff]
        %s7374 = scalar_lea.vmem [#allocation4], 1
        %v7375 = vld [vmem:[%s7374] ss:$2 sm:$0xff]
        %v7376 = vmax.f32 %v7373, %v7375
        %s7377 = scalar_lea.vmem [#allocation4], 18
        %v7378 = vld [vmem:[%s7377] ss:$2 sm:$0xff]
        %s7379 = scalar_lea.vmem [#allocation4], 19
        %v7380 = vld [vmem:[%s7379] ss:$2 sm:$0xff]
        %v7381 = vmax.f32 %v7378, %v7380
        %v7382 = vmax.f32 %v7376, %v7381
        %v7383 = vpack.c.bf16 %v7382, %v7382
        %v7385 = vshrl.u32 %v7383, 16
        %v7387 = vrot.slane %v7385, 6
        %v7388 = vshll.u32 %v7383, 16
        %v7390 = vrot.slane %v7388, 7
        %v7391 = vor.u32 %v7387, %v7390
        %v7392 = vrot.slane %v7391, 4
        %v7395 = vld [vmem:[#allocation2 + $0x4] sm:$0xe]
        %v7396 = vsel %vm4202, %v7391, %v7395
        %7397 = vst [vmem:[#allocation2 + $0x4] sm:$0xe] %v7396
        %v7398 = vld [vmem:[#allocation2 + $0x8] sm:$0x3]
        %v7399 = vsel %vm4242, %v7392, %v7398
        %7400 = vst [vmem:[#allocation2 + $0x8] sm:$0x3] %v7399
        %s7401 = scalar_lea.vmem [#allocation4], 36
        %v7402 = vld [vmem:[%s7401] ss:$2 sm:$0xff]
        %s7403 = scalar_lea.vmem [#allocation4], 37
        %v7404 = vld [vmem:[%s7403] ss:$2 sm:$0xff]
        %v7405 = vmax.f32 %v7402, %v7404
        %s7406 = scalar_lea.vmem [#allocation4], 54
        %v7407 = vld [vmem:[%s7406] ss:$2 sm:$0xff]
        %s7408 = scalar_lea.vmem [#allocation4], 55
        %v7409 = vld [vmem:[%s7408] ss:$2 sm:$0xff]
        %v7410 = vmax.f32 %v7407, %v7409
        %v7411 = vmax.f32 %v7405, %v7410
        %v7412 = vpack.c.bf16 %v7411, %v7411
        %v7414 = vshrl.u32 %v7412, 16
        %v7416 = vrot.slane %v7414, 5
        %v7417 = vshll.u32 %v7412, 16
        %v7419 = vrot.slane %v7417, 6
        %v7420 = vor.u32 %v7416, %v7419
        %v7421 = vrot.slane %v7420, 4
        %vm7424 = vcmask 1043458
        %vm7425 = vsmask.f32 7946
        %vm7426 = vmand %vm7424, %vm7425
        %v7427 = vld [vmem:[#allocation2 + $0x8] sm:$0xc]
        %v7428 = vsel %vm7426, %v7420, %v7427
        %7429 = vst [vmem:[#allocation2 + $0x8] sm:$0xc] %v7428
        %vm7430 = vcmask 1042432
        %vm7431 = vsmask.f32 2304
        %vm7432 = vmand %vm7430, %vm7431
        %v7433 = vld [vmem:[#allocation2 + $0xc] sm:$0x7]
        %v7434 = vsel %vm7432, %v7421, %v7433
        %7435 = vst [vmem:[#allocation2 + $0xc] sm:$0x7] %v7434
        %s7436 = scalar_lea.vmem [#allocation4], 72
        %v7437 = vld [vmem:[%s7436] ss:$2 sm:$0xff]
        %s7438 = scalar_lea.vmem [#allocation4], 73
        %v7439 = vld [vmem:[%s7438] ss:$2 sm:$0xff]
        %v7440 = vmax.f32 %v7437, %v7439
        %s7441 = scalar_lea.vmem [#allocation4], 90
        %v7442 = vld [vmem:[%s7441] ss:$2 sm:$0xff]
        %s7443 = scalar_lea.vmem [#allocation4], 91
        %v7444 = vld [vmem:[%s7443] ss:$2 sm:$0xff]
        %v7445 = vmax.f32 %v7442, %v7444
        %v7446 = vmax.f32 %v7440, %v7445
        %v7447 = vpack.c.bf16 %v7446, %v7446
        %v7449 = vshll.u32 %v7447, 16
        %v7451 = vrot.slane %v7449, 5
        %v7452 = vshrl.u32 %v7447, 16
        %v7454 = vrot.slane %v7452, 4
        %v7455 = vor.u32 %v7454, %v7451
        %v7456 = vrot.slane %v7455, 4
        %vm7459 = vcmask 1043459
        %vm7460 = vsmask.f32 7950
        %vm7461 = vmand %vm7459, %vm7460
        %v7462 = vld [vmem:[#allocation2 + $0xc] sm:$0x8]
        %v7463 = vsel %vm7461, %v7451, %v7462
        %7464 = vst [vmem:[#allocation2 + $0xc] sm:$0x8] %v7463
        %vm7465 = vcmask 1043456
        %vm7466 = vsmask.f32 3328
        %vm7467 = vmand %vm7465, %vm7466
        %v7468 = vld [vmem:[#allocation2 + $0x10] sm:$0xf]
        %v7469 = vsel %vm7467, %v7456, %v7468
        %7470 = vst [vmem:[#allocation2 + $0x10] sm:$0xf] %v7469
        %s7471 = scalar_lea.vmem [#allocation4], 108
        %v7472 = vld [vmem:[%s7471] ss:$2 sm:$0xff]
        %s7473 = scalar_lea.vmem [#allocation4], 109
        %v7474 = vld [vmem:[%s7473] ss:$2 sm:$0xff]
        %v7475 = vmax.f32 %v7472, %v7474
        %s7476 = scalar_lea.vmem [#allocation4], 126
        %v7477 = vld [vmem:[%s7476] ss:$2 sm:$0xff]
        %s7478 = scalar_lea.vmem [#allocation4], 127
        %v7479 = vld [vmem:[%s7478] ss:$2 sm:$0xff]
        %v7480 = vmax.f32 %v7477, %v7479
        %v7481 = vmax.f32 %v7475, %v7480
        %v7482 = vpack.c.bf16 %v7481, %v7481
        %v7484 = vshrl.u32 %v7482, 16
        %v7486 = vrot.slane %v7484, 7
        %v7487 = vshll.u32 %v7482, 16
        %v7489 = vor.u32 %v7486, %v7487
        %v7490 = vrot.slane %v7486, 4
        %vm7493 = vsmask.f32 7938
        %vm7494 = vmand %vm7465, %vm7493
        %v7495 = vld [vmem:[#allocation2 + $0x14] sm:$0xf]
        %v7496 = vsel %vm7494, %v7489, %v7495
        %7497 = vst [vmem:[#allocation2 + $0x14] sm:$0xf] %v7496
        %vm7498 = vcmask 1040384
        %vm7499 = vsmask.f32 256
        %vm7500 = vmand %vm7498, %vm7499
        %v7501 = vld [vmem:[#allocation2 + $0x18] sm:$0x1]
        %v7502 = vsel %vm7500, %v7490, %v7501
        %7503 = vst [vmem:[#allocation2 + $0x18] sm:$0x1] %v7502
        %s7504 = scalar_lea.vmem [#allocation4], 144
        %v7505 = vld [vmem:[%s7504] ss:$2 sm:$0xff]
        %s7506 = scalar_lea.vmem [#allocation4], 145
        %v7507 = vld [vmem:[%s7506] ss:$2 sm:$0xff]
        %v7508 = vmax.f32 %v7505, %v7507
        %s7509 = scalar_lea.vmem [#allocation4], 162
        %v7510 = vld [vmem:[%s7509] ss:$2 sm:$0xff]
        %s7511 = scalar_lea.vmem [#allocation4], 163
        %v7512 = vld [vmem:[%s7511] ss:$2 sm:$0xff]
        %v7513 = vmax.f32 %v7510, %v7512
        %v7514 = vmax.f32 %v7508, %v7513
        %v7515 = vpack.c.bf16 %v7514, %v7514
        %v7517 = vshrl.u32 %v7515, 16
        %v7519 = vrot.slane %v7517, 6
        %v7520 = vshll.u32 %v7515, 16
        %v7522 = vrot.slane %v7520, 7
        %v7523 = vor.u32 %v7519, %v7522
        %v7524 = vrot.slane %v7523, 4
        %v7527 = vld [vmem:[#allocation2 + $0x18] sm:$0xe]
        %v7528 = vsel %vm4202, %v7523, %v7527
        %7529 = vst [vmem:[#allocation2 + $0x18] sm:$0xe] %v7528
        %v7530 = vld [vmem:[#allocation2 + $0x1c] sm:$0x3]
        %v7531 = vsel %vm4242, %v7524, %v7530
        %7532 = vst [vmem:[#allocation2 + $0x1c] sm:$0x3] %v7531
        %s7533 = scalar_lea.vmem [#allocation4], 180
        %v7534 = vld [vmem:[%s7533] ss:$2 sm:$0xff]
        %s7535 = scalar_lea.vmem [#allocation4], 181
        %v7536 = vld [vmem:[%s7535] ss:$2 sm:$0xff]
        %v7537 = vmax.f32 %v7534, %v7536
        %s7538 = scalar_lea.vmem [#allocation4], 198
        %v7539 = vld [vmem:[%s7538] ss:$2 sm:$0xff]
        %s7540 = scalar_lea.vmem [#allocation4], 199
        %v7541 = vld [vmem:[%s7540] ss:$2 sm:$0xff]
        %v7542 = vmax.f32 %v7539, %v7541
        %v7543 = vmax.f32 %v7537, %v7542
        %v7544 = vpack.c.bf16 %v7543, %v7543
        %v7546 = vshrl.u32 %v7544, 16
        %v7548 = vrot.slane %v7546, 5
        %v7549 = vshll.u32 %v7544, 16
        %v7551 = vrot.slane %v7549, 6
        %v7552 = vor.u32 %v7548, %v7551
        %v7553 = vrot.slane %v7552, 4
        %v7556 = vld [vmem:[#allocation2 + $0x1c] sm:$0xc]
        %v7557 = vsel %vm7426, %v7552, %v7556
        %7558 = vst [vmem:[#allocation2 + $0x1c] sm:$0xc] %v7557
        %v7559 = vld [vmem:[#allocation2 + $0x20] sm:$0x7]
        %v7560 = vsel %vm7432, %v7553, %v7559
        %7561 = vst [vmem:[#allocation2 + $0x20] sm:$0x7] %v7560
        %s7562 = scalar_lea.vmem [#allocation4], 216
        %v7563 = vld [vmem:[%s7562] ss:$2 sm:$0xff]
        %s7564 = scalar_lea.vmem [#allocation4], 217
        %v7565 = vld [vmem:[%s7564] ss:$2 sm:$0xff]
        %v7566 = vmax.f32 %v7563, %v7565
        %s7567 = scalar_lea.vmem [#allocation4], 234
        %v7568 = vld [vmem:[%s7567] ss:$2 sm:$0xff]
        %s7569 = scalar_lea.vmem [#allocation4], 235
        %v7570 = vld [vmem:[%s7569] ss:$2 sm:$0xff]
        %v7571 = vmax.f32 %v7568, %v7570
        %v7572 = vmax.f32 %v7566, %v7571
        %v7573 = vpack.c.bf16 %v7572, %v7572
        %v7575 = vshll.u32 %v7573, 16
        %v7577 = vrot.slane %v7575, 5
        %v7578 = vshrl.u32 %v7573, 16
        %v7580 = vrot.slane %v7578, 4
        %v7581 = vor.u32 %v7580, %v7577
        %v7582 = vrot.slane %v7581, 4
        %v7585 = vld [vmem:[#allocation2 + $0x20] sm:$0x8]
        %v7586 = vsel %vm7461, %v7577, %v7585
        %7587 = vst [vmem:[#allocation2 + $0x20] sm:$0x8] %v7586
        %v7588 = vld [vmem:[#allocation2 + $0x24] sm:$0xf]
        %v7589 = vsel %vm7467, %v7582, %v7588
        %7590 = vst [vmem:[#allocation2 + $0x24] sm:$0xf] %v7589
        %s7591 = scalar_lea.vmem [#allocation4], 252
        %v7592 = vld [vmem:[%s7591] ss:$2 sm:$0xff]
        %s7593 = scalar_lea.vmem [#allocation4], 253
        %v7594 = vld [vmem:[%s7593] ss:$2 sm:$0xff]
        %v7595 = vmax.f32 %v7592, %v7594
        %s7596 = scalar_lea.vmem [#allocation4], 270
        %v7597 = vld [vmem:[%s7596] ss:$2 sm:$0xff]
        %s7598 = scalar_lea.vmem [#allocation4], 271
        %v7599 = vld [vmem:[%s7598] ss:$2 sm:$0xff]
        %v7600 = vmax.f32 %v7597, %v7599
        %v7601 = vmax.f32 %v7595, %v7600
        %v7602 = vpack.c.bf16 %v7601, %v7601
        %v7604 = vshrl.u32 %v7602, 16
        %v7606 = vrot.slane %v7604, 7
        %v7607 = vshll.u32 %v7602, 16
        %v7609 = vor.u32 %v7606, %v7607
        %v7610 = vrot.slane %v7606, 4
        %v7613 = vld [vmem:[#allocation2 + $0x28] sm:$0xf]
        %v7614 = vsel %vm7494, %v7609, %v7613
        %7615 = vst [vmem:[#allocation2 + $0x28] sm:$0xf] %v7614
        %v7616 = vld [vmem:[#allocation2 + $0x2c] sm:$0x1]
        %v7617 = vsel %vm7500, %v7610, %v7616
        %7618 = vst [vmem:[#allocation2 + $0x2c] sm:$0x1] %v7617
        %v7619 = vld [vmem:[#allocation2] sm:$0xf]
        %v7620 = vld [vmem:[#allocation2 + $0x4] sm:$0xf]
        %v7621 = vld [vmem:[#allocation2 + $0x8] sm:$0xf]
        %v7622 = vld [vmem:[#allocation2 + $0xc] sm:$0xf]
        %v7623 = vld [vmem:[#allocation2 + $0x10] sm:$0xf]
        %v7624 = vld [vmem:[#allocation2 + $0x14] sm:$0xf]
        %v7625 = vld [vmem:[#allocation2 + $0x18] sm:$0xf]
        %v7626 = vld [vmem:[#allocation2 + $0x1c] sm:$0xf]
        %v7627 = vld [vmem:[#allocation2 + $0x20] sm:$0xf]
        %v7628 = vld [vmem:[#allocation2 + $0x24] sm:$0xf]
        %s7629 = scalar_lea.vmem [#allocation5], 1152
        %v7630 = vld [vmem:[%s7629] sm:$0xf]
        %v7631 = vld [vmem:[%s7629 + $0x4] sm:$0xf]
        %v7632 = vld [vmem:[%s7629 + $0x8] sm:$0xf]
        %v7633 = vld [vmem:[%s7629 + $0xc] sm:$0xf]
        %v7634 = vld [vmem:[%s7629 + $0x10] sm:$0xf]
        %v7635 = vld [vmem:[%s7629 + $0x14] sm:$0xf]
        %v7636 = vld [vmem:[%s7629 + $0x18] sm:$0xf]
        %v7637 = vld [vmem:[%s7629 + $0x1c] sm:$0xf]
        %v7638 = vld [vmem:[%s7629 + $0x20] sm:$0xf]
        %v7639 = vld [vmem:[%s7629 + $0x24] sm:$0xf]
        %v7640 = vld [vmem:[%s7629 + $0x28] sm:$0xf]
        %v7641 = vld [vmem:[%s7629 + $0x2c] sm:$0xf]
        %v7642 = vld [vmem:[%s7629 + $0x30] sm:$0xf]
        %v7643 = vld [vmem:[%s7629 + $0x34] sm:$0xf]
        %v7644 = vld [vmem:[%s7629 + $0x38] sm:$0xf]
        %v7645 = vld [vmem:[%s7629 + $0x3c] sm:$0xf]
        %v7646 = vld [vmem:[#allocation2 + $0x28] sm:$0x1]
        %s7647 = scalar_lea.vmem [#allocation5], 1216
        %v7648 = vld [vmem:[%s7647] sm:$0xf]
        %v7649 = vld [vmem:[%s7647 + $0x4] sm:$0xf]
        %v7650 = vld [vmem:[%s7647 + $0x8] sm:$0xf]
        %v7651 = vld [vmem:[%s7647 + $0xc] sm:$0xf]
        %v7652 = vld [vmem:[%s7647 + $0x10] sm:$0xf]
        %v7653 = vld [vmem:[%s7647 + $0x14] sm:$0xf]
        %v7654 = vld [vmem:[%s7647 + $0x18] sm:$0xf]
        %v7655 = vld [vmem:[%s7647 + $0x1c] sm:$0xf]
        %v7656 = vld [vmem:[%s7647 + $0x20] sm:$0xf]
        %v7657 = vld [vmem:[%s7647 + $0x24] sm:$0xf]
        %v7658 = vld [vmem:[%s7647 + $0x28] sm:$0xf]
        %v7659 = vld [vmem:[%s7647 + $0x2c] sm:$0xf]
        %v7660 = vld [vmem:[%s7647 + $0x30] sm:$0xf]
        %v7661 = vld [vmem:[%s7647 + $0x34] sm:$0xf]
        %v7662 = vld [vmem:[%s7647 + $0x38] sm:$0xf]
        %v7663 = vld [vmem:[%s7647 + $0x3c] sm:$0xf]
        %v7675 = vunpack.c.l.b16 %v7619
        %v7676 = vunpack.c.l.b16 %v7620
        %v7677 = vunpack.c.l.b16 %v7621
        %v7678 = vunpack.c.l.b16 %v7622
        %v7679 = vunpack.c.l.b16 %v7623
        %v7680 = vunpack.c.l.b16 %v7624
        %v7681 = vunpack.c.l.b16 %v7625
        %v7682 = vunpack.c.l.b16 %v7626
        %v7683 = vunpack.c.l.b16 %v7627
        %v7684 = vunpack.c.l.b16 %v7628
        %v7685 = vunpack.c.l.b16 %v7646
        %v7686 = vpack.c.b16 %v7676, %v7675
        %v7687 = vpack.c.b16 %v7678, %v7677
        %v7688 = vpack.c.b16 %v7680, %v7679
        %v7689 = vpack.c.b16 %v7682, %v7681
        %v7690 = vpack.c.b16 %v7684, %v7683
        %v7691 = vpack.c.b16 %v7685, %v7685
        %v7693 = vshrl.u32 %v7686, 16
        %v7695 = vshll.u32 %v7686, 16
        %v7697 = vrot.slane %v7695, 1
        %v7698 = vor.u32 %v7693, %v7697
        %v7700 = vshll.u32 %v7687, 16
        %v7702 = vrot.slane %v7700, 1
        %v7703 = vsel %vm581, %v7698, %v7702
        %v7704 = vshrl.u32 %v7687, 16
        %v7706 = vor.u32 %v7704, %v7702
        %v7708 = vshll.u32 %v7688, 16
        %v7710 = vrot.slane %v7708, 1
        %v7711 = vsel %vm581, %v7706, %v7710
        %v7712 = vshrl.u32 %v7688, 16
        %v7714 = vor.u32 %v7712, %v7710
        %v7716 = vshll.u32 %v7689, 16
        %v7718 = vrot.slane %v7716, 1
        %v7719 = vsel %vm581, %v7714, %v7718
        %v7720 = vshrl.u32 %v7689, 16
        %v7722 = vor.u32 %v7720, %v7718
        %v7724 = vshll.u32 %v7690, 16
        %v7726 = vrot.slane %v7724, 1
        %v7727 = vsel %vm581, %v7722, %v7726
        %v7728 = vshrl.u32 %v7690, 16
        %v7730 = vor.u32 %v7728, %v7726
        %v7732 = vshll.u32 %v7691, 16
        %v7734 = vrot.slane %v7732, 1
        %v7735 = vsel %vm581, %v7730, %v7734
        %v7757 = vunpack.c.l.b16 %v7648
        %v7758 = vunpack.c.l.b16 %v7649
        %v7759 = vunpack.c.l.b16 %v7650
        %v7760 = vunpack.c.l.b16 %v7651
        %v7761 = vunpack.c.l.b16 %v7652
        %v7762 = vunpack.c.l.b16 %v7653
        %v7763 = vunpack.c.l.b16 %v7654
        %v7764 = vunpack.c.l.b16 %v7655
        %v7765 = vunpack.c.l.b16 %v7656
        %v7766 = vunpack.c.l.b16 %v7657
        %v7767 = vunpack.c.l.b16 %v7658
        %v7768 = vunpack.c.l.b16 %v7659
        %v7769 = vunpack.c.l.b16 %v7660
        %v7770 = vunpack.c.l.b16 %v7661
        %v7771 = vunpack.c.l.b16 %v7662
        %v7772 = vunpack.c.l.b16 %v7663
        %v7773 = vpack.c.b16 %v7758, %v7757
        %v7774 = vpack.c.b16 %v7760, %v7759
        %v7775 = vpack.c.b16 %v7762, %v7761
        %v7776 = vpack.c.b16 %v7764, %v7763
        %v7777 = vpack.c.b16 %v7766, %v7765
        %v7778 = vpack.c.b16 %v7768, %v7767
        %v7779 = vpack.c.b16 %v7770, %v7769
        %v7780 = vpack.c.b16 %v7772, %v7771
        %7789 = vmatpush.bf16.msra.mxu0 %v7780
        %7790 = vmatpush.bf16.msra.mxu0 %v7779
        %7791 = vmatpush.bf16.msra.mxu0 %v7778
        %7792 = vmatpush.bf16.msra.mxu0 %v7777
        %7793 = vmatpush.bf16.msra.mxu0 %v7776
        %7794 = vmatpush.bf16.msra.mxu0 %v7775
        %7795 = vmatpush.bf16.msra.mxu0 %v7774
        %7796 = vmatpush.bf16.msra.mxu0 %v7773
        %7797 = vmatmul.bf16.gmra.mxu0 %v7703
        %v7798 = vpop.f32.mrf.mxu0
        %v7799 = vadd.f32 0.0, %v7798
        %v7800 = vpop.f32.mrf.mxu0
        %v7801 = vadd.f32 0.0, %v7800
        %7802 = vmatmul.bf16.gmra.mxu0 %v7711
        %v7803 = vpop.f32.mrf.mxu0
        %v7804 = vadd.f32 0.0, %v7803
        %v7805 = vpop.f32.mrf.mxu0
        %v7806 = vadd.f32 0.0, %v7805
        %7807 = vmatmul.bf16.gmra.mxu0 %v7719
        %v7808 = vpop.f32.mrf.mxu0
        %v7809 = vadd.f32 0.0, %v7808
        %v7810 = vpop.f32.mrf.mxu0
        %v7811 = vadd.f32 0.0, %v7810
        %7812 = vmatmul.bf16.gmra.mxu0 %v7727
        %v7813 = vpop.f32.mrf.mxu0
        %v7814 = vadd.f32 0.0, %v7813
        %v7815 = vpop.f32.mrf.mxu0
        %v7816 = vadd.f32 0.0, %v7815
        %7817 = vmatmul.bf16.gmra.mxu0 %v7735
        %v7818 = vpop.f32.mrf.mxu0
        %v7819 = vadd.f32 0.0, %v7818
        %v7820 = vpop.f32.mrf.mxu0
        %v7821 = vadd.f32 0.0, %v7820
        %7822 = vdwg.mxu0
        %v7844 = vunpack.c.l.b16 %v7630
        %v7845 = vunpack.c.l.b16 %v7631
        %v7846 = vunpack.c.l.b16 %v7632
        %v7847 = vunpack.c.l.b16 %v7633
        %v7848 = vunpack.c.l.b16 %v7634
        %v7849 = vunpack.c.l.b16 %v7635
        %v7850 = vunpack.c.l.b16 %v7636
        %v7851 = vunpack.c.l.b16 %v7637
        %v7852 = vunpack.c.l.b16 %v7638
        %v7853 = vunpack.c.l.b16 %v7639
        %v7854 = vunpack.c.l.b16 %v7640
        %v7855 = vunpack.c.l.b16 %v7641
        %v7856 = vunpack.c.l.b16 %v7642
        %v7857 = vunpack.c.l.b16 %v7643
        %v7858 = vunpack.c.l.b16 %v7644
        %v7859 = vunpack.c.l.b16 %v7645
        %v7860 = vpack.c.b16 %v7845, %v7844
        %v7861 = vpack.c.b16 %v7847, %v7846
        %v7862 = vpack.c.b16 %v7849, %v7848
        %v7863 = vpack.c.b16 %v7851, %v7850
        %v7864 = vpack.c.b16 %v7853, %v7852
        %v7865 = vpack.c.b16 %v7855, %v7854
        %v7866 = vpack.c.b16 %v7857, %v7856
        %v7867 = vpack.c.b16 %v7859, %v7858
        %7876 = vmatpush.bf16.msra.mxu0 %v7867
        %7877 = vmatpush.bf16.msra.mxu0 %v7866
        %7878 = vmatpush.bf16.msra.mxu0 %v7865
        %7879 = vmatpush.bf16.msra.mxu0 %v7864
        %7880 = vmatpush.bf16.msra.mxu0 %v7863
        %7881 = vmatpush.bf16.msra.mxu0 %v7862
        %7882 = vmatpush.bf16.msra.mxu0 %v7861
        %7883 = vmatpush.bf16.msra.mxu0 %v7860
        %7884 = vmatmul.bf16.gmra.mxu0 %v7686
        %v7885 = vpop.f32.mrf.mxu0
        %v7886 = vadd.f32 %v7799, %v7885
        %v7887 = vpop.f32.mrf.mxu0
        %v7888 = vadd.f32 %v7801, %v7887
        %7889 = vmatmul.bf16.gmra.mxu0 %v7687
        %v7890 = vpop.f32.mrf.mxu0
        %v7891 = vadd.f32 %v7804, %v7890
        %v7892 = vpop.f32.mrf.mxu0
        %v7893 = vadd.f32 %v7806, %v7892
        %7894 = vmatmul.bf16.gmra.mxu0 %v7688
        %v7895 = vpop.f32.mrf.mxu0
        %v7896 = vadd.f32 %v7809, %v7895
        %v7897 = vpop.f32.mrf.mxu0
        %v7898 = vadd.f32 %v7811, %v7897
        %7899 = vmatmul.bf16.gmra.mxu0 %v7689
        %v7900 = vpop.f32.mrf.mxu0
        %v7901 = vadd.f32 %v7814, %v7900
        %v7902 = vpop.f32.mrf.mxu0
        %v7903 = vadd.f32 %v7816, %v7902
        %7904 = vmatmul.bf16.gmra.mxu0 %v7690
        %v7905 = vpop.f32.mrf.mxu0
        %v7906 = vadd.f32 %v7819, %v7905
        %v7907 = vpop.f32.mrf.mxu0
        %v7908 = vadd.f32 %v7821, %v7907
        %7909 = vdwg.mxu0
        %v7910 = vld [vmem:[#allocation2] sm:$0xe]
        %s7911 = scalar_lea.vmem [#allocation5], 1280
        %v7912 = vld [vmem:[%s7911] sm:$0xf]
        %v7913 = vld [vmem:[%s7911 + $0x4] sm:$0xf]
        %v7914 = vld [vmem:[%s7911 + $0x8] sm:$0xf]
        %v7915 = vld [vmem:[%s7911 + $0xc] sm:$0xf]
        %v7916 = vld [vmem:[%s7911 + $0x10] sm:$0xf]
        %v7917 = vld [vmem:[%s7911 + $0x14] sm:$0xf]
        %v7918 = vld [vmem:[%s7911 + $0x18] sm:$0xf]
        %v7919 = vld [vmem:[%s7911 + $0x1c] sm:$0xf]
        %v7920 = vld [vmem:[%s7911 + $0x20] sm:$0xf]
        %v7921 = vld [vmem:[%s7911 + $0x24] sm:$0xf]
        %v7922 = vld [vmem:[%s7911 + $0x28] sm:$0xf]
        %v7923 = vld [vmem:[%s7911 + $0x2c] sm:$0xf]
        %v7924 = vld [vmem:[%s7911 + $0x30] sm:$0xf]
        %v7925 = vld [vmem:[%s7911 + $0x34] sm:$0xf]
        %v7926 = vld [vmem:[%s7911 + $0x38] sm:$0xf]
        %v7927 = vld [vmem:[%s7911 + $0x3c] sm:$0xf]
        %v7929 = vunpack.c.l.b16 %v7910
        %v7930 = vpack.c.b16 %v7676, %v7929
        %v7931 = vrot.slane %v7930, 1
        %v7932 = vrot.slane %v7687, 1
        %v7933 = vsel %vm1081, %v7931, %v7932
        %v7934 = vrot.slane %v7688, 1
        %v7935 = vsel %vm1081, %v7932, %v7934
        %v7936 = vrot.slane %v7689, 1
        %v7937 = vsel %vm1081, %v7934, %v7936
        %v7938 = vrot.slane %v7690, 1
        %v7939 = vsel %vm1081, %v7936, %v7938
        %v7940 = vrot.slane %v7691, 1
        %v7941 = vsel %vm1081, %v7938, %v7940
        %v7963 = vunpack.c.l.b16 %v7912
        %v7964 = vunpack.c.l.b16 %v7913
        %v7965 = vunpack.c.l.b16 %v7914
        %v7966 = vunpack.c.l.b16 %v7915
        %v7967 = vunpack.c.l.b16 %v7916
        %v7968 = vunpack.c.l.b16 %v7917
        %v7969 = vunpack.c.l.b16 %v7918
        %v7970 = vunpack.c.l.b16 %v7919
        %v7971 = vunpack.c.l.b16 %v7920
        %v7972 = vunpack.c.l.b16 %v7921
        %v7973 = vunpack.c.l.b16 %v7922
        %v7974 = vunpack.c.l.b16 %v7923
        %v7975 = vunpack.c.l.b16 %v7924
        %v7976 = vunpack.c.l.b16 %v7925
        %v7977 = vunpack.c.l.b16 %v7926
        %v7978 = vunpack.c.l.b16 %v7927
        %v7979 = vpack.c.b16 %v7964, %v7963
        %v7980 = vpack.c.b16 %v7966, %v7965
        %v7981 = vpack.c.b16 %v7968, %v7967
        %v7982 = vpack.c.b16 %v7970, %v7969
        %v7983 = vpack.c.b16 %v7972, %v7971
        %v7984 = vpack.c.b16 %v7974, %v7973
        %v7985 = vpack.c.b16 %v7976, %v7975
        %v7986 = vpack.c.b16 %v7978, %v7977
        %7995 = vmatpush.bf16.msra.mxu0 %v7986
        %7996 = vmatpush.bf16.msra.mxu0 %v7985
        %7997 = vmatpush.bf16.msra.mxu0 %v7984
        %7998 = vmatpush.bf16.msra.mxu0 %v7983
        %7999 = vmatpush.bf16.msra.mxu0 %v7982
        %8000 = vmatpush.bf16.msra.mxu0 %v7981
        %8001 = vmatpush.bf16.msra.mxu0 %v7980
        %8002 = vmatpush.bf16.msra.mxu0 %v7979
        %8003 = vmatmul.bf16.gmra.mxu0 %v7933
        %v8004 = vpop.f32.mrf.mxu0
        %v8005 = vadd.f32 0.0, %v8004
        %v8006 = vpop.f32.mrf.mxu0
        %v8007 = vadd.f32 0.0, %v8006
        %8008 = vmatmul.bf16.gmra.mxu0 %v7935
        %v8009 = vpop.f32.mrf.mxu0
        %v8010 = vadd.f32 0.0, %v8009
        %v8011 = vpop.f32.mrf.mxu0
        %v8012 = vadd.f32 0.0, %v8011
        %8013 = vmatmul.bf16.gmra.mxu0 %v7937
        %v8014 = vpop.f32.mrf.mxu0
        %v8015 = vadd.f32 0.0, %v8014
        %v8016 = vpop.f32.mrf.mxu0
        %v8017 = vadd.f32 0.0, %v8016
        %8018 = vmatmul.bf16.gmra.mxu0 %v7939
        %v8019 = vpop.f32.mrf.mxu0
        %v8020 = vadd.f32 0.0, %v8019
        %v8021 = vpop.f32.mrf.mxu0
        %v8022 = vadd.f32 0.0, %v8021
        %8023 = vmatmul.bf16.gmra.mxu0 %v7941
        %v8024 = vpop.f32.mrf.mxu0
        %v8025 = vadd.f32 0.0, %v8024
        %v8026 = vpop.f32.mrf.mxu0
        %v8027 = vadd.f32 0.0, %v8026
        %8028 = vdwg.mxu0
        %v8029 = vadd.f32 %v7886, %v8005
        %v8030 = vadd.f32 %v7888, %v8007
        %v8031 = vadd.f32 %v7891, %v8010
        %v8032 = vadd.f32 %v7893, %v8012
        %v8033 = vadd.f32 %v7896, %v8015
        %v8034 = vadd.f32 %v7898, %v8017
        %v8035 = vadd.f32 %v7901, %v8020
        %v8036 = vadd.f32 %v7903, %v8022
        %v8037 = vadd.f32 %v7906, %v8025
        %v8038 = vadd.f32 %v7908, %v8027
        %v8039 = vld [vmem:[#allocation2 + $0x4] sm:$0xe]
        %v8040 = vld [vmem:[#allocation2 + $0x8] sm:$0xf]
        %v8041 = vld [vmem:[#allocation2 + $0xc] sm:$0xf]
        %v8042 = vld [vmem:[#allocation2 + $0x10] sm:$0xf]
        %v8043 = vld [vmem:[#allocation2 + $0x14] sm:$0xf]
        %v8044 = vld [vmem:[#allocation2 + $0x18] sm:$0xf]
        %v8045 = vld [vmem:[#allocation2 + $0x1c] sm:$0xf]
        %v8046 = vld [vmem:[#allocation2 + $0x20] sm:$0xf]
        %v8047 = vld [vmem:[#allocation2 + $0x24] sm:$0xf]
        %v8048 = vld [vmem:[#allocation2 + $0x28] sm:$0xf]
        %v8049 = vld [vmem:[#allocation2 + $0x2c] sm:$0x1]
        %s8050 = scalar_lea.vmem [#allocation5], 1344
        %v8051 = vld [vmem:[%s8050] sm:$0xf]
        %v8052 = vld [vmem:[%s8050 + $0x4] sm:$0xf]
        %v8053 = vld [vmem:[%s8050 + $0x8] sm:$0xf]
        %v8054 = vld [vmem:[%s8050 + $0xc] sm:$0xf]
        %v8055 = vld [vmem:[%s8050 + $0x10] sm:$0xf]
        %v8056 = vld [vmem:[%s8050 + $0x14] sm:$0xf]
        %v8057 = vld [vmem:[%s8050 + $0x18] sm:$0xf]
        %v8058 = vld [vmem:[%s8050 + $0x1c] sm:$0xf]
        %v8059 = vld [vmem:[%s8050 + $0x20] sm:$0xf]
        %v8060 = vld [vmem:[%s8050 + $0x24] sm:$0xf]
        %v8061 = vld [vmem:[%s8050 + $0x28] sm:$0xf]
        %v8062 = vld [vmem:[%s8050 + $0x2c] sm:$0xf]
        %v8063 = vld [vmem:[%s8050 + $0x30] sm:$0xf]
        %v8064 = vld [vmem:[%s8050 + $0x34] sm:$0xf]
        %v8065 = vld [vmem:[%s8050 + $0x38] sm:$0xf]
        %v8066 = vld [vmem:[%s8050 + $0x3c] sm:$0xf]
        %v8078 = vunpack.c.l.b16 %v8039
        %v8079 = vunpack.c.l.b16 %v8040
        %v8080 = vunpack.c.l.b16 %v8041
        %v8081 = vunpack.c.l.b16 %v8042
        %v8082 = vunpack.c.l.b16 %v8043
        %v8083 = vunpack.c.l.b16 %v8044
        %v8084 = vunpack.c.l.b16 %v8045
        %v8085 = vunpack.c.l.b16 %v8046
        %v8086 = vunpack.c.l.b16 %v8047
        %v8087 = vunpack.c.l.b16 %v8048
        %v8088 = vunpack.c.l.b16 %v8049
        %v8089 = vpack.c.b16 %v8079, %v8078
        %v8090 = vpack.c.b16 %v8081, %v8080
        %v8091 = vpack.c.b16 %v8083, %v8082
        %v8092 = vpack.c.b16 %v8085, %v8084
        %v8093 = vpack.c.b16 %v8087, %v8086
        %v8094 = vpack.c.b16 %v8088, %v8088
        %v8095 = vrot.slane %v8089, 1
        %v8096 = vrot.slane %v8090, 1
        %v8097 = vsel %vm1081, %v8095, %v8096
        %v8098 = vrot.slane %v8091, 1
        %v8099 = vsel %vm1081, %v8096, %v8098
        %v8100 = vrot.slane %v8092, 1
        %v8101 = vsel %vm1081, %v8098, %v8100
        %v8102 = vrot.slane %v8093, 1
        %v8103 = vsel %vm1081, %v8100, %v8102
        %v8104 = vrot.slane %v8094, 1
        %v8105 = vsel %vm1081, %v8102, %v8104
        %v8127 = vunpack.c.l.b16 %v8051
        %v8128 = vunpack.c.l.b16 %v8052
        %v8129 = vunpack.c.l.b16 %v8053
        %v8130 = vunpack.c.l.b16 %v8054
        %v8131 = vunpack.c.l.b16 %v8055
        %v8132 = vunpack.c.l.b16 %v8056
        %v8133 = vunpack.c.l.b16 %v8057
        %v8134 = vunpack.c.l.b16 %v8058
        %v8135 = vunpack.c.l.b16 %v8059
        %v8136 = vunpack.c.l.b16 %v8060
        %v8137 = vunpack.c.l.b16 %v8061
        %v8138 = vunpack.c.l.b16 %v8062
        %v8139 = vunpack.c.l.b16 %v8063
        %v8140 = vunpack.c.l.b16 %v8064
        %v8141 = vunpack.c.l.b16 %v8065
        %v8142 = vunpack.c.l.b16 %v8066
        %v8143 = vpack.c.b16 %v8128, %v8127
        %v8144 = vpack.c.b16 %v8130, %v8129
        %v8145 = vpack.c.b16 %v8132, %v8131
        %v8146 = vpack.c.b16 %v8134, %v8133
        %v8147 = vpack.c.b16 %v8136, %v8135
        %v8148 = vpack.c.b16 %v8138, %v8137
        %v8149 = vpack.c.b16 %v8140, %v8139
        %v8150 = vpack.c.b16 %v8142, %v8141
        %8159 = vmatpush.bf16.msra.mxu0 %v8150
        %8160 = vmatpush.bf16.msra.mxu0 %v8149
        %8161 = vmatpush.bf16.msra.mxu0 %v8148
        %8162 = vmatpush.bf16.msra.mxu0 %v8147
        %8163 = vmatpush.bf16.msra.mxu0 %v8146
        %8164 = vmatpush.bf16.msra.mxu0 %v8145
        %8165 = vmatpush.bf16.msra.mxu0 %v8144
        %8166 = vmatpush.bf16.msra.mxu0 %v8143
        %8167 = vmatmul.bf16.gmra.mxu0 %v8097
        %v8168 = vpop.f32.mrf.mxu0
        %v8169 = vadd.f32 0.0, %v8168
        %v8170 = vpop.f32.mrf.mxu0
        %v8171 = vadd.f32 0.0, %v8170
        %8172 = vmatmul.bf16.gmra.mxu0 %v8099
        %v8173 = vpop.f32.mrf.mxu0
        %v8174 = vadd.f32 0.0, %v8173
        %v8175 = vpop.f32.mrf.mxu0
        %v8176 = vadd.f32 0.0, %v8175
        %8177 = vmatmul.bf16.gmra.mxu0 %v8101
        %v8178 = vpop.f32.mrf.mxu0
        %v8179 = vadd.f32 0.0, %v8178
        %v8180 = vpop.f32.mrf.mxu0
        %v8181 = vadd.f32 0.0, %v8180
        %8182 = vmatmul.bf16.gmra.mxu0 %v8103
        %v8183 = vpop.f32.mrf.mxu0
        %v8184 = vadd.f32 0.0, %v8183
        %v8185 = vpop.f32.mrf.mxu0
        %v8186 = vadd.f32 0.0, %v8185
        %8187 = vmatmul.bf16.gmra.mxu0 %v8105
        %v8188 = vpop.f32.mrf.mxu0
        %v8189 = vadd.f32 0.0, %v8188
        %v8190 = vpop.f32.mrf.mxu0
        %v8191 = vadd.f32 0.0, %v8190
        %8192 = vdwg.mxu0
        %v8193 = vadd.f32 %v8029, %v8169
        %v8194 = vadd.f32 %v8030, %v8171
        %v8195 = vadd.f32 %v8031, %v8174
        %v8196 = vadd.f32 %v8032, %v8176
        %v8197 = vadd.f32 %v8033, %v8179
        %v8198 = vadd.f32 %v8034, %v8181
        %v8199 = vadd.f32 %v8035, %v8184
        %v8200 = vadd.f32 %v8036, %v8186
        %v8201 = vadd.f32 %v8037, %v8189
        %v8202 = vadd.f32 %v8038, %v8191
        %v8203 = vld [vmem:[#allocation2 + $0x2c] sm:$0x3]
        %s8204 = scalar_lea.vmem [#allocation5], 1408
        %v8205 = vld [vmem:[%s8204] sm:$0xf]
        %v8206 = vld [vmem:[%s8204 + $0x4] sm:$0xf]
        %v8207 = vld [vmem:[%s8204 + $0x8] sm:$0xf]
        %v8208 = vld [vmem:[%s8204 + $0xc] sm:$0xf]
        %v8209 = vld [vmem:[%s8204 + $0x10] sm:$0xf]
        %v8210 = vld [vmem:[%s8204 + $0x14] sm:$0xf]
        %v8211 = vld [vmem:[%s8204 + $0x18] sm:$0xf]
        %v8212 = vld [vmem:[%s8204 + $0x1c] sm:$0xf]
        %v8213 = vld [vmem:[%s8204 + $0x20] sm:$0xf]
        %v8214 = vld [vmem:[%s8204 + $0x24] sm:$0xf]
        %v8215 = vld [vmem:[%s8204 + $0x28] sm:$0xf]
        %v8216 = vld [vmem:[%s8204 + $0x2c] sm:$0xf]
        %v8217 = vld [vmem:[%s8204 + $0x30] sm:$0xf]
        %v8218 = vld [vmem:[%s8204 + $0x34] sm:$0xf]
        %v8219 = vld [vmem:[%s8204 + $0x38] sm:$0xf]
        %v8220 = vld [vmem:[%s8204 + $0x3c] sm:$0xf]
        %v8222 = vunpack.c.l.b16 %v8203
        %v8223 = vpack.c.b16 %v8222, %v8222
        %v8225 = vshrl.u32 %v8089, 16
        %v8227 = vrot.slane %v8225, 1
        %v8228 = vshll.u32 %v8089, 16
        %v8230 = vrot.slane %v8228, 2
        %v8231 = vor.u32 %v8227, %v8230
        %v8233 = vshrl.u32 %v8090, 16
        %v8235 = vrot.slane %v8233, 1
        %v8236 = vshll.u32 %v8090, 16
        %v8238 = vrot.slane %v8236, 2
        %v8239 = vor.u32 %v8235, %v8238
        %v8240 = vsel %vm1726, %v8231, %v8239
        %v8242 = vshrl.u32 %v8091, 16
        %v8244 = vrot.slane %v8242, 1
        %v8245 = vshll.u32 %v8091, 16
        %v8247 = vrot.slane %v8245, 2
        %v8248 = vor.u32 %v8244, %v8247
        %v8249 = vsel %vm1726, %v8239, %v8248
        %v8251 = vshrl.u32 %v8092, 16
        %v8253 = vrot.slane %v8251, 1
        %v8254 = vshll.u32 %v8092, 16
        %v8256 = vrot.slane %v8254, 2
        %v8257 = vor.u32 %v8253, %v8256
        %v8258 = vsel %vm1726, %v8248, %v8257
        %v8260 = vshrl.u32 %v8093, 16
        %v8262 = vrot.slane %v8260, 1
        %v8263 = vshll.u32 %v8093, 16
        %v8265 = vrot.slane %v8263, 2
        %v8266 = vor.u32 %v8262, %v8265
        %v8267 = vsel %vm1726, %v8257, %v8266
        %v8269 = vshrl.u32 %v8223, 16
        %v8271 = vrot.slane %v8269, 1
        %v8272 = vshll.u32 %v8223, 16
        %v8274 = vrot.slane %v8272, 2
        %v8275 = vor.u32 %v8271, %v8274
        %v8276 = vsel %vm1726, %v8266, %v8275
        %v8298 = vunpack.c.l.b16 %v8205
        %v8299 = vunpack.c.l.b16 %v8206
        %v8300 = vunpack.c.l.b16 %v8207
        %v8301 = vunpack.c.l.b16 %v8208
        %v8302 = vunpack.c.l.b16 %v8209
        %v8303 = vunpack.c.l.b16 %v8210
        %v8304 = vunpack.c.l.b16 %v8211
        %v8305 = vunpack.c.l.b16 %v8212
        %v8306 = vunpack.c.l.b16 %v8213
        %v8307 = vunpack.c.l.b16 %v8214
        %v8308 = vunpack.c.l.b16 %v8215
        %v8309 = vunpack.c.l.b16 %v8216
        %v8310 = vunpack.c.l.b16 %v8217
        %v8311 = vunpack.c.l.b16 %v8218
        %v8312 = vunpack.c.l.b16 %v8219
        %v8313 = vunpack.c.l.b16 %v8220
        %v8314 = vpack.c.b16 %v8299, %v8298
        %v8315 = vpack.c.b16 %v8301, %v8300
        %v8316 = vpack.c.b16 %v8303, %v8302
        %v8317 = vpack.c.b16 %v8305, %v8304
        %v8318 = vpack.c.b16 %v8307, %v8306
        %v8319 = vpack.c.b16 %v8309, %v8308
        %v8320 = vpack.c.b16 %v8311, %v8310
        %v8321 = vpack.c.b16 %v8313, %v8312
        %8330 = vmatpush.bf16.msra.mxu0 %v8321
        %8331 = vmatpush.bf16.msra.mxu0 %v8320
        %8332 = vmatpush.bf16.msra.mxu0 %v8319
        %8333 = vmatpush.bf16.msra.mxu0 %v8318
        %8334 = vmatpush.bf16.msra.mxu0 %v8317
        %8335 = vmatpush.bf16.msra.mxu0 %v8316
        %8336 = vmatpush.bf16.msra.mxu0 %v8315
        %8337 = vmatpush.bf16.msra.mxu0 %v8314
        %8338 = vmatmul.bf16.gmra.mxu0 %v8240
        %v8339 = vpop.f32.mrf.mxu0
        %v8340 = vadd.f32 0.0, %v8339
        %v8341 = vpop.f32.mrf.mxu0
        %v8342 = vadd.f32 0.0, %v8341
        %8343 = vmatmul.bf16.gmra.mxu0 %v8249
        %v8344 = vpop.f32.mrf.mxu0
        %v8345 = vadd.f32 0.0, %v8344
        %v8346 = vpop.f32.mrf.mxu0
        %v8347 = vadd.f32 0.0, %v8346
        %8348 = vmatmul.bf16.gmra.mxu0 %v8258
        %v8349 = vpop.f32.mrf.mxu0
        %v8350 = vadd.f32 0.0, %v8349
        %v8351 = vpop.f32.mrf.mxu0
        %v8352 = vadd.f32 0.0, %v8351
        %8353 = vmatmul.bf16.gmra.mxu0 %v8267
        %v8354 = vpop.f32.mrf.mxu0
        %v8355 = vadd.f32 0.0, %v8354
        %v8356 = vpop.f32.mrf.mxu0
        %v8357 = vadd.f32 0.0, %v8356
        %8358 = vmatmul.bf16.gmra.mxu0 %v8276
        %v8359 = vpop.f32.mrf.mxu0
        %v8360 = vadd.f32 0.0, %v8359
        %v8361 = vpop.f32.mrf.mxu0
        %v8362 = vadd.f32 0.0, %v8361
        %8363 = vdwg.mxu0
        %v8364 = vadd.f32 %v8193, %v8340
        %v8365 = vadd.f32 %v8194, %v8342
        %v8366 = vadd.f32 %v8195, %v8345
        %v8367 = vadd.f32 %v8196, %v8347
        %v8368 = vadd.f32 %v8197, %v8350
        %v8369 = vadd.f32 %v8198, %v8352
        %v8370 = vadd.f32 %v8199, %v8355
        %v8371 = vadd.f32 %v8200, %v8357
        %v8372 = vadd.f32 %v8201, %v8360
        %v8373 = vadd.f32 %v8202, %v8362
        %v8374 = vld [vmem:[#allocation2 + $0x4] sm:$0xc]
        %s8375 = scalar_lea.vmem [#allocation5], 1472
        %v8376 = vld [vmem:[%s8375] sm:$0xf]
        %v8377 = vld [vmem:[%s8375 + $0x4] sm:$0xf]
        %v8378 = vld [vmem:[%s8375 + $0x8] sm:$0xf]
        %v8379 = vld [vmem:[%s8375 + $0xc] sm:$0xf]
        %v8380 = vld [vmem:[%s8375 + $0x10] sm:$0xf]
        %v8381 = vld [vmem:[%s8375 + $0x14] sm:$0xf]
        %v8382 = vld [vmem:[%s8375 + $0x18] sm:$0xf]
        %v8383 = vld [vmem:[%s8375 + $0x1c] sm:$0xf]
        %v8384 = vld [vmem:[%s8375 + $0x20] sm:$0xf]
        %v8385 = vld [vmem:[%s8375 + $0x24] sm:$0xf]
        %v8386 = vld [vmem:[%s8375 + $0x28] sm:$0xf]
        %v8387 = vld [vmem:[%s8375 + $0x2c] sm:$0xf]
        %v8388 = vld [vmem:[%s8375 + $0x30] sm:$0xf]
        %v8389 = vld [vmem:[%s8375 + $0x34] sm:$0xf]
        %v8390 = vld [vmem:[%s8375 + $0x38] sm:$0xf]
        %v8391 = vld [vmem:[%s8375 + $0x3c] sm:$0xf]
        %v8393 = vunpack.c.l.b16 %v8374
        %v8394 = vpack.c.b16 %v8079, %v8393
        %v8395 = vrot.slane %v8394, 2
        %v8396 = vrot.slane %v8090, 2
        %v8397 = vsel %vm2119, %v8395, %v8396
        %v8398 = vrot.slane %v8091, 2
        %v8399 = vsel %vm2119, %v8396, %v8398
        %v8400 = vrot.slane %v8092, 2
        %v8401 = vsel %vm2119, %v8398, %v8400
        %v8402 = vrot.slane %v8093, 2
        %v8403 = vsel %vm2119, %v8400, %v8402
        %v8404 = vrot.slane %v8223, 2
        %v8405 = vsel %vm2119, %v8402, %v8404
        %v8427 = vunpack.c.l.b16 %v8376
        %v8428 = vunpack.c.l.b16 %v8377
        %v8429 = vunpack.c.l.b16 %v8378
        %v8430 = vunpack.c.l.b16 %v8379
        %v8431 = vunpack.c.l.b16 %v8380
        %v8432 = vunpack.c.l.b16 %v8381
        %v8433 = vunpack.c.l.b16 %v8382
        %v8434 = vunpack.c.l.b16 %v8383
        %v8435 = vunpack.c.l.b16 %v8384
        %v8436 = vunpack.c.l.b16 %v8385
        %v8437 = vunpack.c.l.b16 %v8386
        %v8438 = vunpack.c.l.b16 %v8387
        %v8439 = vunpack.c.l.b16 %v8388
        %v8440 = vunpack.c.l.b16 %v8389
        %v8441 = vunpack.c.l.b16 %v8390
        %v8442 = vunpack.c.l.b16 %v8391
        %v8443 = vpack.c.b16 %v8428, %v8427
        %v8444 = vpack.c.b16 %v8430, %v8429
        %v8445 = vpack.c.b16 %v8432, %v8431
        %v8446 = vpack.c.b16 %v8434, %v8433
        %v8447 = vpack.c.b16 %v8436, %v8435
        %v8448 = vpack.c.b16 %v8438, %v8437
        %v8449 = vpack.c.b16 %v8440, %v8439
        %v8450 = vpack.c.b16 %v8442, %v8441
        %8459 = vmatpush.bf16.msra.mxu0 %v8450
        %8460 = vmatpush.bf16.msra.mxu0 %v8449
        %8461 = vmatpush.bf16.msra.mxu0 %v8448
        %8462 = vmatpush.bf16.msra.mxu0 %v8447
        %8463 = vmatpush.bf16.msra.mxu0 %v8446
        %8464 = vmatpush.bf16.msra.mxu0 %v8445
        %8465 = vmatpush.bf16.msra.mxu0 %v8444
        %8466 = vmatpush.bf16.msra.mxu0 %v8443
        %8467 = vmatmul.bf16.gmra.mxu0 %v8397
        %v8468 = vpop.f32.mrf.mxu0
        %v8469 = vadd.f32 0.0, %v8468
        %v8470 = vpop.f32.mrf.mxu0
        %v8471 = vadd.f32 0.0, %v8470
        %8472 = vmatmul.bf16.gmra.mxu0 %v8399
        %v8473 = vpop.f32.mrf.mxu0
        %v8474 = vadd.f32 0.0, %v8473
        %v8475 = vpop.f32.mrf.mxu0
        %v8476 = vadd.f32 0.0, %v8475
        %8477 = vmatmul.bf16.gmra.mxu0 %v8401
        %v8478 = vpop.f32.mrf.mxu0
        %v8479 = vadd.f32 0.0, %v8478
        %v8480 = vpop.f32.mrf.mxu0
        %v8481 = vadd.f32 0.0, %v8480
        %8482 = vmatmul.bf16.gmra.mxu0 %v8403
        %v8483 = vpop.f32.mrf.mxu0
        %v8484 = vadd.f32 0.0, %v8483
        %v8485 = vpop.f32.mrf.mxu0
        %v8486 = vadd.f32 0.0, %v8485
        %8487 = vmatmul.bf16.gmra.mxu0 %v8405
        %v8488 = vpop.f32.mrf.mxu0
        %v8489 = vadd.f32 0.0, %v8488
        %v8490 = vpop.f32.mrf.mxu0
        %v8491 = vadd.f32 0.0, %v8490
        %8492 = vdwg.mxu0
        %v8493 = vadd.f32 %v8364, %v8469
        %v8494 = vadd.f32 %v8365, %v8471
        %v8495 = vadd.f32 %v8366, %v8474
        %v8496 = vadd.f32 %v8367, %v8476
        %v8497 = vadd.f32 %v8368, %v8479
        %v8498 = vadd.f32 %v8369, %v8481
        %v8499 = vadd.f32 %v8370, %v8484
        %v8500 = vadd.f32 %v8371, %v8486
        %v8501 = vadd.f32 %v8372, %v8489
        %v8502 = vadd.f32 %v8373, %v8491
        %v8503 = vld [vmem:[#allocation2 + $0x8] sm:$0xc]
        %v8504 = vld [vmem:[#allocation2 + $0xc] sm:$0xf]
        %v8505 = vld [vmem:[#allocation2 + $0x10] sm:$0xf]
        %v8506 = vld [vmem:[#allocation2 + $0x14] sm:$0xf]
        %v8507 = vld [vmem:[#allocation2 + $0x18] sm:$0xf]
        %v8508 = vld [vmem:[#allocation2 + $0x1c] sm:$0xf]
        %v8509 = vld [vmem:[#allocation2 + $0x20] sm:$0xf]
        %v8510 = vld [vmem:[#allocation2 + $0x24] sm:$0xf]
        %v8511 = vld [vmem:[#allocation2 + $0x28] sm:$0xf]
        %v8512 = vld [vmem:[#allocation2 + $0x2c] sm:$0xf]
        %v8513 = vld [vmem:[#allocation2 + $0x30] sm:$0x3]
        %s8514 = scalar_lea.vmem [#allocation5], 1536
        %v8515 = vld [vmem:[%s8514] sm:$0xf]
        %v8516 = vld [vmem:[%s8514 + $0x4] sm:$0xf]
        %v8517 = vld [vmem:[%s8514 + $0x8] sm:$0xf]
        %v8518 = vld [vmem:[%s8514 + $0xc] sm:$0xf]
        %v8519 = vld [vmem:[%s8514 + $0x10] sm:$0xf]
        %v8520 = vld [vmem:[%s8514 + $0x14] sm:$0xf]
        %v8521 = vld [vmem:[%s8514 + $0x18] sm:$0xf]
        %v8522 = vld [vmem:[%s8514 + $0x1c] sm:$0xf]
        %v8523 = vld [vmem:[%s8514 + $0x20] sm:$0xf]
        %v8524 = vld [vmem:[%s8514 + $0x24] sm:$0xf]
        %v8525 = vld [vmem:[%s8514 + $0x28] sm:$0xf]
        %v8526 = vld [vmem:[%s8514 + $0x2c] sm:$0xf]
        %v8527 = vld [vmem:[%s8514 + $0x30] sm:$0xf]
        %v8528 = vld [vmem:[%s8514 + $0x34] sm:$0xf]
        %v8529 = vld [vmem:[%s8514 + $0x38] sm:$0xf]
        %v8530 = vld [vmem:[%s8514 + $0x3c] sm:$0xf]
        %v8542 = vunpack.c.l.b16 %v8503
        %v8543 = vunpack.c.l.b16 %v8504
        %v8544 = vunpack.c.l.b16 %v8505
        %v8545 = vunpack.c.l.b16 %v8506
        %v8546 = vunpack.c.l.b16 %v8507
        %v8547 = vunpack.c.l.b16 %v8508
        %v8548 = vunpack.c.l.b16 %v8509
        %v8549 = vunpack.c.l.b16 %v8510
        %v8550 = vunpack.c.l.b16 %v8511
        %v8551 = vunpack.c.l.b16 %v8512
        %v8552 = vunpack.c.l.b16 %v8513
        %v8553 = vpack.c.b16 %v8543, %v8542
        %v8554 = vpack.c.b16 %v8545, %v8544
        %v8555 = vpack.c.b16 %v8547, %v8546
        %v8556 = vpack.c.b16 %v8549, %v8548
        %v8557 = vpack.c.b16 %v8551, %v8550
        %v8558 = vpack.c.b16 %v8552, %v8552
        %v8559 = vrot.slane %v8553, 2
        %v8560 = vrot.slane %v8554, 2
        %v8561 = vsel %vm2119, %v8559, %v8560
        %v8562 = vrot.slane %v8555, 2
        %v8563 = vsel %vm2119, %v8560, %v8562
        %v8564 = vrot.slane %v8556, 2
        %v8565 = vsel %vm2119, %v8562, %v8564
        %v8566 = vrot.slane %v8557, 2
        %v8567 = vsel %vm2119, %v8564, %v8566
        %v8568 = vrot.slane %v8558, 2
        %v8569 = vsel %vm2119, %v8566, %v8568
        %v8591 = vunpack.c.l.b16 %v8515
        %v8592 = vunpack.c.l.b16 %v8516
        %v8593 = vunpack.c.l.b16 %v8517
        %v8594 = vunpack.c.l.b16 %v8518
        %v8595 = vunpack.c.l.b16 %v8519
        %v8596 = vunpack.c.l.b16 %v8520
        %v8597 = vunpack.c.l.b16 %v8521
        %v8598 = vunpack.c.l.b16 %v8522
        %v8599 = vunpack.c.l.b16 %v8523
        %v8600 = vunpack.c.l.b16 %v8524
        %v8601 = vunpack.c.l.b16 %v8525
        %v8602 = vunpack.c.l.b16 %v8526
        %v8603 = vunpack.c.l.b16 %v8527
        %v8604 = vunpack.c.l.b16 %v8528
        %v8605 = vunpack.c.l.b16 %v8529
        %v8606 = vunpack.c.l.b16 %v8530
        %v8607 = vpack.c.b16 %v8592, %v8591
        %v8608 = vpack.c.b16 %v8594, %v8593
        %v8609 = vpack.c.b16 %v8596, %v8595
        %v8610 = vpack.c.b16 %v8598, %v8597
        %v8611 = vpack.c.b16 %v8600, %v8599
        %v8612 = vpack.c.b16 %v8602, %v8601
        %v8613 = vpack.c.b16 %v8604, %v8603
        %v8614 = vpack.c.b16 %v8606, %v8605
        %8623 = vmatpush.bf16.msra.mxu0 %v8614
        %8624 = vmatpush.bf16.msra.mxu0 %v8613
        %8625 = vmatpush.bf16.msra.mxu0 %v8612
        %8626 = vmatpush.bf16.msra.mxu0 %v8611
        %8627 = vmatpush.bf16.msra.mxu0 %v8610
        %8628 = vmatpush.bf16.msra.mxu0 %v8609
        %8629 = vmatpush.bf16.msra.mxu0 %v8608
        %8630 = vmatpush.bf16.msra.mxu0 %v8607
        %8631 = vmatmul.bf16.gmra.mxu0 %v8561
        %v8632 = vpop.f32.mrf.mxu0
        %v8633 = vadd.f32 0.0, %v8632
        %v8634 = vpop.f32.mrf.mxu0
        %v8635 = vadd.f32 0.0, %v8634
        %8636 = vmatmul.bf16.gmra.mxu0 %v8563
        %v8637 = vpop.f32.mrf.mxu0
        %v8638 = vadd.f32 0.0, %v8637
        %v8639 = vpop.f32.mrf.mxu0
        %v8640 = vadd.f32 0.0, %v8639
        %8641 = vmatmul.bf16.gmra.mxu0 %v8565
        %v8642 = vpop.f32.mrf.mxu0
        %v8643 = vadd.f32 0.0, %v8642
        %v8644 = vpop.f32.mrf.mxu0
        %v8645 = vadd.f32 0.0, %v8644
        %8646 = vmatmul.bf16.gmra.mxu0 %v8567
        %v8647 = vpop.f32.mrf.mxu0
        %v8648 = vadd.f32 0.0, %v8647
        %v8649 = vpop.f32.mrf.mxu0
        %v8650 = vadd.f32 0.0, %v8649
        %8651 = vmatmul.bf16.gmra.mxu0 %v8569
        %v8652 = vpop.f32.mrf.mxu0
        %v8653 = vadd.f32 0.0, %v8652
        %v8654 = vpop.f32.mrf.mxu0
        %v8655 = vadd.f32 0.0, %v8654
        %8656 = vdwg.mxu0
        %v8657 = vadd.f32 %v8493, %v8633
        %v8658 = vadd.f32 %v8494, %v8635
        %v8659 = vadd.f32 %v8495, %v8638
        %v8660 = vadd.f32 %v8496, %v8640
        %v8661 = vadd.f32 %v8497, %v8643
        %v8662 = vadd.f32 %v8498, %v8645
        %v8663 = vadd.f32 %v8499, %v8648
        %v8664 = vadd.f32 %v8500, %v8650
        %v8665 = vadd.f32 %v8501, %v8653
        %v8666 = vadd.f32 %v8502, %v8655
        %v8667 = vld [vmem:[#allocation2 + $0x30] sm:$0x7]
        %s8668 = scalar_lea.vmem [#allocation5], 1600
        %v8669 = vld [vmem:[%s8668] sm:$0xf]
        %v8670 = vld [vmem:[%s8668 + $0x4] sm:$0xf]
        %v8671 = vld [vmem:[%s8668 + $0x8] sm:$0xf]
        %v8672 = vld [vmem:[%s8668 + $0xc] sm:$0xf]
        %v8673 = vld [vmem:[%s8668 + $0x10] sm:$0xf]
        %v8674 = vld [vmem:[%s8668 + $0x14] sm:$0xf]
        %v8675 = vld [vmem:[%s8668 + $0x18] sm:$0xf]
        %v8676 = vld [vmem:[%s8668 + $0x1c] sm:$0xf]
        %v8677 = vld [vmem:[%s8668 + $0x20] sm:$0xf]
        %v8678 = vld [vmem:[%s8668 + $0x24] sm:$0xf]
        %v8679 = vld [vmem:[%s8668 + $0x28] sm:$0xf]
        %v8680 = vld [vmem:[%s8668 + $0x2c] sm:$0xf]
        %v8681 = vld [vmem:[%s8668 + $0x30] sm:$0xf]
        %v8682 = vld [vmem:[%s8668 + $0x34] sm:$0xf]
        %v8683 = vld [vmem:[%s8668 + $0x38] sm:$0xf]
        %v8684 = vld [vmem:[%s8668 + $0x3c] sm:$0xf]
        %v8686 = vunpack.c.l.b16 %v8667
        %v8687 = vpack.c.b16 %v8686, %v8686
        %v8689 = vshrl.u32 %v8553, 16
        %v8691 = vrot.slane %v8689, 2
        %v8692 = vshll.u32 %v8553, 16
        %v8694 = vrot.slane %v8692, 3
        %v8695 = vor.u32 %v8691, %v8694
        %v8697 = vshrl.u32 %v8554, 16
        %v8699 = vrot.slane %v8697, 2
        %v8700 = vshll.u32 %v8554, 16
        %v8702 = vrot.slane %v8700, 3
        %v8703 = vor.u32 %v8699, %v8702
        %v8704 = vsel %vm2764, %v8695, %v8703
        %v8706 = vshrl.u32 %v8555, 16
        %v8708 = vrot.slane %v8706, 2
        %v8709 = vshll.u32 %v8555, 16
        %v8711 = vrot.slane %v8709, 3
        %v8712 = vor.u32 %v8708, %v8711
        %v8713 = vsel %vm2764, %v8703, %v8712
        %v8715 = vshrl.u32 %v8556, 16
        %v8717 = vrot.slane %v8715, 2
        %v8718 = vshll.u32 %v8556, 16
        %v8720 = vrot.slane %v8718, 3
        %v8721 = vor.u32 %v8717, %v8720
        %v8722 = vsel %vm2764, %v8712, %v8721
        %v8724 = vshrl.u32 %v8557, 16
        %v8726 = vrot.slane %v8724, 2
        %v8727 = vshll.u32 %v8557, 16
        %v8729 = vrot.slane %v8727, 3
        %v8730 = vor.u32 %v8726, %v8729
        %v8731 = vsel %vm2764, %v8721, %v8730
        %v8733 = vshrl.u32 %v8687, 16
        %v8735 = vrot.slane %v8733, 2
        %v8736 = vshll.u32 %v8687, 16
        %v8738 = vrot.slane %v8736, 3
        %v8739 = vor.u32 %v8735, %v8738
        %v8740 = vsel %vm2764, %v8730, %v8739
        %v8762 = vunpack.c.l.b16 %v8669
        %v8763 = vunpack.c.l.b16 %v8670
        %v8764 = vunpack.c.l.b16 %v8671
        %v8765 = vunpack.c.l.b16 %v8672
        %v8766 = vunpack.c.l.b16 %v8673
        %v8767 = vunpack.c.l.b16 %v8674
        %v8768 = vunpack.c.l.b16 %v8675
        %v8769 = vunpack.c.l.b16 %v8676
        %v8770 = vunpack.c.l.b16 %v8677
        %v8771 = vunpack.c.l.b16 %v8678
        %v8772 = vunpack.c.l.b16 %v8679
        %v8773 = vunpack.c.l.b16 %v8680
        %v8774 = vunpack.c.l.b16 %v8681
        %v8775 = vunpack.c.l.b16 %v8682
        %v8776 = vunpack.c.l.b16 %v8683
        %v8777 = vunpack.c.l.b16 %v8684
        %v8778 = vpack.c.b16 %v8763, %v8762
        %v8779 = vpack.c.b16 %v8765, %v8764
        %v8780 = vpack.c.b16 %v8767, %v8766
        %v8781 = vpack.c.b16 %v8769, %v8768
        %v8782 = vpack.c.b16 %v8771, %v8770
        %v8783 = vpack.c.b16 %v8773, %v8772
        %v8784 = vpack.c.b16 %v8775, %v8774
        %v8785 = vpack.c.b16 %v8777, %v8776
        %8794 = vmatpush.bf16.msra.mxu0 %v8785
        %8795 = vmatpush.bf16.msra.mxu0 %v8784
        %8796 = vmatpush.bf16.msra.mxu0 %v8783
        %8797 = vmatpush.bf16.msra.mxu0 %v8782
        %8798 = vmatpush.bf16.msra.mxu0 %v8781
        %8799 = vmatpush.bf16.msra.mxu0 %v8780
        %8800 = vmatpush.bf16.msra.mxu0 %v8779
        %8801 = vmatpush.bf16.msra.mxu0 %v8778
        %8802 = vmatmul.bf16.gmra.mxu0 %v8704
        %v8803 = vpop.f32.mrf.mxu0
        %v8804 = vadd.f32 0.0, %v8803
        %v8805 = vpop.f32.mrf.mxu0
        %v8806 = vadd.f32 0.0, %v8805
        %8807 = vmatmul.bf16.gmra.mxu0 %v8713
        %v8808 = vpop.f32.mrf.mxu0
        %v8809 = vadd.f32 0.0, %v8808
        %v8810 = vpop.f32.mrf.mxu0
        %v8811 = vadd.f32 0.0, %v8810
        %8812 = vmatmul.bf16.gmra.mxu0 %v8722
        %v8813 = vpop.f32.mrf.mxu0
        %v8814 = vadd.f32 0.0, %v8813
        %v8815 = vpop.f32.mrf.mxu0
        %v8816 = vadd.f32 0.0, %v8815
        %8817 = vmatmul.bf16.gmra.mxu0 %v8731
        %v8818 = vpop.f32.mrf.mxu0
        %v8819 = vadd.f32 0.0, %v8818
        %v8820 = vpop.f32.mrf.mxu0
        %v8821 = vadd.f32 0.0, %v8820
        %8822 = vmatmul.bf16.gmra.mxu0 %v8740
        %v8823 = vpop.f32.mrf.mxu0
        %v8824 = vadd.f32 0.0, %v8823
        %v8825 = vpop.f32.mrf.mxu0
        %v8826 = vadd.f32 0.0, %v8825
        %8827 = vdwg.mxu0
        %v8828 = vadd.f32 %v8657, %v8804
        %v8829 = vadd.f32 %v8658, %v8806
        %v8830 = vadd.f32 %v8659, %v8809
        %v8831 = vadd.f32 %v8660, %v8811
        %v8832 = vadd.f32 %v8661, %v8814
        %v8833 = vadd.f32 %v8662, %v8816
        %v8834 = vadd.f32 %v8663, %v8819
        %v8835 = vadd.f32 %v8664, %v8821
        %v8836 = vadd.f32 %v8665, %v8824
        %v8837 = vadd.f32 %v8666, %v8826
        %v8838 = vld [vmem:[#allocation2 + $0x8] sm:$0x8]
        %s8839 = scalar_lea.vmem [#allocation5], 1664
        %v8840 = vld [vmem:[%s8839] sm:$0xf]
        %v8841 = vld [vmem:[%s8839 + $0x4] sm:$0xf]
        %v8842 = vld [vmem:[%s8839 + $0x8] sm:$0xf]
        %v8843 = vld [vmem:[%s8839 + $0xc] sm:$0xf]
        %v8844 = vld [vmem:[%s8839 + $0x10] sm:$0xf]
        %v8845 = vld [vmem:[%s8839 + $0x14] sm:$0xf]
        %v8846 = vld [vmem:[%s8839 + $0x18] sm:$0xf]
        %v8847 = vld [vmem:[%s8839 + $0x1c] sm:$0xf]
        %v8848 = vld [vmem:[%s8839 + $0x20] sm:$0xf]
        %v8849 = vld [vmem:[%s8839 + $0x24] sm:$0xf]
        %v8850 = vld [vmem:[%s8839 + $0x28] sm:$0xf]
        %v8851 = vld [vmem:[%s8839 + $0x2c] sm:$0xf]
        %v8852 = vld [vmem:[%s8839 + $0x30] sm:$0xf]
        %v8853 = vld [vmem:[%s8839 + $0x34] sm:$0xf]
        %v8854 = vld [vmem:[%s8839 + $0x38] sm:$0xf]
        %v8855 = vld [vmem:[%s8839 + $0x3c] sm:$0xf]
        %v8857 = vunpack.c.l.b16 %v8838
        %v8858 = vpack.c.b16 %v8543, %v8857
        %v8859 = vrot.slane %v8858, 3
        %v8860 = vrot.slane %v8554, 3
        %v8861 = vsel %vm3157, %v8859, %v8860
        %v8862 = vrot.slane %v8555, 3
        %v8863 = vsel %vm3157, %v8860, %v8862
        %v8864 = vrot.slane %v8556, 3
        %v8865 = vsel %vm3157, %v8862, %v8864
        %v8866 = vrot.slane %v8557, 3
        %v8867 = vsel %vm3157, %v8864, %v8866
        %v8868 = vrot.slane %v8687, 3
        %v8869 = vsel %vm3157, %v8866, %v8868
        %v8891 = vunpack.c.l.b16 %v8840
        %v8892 = vunpack.c.l.b16 %v8841
        %v8893 = vunpack.c.l.b16 %v8842
        %v8894 = vunpack.c.l.b16 %v8843
        %v8895 = vunpack.c.l.b16 %v8844
        %v8896 = vunpack.c.l.b16 %v8845
        %v8897 = vunpack.c.l.b16 %v8846
        %v8898 = vunpack.c.l.b16 %v8847
        %v8899 = vunpack.c.l.b16 %v8848
        %v8900 = vunpack.c.l.b16 %v8849
        %v8901 = vunpack.c.l.b16 %v8850
        %v8902 = vunpack.c.l.b16 %v8851
        %v8903 = vunpack.c.l.b16 %v8852
        %v8904 = vunpack.c.l.b16 %v8853
        %v8905 = vunpack.c.l.b16 %v8854
        %v8906 = vunpack.c.l.b16 %v8855
        %v8907 = vpack.c.b16 %v8892, %v8891
        %v8908 = vpack.c.b16 %v8894, %v8893
        %v8909 = vpack.c.b16 %v8896, %v8895
        %v8910 = vpack.c.b16 %v8898, %v8897
        %v8911 = vpack.c.b16 %v8900, %v8899
        %v8912 = vpack.c.b16 %v8902, %v8901
        %v8913 = vpack.c.b16 %v8904, %v8903
        %v8914 = vpack.c.b16 %v8906, %v8905
        %8923 = vmatpush.bf16.msra.mxu0 %v8914
        %8924 = vmatpush.bf16.msra.mxu0 %v8913
        %8925 = vmatpush.bf16.msra.mxu0 %v8912
        %8926 = vmatpush.bf16.msra.mxu0 %v8911
        %8927 = vmatpush.bf16.msra.mxu0 %v8910
        %8928 = vmatpush.bf16.msra.mxu0 %v8909
        %8929 = vmatpush.bf16.msra.mxu0 %v8908
        %8930 = vmatpush.bf16.msra.mxu0 %v8907
        %8931 = vmatmul.bf16.gmra.mxu0 %v8861
        %v8932 = vpop.f32.mrf.mxu0
        %v8933 = vadd.f32 0.0, %v8932
        %v8934 = vpop.f32.mrf.mxu0
        %v8935 = vadd.f32 0.0, %v8934
        %8936 = vmatmul.bf16.gmra.mxu0 %v8863
        %v8937 = vpop.f32.mrf.mxu0
        %v8938 = vadd.f32 0.0, %v8937
        %v8939 = vpop.f32.mrf.mxu0
        %v8940 = vadd.f32 0.0, %v8939
        %8941 = vmatmul.bf16.gmra.mxu0 %v8865
        %v8942 = vpop.f32.mrf.mxu0
        %v8943 = vadd.f32 0.0, %v8942
        %v8944 = vpop.f32.mrf.mxu0
        %v8945 = vadd.f32 0.0, %v8944
        %8946 = vmatmul.bf16.gmra.mxu0 %v8867
        %v8947 = vpop.f32.mrf.mxu0
        %v8948 = vadd.f32 0.0, %v8947
        %v8949 = vpop.f32.mrf.mxu0
        %v8950 = vadd.f32 0.0, %v8949
        %8951 = vmatmul.bf16.gmra.mxu0 %v8869
        %v8952 = vpop.f32.mrf.mxu0
        %v8953 = vadd.f32 0.0, %v8952
        %v8954 = vpop.f32.mrf.mxu0
        %v8955 = vadd.f32 0.0, %v8954
        %8956 = vdwg.mxu0
        %v8957 = vadd.f32 %v8828, %v8933
        %v8958 = vadd.f32 %v8829, %v8935
        %v8959 = vadd.f32 %v8830, %v8938
        %v8960 = vadd.f32 %v8831, %v8940
        %v8961 = vadd.f32 %v8832, %v8943
        %v8962 = vadd.f32 %v8833, %v8945
        %v8963 = vadd.f32 %v8834, %v8948
        %v8964 = vadd.f32 %v8835, %v8950
        %v8965 = vadd.f32 %v8836, %v8953
        %v8966 = vadd.f32 %v8837, %v8955
        %s8967 = scalar_lea.vmem [#allocation8], 2
        %v8968 = vld [vmem:[%s8967] sm:$0x1]
        %v8970 = vperm.slane %v8968, 0
        %v8972 = vadd.f32 %v8957, %v8970
        %v8973 = vadd.f32 %v8958, %v8970
        %v8974 = vadd.f32 %v8959, %v8970
        %v8975 = vadd.f32 %v8960, %v8970
        %v8976 = vadd.f32 %v8961, %v8970
        %v8977 = vadd.f32 %v8962, %v8970
        %v8978 = vadd.f32 %v8963, %v8970
        %v8979 = vadd.f32 %v8964, %v8970
        %v8980 = vadd.f32 %v8965, %v8970
        %v8981 = vadd.f32 %v8966, %v8970
        %v8982 = vmax.f32 %v8972, 0.0
        %v8983 = vmax.f32 %v8973, 0.0
        %v8984 = vmax.f32 %v8974, 0.0
        %v8985 = vmax.f32 %v8975, 0.0
        %v8986 = vmax.f32 %v8976, 0.0
        %v8987 = vmax.f32 %v8977, 0.0
        %v8988 = vmax.f32 %v8978, 0.0
        %v8989 = vmax.f32 %v8979, 0.0
        %v8990 = vmax.f32 %v8980, 0.0
        %v8991 = vmax.f32 %v8981, 0.0
        %v8992 = vld [vmem:[#allocation14] sm:$0xff]
        %v8993 = vld [vmem:[#allocation14 + $0x8] sm:$0xff]
        %v8994 = vld [vmem:[#allocation14 + $0x10] sm:$0xff]
        %v8995 = vld [vmem:[#allocation14 + $0x18] sm:$0xff]
        %v8996 = vld [vmem:[#allocation14 + $0x20] sm:$0xff]
        %v8997 = vld [vmem:[#allocation14 + $0x28] sm:$0xff]
        %v8998 = vld [vmem:[#allocation14 + $0x30] sm:$0xff]
        %v8999 = vld [vmem:[#allocation14 + $0x38] sm:$0xff]
        %v9000 = vld [vmem:[#allocation14 + $0x40] sm:$0xff]
        %v9001 = vld [vmem:[#allocation14 + $0x48] sm:$0xff]
        %9002 = vst [vmem:[#allocation3] sm:$0xf] 0
        %9003 = vst [vmem:[#allocation3 + $0x4] sm:$0xf] 0
        %9004 = vst [vmem:[#allocation3 + $0x8] sm:$0xf] 0
        %9005 = vst [vmem:[#allocation3 + $0xc] sm:$0xf] 0
        %9006 = vst [vmem:[#allocation3 + $0x10] sm:$0xf] 0
        %9007 = vst [vmem:[#allocation3 + $0x14] sm:$0xf] 0
        %9008 = vst [vmem:[#allocation3 + $0x18] sm:$0xf] 0
        %9009 = vst [vmem:[#allocation3 + $0x1c] sm:$0xf] 0
        %9010 = vst [vmem:[#allocation3 + $0x20] sm:$0xf] 0
        %9011 = vst [vmem:[#allocation3 + $0x24] sm:$0xf] 0
        %9012 = vst [vmem:[#allocation3 + $0x28] sm:$0xf] 0
        %9013 = vst [vmem:[#allocation3 + $0x2c] sm:$0xf] 0
        %9014 = vst [vmem:[#allocation3 + $0x30] sm:$0xf] 0
        %9015 = vst [vmem:[#allocation3 + $0x34] sm:$0xf] 0
        %9016 = vst [vmem:[#allocation3 + $0x38] sm:$0xf] 0
        %9017 = vst [vmem:[#allocation3 + $0x3c] sm:$0xf] 0
        %9018 = vst [vmem:[#allocation3 + $0x40] sm:$0xf] 0
        %9019 = vst [vmem:[#allocation3 + $0x44] sm:$0xf] 0
        %9020 = vst [vmem:[#allocation3 + $0x48] sm:$0xf] 0
        %9021 = vst [vmem:[#allocation3 + $0x4c] sm:$0xf] 0
        %9022 = vst [vmem:[#allocation3 + $0x50] sm:$0xf] 0
        %9023 = vst [vmem:[#allocation3 + $0x54] sm:$0xf] 0
        %9024 = vst [vmem:[#allocation3 + $0x58] sm:$0xf] 0
        %9025 = vst [vmem:[#allocation3 + $0x5c] sm:$0xf] 0
        %9026 = vst [vmem:[#allocation3 + $0x60] sm:$0xf] 0
        %9027 = vst [vmem:[#allocation3 + $0x64] sm:$0xf] 0
        %9028 = vst [vmem:[#allocation3 + $0x68] sm:$0xf] 0
        %9029 = vst [vmem:[#allocation3 + $0x6c] sm:$0xf] 0
        %9030 = vst [vmem:[#allocation3 + $0x70] sm:$0xf] 0
        %9031 = vst [vmem:[#allocation3 + $0x74] sm:$0xf] 0
        %9032 = vst [vmem:[#allocation3 + $0x78] sm:$0xf] 0
        %9033 = vst [vmem:[#allocation3 + $0x7c] sm:$0xf] 0
        %9034 = vst [vmem:[#allocation3 + $0x80] sm:$0xf] 0
        %9035 = vst [vmem:[#allocation3 + $0x84] sm:$0xf] 0
        %9036 = vst [vmem:[#allocation3 + $0x88] sm:$0xf] 0
        %9037 = vst [vmem:[#allocation3 + $0x8c] sm:$0xf] 0
        %9038 = vst [vmem:[#allocation3 + $0x90] sm:$0xf] 0
        %9039 = vst [vmem:[#allocation3 + $0x94] sm:$0xf] 0
        %9040 = vst [vmem:[#allocation3 + $0x98] sm:$0xf] 0
        %9041 = vst [vmem:[#allocation3 + $0x9c] sm:$0xf] 0
        %9042 = vst [vmem:[#allocation3 + $0xa0] sm:$0x7] 0
        %9044 = vset.pattern.permute.xlu0 0
        %9045 = vperm.xlu0 %9044, %v8992
        %v9046 = vpop.permute.xlu0 %9045
        %9049 = vset.pattern.permute.xlu0 0
        %9050 = vperm.xlu0 %9049, %v8993
        %v9051 = vpop.permute.xlu0 %9050
        %9054 = vset.pattern.permute.xlu0 0
        %9055 = vperm.xlu0 %9054, %v8994
        %v9056 = vpop.permute.xlu0 %9055
        %9059 = vset.pattern.permute.xlu0 0
        %9060 = vperm.xlu0 %9059, %v8995
        %v9061 = vpop.permute.xlu0 %9060
        %9064 = vset.pattern.permute.xlu0 0
        %9065 = vperm.xlu0 %9064, %v8996
        %v9066 = vpop.permute.xlu0 %9065
        %9069 = vset.pattern.permute.xlu0 0
        %9070 = vperm.xlu0 %9069, %v8997
        %v9071 = vpop.permute.xlu0 %9070
        %9074 = vset.pattern.permute.xlu0 0
        %9075 = vperm.xlu0 %9074, %v8998
        %v9076 = vpop.permute.xlu0 %9075
        %9079 = vset.pattern.permute.xlu0 0
        %9080 = vperm.xlu0 %9079, %v8999
        %v9081 = vpop.permute.xlu0 %9080
        %9084 = vset.pattern.permute.xlu0 0
        %9085 = vperm.xlu0 %9084, %v9000
        %v9086 = vpop.permute.xlu0 %9085
        %9089 = vset.pattern.permute.xlu0 0
        %9090 = vperm.xlu0 %9089, %v9001
        %v9091 = vpop.permute.xlu0 %9090
        %v9093 = vmul.f32 %v8982, %v9046
        %v9094 = vmul.f32 %v8983, %v9051
        %v9095 = vmul.f32 %v8984, %v9056
        %v9096 = vmul.f32 %v8985, %v9061
        %v9097 = vmul.f32 %v8986, %v9066
        %v9098 = vmul.f32 %v8987, %v9071
        %v9099 = vmul.f32 %v8988, %v9076
        %v9100 = vmul.f32 %v8989, %v9081
        %v9101 = vmul.f32 %v8990, %v9086
        %v9102 = vmul.f32 %v8991, %v9091
        %v9103 = vpack.c.bf16 %v9093, %v9093
        %v9104 = vpack.c.bf16 %v9094, %v9094
        %v9105 = vpack.c.bf16 %v9095, %v9095
        %v9106 = vpack.c.bf16 %v9096, %v9096
        %v9107 = vpack.c.bf16 %v9097, %v9097
        %v9108 = vpack.c.bf16 %v9098, %v9098
        %v9109 = vpack.c.bf16 %v9099, %v9099
        %v9110 = vpack.c.bf16 %v9100, %v9100
        %v9111 = vpack.c.bf16 %v9101, %v9101
        %v9112 = vpack.c.bf16 %v9102, %v9102
        %v9114 = vshrl.u32 %v9103, 16
        %v9116 = vrot.slane %v9114, 6
        %v9117 = vshll.u32 %v9103, 16
        %v9119 = vrot.slane %v9117, 7
        %v9120 = vor.u32 %v9116, %v9119
        %v9121 = vrot.slane %v9120, 4
        %v9123 = vshrl.u32 %v9104, 16
        %v9125 = vrot.slane %v9123, 6
        %v9126 = vshll.u32 %v9104, 16
        %v9128 = vrot.slane %v9126, 7
        %v9129 = vor.u32 %v9125, %v9128
        %v9130 = vsel %vm3803, %v9121, %v9129
        %v9131 = vrot.slane %v9129, 4
        %v9133 = vshrl.u32 %v9105, 16
        %v9135 = vrot.slane %v9133, 6
        %v9136 = vshll.u32 %v9105, 16
        %v9138 = vrot.slane %v9136, 7
        %v9139 = vor.u32 %v9135, %v9138
        %v9140 = vsel %vm3803, %v9131, %v9139
        %v9141 = vrot.slane %v9139, 4
        %v9143 = vshrl.u32 %v9106, 16
        %v9145 = vrot.slane %v9143, 6
        %v9146 = vshll.u32 %v9106, 16
        %v9148 = vrot.slane %v9146, 7
        %v9149 = vor.u32 %v9145, %v9148
        %v9150 = vsel %vm3803, %v9141, %v9149
        %v9151 = vrot.slane %v9149, 4
        %v9153 = vshrl.u32 %v9107, 16
        %v9155 = vrot.slane %v9153, 6
        %v9156 = vshll.u32 %v9107, 16
        %v9158 = vrot.slane %v9156, 7
        %v9159 = vor.u32 %v9155, %v9158
        %v9160 = vsel %vm3803, %v9151, %v9159
        %v9161 = vrot.slane %v9159, 4
        %v9163 = vshrl.u32 %v9108, 16
        %v9165 = vrot.slane %v9163, 6
        %v9166 = vshll.u32 %v9108, 16
        %v9168 = vrot.slane %v9166, 7
        %v9169 = vor.u32 %v9165, %v9168
        %v9170 = vsel %vm3803, %v9161, %v9169
        %v9171 = vrot.slane %v9169, 4
        %v9173 = vshrl.u32 %v9109, 16
        %v9175 = vrot.slane %v9173, 6
        %v9176 = vshll.u32 %v9109, 16
        %v9178 = vrot.slane %v9176, 7
        %v9179 = vor.u32 %v9175, %v9178
        %v9180 = vsel %vm3803, %v9171, %v9179
        %v9181 = vrot.slane %v9179, 4
        %v9183 = vshrl.u32 %v9110, 16
        %v9185 = vrot.slane %v9183, 6
        %v9186 = vshll.u32 %v9110, 16
        %v9188 = vrot.slane %v9186, 7
        %v9189 = vor.u32 %v9185, %v9188
        %v9190 = vsel %vm3803, %v9181, %v9189
        %v9191 = vrot.slane %v9189, 4
        %v9193 = vshrl.u32 %v9111, 16
        %v9195 = vrot.slane %v9193, 6
        %v9196 = vshll.u32 %v9111, 16
        %v9198 = vrot.slane %v9196, 7
        %v9199 = vor.u32 %v9195, %v9198
        %v9200 = vsel %vm3803, %v9191, %v9199
        %v9201 = vrot.slane %v9199, 4
        %v9203 = vshrl.u32 %v9112, 16
        %v9205 = vrot.slane %v9203, 6
        %v9206 = vshll.u32 %v9112, 16
        %v9208 = vrot.slane %v9206, 7
        %v9209 = vor.u32 %v9205, %v9208
        %v9210 = vsel %vm3803, %v9201, %v9209
        %v9211 = vrot.slane %v9209, 4
        %v9223 = vld [vmem:[#allocation3 + $0x4] sm:$0xe]
        %v9224 = vsel %vm4202, %v9120, %v9223
        %9225 = vst [vmem:[#allocation3 + $0x4] sm:$0xe] %v9224
        %9226 = vst [vmem:[#allocation3 + $0x8] sm:$0xf] %v9130
        %9227 = vst [vmem:[#allocation3 + $0xc] sm:$0xf] %v9140
        %9228 = vst [vmem:[#allocation3 + $0x10] sm:$0xf] %v9150
        %9229 = vst [vmem:[#allocation3 + $0x14] sm:$0xf] %v9160
        %9230 = vst [vmem:[#allocation3 + $0x18] sm:$0xf] %v9170
        %9231 = vst [vmem:[#allocation3 + $0x1c] sm:$0xf] %v9180
        %9232 = vst [vmem:[#allocation3 + $0x20] sm:$0xf] %v9190
        %9233 = vst [vmem:[#allocation3 + $0x24] sm:$0xf] %v9200
        %9234 = vst [vmem:[#allocation3 + $0x28] sm:$0xf] %v9210
        %v9235 = vld [vmem:[#allocation3 + $0x2c] sm:$0x3]
        %v9236 = vsel %vm4242, %v9211, %v9235
        %9237 = vst [vmem:[#allocation3 + $0x2c] sm:$0x3] %v9236
        %v9238 = vld [vmem:[#allocation3] sm:$0xf]
        %v9239 = vld [vmem:[#allocation3 + $0x4] sm:$0xf]
        %v9240 = vld [vmem:[#allocation3 + $0x8] sm:$0xf]
        %v9241 = vld [vmem:[#allocation3 + $0xc] sm:$0xf]
        %v9242 = vld [vmem:[#allocation3 + $0x10] sm:$0xf]
        %v9243 = vld [vmem:[#allocation3 + $0x14] sm:$0xf]
        %v9244 = vld [vmem:[#allocation3 + $0x18] sm:$0xf]
        %v9245 = vld [vmem:[#allocation3 + $0x1c] sm:$0xf]
        %v9246 = vld [vmem:[#allocation3 + $0x20] sm:$0xf]
        %v9247 = vld [vmem:[#allocation3 + $0x24] sm:$0xf]
        %s9248 = scalar_lea.vmem [#allocation5], 1728
        %v9249 = vld [vmem:[%s9248] sm:$0xf]
        %v9250 = vld [vmem:[%s9248 + $0x4] sm:$0xf]
        %v9251 = vld [vmem:[%s9248 + $0x8] sm:$0xf]
        %v9252 = vld [vmem:[%s9248 + $0xc] sm:$0xf]
        %v9253 = vld [vmem:[%s9248 + $0x10] sm:$0xf]
        %v9254 = vld [vmem:[%s9248 + $0x14] sm:$0xf]
        %v9255 = vld [vmem:[%s9248 + $0x18] sm:$0xf]
        %v9256 = vld [vmem:[%s9248 + $0x1c] sm:$0xf]
        %v9257 = vld [vmem:[%s9248 + $0x20] sm:$0xf]
        %v9258 = vld [vmem:[%s9248 + $0x24] sm:$0xf]
        %v9259 = vld [vmem:[%s9248 + $0x28] sm:$0xf]
        %v9260 = vld [vmem:[%s9248 + $0x2c] sm:$0xf]
        %v9261 = vld [vmem:[%s9248 + $0x30] sm:$0xf]
        %v9262 = vld [vmem:[%s9248 + $0x34] sm:$0xf]
        %v9263 = vld [vmem:[%s9248 + $0x38] sm:$0xf]
        %v9264 = vld [vmem:[%s9248 + $0x3c] sm:$0xf]
        %v9265 = vld [vmem:[#allocation3 + $0x28] sm:$0x1]
        %s9266 = scalar_lea.vmem [#allocation5], 1792
        %v9267 = vld [vmem:[%s9266] sm:$0xf]
        %v9268 = vld [vmem:[%s9266 + $0x4] sm:$0xf]
        %v9269 = vld [vmem:[%s9266 + $0x8] sm:$0xf]
        %v9270 = vld [vmem:[%s9266 + $0xc] sm:$0xf]
        %v9271 = vld [vmem:[%s9266 + $0x10] sm:$0xf]
        %v9272 = vld [vmem:[%s9266 + $0x14] sm:$0xf]
        %v9273 = vld [vmem:[%s9266 + $0x18] sm:$0xf]
        %v9274 = vld [vmem:[%s9266 + $0x1c] sm:$0xf]
        %v9275 = vld [vmem:[%s9266 + $0x20] sm:$0xf]
        %v9276 = vld [vmem:[%s9266 + $0x24] sm:$0xf]
        %v9277 = vld [vmem:[%s9266 + $0x28] sm:$0xf]
        %v9278 = vld [vmem:[%s9266 + $0x2c] sm:$0xf]
        %v9279 = vld [vmem:[%s9266 + $0x30] sm:$0xf]
        %v9280 = vld [vmem:[%s9266 + $0x34] sm:$0xf]
        %v9281 = vld [vmem:[%s9266 + $0x38] sm:$0xf]
        %v9282 = vld [vmem:[%s9266 + $0x3c] sm:$0xf]
        %v9294 = vunpack.c.l.b16 %v9238
        %v9295 = vunpack.c.l.b16 %v9239
        %v9296 = vunpack.c.l.b16 %v9240
        %v9297 = vunpack.c.l.b16 %v9241
        %v9298 = vunpack.c.l.b16 %v9242
        %v9299 = vunpack.c.l.b16 %v9243
        %v9300 = vunpack.c.l.b16 %v9244
        %v9301 = vunpack.c.l.b16 %v9245
        %v9302 = vunpack.c.l.b16 %v9246
        %v9303 = vunpack.c.l.b16 %v9247
        %v9304 = vunpack.c.l.b16 %v9265
        %v9305 = vpack.c.b16 %v9295, %v9294
        %v9306 = vpack.c.b16 %v9297, %v9296
        %v9307 = vpack.c.b16 %v9299, %v9298
        %v9308 = vpack.c.b16 %v9301, %v9300
        %v9309 = vpack.c.b16 %v9303, %v9302
        %v9310 = vpack.c.b16 %v9304, %v9304
        %v9312 = vshrl.u32 %v9305, 16
        %v9314 = vshll.u32 %v9305, 16
        %v9316 = vrot.slane %v9314, 1
        %v9317 = vor.u32 %v9312, %v9316
        %v9319 = vshll.u32 %v9306, 16
        %v9321 = vrot.slane %v9319, 1
        %v9322 = vsel %vm581, %v9317, %v9321
        %v9323 = vshrl.u32 %v9306, 16
        %v9325 = vor.u32 %v9323, %v9321
        %v9327 = vshll.u32 %v9307, 16
        %v9329 = vrot.slane %v9327, 1
        %v9330 = vsel %vm581, %v9325, %v9329
        %v9331 = vshrl.u32 %v9307, 16
        %v9333 = vor.u32 %v9331, %v9329
        %v9335 = vshll.u32 %v9308, 16
        %v9337 = vrot.slane %v9335, 1
        %v9338 = vsel %vm581, %v9333, %v9337
        %v9339 = vshrl.u32 %v9308, 16
        %v9341 = vor.u32 %v9339, %v9337
        %v9343 = vshll.u32 %v9309, 16
        %v9345 = vrot.slane %v9343, 1
        %v9346 = vsel %vm581, %v9341, %v9345
        %v9347 = vshrl.u32 %v9309, 16
        %v9349 = vor.u32 %v9347, %v9345
        %v9351 = vshll.u32 %v9310, 16
        %v9353 = vrot.slane %v9351, 1
        %v9354 = vsel %vm581, %v9349, %v9353
        %v9376 = vunpack.c.l.b16 %v9267
        %v9377 = vunpack.c.l.b16 %v9268
        %v9378 = vunpack.c.l.b16 %v9269
        %v9379 = vunpack.c.l.b16 %v9270
        %v9380 = vunpack.c.l.b16 %v9271
        %v9381 = vunpack.c.l.b16 %v9272
        %v9382 = vunpack.c.l.b16 %v9273
        %v9383 = vunpack.c.l.b16 %v9274
        %v9384 = vunpack.c.l.b16 %v9275
        %v9385 = vunpack.c.l.b16 %v9276
        %v9386 = vunpack.c.l.b16 %v9277
        %v9387 = vunpack.c.l.b16 %v9278
        %v9388 = vunpack.c.l.b16 %v9279
        %v9389 = vunpack.c.l.b16 %v9280
        %v9390 = vunpack.c.l.b16 %v9281
        %v9391 = vunpack.c.l.b16 %v9282
        %v9392 = vpack.c.b16 %v9377, %v9376
        %v9393 = vpack.c.b16 %v9379, %v9378
        %v9394 = vpack.c.b16 %v9381, %v9380
        %v9395 = vpack.c.b16 %v9383, %v9382
        %v9396 = vpack.c.b16 %v9385, %v9384
        %v9397 = vpack.c.b16 %v9387, %v9386
        %v9398 = vpack.c.b16 %v9389, %v9388
        %v9399 = vpack.c.b16 %v9391, %v9390
        %9408 = vmatpush.bf16.msra.mxu0 %v9399
        %9409 = vmatpush.bf16.msra.mxu0 %v9398
        %9410 = vmatpush.bf16.msra.mxu0 %v9397
        %9411 = vmatpush.bf16.msra.mxu0 %v9396
        %9412 = vmatpush.bf16.msra.mxu0 %v9395
        %9413 = vmatpush.bf16.msra.mxu0 %v9394
        %9414 = vmatpush.bf16.msra.mxu0 %v9393
        %9415 = vmatpush.bf16.msra.mxu0 %v9392
        %9416 = vmatmul.bf16.gmra.mxu0 %v9322
        %v9417 = vpop.f32.mrf.mxu0
        %v9418 = vadd.f32 0.0, %v9417
        %v9419 = vpop.f32.mrf.mxu0
        %v9420 = vadd.f32 0.0, %v9419
        %9421 = vmatmul.bf16.gmra.mxu0 %v9330
        %v9422 = vpop.f32.mrf.mxu0
        %v9423 = vadd.f32 0.0, %v9422
        %v9424 = vpop.f32.mrf.mxu0
        %v9425 = vadd.f32 0.0, %v9424
        %9426 = vmatmul.bf16.gmra.mxu0 %v9338
        %v9427 = vpop.f32.mrf.mxu0
        %v9428 = vadd.f32 0.0, %v9427
        %v9429 = vpop.f32.mrf.mxu0
        %v9430 = vadd.f32 0.0, %v9429
        %9431 = vmatmul.bf16.gmra.mxu0 %v9346
        %v9432 = vpop.f32.mrf.mxu0
        %v9433 = vadd.f32 0.0, %v9432
        %v9434 = vpop.f32.mrf.mxu0
        %v9435 = vadd.f32 0.0, %v9434
        %9436 = vmatmul.bf16.gmra.mxu0 %v9354
        %v9437 = vpop.f32.mrf.mxu0
        %v9438 = vadd.f32 0.0, %v9437
        %v9439 = vpop.f32.mrf.mxu0
        %v9440 = vadd.f32 0.0, %v9439
        %9441 = vdwg.mxu0
        %v9463 = vunpack.c.l.b16 %v9249
        %v9464 = vunpack.c.l.b16 %v9250
        %v9465 = vunpack.c.l.b16 %v9251
        %v9466 = vunpack.c.l.b16 %v9252
        %v9467 = vunpack.c.l.b16 %v9253
        %v9468 = vunpack.c.l.b16 %v9254
        %v9469 = vunpack.c.l.b16 %v9255
        %v9470 = vunpack.c.l.b16 %v9256
        %v9471 = vunpack.c.l.b16 %v9257
        %v9472 = vunpack.c.l.b16 %v9258
        %v9473 = vunpack.c.l.b16 %v9259
        %v9474 = vunpack.c.l.b16 %v9260
        %v9475 = vunpack.c.l.b16 %v9261
        %v9476 = vunpack.c.l.b16 %v9262
        %v9477 = vunpack.c.l.b16 %v9263
        %v9478 = vunpack.c.l.b16 %v9264
        %v9479 = vpack.c.b16 %v9464, %v9463
        %v9480 = vpack.c.b16 %v9466, %v9465
        %v9481 = vpack.c.b16 %v9468, %v9467
        %v9482 = vpack.c.b16 %v9470, %v9469
        %v9483 = vpack.c.b16 %v9472, %v9471
        %v9484 = vpack.c.b16 %v9474, %v9473
        %v9485 = vpack.c.b16 %v9476, %v9475
        %v9486 = vpack.c.b16 %v9478, %v9477
        %9495 = vmatpush.bf16.msra.mxu0 %v9486
        %9496 = vmatpush.bf16.msra.mxu0 %v9485
        %9497 = vmatpush.bf16.msra.mxu0 %v9484
        %9498 = vmatpush.bf16.msra.mxu0 %v9483
        %9499 = vmatpush.bf16.msra.mxu0 %v9482
        %9500 = vmatpush.bf16.msra.mxu0 %v9481
        %9501 = vmatpush.bf16.msra.mxu0 %v9480
        %9502 = vmatpush.bf16.msra.mxu0 %v9479
        %9503 = vmatmul.bf16.gmra.mxu0 %v9305
        %v9504 = vpop.f32.mrf.mxu0
        %v9505 = vadd.f32 %v9418, %v9504
        %v9506 = vpop.f32.mrf.mxu0
        %v9507 = vadd.f32 %v9420, %v9506
        %9508 = vmatmul.bf16.gmra.mxu0 %v9306
        %v9509 = vpop.f32.mrf.mxu0
        %v9510 = vadd.f32 %v9423, %v9509
        %v9511 = vpop.f32.mrf.mxu0
        %v9512 = vadd.f32 %v9425, %v9511
        %9513 = vmatmul.bf16.gmra.mxu0 %v9307
        %v9514 = vpop.f32.mrf.mxu0
        %v9515 = vadd.f32 %v9428, %v9514
        %v9516 = vpop.f32.mrf.mxu0
        %v9517 = vadd.f32 %v9430, %v9516
        %9518 = vmatmul.bf16.gmra.mxu0 %v9308
        %v9519 = vpop.f32.mrf.mxu0
        %v9520 = vadd.f32 %v9433, %v9519
        %v9521 = vpop.f32.mrf.mxu0
        %v9522 = vadd.f32 %v9435, %v9521
        %9523 = vmatmul.bf16.gmra.mxu0 %v9309
        %v9524 = vpop.f32.mrf.mxu0
        %v9525 = vadd.f32 %v9438, %v9524
        %v9526 = vpop.f32.mrf.mxu0
        %v9527 = vadd.f32 %v9440, %v9526
        %9528 = vdwg.mxu0
        %v9529 = vld [vmem:[#allocation3] sm:$0xe]
        %s9530 = scalar_lea.vmem [#allocation5], 1856
        %v9531 = vld [vmem:[%s9530] sm:$0xf]
        %v9532 = vld [vmem:[%s9530 + $0x4] sm:$0xf]
        %v9533 = vld [vmem:[%s9530 + $0x8] sm:$0xf]
        %v9534 = vld [vmem:[%s9530 + $0xc] sm:$0xf]
        %v9535 = vld [vmem:[%s9530 + $0x10] sm:$0xf]
        %v9536 = vld [vmem:[%s9530 + $0x14] sm:$0xf]
        %v9537 = vld [vmem:[%s9530 + $0x18] sm:$0xf]
        %v9538 = vld [vmem:[%s9530 + $0x1c] sm:$0xf]
        %v9539 = vld [vmem:[%s9530 + $0x20] sm:$0xf]
        %v9540 = vld [vmem:[%s9530 + $0x24] sm:$0xf]
        %v9541 = vld [vmem:[%s9530 + $0x28] sm:$0xf]
        %v9542 = vld [vmem:[%s9530 + $0x2c] sm:$0xf]
        %v9543 = vld [vmem:[%s9530 + $0x30] sm:$0xf]
        %v9544 = vld [vmem:[%s9530 + $0x34] sm:$0xf]
        %v9545 = vld [vmem:[%s9530 + $0x38] sm:$0xf]
        %v9546 = vld [vmem:[%s9530 + $0x3c] sm:$0xf]
        %v9548 = vunpack.c.l.b16 %v9529
        %v9549 = vpack.c.b16 %v9295, %v9548
        %v9550 = vrot.slane %v9549, 1
        %v9551 = vrot.slane %v9306, 1
        %v9552 = vsel %vm1081, %v9550, %v9551
        %v9553 = vrot.slane %v9307, 1
        %v9554 = vsel %vm1081, %v9551, %v9553
        %v9555 = vrot.slane %v9308, 1
        %v9556 = vsel %vm1081, %v9553, %v9555
        %v9557 = vrot.slane %v9309, 1
        %v9558 = vsel %vm1081, %v9555, %v9557
        %v9559 = vrot.slane %v9310, 1
        %v9560 = vsel %vm1081, %v9557, %v9559
        %v9582 = vunpack.c.l.b16 %v9531
        %v9583 = vunpack.c.l.b16 %v9532
        %v9584 = vunpack.c.l.b16 %v9533
        %v9585 = vunpack.c.l.b16 %v9534
        %v9586 = vunpack.c.l.b16 %v9535
        %v9587 = vunpack.c.l.b16 %v9536
        %v9588 = vunpack.c.l.b16 %v9537
        %v9589 = vunpack.c.l.b16 %v9538
        %v9590 = vunpack.c.l.b16 %v9539
        %v9591 = vunpack.c.l.b16 %v9540
        %v9592 = vunpack.c.l.b16 %v9541
        %v9593 = vunpack.c.l.b16 %v9542
        %v9594 = vunpack.c.l.b16 %v9543
        %v9595 = vunpack.c.l.b16 %v9544
        %v9596 = vunpack.c.l.b16 %v9545
        %v9597 = vunpack.c.l.b16 %v9546
        %v9598 = vpack.c.b16 %v9583, %v9582
        %v9599 = vpack.c.b16 %v9585, %v9584
        %v9600 = vpack.c.b16 %v9587, %v9586
        %v9601 = vpack.c.b16 %v9589, %v9588
        %v9602 = vpack.c.b16 %v9591, %v9590
        %v9603 = vpack.c.b16 %v9593, %v9592
        %v9604 = vpack.c.b16 %v9595, %v9594
        %v9605 = vpack.c.b16 %v9597, %v9596
        %9614 = vmatpush.bf16.msra.mxu0 %v9605
        %9615 = vmatpush.bf16.msra.mxu0 %v9604
        %9616 = vmatpush.bf16.msra.mxu0 %v9603
        %9617 = vmatpush.bf16.msra.mxu0 %v9602
        %9618 = vmatpush.bf16.msra.mxu0 %v9601
        %9619 = vmatpush.bf16.msra.mxu0 %v9600
        %9620 = vmatpush.bf16.msra.mxu0 %v9599
        %9621 = vmatpush.bf16.msra.mxu0 %v9598
        %9622 = vmatmul.bf16.gmra.mxu0 %v9552
        %v9623 = vpop.f32.mrf.mxu0
        %v9624 = vadd.f32 0.0, %v9623
        %v9625 = vpop.f32.mrf.mxu0
        %v9626 = vadd.f32 0.0, %v9625
        %9627 = vmatmul.bf16.gmra.mxu0 %v9554
        %v9628 = vpop.f32.mrf.mxu0
        %v9629 = vadd.f32 0.0, %v9628
        %v9630 = vpop.f32.mrf.mxu0
        %v9631 = vadd.f32 0.0, %v9630
        %9632 = vmatmul.bf16.gmra.mxu0 %v9556
        %v9633 = vpop.f32.mrf.mxu0
        %v9634 = vadd.f32 0.0, %v9633
        %v9635 = vpop.f32.mrf.mxu0
        %v9636 = vadd.f32 0.0, %v9635
        %9637 = vmatmul.bf16.gmra.mxu0 %v9558
        %v9638 = vpop.f32.mrf.mxu0
        %v9639 = vadd.f32 0.0, %v9638
        %v9640 = vpop.f32.mrf.mxu0
        %v9641 = vadd.f32 0.0, %v9640
        %9642 = vmatmul.bf16.gmra.mxu0 %v9560
        %v9643 = vpop.f32.mrf.mxu0
        %v9644 = vadd.f32 0.0, %v9643
        %v9645 = vpop.f32.mrf.mxu0
        %v9646 = vadd.f32 0.0, %v9645
        %9647 = vdwg.mxu0
        %v9648 = vadd.f32 %v9505, %v9624
        %v9649 = vadd.f32 %v9507, %v9626
        %v9650 = vadd.f32 %v9510, %v9629
        %v9651 = vadd.f32 %v9512, %v9631
        %v9652 = vadd.f32 %v9515, %v9634
        %v9653 = vadd.f32 %v9517, %v9636
        %v9654 = vadd.f32 %v9520, %v9639
        %v9655 = vadd.f32 %v9522, %v9641
        %v9656 = vadd.f32 %v9525, %v9644
        %v9657 = vadd.f32 %v9527, %v9646
        %v9658 = vld [vmem:[#allocation3 + $0x4] sm:$0xe]
        %v9659 = vld [vmem:[#allocation3 + $0x8] sm:$0xf]
        %v9660 = vld [vmem:[#allocation3 + $0xc] sm:$0xf]
        %v9661 = vld [vmem:[#allocation3 + $0x10] sm:$0xf]
        %v9662 = vld [vmem:[#allocation3 + $0x14] sm:$0xf]
        %v9663 = vld [vmem:[#allocation3 + $0x18] sm:$0xf]
        %v9664 = vld [vmem:[#allocation3 + $0x1c] sm:$0xf]
        %v9665 = vld [vmem:[#allocation3 + $0x20] sm:$0xf]
        %v9666 = vld [vmem:[#allocation3 + $0x24] sm:$0xf]
        %v9667 = vld [vmem:[#allocation3 + $0x28] sm:$0xf]
        %v9668 = vld [vmem:[#allocation3 + $0x2c] sm:$0x1]
        %s9669 = scalar_lea.vmem [#allocation5], 1920
        %v9670 = vld [vmem:[%s9669] sm:$0xf]
        %v9671 = vld [vmem:[%s9669 + $0x4] sm:$0xf]
        %v9672 = vld [vmem:[%s9669 + $0x8] sm:$0xf]
        %v9673 = vld [vmem:[%s9669 + $0xc] sm:$0xf]
        %v9674 = vld [vmem:[%s9669 + $0x10] sm:$0xf]
        %v9675 = vld [vmem:[%s9669 + $0x14] sm:$0xf]
        %v9676 = vld [vmem:[%s9669 + $0x18] sm:$0xf]
        %v9677 = vld [vmem:[%s9669 + $0x1c] sm:$0xf]
        %v9678 = vld [vmem:[%s9669 + $0x20] sm:$0xf]
        %v9679 = vld [vmem:[%s9669 + $0x24] sm:$0xf]
        %v9680 = vld [vmem:[%s9669 + $0x28] sm:$0xf]
        %v9681 = vld [vmem:[%s9669 + $0x2c] sm:$0xf]
        %v9682 = vld [vmem:[%s9669 + $0x30] sm:$0xf]
        %v9683 = vld [vmem:[%s9669 + $0x34] sm:$0xf]
        %v9684 = vld [vmem:[%s9669 + $0x38] sm:$0xf]
        %v9685 = vld [vmem:[%s9669 + $0x3c] sm:$0xf]
        %v9697 = vunpack.c.l.b16 %v9658
        %v9698 = vunpack.c.l.b16 %v9659
        %v9699 = vunpack.c.l.b16 %v9660
        %v9700 = vunpack.c.l.b16 %v9661
        %v9701 = vunpack.c.l.b16 %v9662
        %v9702 = vunpack.c.l.b16 %v9663
        %v9703 = vunpack.c.l.b16 %v9664
        %v9704 = vunpack.c.l.b16 %v9665
        %v9705 = vunpack.c.l.b16 %v9666
        %v9706 = vunpack.c.l.b16 %v9667
        %v9707 = vunpack.c.l.b16 %v9668
        %v9708 = vpack.c.b16 %v9698, %v9697
        %v9709 = vpack.c.b16 %v9700, %v9699
        %v9710 = vpack.c.b16 %v9702, %v9701
        %v9711 = vpack.c.b16 %v9704, %v9703
        %v9712 = vpack.c.b16 %v9706, %v9705
        %v9713 = vpack.c.b16 %v9707, %v9707
        %v9714 = vrot.slane %v9708, 1
        %v9715 = vrot.slane %v9709, 1
        %v9716 = vsel %vm1081, %v9714, %v9715
        %v9717 = vrot.slane %v9710, 1
        %v9718 = vsel %vm1081, %v9715, %v9717
        %v9719 = vrot.slane %v9711, 1
        %v9720 = vsel %vm1081, %v9717, %v9719
        %v9721 = vrot.slane %v9712, 1
        %v9722 = vsel %vm1081, %v9719, %v9721
        %v9723 = vrot.slane %v9713, 1
        %v9724 = vsel %vm1081, %v9721, %v9723
        %v9746 = vunpack.c.l.b16 %v9670
        %v9747 = vunpack.c.l.b16 %v9671
        %v9748 = vunpack.c.l.b16 %v9672
        %v9749 = vunpack.c.l.b16 %v9673
        %v9750 = vunpack.c.l.b16 %v9674
        %v9751 = vunpack.c.l.b16 %v9675
        %v9752 = vunpack.c.l.b16 %v9676
        %v9753 = vunpack.c.l.b16 %v9677
        %v9754 = vunpack.c.l.b16 %v9678
        %v9755 = vunpack.c.l.b16 %v9679
        %v9756 = vunpack.c.l.b16 %v9680
        %v9757 = vunpack.c.l.b16 %v9681
        %v9758 = vunpack.c.l.b16 %v9682
        %v9759 = vunpack.c.l.b16 %v9683
        %v9760 = vunpack.c.l.b16 %v9684
        %v9761 = vunpack.c.l.b16 %v9685
        %v9762 = vpack.c.b16 %v9747, %v9746
        %v9763 = vpack.c.b16 %v9749, %v9748
        %v9764 = vpack.c.b16 %v9751, %v9750
        %v9765 = vpack.c.b16 %v9753, %v9752
        %v9766 = vpack.c.b16 %v9755, %v9754
        %v9767 = vpack.c.b16 %v9757, %v9756
        %v9768 = vpack.c.b16 %v9759, %v9758
        %v9769 = vpack.c.b16 %v9761, %v9760
        %9778 = vmatpush.bf16.msra.mxu0 %v9769
        %9779 = vmatpush.bf16.msra.mxu0 %v9768
        %9780 = vmatpush.bf16.msra.mxu0 %v9767
        %9781 = vmatpush.bf16.msra.mxu0 %v9766
        %9782 = vmatpush.bf16.msra.mxu0 %v9765
        %9783 = vmatpush.bf16.msra.mxu0 %v9764
        %9784 = vmatpush.bf16.msra.mxu0 %v9763
        %9785 = vmatpush.bf16.msra.mxu0 %v9762
        %9786 = vmatmul.bf16.gmra.mxu0 %v9716
        %v9787 = vpop.f32.mrf.mxu0
        %v9788 = vadd.f32 0.0, %v9787
        %v9789 = vpop.f32.mrf.mxu0
        %v9790 = vadd.f32 0.0, %v9789
        %9791 = vmatmul.bf16.gmra.mxu0 %v9718
        %v9792 = vpop.f32.mrf.mxu0
        %v9793 = vadd.f32 0.0, %v9792
        %v9794 = vpop.f32.mrf.mxu0
        %v9795 = vadd.f32 0.0, %v9794
        %9796 = vmatmul.bf16.gmra.mxu0 %v9720
        %v9797 = vpop.f32.mrf.mxu0
        %v9798 = vadd.f32 0.0, %v9797
        %v9799 = vpop.f32.mrf.mxu0
        %v9800 = vadd.f32 0.0, %v9799
        %9801 = vmatmul.bf16.gmra.mxu0 %v9722
        %v9802 = vpop.f32.mrf.mxu0
        %v9803 = vadd.f32 0.0, %v9802
        %v9804 = vpop.f32.mrf.mxu0
        %v9805 = vadd.f32 0.0, %v9804
        %9806 = vmatmul.bf16.gmra.mxu0 %v9724
        %v9807 = vpop.f32.mrf.mxu0
        %v9808 = vadd.f32 0.0, %v9807
        %v9809 = vpop.f32.mrf.mxu0
        %v9810 = vadd.f32 0.0, %v9809
        %9811 = vdwg.mxu0
        %v9812 = vadd.f32 %v9648, %v9788
        %v9813 = vadd.f32 %v9649, %v9790
        %v9814 = vadd.f32 %v9650, %v9793
        %v9815 = vadd.f32 %v9651, %v9795
        %v9816 = vadd.f32 %v9652, %v9798
        %v9817 = vadd.f32 %v9653, %v9800
        %v9818 = vadd.f32 %v9654, %v9803
        %v9819 = vadd.f32 %v9655, %v9805
        %v9820 = vadd.f32 %v9656, %v9808
        %v9821 = vadd.f32 %v9657, %v9810
        %v9822 = vld [vmem:[#allocation3 + $0x2c] sm:$0x3]
        %s9823 = scalar_lea.vmem [#allocation5], 1984
        %v9824 = vld [vmem:[%s9823] sm:$0xf]
        %v9825 = vld [vmem:[%s9823 + $0x4] sm:$0xf]
        %v9826 = vld [vmem:[%s9823 + $0x8] sm:$0xf]
        %v9827 = vld [vmem:[%s9823 + $0xc] sm:$0xf]
        %v9828 = vld [vmem:[%s9823 + $0x10] sm:$0xf]
        %v9829 = vld [vmem:[%s9823 + $0x14] sm:$0xf]
        %v9830 = vld [vmem:[%s9823 + $0x18] sm:$0xf]
        %v9831 = vld [vmem:[%s9823 + $0x1c] sm:$0xf]
        %v9832 = vld [vmem:[%s9823 + $0x20] sm:$0xf]
        %v9833 = vld [vmem:[%s9823 + $0x24] sm:$0xf]
        %v9834 = vld [vmem:[%s9823 + $0x28] sm:$0xf]
        %v9835 = vld [vmem:[%s9823 + $0x2c] sm:$0xf]
        %v9836 = vld [vmem:[%s9823 + $0x30] sm:$0xf]
        %v9837 = vld [vmem:[%s9823 + $0x34] sm:$0xf]
        %v9838 = vld [vmem:[%s9823 + $0x38] sm:$0xf]
        %v9839 = vld [vmem:[%s9823 + $0x3c] sm:$0xf]
        %v9841 = vunpack.c.l.b16 %v9822
        %v9842 = vpack.c.b16 %v9841, %v9841
        %v9844 = vshrl.u32 %v9708, 16
        %v9846 = vrot.slane %v9844, 1
        %v9847 = vshll.u32 %v9708, 16
        %v9849 = vrot.slane %v9847, 2
        %v9850 = vor.u32 %v9846, %v9849
        %v9852 = vshrl.u32 %v9709, 16
        %v9854 = vrot.slane %v9852, 1
        %v9855 = vshll.u32 %v9709, 16
        %v9857 = vrot.slane %v9855, 2
        %v9858 = vor.u32 %v9854, %v9857
        %v9859 = vsel %vm1726, %v9850, %v9858
        %v9861 = vshrl.u32 %v9710, 16
        %v9863 = vrot.slane %v9861, 1
        %v9864 = vshll.u32 %v9710, 16
        %v9866 = vrot.slane %v9864, 2
        %v9867 = vor.u32 %v9863, %v9866
        %v9868 = vsel %vm1726, %v9858, %v9867
        %v9870 = vshrl.u32 %v9711, 16
        %v9872 = vrot.slane %v9870, 1
        %v9873 = vshll.u32 %v9711, 16
        %v9875 = vrot.slane %v9873, 2
        %v9876 = vor.u32 %v9872, %v9875
        %v9877 = vsel %vm1726, %v9867, %v9876
        %v9879 = vshrl.u32 %v9712, 16
        %v9881 = vrot.slane %v9879, 1
        %v9882 = vshll.u32 %v9712, 16
        %v9884 = vrot.slane %v9882, 2
        %v9885 = vor.u32 %v9881, %v9884
        %v9886 = vsel %vm1726, %v9876, %v9885
        %v9888 = vshrl.u32 %v9842, 16
        %v9890 = vrot.slane %v9888, 1
        %v9891 = vshll.u32 %v9842, 16
        %v9893 = vrot.slane %v9891, 2
        %v9894 = vor.u32 %v9890, %v9893
        %v9895 = vsel %vm1726, %v9885, %v9894
        %v9917 = vunpack.c.l.b16 %v9824
        %v9918 = vunpack.c.l.b16 %v9825
        %v9919 = vunpack.c.l.b16 %v9826
        %v9920 = vunpack.c.l.b16 %v9827
        %v9921 = vunpack.c.l.b16 %v9828
        %v9922 = vunpack.c.l.b16 %v9829
        %v9923 = vunpack.c.l.b16 %v9830
        %v9924 = vunpack.c.l.b16 %v9831
        %v9925 = vunpack.c.l.b16 %v9832
        %v9926 = vunpack.c.l.b16 %v9833
        %v9927 = vunpack.c.l.b16 %v9834
        %v9928 = vunpack.c.l.b16 %v9835
        %v9929 = vunpack.c.l.b16 %v9836
        %v9930 = vunpack.c.l.b16 %v9837
        %v9931 = vunpack.c.l.b16 %v9838
        %v9932 = vunpack.c.l.b16 %v9839
        %v9933 = vpack.c.b16 %v9918, %v9917
        %v9934 = vpack.c.b16 %v9920, %v9919
        %v9935 = vpack.c.b16 %v9922, %v9921
        %v9936 = vpack.c.b16 %v9924, %v9923
        %v9937 = vpack.c.b16 %v9926, %v9925
        %v9938 = vpack.c.b16 %v9928, %v9927
        %v9939 = vpack.c.b16 %v9930, %v9929
        %v9940 = vpack.c.b16 %v9932, %v9931
        %9949 = vmatpush.bf16.msra.mxu0 %v9940
        %9950 = vmatpush.bf16.msra.mxu0 %v9939
        %9951 = vmatpush.bf16.msra.mxu0 %v9938
        %9952 = vmatpush.bf16.msra.mxu0 %v9937
        %9953 = vmatpush.bf16.msra.mxu0 %v9936
        %9954 = vmatpush.bf16.msra.mxu0 %v9935
        %9955 = vmatpush.bf16.msra.mxu0 %v9934
        %9956 = vmatpush.bf16.msra.mxu0 %v9933
        %9957 = vmatmul.bf16.gmra.mxu0 %v9859
        %v9958 = vpop.f32.mrf.mxu0
        %v9959 = vadd.f32 0.0, %v9958
        %v9960 = vpop.f32.mrf.mxu0
        %v9961 = vadd.f32 0.0, %v9960
        %9962 = vmatmul.bf16.gmra.mxu0 %v9868
        %v9963 = vpop.f32.mrf.mxu0
        %v9964 = vadd.f32 0.0, %v9963
        %v9965 = vpop.f32.mrf.mxu0
        %v9966 = vadd.f32 0.0, %v9965
        %9967 = vmatmul.bf16.gmra.mxu0 %v9877
        %v9968 = vpop.f32.mrf.mxu0
        %v9969 = vadd.f32 0.0, %v9968
        %v9970 = vpop.f32.mrf.mxu0
        %v9971 = vadd.f32 0.0, %v9970
        %9972 = vmatmul.bf16.gmra.mxu0 %v9886
        %v9973 = vpop.f32.mrf.mxu0
        %v9974 = vadd.f32 0.0, %v9973
        %v9975 = vpop.f32.mrf.mxu0
        %v9976 = vadd.f32 0.0, %v9975
        %9977 = vmatmul.bf16.gmra.mxu0 %v9895
        %v9978 = vpop.f32.mrf.mxu0
        %v9979 = vadd.f32 0.0, %v9978
        %v9980 = vpop.f32.mrf.mxu0
        %v9981 = vadd.f32 0.0, %v9980
        %9982 = vdwg.mxu0
        %v9983 = vadd.f32 %v9812, %v9959
        %v9984 = vadd.f32 %v9813, %v9961
        %v9985 = vadd.f32 %v9814, %v9964
        %v9986 = vadd.f32 %v9815, %v9966
        %v9987 = vadd.f32 %v9816, %v9969
        %v9988 = vadd.f32 %v9817, %v9971
        %v9989 = vadd.f32 %v9818, %v9974
        %v9990 = vadd.f32 %v9819, %v9976
        %v9991 = vadd.f32 %v9820, %v9979
        %v9992 = vadd.f32 %v9821, %v9981
        %v9993 = vld [vmem:[#allocation3 + $0x4] sm:$0xc]
        %s9994 = scalar_lea.vmem [#allocation5], 2048
        %v9995 = vld [vmem:[%s9994] sm:$0xf]
        %v9996 = vld [vmem:[%s9994 + $0x4] sm:$0xf]
        %v9997 = vld [vmem:[%s9994 + $0x8] sm:$0xf]
        %v9998 = vld [vmem:[%s9994 + $0xc] sm:$0xf]
        %v9999 = vld [vmem:[%s9994 + $0x10] sm:$0xf]
        %v10000 = vld [vmem:[%s9994 + $0x14] sm:$0xf]
        %v10001 = vld [vmem:[%s9994 + $0x18] sm:$0xf]
        %v10002 = vld [vmem:[%s9994 + $0x1c] sm:$0xf]
        %v10003 = vld [vmem:[%s9994 + $0x20] sm:$0xf]
        %v10004 = vld [vmem:[%s9994 + $0x24] sm:$0xf]
        %v10005 = vld [vmem:[%s9994 + $0x28] sm:$0xf]
        %v10006 = vld [vmem:[%s9994 + $0x2c] sm:$0xf]
        %v10007 = vld [vmem:[%s9994 + $0x30] sm:$0xf]
        %v10008 = vld [vmem:[%s9994 + $0x34] sm:$0xf]
        %v10009 = vld [vmem:[%s9994 + $0x38] sm:$0xf]
        %v10010 = vld [vmem:[%s9994 + $0x3c] sm:$0xf]
        %v10012 = vunpack.c.l.b16 %v9993
        %v10013 = vpack.c.b16 %v9698, %v10012
        %v10014 = vrot.slane %v10013, 2
        %v10015 = vrot.slane %v9709, 2
        %v10016 = vsel %vm2119, %v10014, %v10015
        %v10017 = vrot.slane %v9710, 2
        %v10018 = vsel %vm2119, %v10015, %v10017
        %v10019 = vrot.slane %v9711, 2
        %v10020 = vsel %vm2119, %v10017, %v10019
        %v10021 = vrot.slane %v9712, 2
        %v10022 = vsel %vm2119, %v10019, %v10021
        %v10023 = vrot.slane %v9842, 2
        %v10024 = vsel %vm2119, %v10021, %v10023
        %v10046 = vunpack.c.l.b16 %v9995
        %v10047 = vunpack.c.l.b16 %v9996
        %v10048 = vunpack.c.l.b16 %v9997
        %v10049 = vunpack.c.l.b16 %v9998
        %v10050 = vunpack.c.l.b16 %v9999
        %v10051 = vunpack.c.l.b16 %v10000
        %v10052 = vunpack.c.l.b16 %v10001
        %v10053 = vunpack.c.l.b16 %v10002
        %v10054 = vunpack.c.l.b16 %v10003
        %v10055 = vunpack.c.l.b16 %v10004
        %v10056 = vunpack.c.l.b16 %v10005
        %v10057 = vunpack.c.l.b16 %v10006
        %v10058 = vunpack.c.l.b16 %v10007
        %v10059 = vunpack.c.l.b16 %v10008
        %v10060 = vunpack.c.l.b16 %v10009
        %v10061 = vunpack.c.l.b16 %v10010
        %v10062 = vpack.c.b16 %v10047, %v10046
        %v10063 = vpack.c.b16 %v10049, %v10048
        %v10064 = vpack.c.b16 %v10051, %v10050
        %v10065 = vpack.c.b16 %v10053, %v10052
        %v10066 = vpack.c.b16 %v10055, %v10054
        %v10067 = vpack.c.b16 %v10057, %v10056
        %v10068 = vpack.c.b16 %v10059, %v10058
        %v10069 = vpack.c.b16 %v10061, %v10060
        %10078 = vmatpush.bf16.msra.mxu0 %v10069
        %10079 = vmatpush.bf16.msra.mxu0 %v10068
        %10080 = vmatpush.bf16.msra.mxu0 %v10067
        %10081 = vmatpush.bf16.msra.mxu0 %v10066
        %10082 = vmatpush.bf16.msra.mxu0 %v10065
        %10083 = vmatpush.bf16.msra.mxu0 %v10064
        %10084 = vmatpush.bf16.msra.mxu0 %v10063
        %10085 = vmatpush.bf16.msra.mxu0 %v10062
        %10086 = vmatmul.bf16.gmra.mxu0 %v10016
        %v10087 = vpop.f32.mrf.mxu0
        %v10088 = vadd.f32 0.0, %v10087
        %v10089 = vpop.f32.mrf.mxu0
        %v10090 = vadd.f32 0.0, %v10089
        %10091 = vmatmul.bf16.gmra.mxu0 %v10018
        %v10092 = vpop.f32.mrf.mxu0
        %v10093 = vadd.f32 0.0, %v10092
        %v10094 = vpop.f32.mrf.mxu0
        %v10095 = vadd.f32 0.0, %v10094
        %10096 = vmatmul.bf16.gmra.mxu0 %v10020
        %v10097 = vpop.f32.mrf.mxu0
        %v10098 = vadd.f32 0.0, %v10097
        %v10099 = vpop.f32.mrf.mxu0
        %v10100 = vadd.f32 0.0, %v10099
        %10101 = vmatmul.bf16.gmra.mxu0 %v10022
        %v10102 = vpop.f32.mrf.mxu0
        %v10103 = vadd.f32 0.0, %v10102
        %v10104 = vpop.f32.mrf.mxu0
        %v10105 = vadd.f32 0.0, %v10104
        %10106 = vmatmul.bf16.gmra.mxu0 %v10024
        %v10107 = vpop.f32.mrf.mxu0
        %v10108 = vadd.f32 0.0, %v10107
        %v10109 = vpop.f32.mrf.mxu0
        %v10110 = vadd.f32 0.0, %v10109
        %10111 = vdwg.mxu0
        %v10112 = vadd.f32 %v9983, %v10088
        %v10113 = vadd.f32 %v9984, %v10090
        %v10114 = vadd.f32 %v9985, %v10093
        %v10115 = vadd.f32 %v9986, %v10095
        %v10116 = vadd.f32 %v9987, %v10098
        %v10117 = vadd.f32 %v9988, %v10100
        %v10118 = vadd.f32 %v9989, %v10103
        %v10119 = vadd.f32 %v9990, %v10105
        %v10120 = vadd.f32 %v9991, %v10108
        %v10121 = vadd.f32 %v9992, %v10110
        %v10122 = vld [vmem:[#allocation3 + $0x8] sm:$0xc]
        %v10123 = vld [vmem:[#allocation3 + $0xc] sm:$0xf]
        %v10124 = vld [vmem:[#allocation3 + $0x10] sm:$0xf]
        %v10125 = vld [vmem:[#allocation3 + $0x14] sm:$0xf]
        %v10126 = vld [vmem:[#allocation3 + $0x18] sm:$0xf]
        %v10127 = vld [vmem:[#allocation3 + $0x1c] sm:$0xf]
        %v10128 = vld [vmem:[#allocation3 + $0x20] sm:$0xf]
        %v10129 = vld [vmem:[#allocation3 + $0x24] sm:$0xf]
        %v10130 = vld [vmem:[#allocation3 + $0x28] sm:$0xf]
        %v10131 = vld [vmem:[#allocation3 + $0x2c] sm:$0xf]
        %v10132 = vld [vmem:[#allocation3 + $0x30] sm:$0x3]
        %s10133 = scalar_lea.vmem [#allocation5], 2112
        %v10134 = vld [vmem:[%s10133] sm:$0xf]
        %v10135 = vld [vmem:[%s10133 + $0x4] sm:$0xf]
        %v10136 = vld [vmem:[%s10133 + $0x8] sm:$0xf]
        %v10137 = vld [vmem:[%s10133 + $0xc] sm:$0xf]
        %v10138 = vld [vmem:[%s10133 + $0x10] sm:$0xf]
        %v10139 = vld [vmem:[%s10133 + $0x14] sm:$0xf]
        %v10140 = vld [vmem:[%s10133 + $0x18] sm:$0xf]
        %v10141 = vld [vmem:[%s10133 + $0x1c] sm:$0xf]
        %v10142 = vld [vmem:[%s10133 + $0x20] sm:$0xf]
        %v10143 = vld [vmem:[%s10133 + $0x24] sm:$0xf]
        %v10144 = vld [vmem:[%s10133 + $0x28] sm:$0xf]
        %v10145 = vld [vmem:[%s10133 + $0x2c] sm:$0xf]
        %v10146 = vld [vmem:[%s10133 + $0x30] sm:$0xf]
        %v10147 = vld [vmem:[%s10133 + $0x34] sm:$0xf]
        %v10148 = vld [vmem:[%s10133 + $0x38] sm:$0xf]
        %v10149 = vld [vmem:[%s10133 + $0x3c] sm:$0xf]
        %v10161 = vunpack.c.l.b16 %v10122
        %v10162 = vunpack.c.l.b16 %v10123
        %v10163 = vunpack.c.l.b16 %v10124
        %v10164 = vunpack.c.l.b16 %v10125
        %v10165 = vunpack.c.l.b16 %v10126
        %v10166 = vunpack.c.l.b16 %v10127
        %v10167 = vunpack.c.l.b16 %v10128
        %v10168 = vunpack.c.l.b16 %v10129
        %v10169 = vunpack.c.l.b16 %v10130
        %v10170 = vunpack.c.l.b16 %v10131
        %v10171 = vunpack.c.l.b16 %v10132
        %v10172 = vpack.c.b16 %v10162, %v10161
        %v10173 = vpack.c.b16 %v10164, %v10163
        %v10174 = vpack.c.b16 %v10166, %v10165
        %v10175 = vpack.c.b16 %v10168, %v10167
        %v10176 = vpack.c.b16 %v10170, %v10169
        %v10177 = vpack.c.b16 %v10171, %v10171
        %v10178 = vrot.slane %v10172, 2
        %v10179 = vrot.slane %v10173, 2
        %v10180 = vsel %vm2119, %v10178, %v10179
        %v10181 = vrot.slane %v10174, 2
        %v10182 = vsel %vm2119, %v10179, %v10181
        %v10183 = vrot.slane %v10175, 2
        %v10184 = vsel %vm2119, %v10181, %v10183
        %v10185 = vrot.slane %v10176, 2
        %v10186 = vsel %vm2119, %v10183, %v10185
        %v10187 = vrot.slane %v10177, 2
        %v10188 = vsel %vm2119, %v10185, %v10187
        %v10210 = vunpack.c.l.b16 %v10134
        %v10211 = vunpack.c.l.b16 %v10135
        %v10212 = vunpack.c.l.b16 %v10136
        %v10213 = vunpack.c.l.b16 %v10137
        %v10214 = vunpack.c.l.b16 %v10138
        %v10215 = vunpack.c.l.b16 %v10139
        %v10216 = vunpack.c.l.b16 %v10140
        %v10217 = vunpack.c.l.b16 %v10141
        %v10218 = vunpack.c.l.b16 %v10142
        %v10219 = vunpack.c.l.b16 %v10143
        %v10220 = vunpack.c.l.b16 %v10144
        %v10221 = vunpack.c.l.b16 %v10145
        %v10222 = vunpack.c.l.b16 %v10146
        %v10223 = vunpack.c.l.b16 %v10147
        %v10224 = vunpack.c.l.b16 %v10148
        %v10225 = vunpack.c.l.b16 %v10149
        %v10226 = vpack.c.b16 %v10211, %v10210
        %v10227 = vpack.c.b16 %v10213, %v10212
        %v10228 = vpack.c.b16 %v10215, %v10214
        %v10229 = vpack.c.b16 %v10217, %v10216
        %v10230 = vpack.c.b16 %v10219, %v10218
        %v10231 = vpack.c.b16 %v10221, %v10220
        %v10232 = vpack.c.b16 %v10223, %v10222
        %v10233 = vpack.c.b16 %v10225, %v10224
        %10242 = vmatpush.bf16.msra.mxu0 %v10233
        %10243 = vmatpush.bf16.msra.mxu0 %v10232
        %10244 = vmatpush.bf16.msra.mxu0 %v10231
        %10245 = vmatpush.bf16.msra.mxu0 %v10230
        %10246 = vmatpush.bf16.msra.mxu0 %v10229
        %10247 = vmatpush.bf16.msra.mxu0 %v10228
        %10248 = vmatpush.bf16.msra.mxu0 %v10227
        %10249 = vmatpush.bf16.msra.mxu0 %v10226
        %10250 = vmatmul.bf16.gmra.mxu0 %v10180
        %v10251 = vpop.f32.mrf.mxu0
        %v10252 = vadd.f32 0.0, %v10251
        %v10253 = vpop.f32.mrf.mxu0
        %v10254 = vadd.f32 0.0, %v10253
        %10255 = vmatmul.bf16.gmra.mxu0 %v10182
        %v10256 = vpop.f32.mrf.mxu0
        %v10257 = vadd.f32 0.0, %v10256
        %v10258 = vpop.f32.mrf.mxu0
        %v10259 = vadd.f32 0.0, %v10258
        %10260 = vmatmul.bf16.gmra.mxu0 %v10184
        %v10261 = vpop.f32.mrf.mxu0
        %v10262 = vadd.f32 0.0, %v10261
        %v10263 = vpop.f32.mrf.mxu0
        %v10264 = vadd.f32 0.0, %v10263
        %10265 = vmatmul.bf16.gmra.mxu0 %v10186
        %v10266 = vpop.f32.mrf.mxu0
        %v10267 = vadd.f32 0.0, %v10266
        %v10268 = vpop.f32.mrf.mxu0
        %v10269 = vadd.f32 0.0, %v10268
        %10270 = vmatmul.bf16.gmra.mxu0 %v10188
        %v10271 = vpop.f32.mrf.mxu0
        %v10272 = vadd.f32 0.0, %v10271
        %v10273 = vpop.f32.mrf.mxu0
        %v10274 = vadd.f32 0.0, %v10273
        %10275 = vdwg.mxu0
        %v10276 = vadd.f32 %v10112, %v10252
        %v10277 = vadd.f32 %v10113, %v10254
        %v10278 = vadd.f32 %v10114, %v10257
        %v10279 = vadd.f32 %v10115, %v10259
        %v10280 = vadd.f32 %v10116, %v10262
        %v10281 = vadd.f32 %v10117, %v10264
        %v10282 = vadd.f32 %v10118, %v10267
        %v10283 = vadd.f32 %v10119, %v10269
        %v10284 = vadd.f32 %v10120, %v10272
        %v10285 = vadd.f32 %v10121, %v10274
        %v10286 = vld [vmem:[#allocation3 + $0x30] sm:$0x7]
        %s10287 = scalar_lea.vmem [#allocation5], 2176
        %v10288 = vld [vmem:[%s10287] sm:$0xf]
        %v10289 = vld [vmem:[%s10287 + $0x4] sm:$0xf]
        %v10290 = vld [vmem:[%s10287 + $0x8] sm:$0xf]
        %v10291 = vld [vmem:[%s10287 + $0xc] sm:$0xf]
        %v10292 = vld [vmem:[%s10287 + $0x10] sm:$0xf]
        %v10293 = vld [vmem:[%s10287 + $0x14] sm:$0xf]
        %v10294 = vld [vmem:[%s10287 + $0x18] sm:$0xf]
        %v10295 = vld [vmem:[%s10287 + $0x1c] sm:$0xf]
        %v10296 = vld [vmem:[%s10287 + $0x20] sm:$0xf]
        %v10297 = vld [vmem:[%s10287 + $0x24] sm:$0xf]
        %v10298 = vld [vmem:[%s10287 + $0x28] sm:$0xf]
        %v10299 = vld [vmem:[%s10287 + $0x2c] sm:$0xf]
        %v10300 = vld [vmem:[%s10287 + $0x30] sm:$0xf]
        %v10301 = vld [vmem:[%s10287 + $0x34] sm:$0xf]
        %v10302 = vld [vmem:[%s10287 + $0x38] sm:$0xf]
        %v10303 = vld [vmem:[%s10287 + $0x3c] sm:$0xf]
        %v10305 = vunpack.c.l.b16 %v10286
        %v10306 = vpack.c.b16 %v10305, %v10305
        %v10308 = vshrl.u32 %v10172, 16
        %v10310 = vrot.slane %v10308, 2
        %v10311 = vshll.u32 %v10172, 16
        %v10313 = vrot.slane %v10311, 3
        %v10314 = vor.u32 %v10310, %v10313
        %v10316 = vshrl.u32 %v10173, 16
        %v10318 = vrot.slane %v10316, 2
        %v10319 = vshll.u32 %v10173, 16
        %v10321 = vrot.slane %v10319, 3
        %v10322 = vor.u32 %v10318, %v10321
        %v10323 = vsel %vm2764, %v10314, %v10322
        %v10325 = vshrl.u32 %v10174, 16
        %v10327 = vrot.slane %v10325, 2
        %v10328 = vshll.u32 %v10174, 16
        %v10330 = vrot.slane %v10328, 3
        %v10331 = vor.u32 %v10327, %v10330
        %v10332 = vsel %vm2764, %v10322, %v10331
        %v10334 = vshrl.u32 %v10175, 16
        %v10336 = vrot.slane %v10334, 2
        %v10337 = vshll.u32 %v10175, 16
        %v10339 = vrot.slane %v10337, 3
        %v10340 = vor.u32 %v10336, %v10339
        %v10341 = vsel %vm2764, %v10331, %v10340
        %v10343 = vshrl.u32 %v10176, 16
        %v10345 = vrot.slane %v10343, 2
        %v10346 = vshll.u32 %v10176, 16
        %v10348 = vrot.slane %v10346, 3
        %v10349 = vor.u32 %v10345, %v10348
        %v10350 = vsel %vm2764, %v10340, %v10349
        %v10352 = vshrl.u32 %v10306, 16
        %v10354 = vrot.slane %v10352, 2
        %v10355 = vshll.u32 %v10306, 16
        %v10357 = vrot.slane %v10355, 3
        %v10358 = vor.u32 %v10354, %v10357
        %v10359 = vsel %vm2764, %v10349, %v10358
        %v10381 = vunpack.c.l.b16 %v10288
        %v10382 = vunpack.c.l.b16 %v10289
        %v10383 = vunpack.c.l.b16 %v10290
        %v10384 = vunpack.c.l.b16 %v10291
        %v10385 = vunpack.c.l.b16 %v10292
        %v10386 = vunpack.c.l.b16 %v10293
        %v10387 = vunpack.c.l.b16 %v10294
        %v10388 = vunpack.c.l.b16 %v10295
        %v10389 = vunpack.c.l.b16 %v10296
        %v10390 = vunpack.c.l.b16 %v10297
        %v10391 = vunpack.c.l.b16 %v10298
        %v10392 = vunpack.c.l.b16 %v10299
        %v10393 = vunpack.c.l.b16 %v10300
        %v10394 = vunpack.c.l.b16 %v10301
        %v10395 = vunpack.c.l.b16 %v10302
        %v10396 = vunpack.c.l.b16 %v10303
        %v10397 = vpack.c.b16 %v10382, %v10381
        %v10398 = vpack.c.b16 %v10384, %v10383
        %v10399 = vpack.c.b16 %v10386, %v10385
        %v10400 = vpack.c.b16 %v10388, %v10387
        %v10401 = vpack.c.b16 %v10390, %v10389
        %v10402 = vpack.c.b16 %v10392, %v10391
        %v10403 = vpack.c.b16 %v10394, %v10393
        %v10404 = vpack.c.b16 %v10396, %v10395
        %10413 = vmatpush.bf16.msra.mxu0 %v10404
        %10414 = vmatpush.bf16.msra.mxu0 %v10403
        %10415 = vmatpush.bf16.msra.mxu0 %v10402
        %10416 = vmatpush.bf16.msra.mxu0 %v10401
        %10417 = vmatpush.bf16.msra.mxu0 %v10400
        %10418 = vmatpush.bf16.msra.mxu0 %v10399
        %10419 = vmatpush.bf16.msra.mxu0 %v10398
        %10420 = vmatpush.bf16.msra.mxu0 %v10397
        %10421 = vmatmul.bf16.gmra.mxu0 %v10323
        %v10422 = vpop.f32.mrf.mxu0
        %v10423 = vadd.f32 0.0, %v10422
        %v10424 = vpop.f32.mrf.mxu0
        %v10425 = vadd.f32 0.0, %v10424
        %10426 = vmatmul.bf16.gmra.mxu0 %v10332
        %v10427 = vpop.f32.mrf.mxu0
        %v10428 = vadd.f32 0.0, %v10427
        %v10429 = vpop.f32.mrf.mxu0
        %v10430 = vadd.f32 0.0, %v10429
        %10431 = vmatmul.bf16.gmra.mxu0 %v10341
        %v10432 = vpop.f32.mrf.mxu0
        %v10433 = vadd.f32 0.0, %v10432
        %v10434 = vpop.f32.mrf.mxu0
        %v10435 = vadd.f32 0.0, %v10434
        %10436 = vmatmul.bf16.gmra.mxu0 %v10350
        %v10437 = vpop.f32.mrf.mxu0
        %v10438 = vadd.f32 0.0, %v10437
        %v10439 = vpop.f32.mrf.mxu0
        %v10440 = vadd.f32 0.0, %v10439
        %10441 = vmatmul.bf16.gmra.mxu0 %v10359
        %v10442 = vpop.f32.mrf.mxu0
        %v10443 = vadd.f32 0.0, %v10442
        %v10444 = vpop.f32.mrf.mxu0
        %v10445 = vadd.f32 0.0, %v10444
        %10446 = vdwg.mxu0
        %v10447 = vadd.f32 %v10276, %v10423
        %v10448 = vadd.f32 %v10277, %v10425
        %v10449 = vadd.f32 %v10278, %v10428
        %v10450 = vadd.f32 %v10279, %v10430
        %v10451 = vadd.f32 %v10280, %v10433
        %v10452 = vadd.f32 %v10281, %v10435
        %v10453 = vadd.f32 %v10282, %v10438
        %v10454 = vadd.f32 %v10283, %v10440
        %v10455 = vadd.f32 %v10284, %v10443
        %v10456 = vadd.f32 %v10285, %v10445
        %v10457 = vld [vmem:[#allocation3 + $0x8] sm:$0x8]
        %s10458 = scalar_lea.vmem [#allocation5], 2240
        %v10459 = vld [vmem:[%s10458] sm:$0xf]
        %v10460 = vld [vmem:[%s10458 + $0x4] sm:$0xf]
        %v10461 = vld [vmem:[%s10458 + $0x8] sm:$0xf]
        %v10462 = vld [vmem:[%s10458 + $0xc] sm:$0xf]
        %v10463 = vld [vmem:[%s10458 + $0x10] sm:$0xf]
        %v10464 = vld [vmem:[%s10458 + $0x14] sm:$0xf]
        %v10465 = vld [vmem:[%s10458 + $0x18] sm:$0xf]
        %v10466 = vld [vmem:[%s10458 + $0x1c] sm:$0xf]
        %v10467 = vld [vmem:[%s10458 + $0x20] sm:$0xf]
        %v10468 = vld [vmem:[%s10458 + $0x24] sm:$0xf]
        %v10469 = vld [vmem:[%s10458 + $0x28] sm:$0xf]
        %v10470 = vld [vmem:[%s10458 + $0x2c] sm:$0xf]
        %v10471 = vld [vmem:[%s10458 + $0x30] sm:$0xf]
        %v10472 = vld [vmem:[%s10458 + $0x34] sm:$0xf]
        %v10473 = vld [vmem:[%s10458 + $0x38] sm:$0xf]
        %v10474 = vld [vmem:[%s10458 + $0x3c] sm:$0xf]
        %v10476 = vunpack.c.l.b16 %v10457
        %v10477 = vpack.c.b16 %v10162, %v10476
        %v10478 = vrot.slane %v10477, 3
        %v10479 = vrot.slane %v10173, 3
        %v10480 = vsel %vm3157, %v10478, %v10479
        %v10481 = vrot.slane %v10174, 3
        %v10482 = vsel %vm3157, %v10479, %v10481
        %v10483 = vrot.slane %v10175, 3
        %v10484 = vsel %vm3157, %v10481, %v10483
        %v10485 = vrot.slane %v10176, 3
        %v10486 = vsel %vm3157, %v10483, %v10485
        %v10487 = vrot.slane %v10306, 3
        %v10488 = vsel %vm3157, %v10485, %v10487
        %v10510 = vunpack.c.l.b16 %v10459
        %v10511 = vunpack.c.l.b16 %v10460
        %v10512 = vunpack.c.l.b16 %v10461
        %v10513 = vunpack.c.l.b16 %v10462
        %v10514 = vunpack.c.l.b16 %v10463
        %v10515 = vunpack.c.l.b16 %v10464
        %v10516 = vunpack.c.l.b16 %v10465
        %v10517 = vunpack.c.l.b16 %v10466
        %v10518 = vunpack.c.l.b16 %v10467
        %v10519 = vunpack.c.l.b16 %v10468
        %v10520 = vunpack.c.l.b16 %v10469
        %v10521 = vunpack.c.l.b16 %v10470
        %v10522 = vunpack.c.l.b16 %v10471
        %v10523 = vunpack.c.l.b16 %v10472
        %v10524 = vunpack.c.l.b16 %v10473
        %v10525 = vunpack.c.l.b16 %v10474
        %v10526 = vpack.c.b16 %v10511, %v10510
        %v10527 = vpack.c.b16 %v10513, %v10512
        %v10528 = vpack.c.b16 %v10515, %v10514
        %v10529 = vpack.c.b16 %v10517, %v10516
        %v10530 = vpack.c.b16 %v10519, %v10518
        %v10531 = vpack.c.b16 %v10521, %v10520
        %v10532 = vpack.c.b16 %v10523, %v10522
        %v10533 = vpack.c.b16 %v10525, %v10524
        %10542 = vmatpush.bf16.msra.mxu0 %v10533
        %10543 = vmatpush.bf16.msra.mxu0 %v10532
        %10544 = vmatpush.bf16.msra.mxu0 %v10531
        %10545 = vmatpush.bf16.msra.mxu0 %v10530
        %10546 = vmatpush.bf16.msra.mxu0 %v10529
        %10547 = vmatpush.bf16.msra.mxu0 %v10528
        %10548 = vmatpush.bf16.msra.mxu0 %v10527
        %10549 = vmatpush.bf16.msra.mxu0 %v10526
        %10550 = vmatmul.bf16.gmra.mxu0 %v10480
        %v10551 = vpop.f32.mrf.mxu0
        %v10552 = vadd.f32 0.0, %v10551
        %v10553 = vpop.f32.mrf.mxu0
        %v10554 = vadd.f32 0.0, %v10553
        %10555 = vmatmul.bf16.gmra.mxu0 %v10482
        %v10556 = vpop.f32.mrf.mxu0
        %v10557 = vadd.f32 0.0, %v10556
        %v10558 = vpop.f32.mrf.mxu0
        %v10559 = vadd.f32 0.0, %v10558
        %10560 = vmatmul.bf16.gmra.mxu0 %v10484
        %v10561 = vpop.f32.mrf.mxu0
        %v10562 = vadd.f32 0.0, %v10561
        %v10563 = vpop.f32.mrf.mxu0
        %v10564 = vadd.f32 0.0, %v10563
        %10565 = vmatmul.bf16.gmra.mxu0 %v10486
        %v10566 = vpop.f32.mrf.mxu0
        %v10567 = vadd.f32 0.0, %v10566
        %v10568 = vpop.f32.mrf.mxu0
        %v10569 = vadd.f32 0.0, %v10568
        %10570 = vmatmul.bf16.gmra.mxu0 %v10488
        %v10571 = vpop.f32.mrf.mxu0
        %v10572 = vadd.f32 0.0, %v10571
        %v10573 = vpop.f32.mrf.mxu0
        %v10574 = vadd.f32 0.0, %v10573
        %10575 = vdwg.mxu0
        %v10576 = vadd.f32 %v10447, %v10552
        %v10577 = vadd.f32 %v10448, %v10554
        %v10578 = vadd.f32 %v10449, %v10557
        %v10579 = vadd.f32 %v10450, %v10559
        %v10580 = vadd.f32 %v10451, %v10562
        %v10581 = vadd.f32 %v10452, %v10564
        %v10582 = vadd.f32 %v10453, %v10567
        %v10583 = vadd.f32 %v10454, %v10569
        %v10584 = vadd.f32 %v10455, %v10572
        %v10585 = vadd.f32 %v10456, %v10574
        %s10586 = scalar_lea.vmem [#allocation8], 3
        %v10587 = vld [vmem:[%s10586] sm:$0x1]
        %v10589 = vperm.slane %v10587, 0
        %v10591 = vadd.f32 %v10576, %v10589
        %v10592 = vadd.f32 %v10577, %v10589
        %v10593 = vadd.f32 %v10578, %v10589
        %v10594 = vadd.f32 %v10579, %v10589
        %v10595 = vadd.f32 %v10580, %v10589
        %v10596 = vadd.f32 %v10581, %v10589
        %v10597 = vadd.f32 %v10582, %v10589
        %v10598 = vadd.f32 %v10583, %v10589
        %v10599 = vadd.f32 %v10584, %v10589
        %v10600 = vadd.f32 %v10585, %v10589
        %v10601 = vmax.f32 %v10591, 0.0
        %v10602 = vmax.f32 %v10592, 0.0
        %v10603 = vmax.f32 %v10593, 0.0
        %v10604 = vmax.f32 %v10594, 0.0
        %v10605 = vmax.f32 %v10595, 0.0
        %v10606 = vmax.f32 %v10596, 0.0
        %v10607 = vmax.f32 %v10597, 0.0
        %v10608 = vmax.f32 %v10598, 0.0
        %v10609 = vmax.f32 %v10599, 0.0
        %v10610 = vmax.f32 %v10600, 0.0
        %10611 = vst [vmem:[#allocation4] sm:$0xff] %v10601
        %10612 = vst [vmem:[#allocation4 + $0x8] sm:$0xff] %v10602
        %10613 = vst [vmem:[#allocation4 + $0x10] sm:$0xff] %v10603
        %10614 = vst [vmem:[#allocation4 + $0x18] sm:$0xff] %v10604
        %10615 = vst [vmem:[#allocation4 + $0x20] sm:$0xff] %v10605
        %10616 = vst [vmem:[#allocation4 + $0x28] sm:$0xff] %v10606
        %10617 = vst [vmem:[#allocation4 + $0x30] sm:$0xff] %v10607
        %10618 = vst [vmem:[#allocation4 + $0x38] sm:$0xff] %v10608
        %10619 = vst [vmem:[#allocation4 + $0x40] sm:$0xff] %v10609
        %10620 = vst [vmem:[#allocation4 + $0x48] sm:$0xff] %v10610
        %10621 = vst [vmem:[#allocation2] sm:$0xf] 0
        %10622 = vst [vmem:[#allocation2 + $0x4] sm:$0xf] 0
        %10623 = vst [vmem:[#allocation2 + $0x8] sm:$0xf] 0
        %10624 = vst [vmem:[#allocation2 + $0xc] sm:$0xf] 0
        %10625 = vst [vmem:[#allocation2 + $0x10] sm:$0xf] 0
        %10626 = vst [vmem:[#allocation2 + $0x14] sm:$0xf] 0
        %10627 = vst [vmem:[#allocation2 + $0x18] sm:$0xf] 0
        %10628 = vst [vmem:[#allocation2 + $0x1c] sm:$0xf] 0
        %10629 = vst [vmem:[#allocation2 + $0x20] sm:$0xf] 0
        %10630 = vst [vmem:[#allocation2 + $0x24] sm:$0xf] 0
        %10631 = vst [vmem:[#allocation2 + $0x28] sm:$0xf] 0
        %10632 = vst [vmem:[#allocation2 + $0x2c] sm:$0xf] 0
        %10633 = vst [vmem:[#allocation2 + $0x30] sm:$0xf] 0
        %10634 = vst [vmem:[#allocation2 + $0x34] sm:$0xf] 0
        %10635 = vst [vmem:[#allocation2 + $0x38] sm:$0xf] 0
        %10636 = vst [vmem:[#allocation2 + $0x3c] sm:$0xf] 0
        %10637 = vst [vmem:[#allocation2 + $0x40] sm:$0xf] 0
        %10638 = vst [vmem:[#allocation2 + $0x44] sm:$0xf] 0
        %10639 = vst [vmem:[#allocation2 + $0x48] sm:$0xf] 0
        %10640 = vst [vmem:[#allocation2 + $0x4c] sm:$0xf] 0
        %10641 = vst [vmem:[#allocation2 + $0x50] sm:$0xf] 0
        %10642 = vst [vmem:[#allocation2 + $0x54] sm:$0xf] 0
        %10643 = vst [vmem:[#allocation2 + $0x58] sm:$0xf] 0
        %10644 = vst [vmem:[#allocation2 + $0x5c] sm:$0xf] 0
        %10645 = vst [vmem:[#allocation2 + $0x60] sm:$0xf] 0
        %10646 = vst [vmem:[#allocation2 + $0x64] sm:$0xf] 0
        %10647 = vst [vmem:[#allocation2 + $0x68] sm:$0xf] 0
        %10648 = vst [vmem:[#allocation2 + $0x6c] sm:$0xf] 0
        %10649 = vst [vmem:[#allocation2 + $0x70] sm:$0xf] 0
        %10650 = vst [vmem:[#allocation2 + $0x74] sm:$0xf] 0
        %10651 = vst [vmem:[#allocation2 + $0x78] sm:$0xf] 0
        %10652 = vst [vmem:[#allocation2 + $0x7c] sm:$0xf] 0
        %10653 = vst [vmem:[#allocation2 + $0x80] sm:$0xf] 0
        %10654 = vst [vmem:[#allocation2 + $0x84] sm:$0xf] 0
        %10655 = vst [vmem:[#allocation2 + $0x88] sm:$0xf] 0
        %10656 = vst [vmem:[#allocation2 + $0x8c] sm:$0xf] 0
        %10657 = vst [vmem:[#allocation2 + $0x90] sm:$0xf] 0
        %10658 = vst [vmem:[#allocation2 + $0x94] sm:$0xf] 0
        %10659 = vst [vmem:[#allocation2 + $0x98] sm:$0xf] 0
        %10660 = vst [vmem:[#allocation2 + $0x9c] sm:$0xf] 0
        %10661 = vst [vmem:[#allocation2 + $0xa0] sm:$0x7] 0
        %v10662 = vld [vmem:[#allocation4] ss:$2 sm:$0xf]
        %v10663 = vld [vmem:[%s7374] ss:$2 sm:$0xf]
        %v10664 = vmax.f32 %v10662, %v10663
        %s10665 = scalar_lea.vmem [#allocation4], 10
        %v10666 = vld [vmem:[%s10665] ss:$2 sm:$0xf]
        %s10667 = scalar_lea.vmem [#allocation4], 11
        %v10668 = vld [vmem:[%s10667] ss:$2 sm:$0xf]
        %v10669 = vmax.f32 %v10666, %v10668
        %v10670 = vmax.f32 %v10664, %v10669
        %v10671 = vpack.c.bf16 %v10670, %v10670
        %v10673 = vshll.u32 %v10671, 16
        %v10675 = vrot.slane %v10673, 5
        %v10676 = vshrl.u32 %v10671, 16
        %v10678 = vrot.slane %v10676, 4
        %v10679 = vor.u32 %v10678, %v10675
        %v10680 = vrot.slane %v10679, 4
        %v10683 = vld [vmem:[#allocation2] sm:$0x8]
        %v10684 = vsel %vm7461, %v10675, %v10683
        %10685 = vst [vmem:[#allocation2] sm:$0x8] %v10684
        %v10686 = vld [vmem:[#allocation2 + $0x4] sm:$0x3]
        %v10687 = vsel %vm4242, %v10680, %v10686
        %10688 = vst [vmem:[#allocation2 + $0x4] sm:$0x3] %v10687
        %s10689 = scalar_lea.vmem [#allocation4], 20
        %v10690 = vld [vmem:[%s10689] ss:$2 sm:$0xf]
        %s10691 = scalar_lea.vmem [#allocation4], 21
        %v10692 = vld [vmem:[%s10691] ss:$2 sm:$0xf]
        %v10693 = vmax.f32 %v10690, %v10692
        %s10694 = scalar_lea.vmem [#allocation4], 30
        %v10695 = vld [vmem:[%s10694] ss:$2 sm:$0xf]
        %s10696 = scalar_lea.vmem [#allocation4], 31
        %v10697 = vld [vmem:[%s10696] ss:$2 sm:$0xf]
        %v10698 = vmax.f32 %v10695, %v10697
        %v10699 = vmax.f32 %v10693, %v10698
        %v10700 = vpack.c.bf16 %v10699, %v10699
        %v10702 = vshrl.u32 %v10700, 16
        %v10704 = vrot.slane %v10702, 5
        %v10705 = vshll.u32 %v10700, 16
        %v10707 = vrot.slane %v10705, 6
        %v10708 = vor.u32 %v10704, %v10707
        %v10709 = vrot.slane %v10704, 4
        %v10712 = vld [vmem:[#allocation2 + $0x4] sm:$0xc]
        %v10713 = vsel %vm7426, %v10708, %v10712
        %10714 = vst [vmem:[#allocation2 + $0x4] sm:$0xc] %v10713
        %v10715 = vld [vmem:[#allocation2 + $0x8] sm:$0x1]
        %v10716 = vsel %vm7500, %v10709, %v10715
        %10717 = vst [vmem:[#allocation2 + $0x8] sm:$0x1] %v10716
        %s10718 = scalar_lea.vmem [#allocation4], 40
        %v10719 = vld [vmem:[%s10718] ss:$2 sm:$0xf]
        %s10720 = scalar_lea.vmem [#allocation4], 41
        %v10721 = vld [vmem:[%s10720] ss:$2 sm:$0xf]
        %v10722 = vmax.f32 %v10719, %v10721
        %s10723 = scalar_lea.vmem [#allocation4], 50
        %v10724 = vld [vmem:[%s10723] ss:$2 sm:$0xf]
        %s10725 = scalar_lea.vmem [#allocation4], 51
        %v10726 = vld [vmem:[%s10725] ss:$2 sm:$0xf]
        %v10727 = vmax.f32 %v10724, %v10726
        %v10728 = vmax.f32 %v10722, %v10727
        %v10729 = vpack.c.bf16 %v10728, %v10728
        %v10731 = vshrl.u32 %v10729, 16
        %v10733 = vrot.slane %v10731, 6
        %v10734 = vshll.u32 %v10729, 16
        %v10736 = vrot.slane %v10734, 7
        %v10737 = vor.u32 %v10733, %v10736
        %vm10739 = vsmask.f32 3334
        %vm10740 = vmand %vm4200, %vm10739
        %v10741 = vld [vmem:[#allocation2 + $0x8] sm:$0xe]
        %v10742 = vsel %vm10740, %v10737, %v10741
        %10743 = vst [vmem:[#allocation2 + $0x8] sm:$0xe] %v10742
        %s10744 = scalar_lea.vmem [#allocation4], 60
        %v10745 = vld [vmem:[%s10744] ss:$2 sm:$0xf]
        %s10746 = scalar_lea.vmem [#allocation4], 61
        %v10747 = vld [vmem:[%s10746] ss:$2 sm:$0xf]
        %v10748 = vmax.f32 %v10745, %v10747
        %s10749 = scalar_lea.vmem [#allocation4], 70
        %v10750 = vld [vmem:[%s10749] ss:$2 sm:$0xf]
        %s10751 = scalar_lea.vmem [#allocation4], 71
        %v10752 = vld [vmem:[%s10751] ss:$2 sm:$0xf]
        %v10753 = vmax.f32 %v10750, %v10752
        %v10754 = vmax.f32 %v10748, %v10753
        %v10755 = vpack.c.bf16 %v10754, %v10754
        %v10757 = vshrl.u32 %v10755, 16
        %v10759 = vrot.slane %v10757, 7
        %v10760 = vshll.u32 %v10755, 16
        %v10762 = vor.u32 %v10759, %v10760
        %vm10764 = vsmask.f32 2306
        %vm10765 = vmand %vm7430, %vm10764
        %v10766 = vld [vmem:[#allocation2 + $0xc] sm:$0x7]
        %v10767 = vsel %vm10765, %v10762, %v10766
        %10768 = vst [vmem:[#allocation2 + $0xc] sm:$0x7] %v10767
        %v10769 = vld [vmem:[#allocation2] sm:$0xf]
        %v10770 = vld [vmem:[#allocation2 + $0x4] sm:$0xf]
        %v10771 = vld [vmem:[#allocation2 + $0x8] sm:$0xf]
        %s10772 = scalar_lea.vmem [#allocation5], 2304
        %v10773 = vld [vmem:[%s10772] sm:$0xf]
        %v10774 = vld [vmem:[%s10772 + $0x4] sm:$0xf]
        %v10775 = vld [vmem:[%s10772 + $0x8] sm:$0xf]
        %v10776 = vld [vmem:[%s10772 + $0xc] sm:$0xf]
        %v10777 = vld [vmem:[%s10772 + $0x10] sm:$0xf]
        %v10778 = vld [vmem:[%s10772 + $0x14] sm:$0xf]
        %v10779 = vld [vmem:[%s10772 + $0x18] sm:$0xf]
        %v10780 = vld [vmem:[%s10772 + $0x1c] sm:$0xf]
        %v10781 = vld [vmem:[%s10772 + $0x20] sm:$0xf]
        %v10782 = vld [vmem:[%s10772 + $0x24] sm:$0xf]
        %v10783 = vld [vmem:[%s10772 + $0x28] sm:$0xf]
        %v10784 = vld [vmem:[%s10772 + $0x2c] sm:$0xf]
        %v10785 = vld [vmem:[%s10772 + $0x30] sm:$0xf]
        %v10786 = vld [vmem:[%s10772 + $0x34] sm:$0xf]
        %v10787 = vld [vmem:[%s10772 + $0x38] sm:$0xf]
        %v10788 = vld [vmem:[%s10772 + $0x3c] sm:$0xf]
        %v10789 = vld [vmem:[#allocation2 + $0xc] sm:$0x1]
        %s10790 = scalar_lea.vmem [#allocation5], 2368
        %v10791 = vld [vmem:[%s10790] sm:$0xf]
        %v10792 = vld [vmem:[%s10790 + $0x4] sm:$0xf]
        %v10793 = vld [vmem:[%s10790 + $0x8] sm:$0xf]
        %v10794 = vld [vmem:[%s10790 + $0xc] sm:$0xf]
        %v10795 = vld [vmem:[%s10790 + $0x10] sm:$0xf]
        %v10796 = vld [vmem:[%s10790 + $0x14] sm:$0xf]
        %v10797 = vld [vmem:[%s10790 + $0x18] sm:$0xf]
        %v10798 = vld [vmem:[%s10790 + $0x1c] sm:$0xf]
        %v10799 = vld [vmem:[%s10790 + $0x20] sm:$0xf]
        %v10800 = vld [vmem:[%s10790 + $0x24] sm:$0xf]
        %v10801 = vld [vmem:[%s10790 + $0x28] sm:$0xf]
        %v10802 = vld [vmem:[%s10790 + $0x2c] sm:$0xf]
        %v10803 = vld [vmem:[%s10790 + $0x30] sm:$0xf]
        %v10804 = vld [vmem:[%s10790 + $0x34] sm:$0xf]
        %v10805 = vld [vmem:[%s10790 + $0x38] sm:$0xf]
        %v10806 = vld [vmem:[%s10790 + $0x3c] sm:$0xf]
        %v10811 = vunpack.c.l.b16 %v10769
        %v10812 = vunpack.c.l.b16 %v10770
        %v10813 = vunpack.c.l.b16 %v10771
        %v10814 = vunpack.c.l.b16 %v10789
        %v10815 = vpack.c.b16 %v10812, %v10811
        %v10816 = vpack.c.b16 %v10814, %v10813
        %v10818 = vshrl.u32 %v10815, 16
        %v10820 = vshll.u32 %v10815, 16
        %v10822 = vrot.slane %v10820, 1
        %v10823 = vor.u32 %v10818, %v10822
        %v10825 = vshll.u32 %v10816, 16
        %v10827 = vrot.slane %v10825, 1
        %v10828 = vsel %vm581, %v10823, %v10827
        %v10829 = vshrl.u32 %v10816, 16
        %v10831 = vor.u32 %v10829, %v10827
        %v10850 = vunpack.c.l.b16 %v10791
        %v10851 = vunpack.c.l.b16 %v10792
        %v10852 = vunpack.c.l.b16 %v10793
        %v10853 = vunpack.c.l.b16 %v10794
        %v10854 = vunpack.c.l.b16 %v10795
        %v10855 = vunpack.c.l.b16 %v10796
        %v10856 = vunpack.c.l.b16 %v10797
        %v10857 = vunpack.c.l.b16 %v10798
        %v10858 = vunpack.c.l.b16 %v10799
        %v10859 = vunpack.c.l.b16 %v10800
        %v10860 = vunpack.c.l.b16 %v10801
        %v10861 = vunpack.c.l.b16 %v10802
        %v10862 = vunpack.c.l.b16 %v10803
        %v10863 = vunpack.c.l.b16 %v10804
        %v10864 = vunpack.c.l.b16 %v10805
        %v10865 = vunpack.c.l.b16 %v10806
        %v10866 = vpack.c.b16 %v10851, %v10850
        %v10867 = vpack.c.b16 %v10853, %v10852
        %v10868 = vpack.c.b16 %v10855, %v10854
        %v10869 = vpack.c.b16 %v10857, %v10856
        %v10870 = vpack.c.b16 %v10859, %v10858
        %v10871 = vpack.c.b16 %v10861, %v10860
        %v10872 = vpack.c.b16 %v10863, %v10862
        %v10873 = vpack.c.b16 %v10865, %v10864
        %10882 = vmatpush.bf16.msra.mxu0 %v10873
        %10883 = vmatpush.bf16.msra.mxu0 %v10872
        %10884 = vmatpush.bf16.msra.mxu0 %v10871
        %10885 = vmatpush.bf16.msra.mxu0 %v10870
        %10886 = vmatpush.bf16.msra.mxu0 %v10869
        %10887 = vmatpush.bf16.msra.mxu0 %v10868
        %10888 = vmatpush.bf16.msra.mxu0 %v10867
        %10889 = vmatpush.bf16.msra.mxu0 %v10866
        %10890 = vmatmul.bf16.gmra.mxu0 %v10828
        %v10891 = vpop.f32.mrf.mxu0
        %v10892 = vadd.f32 0.0, %v10891
        %v10893 = vpop.f32.mrf.mxu0
        %v10894 = vadd.f32 0.0, %v10893
        %10895 = vmatmul.bf16.gmra.mxu0 %v10831
        %v10896 = vpop.f32.mrf.mxu0
        %v10897 = vadd.f32 0.0, %v10896
        %v10898 = vpop.f32.mrf.mxu0
        %10899 = vdwg.mxu0
        %v10900 = vpack.c.b16 %v10813, %v10813
        %v10919 = vunpack.c.l.b16 %v10773
        %v10920 = vunpack.c.l.b16 %v10774
        %v10921 = vunpack.c.l.b16 %v10775
        %v10922 = vunpack.c.l.b16 %v10776
        %v10923 = vunpack.c.l.b16 %v10777
        %v10924 = vunpack.c.l.b16 %v10778
        %v10925 = vunpack.c.l.b16 %v10779
        %v10926 = vunpack.c.l.b16 %v10780
        %v10927 = vunpack.c.l.b16 %v10781
        %v10928 = vunpack.c.l.b16 %v10782
        %v10929 = vunpack.c.l.b16 %v10783
        %v10930 = vunpack.c.l.b16 %v10784
        %v10931 = vunpack.c.l.b16 %v10785
        %v10932 = vunpack.c.l.b16 %v10786
        %v10933 = vunpack.c.l.b16 %v10787
        %v10934 = vunpack.c.l.b16 %v10788
        %v10935 = vpack.c.b16 %v10920, %v10919
        %v10936 = vpack.c.b16 %v10922, %v10921
        %v10937 = vpack.c.b16 %v10924, %v10923
        %v10938 = vpack.c.b16 %v10926, %v10925
        %v10939 = vpack.c.b16 %v10928, %v10927
        %v10940 = vpack.c.b16 %v10930, %v10929
        %v10941 = vpack.c.b16 %v10932, %v10931
        %v10942 = vpack.c.b16 %v10934, %v10933
        %10951 = vmatpush.bf16.msra.mxu0 %v10942
        %10952 = vmatpush.bf16.msra.mxu0 %v10941
        %10953 = vmatpush.bf16.msra.mxu0 %v10940
        %10954 = vmatpush.bf16.msra.mxu0 %v10939
        %10955 = vmatpush.bf16.msra.mxu0 %v10938
        %10956 = vmatpush.bf16.msra.mxu0 %v10937
        %10957 = vmatpush.bf16.msra.mxu0 %v10936
        %10958 = vmatpush.bf16.msra.mxu0 %v10935
        %10959 = vmatmul.bf16.gmra.mxu0 %v10815
        %v10960 = vpop.f32.mrf.mxu0
        %v10961 = vadd.f32 %v10892, %v10960
        %v10962 = vpop.f32.mrf.mxu0
        %v10963 = vadd.f32 %v10894, %v10962
        %10964 = vmatmul.bf16.gmra.mxu0 %v10900
        %v10965 = vpop.f32.mrf.mxu0
        %v10966 = vadd.f32 %v10897, %v10965
        %v10967 = vpop.f32.mrf.mxu0
        %10968 = vdwg.mxu0
        %v10969 = vld [vmem:[#allocation2] sm:$0xe]
        %s10970 = scalar_lea.vmem [#allocation5], 2432
        %v10971 = vld [vmem:[%s10970] sm:$0xf]
        %v10972 = vld [vmem:[%s10970 + $0x4] sm:$0xf]
        %v10973 = vld [vmem:[%s10970 + $0x8] sm:$0xf]
        %v10974 = vld [vmem:[%s10970 + $0xc] sm:$0xf]
        %v10975 = vld [vmem:[%s10970 + $0x10] sm:$0xf]
        %v10976 = vld [vmem:[%s10970 + $0x14] sm:$0xf]
        %v10977 = vld [vmem:[%s10970 + $0x18] sm:$0xf]
        %v10978 = vld [vmem:[%s10970 + $0x1c] sm:$0xf]
        %v10979 = vld [vmem:[%s10970 + $0x20] sm:$0xf]
        %v10980 = vld [vmem:[%s10970 + $0x24] sm:$0xf]
        %v10981 = vld [vmem:[%s10970 + $0x28] sm:$0xf]
        %v10982 = vld [vmem:[%s10970 + $0x2c] sm:$0xf]
        %v10983 = vld [vmem:[%s10970 + $0x30] sm:$0xf]
        %v10984 = vld [vmem:[%s10970 + $0x34] sm:$0xf]
        %v10985 = vld [vmem:[%s10970 + $0x38] sm:$0xf]
        %v10986 = vld [vmem:[%s10970 + $0x3c] sm:$0xf]
        %v10988 = vunpack.c.l.b16 %v10969
        %v10989 = vpack.c.b16 %v10812, %v10988
        %v10990 = vrot.slane %v10989, 1
        %v10991 = vrot.slane %v10816, 1
        %v10992 = vsel %vm1081, %v10990, %v10991
        %v11011 = vunpack.c.l.b16 %v10971
        %v11012 = vunpack.c.l.b16 %v10972
        %v11013 = vunpack.c.l.b16 %v10973
        %v11014 = vunpack.c.l.b16 %v10974
        %v11015 = vunpack.c.l.b16 %v10975
        %v11016 = vunpack.c.l.b16 %v10976
        %v11017 = vunpack.c.l.b16 %v10977
        %v11018 = vunpack.c.l.b16 %v10978
        %v11019 = vunpack.c.l.b16 %v10979
        %v11020 = vunpack.c.l.b16 %v10980
        %v11021 = vunpack.c.l.b16 %v10981
        %v11022 = vunpack.c.l.b16 %v10982
        %v11023 = vunpack.c.l.b16 %v10983
        %v11024 = vunpack.c.l.b16 %v10984
        %v11025 = vunpack.c.l.b16 %v10985
        %v11026 = vunpack.c.l.b16 %v10986
        %v11027 = vpack.c.b16 %v11012, %v11011
        %v11028 = vpack.c.b16 %v11014, %v11013
        %v11029 = vpack.c.b16 %v11016, %v11015
        %v11030 = vpack.c.b16 %v11018, %v11017
        %v11031 = vpack.c.b16 %v11020, %v11019
        %v11032 = vpack.c.b16 %v11022, %v11021
        %v11033 = vpack.c.b16 %v11024, %v11023
        %v11034 = vpack.c.b16 %v11026, %v11025
        %11043 = vmatpush.bf16.msra.mxu0 %v11034
        %11044 = vmatpush.bf16.msra.mxu0 %v11033
        %11045 = vmatpush.bf16.msra.mxu0 %v11032
        %11046 = vmatpush.bf16.msra.mxu0 %v11031
        %11047 = vmatpush.bf16.msra.mxu0 %v11030
        %11048 = vmatpush.bf16.msra.mxu0 %v11029
        %11049 = vmatpush.bf16.msra.mxu0 %v11028
        %11050 = vmatpush.bf16.msra.mxu0 %v11027
        %11051 = vmatmul.bf16.gmra.mxu0 %v10992
        %v11052 = vpop.f32.mrf.mxu0
        %v11053 = vadd.f32 0.0, %v11052
        %v11054 = vpop.f32.mrf.mxu0
        %v11055 = vadd.f32 0.0, %v11054
        %11056 = vmatmul.bf16.gmra.mxu0 %v10991
        %v11057 = vpop.f32.mrf.mxu0
        %v11058 = vadd.f32 0.0, %v11057
        %v11059 = vpop.f32.mrf.mxu0
        %11060 = vdwg.mxu0
        %v11061 = vadd.f32 %v10961, %v11053
        %v11062 = vadd.f32 %v10963, %v11055
        %v11063 = vadd.f32 %v10966, %v11058
        %v11064 = vld [vmem:[#allocation2] sm:$0x8]
        %v11065 = vld [vmem:[#allocation2 + $0xc] sm:$0x7]
        %s11066 = scalar_lea.vmem [#allocation5], 2496
        %v11067 = vld [vmem:[%s11066] sm:$0xf]
        %v11068 = vld [vmem:[%s11066 + $0x4] sm:$0xf]
        %v11069 = vld [vmem:[%s11066 + $0x8] sm:$0xf]
        %v11070 = vld [vmem:[%s11066 + $0xc] sm:$0xf]
        %v11071 = vld [vmem:[%s11066 + $0x10] sm:$0xf]
        %v11072 = vld [vmem:[%s11066 + $0x14] sm:$0xf]
        %v11073 = vld [vmem:[%s11066 + $0x18] sm:$0xf]
        %v11074 = vld [vmem:[%s11066 + $0x1c] sm:$0xf]
        %v11075 = vld [vmem:[%s11066 + $0x20] sm:$0xf]
        %v11076 = vld [vmem:[%s11066 + $0x24] sm:$0xf]
        %v11077 = vld [vmem:[%s11066 + $0x28] sm:$0xf]
        %v11078 = vld [vmem:[%s11066 + $0x2c] sm:$0xf]
        %v11079 = vld [vmem:[%s11066 + $0x30] sm:$0xf]
        %v11080 = vld [vmem:[%s11066 + $0x34] sm:$0xf]
        %v11081 = vld [vmem:[%s11066 + $0x38] sm:$0xf]
        %v11082 = vld [vmem:[%s11066 + $0x3c] sm:$0xf]
        %v11085 = vunpack.c.l.b16 %v11064
        %v11086 = vunpack.c.l.b16 %v11065
        %v11087 = vpack.c.b16 %v10812, %v11085
        %v11088 = vpack.c.b16 %v11086, %v10813
        %v11089 = vrot.slane %v11087, 3
        %v11090 = vrot.slane %v11088, 3
        %v11091 = vsel %vm3157, %v11089, %v11090
        %v11110 = vunpack.c.l.b16 %v11067
        %v11111 = vunpack.c.l.b16 %v11068
        %v11112 = vunpack.c.l.b16 %v11069
        %v11113 = vunpack.c.l.b16 %v11070
        %v11114 = vunpack.c.l.b16 %v11071
        %v11115 = vunpack.c.l.b16 %v11072
        %v11116 = vunpack.c.l.b16 %v11073
        %v11117 = vunpack.c.l.b16 %v11074
        %v11118 = vunpack.c.l.b16 %v11075
        %v11119 = vunpack.c.l.b16 %v11076
        %v11120 = vunpack.c.l.b16 %v11077
        %v11121 = vunpack.c.l.b16 %v11078
        %v11122 = vunpack.c.l.b16 %v11079
        %v11123 = vunpack.c.l.b16 %v11080
        %v11124 = vunpack.c.l.b16 %v11081
        %v11125 = vunpack.c.l.b16 %v11082
        %v11126 = vpack.c.b16 %v11111, %v11110
        %v11127 = vpack.c.b16 %v11113, %v11112
        %v11128 = vpack.c.b16 %v11115, %v11114
        %v11129 = vpack.c.b16 %v11117, %v11116
        %v11130 = vpack.c.b16 %v11119, %v11118
        %v11131 = vpack.c.b16 %v11121, %v11120
        %v11132 = vpack.c.b16 %v11123, %v11122
        %v11133 = vpack.c.b16 %v11125, %v11124
        %11142 = vmatpush.bf16.msra.mxu0 %v11133
        %11143 = vmatpush.bf16.msra.mxu0 %v11132
        %11144 = vmatpush.bf16.msra.mxu0 %v11131
        %11145 = vmatpush.bf16.msra.mxu0 %v11130
        %11146 = vmatpush.bf16.msra.mxu0 %v11129
        %11147 = vmatpush.bf16.msra.mxu0 %v11128
        %11148 = vmatpush.bf16.msra.mxu0 %v11127
        %11149 = vmatpush.bf16.msra.mxu0 %v11126
        %11150 = vmatmul.bf16.gmra.mxu0 %v11091
        %v11151 = vpop.f32.mrf.mxu0
        %v11152 = vadd.f32 0.0, %v11151
        %v11153 = vpop.f32.mrf.mxu0
        %v11154 = vadd.f32 0.0, %v11153
        %11155 = vmatmul.bf16.gmra.mxu0 %v11090
        %v11156 = vpop.f32.mrf.mxu0
        %v11157 = vadd.f32 0.0, %v11156
        %v11158 = vpop.f32.mrf.mxu0
        %11159 = vdwg.mxu0
        %v11160 = vadd.f32 %v11061, %v11152
        %v11161 = vadd.f32 %v11062, %v11154
        %v11162 = vadd.f32 %v11063, %v11157
        %v11163 = vld [vmem:[#allocation2 + $0xc] sm:$0xf]
        %s11164 = scalar_lea.vmem [#allocation5], 2560
        %v11165 = vld [vmem:[%s11164] sm:$0xf]
        %v11166 = vld [vmem:[%s11164 + $0x4] sm:$0xf]
        %v11167 = vld [vmem:[%s11164 + $0x8] sm:$0xf]
        %v11168 = vld [vmem:[%s11164 + $0xc] sm:$0xf]
        %v11169 = vld [vmem:[%s11164 + $0x10] sm:$0xf]
        %v11170 = vld [vmem:[%s11164 + $0x14] sm:$0xf]
        %v11171 = vld [vmem:[%s11164 + $0x18] sm:$0xf]
        %v11172 = vld [vmem:[%s11164 + $0x1c] sm:$0xf]
        %v11173 = vld [vmem:[%s11164 + $0x20] sm:$0xf]
        %v11174 = vld [vmem:[%s11164 + $0x24] sm:$0xf]
        %v11175 = vld [vmem:[%s11164 + $0x28] sm:$0xf]
        %v11176 = vld [vmem:[%s11164 + $0x2c] sm:$0xf]
        %v11177 = vld [vmem:[%s11164 + $0x30] sm:$0xf]
        %v11178 = vld [vmem:[%s11164 + $0x34] sm:$0xf]
        %v11179 = vld [vmem:[%s11164 + $0x38] sm:$0xf]
        %v11180 = vld [vmem:[%s11164 + $0x3c] sm:$0xf]
        %v11182 = vunpack.c.l.b16 %v11163
        %v11183 = vpack.c.b16 %v11182, %v10813
        %vm11184 = vsmask.f32 4352
        %v11186 = vshrl.u32 %v11087, 16
        %v11188 = vrot.slane %v11186, 3
        %v11189 = vshll.u32 %v11087, 16
        %v11191 = vrot.slane %v11189, 4
        %v11192 = vor.u32 %v11188, %v11191
        %v11194 = vshrl.u32 %v11183, 16
        %v11196 = vrot.slane %v11194, 3
        %v11197 = vshll.u32 %v11183, 16
        %v11199 = vrot.slane %v11197, 4
        %v11200 = vor.u32 %v11196, %v11199
        %v11201 = vsel %vm11184, %v11192, %v11200
        %v11220 = vunpack.c.l.b16 %v11165
        %v11221 = vunpack.c.l.b16 %v11166
        %v11222 = vunpack.c.l.b16 %v11167
        %v11223 = vunpack.c.l.b16 %v11168
        %v11224 = vunpack.c.l.b16 %v11169
        %v11225 = vunpack.c.l.b16 %v11170
        %v11226 = vunpack.c.l.b16 %v11171
        %v11227 = vunpack.c.l.b16 %v11172
        %v11228 = vunpack.c.l.b16 %v11173
        %v11229 = vunpack.c.l.b16 %v11174
        %v11230 = vunpack.c.l.b16 %v11175
        %v11231 = vunpack.c.l.b16 %v11176
        %v11232 = vunpack.c.l.b16 %v11177
        %v11233 = vunpack.c.l.b16 %v11178
        %v11234 = vunpack.c.l.b16 %v11179
        %v11235 = vunpack.c.l.b16 %v11180
        %v11236 = vpack.c.b16 %v11221, %v11220
        %v11237 = vpack.c.b16 %v11223, %v11222
        %v11238 = vpack.c.b16 %v11225, %v11224
        %v11239 = vpack.c.b16 %v11227, %v11226
        %v11240 = vpack.c.b16 %v11229, %v11228
        %v11241 = vpack.c.b16 %v11231, %v11230
        %v11242 = vpack.c.b16 %v11233, %v11232
        %v11243 = vpack.c.b16 %v11235, %v11234
        %11252 = vmatpush.bf16.msra.mxu0 %v11243
        %11253 = vmatpush.bf16.msra.mxu0 %v11242
        %11254 = vmatpush.bf16.msra.mxu0 %v11241
        %11255 = vmatpush.bf16.msra.mxu0 %v11240
        %11256 = vmatpush.bf16.msra.mxu0 %v11239
        %11257 = vmatpush.bf16.msra.mxu0 %v11238
        %11258 = vmatpush.bf16.msra.mxu0 %v11237
        %11259 = vmatpush.bf16.msra.mxu0 %v11236
        %11260 = vmatmul.bf16.gmra.mxu0 %v11201
        %v11261 = vpop.f32.mrf.mxu0
        %v11262 = vadd.f32 0.0, %v11261
        %v11263 = vpop.f32.mrf.mxu0
        %v11264 = vadd.f32 0.0, %v11263
        %11265 = vmatmul.bf16.gmra.mxu0 %v11200
        %v11266 = vpop.f32.mrf.mxu0
        %v11267 = vadd.f32 0.0, %v11266
        %v11268 = vpop.f32.mrf.mxu0
        %11269 = vdwg.mxu0
        %v11270 = vadd.f32 %v11160, %v11262
        %v11271 = vadd.f32 %v11161, %v11264
        %v11272 = vadd.f32 %v11162, %v11267
        %s11273 = scalar_lea.vmem [#allocation5], 2624
        %v11274 = vld [vmem:[%s11273] sm:$0xf]
        %v11275 = vld [vmem:[%s11273 + $0x4] sm:$0xf]
        %v11276 = vld [vmem:[%s11273 + $0x8] sm:$0xf]
        %v11277 = vld [vmem:[%s11273 + $0xc] sm:$0xf]
        %v11278 = vld [vmem:[%s11273 + $0x10] sm:$0xf]
        %v11279 = vld [vmem:[%s11273 + $0x14] sm:$0xf]
        %v11280 = vld [vmem:[%s11273 + $0x18] sm:$0xf]
        %v11281 = vld [vmem:[%s11273 + $0x1c] sm:$0xf]
        %v11282 = vld [vmem:[%s11273 + $0x20] sm:$0xf]
        %v11283 = vld [vmem:[%s11273 + $0x24] sm:$0xf]
        %v11284 = vld [vmem:[%s11273 + $0x28] sm:$0xf]
        %v11285 = vld [vmem:[%s11273 + $0x2c] sm:$0xf]
        %v11286 = vld [vmem:[%s11273 + $0x30] sm:$0xf]
        %v11287 = vld [vmem:[%s11273 + $0x34] sm:$0xf]
        %v11288 = vld [vmem:[%s11273 + $0x38] sm:$0xf]
        %v11289 = vld [vmem:[%s11273 + $0x3c] sm:$0xf]
        %v11290 = vpack.c.b16 %v10813, %v10812
        %v11291 = vpack.c.b16 %v11182, %v11182
        %v11310 = vunpack.c.l.b16 %v11274
        %v11311 = vunpack.c.l.b16 %v11275
        %v11312 = vunpack.c.l.b16 %v11276
        %v11313 = vunpack.c.l.b16 %v11277
        %v11314 = vunpack.c.l.b16 %v11278
        %v11315 = vunpack.c.l.b16 %v11279
        %v11316 = vunpack.c.l.b16 %v11280
        %v11317 = vunpack.c.l.b16 %v11281
        %v11318 = vunpack.c.l.b16 %v11282
        %v11319 = vunpack.c.l.b16 %v11283
        %v11320 = vunpack.c.l.b16 %v11284
        %v11321 = vunpack.c.l.b16 %v11285
        %v11322 = vunpack.c.l.b16 %v11286
        %v11323 = vunpack.c.l.b16 %v11287
        %v11324 = vunpack.c.l.b16 %v11288
        %v11325 = vunpack.c.l.b16 %v11289
        %v11326 = vpack.c.b16 %v11311, %v11310
        %v11327 = vpack.c.b16 %v11313, %v11312
        %v11328 = vpack.c.b16 %v11315, %v11314
        %v11329 = vpack.c.b16 %v11317, %v11316
        %v11330 = vpack.c.b16 %v11319, %v11318
        %v11331 = vpack.c.b16 %v11321, %v11320
        %v11332 = vpack.c.b16 %v11323, %v11322
        %v11333 = vpack.c.b16 %v11325, %v11324
        %11342 = vmatpush.bf16.msra.mxu0 %v11333
        %11343 = vmatpush.bf16.msra.mxu0 %v11332
        %11344 = vmatpush.bf16.msra.mxu0 %v11331
        %11345 = vmatpush.bf16.msra.mxu0 %v11330
        %11346 = vmatpush.bf16.msra.mxu0 %v11329
        %11347 = vmatpush.bf16.msra.mxu0 %v11328
        %11348 = vmatpush.bf16.msra.mxu0 %v11327
        %11349 = vmatpush.bf16.msra.mxu0 %v11326
        %11350 = vmatmul.bf16.gmra.mxu0 %v11290
        %v11351 = vpop.f32.mrf.mxu0
        %v11352 = vadd.f32 0.0, %v11351
        %v11353 = vpop.f32.mrf.mxu0
        %v11354 = vadd.f32 0.0, %v11353
        %11355 = vmatmul.bf16.gmra.mxu0 %v11291
        %v11356 = vpop.f32.mrf.mxu0
        %v11357 = vadd.f32 0.0, %v11356
        %v11358 = vpop.f32.mrf.mxu0
        %11359 = vdwg.mxu0
        %v11360 = vadd.f32 %v11270, %v11352
        %v11361 = vadd.f32 %v11271, %v11354
        %v11362 = vadd.f32 %v11272, %v11357
        %v11363 = vld [vmem:[#allocation2 + $0x4] sm:$0xc]
        %v11364 = vld [vmem:[#allocation2 + $0x8] sm:$0xf]
        %v11365 = vld [vmem:[#allocation2 + $0xc] sm:$0xf]
        %v11366 = vld [vmem:[#allocation2 + $0x10] sm:$0x3]
        %s11367 = scalar_lea.vmem [#allocation5], 2688
        %v11368 = vld [vmem:[%s11367] sm:$0xf]
        %v11369 = vld [vmem:[%s11367 + $0x4] sm:$0xf]
        %v11370 = vld [vmem:[%s11367 + $0x8] sm:$0xf]
        %v11371 = vld [vmem:[%s11367 + $0xc] sm:$0xf]
        %v11372 = vld [vmem:[%s11367 + $0x10] sm:$0xf]
        %v11373 = vld [vmem:[%s11367 + $0x14] sm:$0xf]
        %v11374 = vld [vmem:[%s11367 + $0x18] sm:$0xf]
        %v11375 = vld [vmem:[%s11367 + $0x1c] sm:$0xf]
        %v11376 = vld [vmem:[%s11367 + $0x20] sm:$0xf]
        %v11377 = vld [vmem:[%s11367 + $0x24] sm:$0xf]
        %v11378 = vld [vmem:[%s11367 + $0x28] sm:$0xf]
        %v11379 = vld [vmem:[%s11367 + $0x2c] sm:$0xf]
        %v11380 = vld [vmem:[%s11367 + $0x30] sm:$0xf]
        %v11381 = vld [vmem:[%s11367 + $0x34] sm:$0xf]
        %v11382 = vld [vmem:[%s11367 + $0x38] sm:$0xf]
        %v11383 = vld [vmem:[%s11367 + $0x3c] sm:$0xf]
        %v11388 = vunpack.c.l.b16 %v11363
        %v11389 = vunpack.c.l.b16 %v11364
        %v11390 = vunpack.c.l.b16 %v11365
        %v11391 = vunpack.c.l.b16 %v11366
        %v11392 = vpack.c.b16 %v11389, %v11388
        %v11393 = vpack.c.b16 %v11391, %v11390
        %v11394 = vrot.slane %v11392, 2
        %v11395 = vrot.slane %v11393, 2
        %v11396 = vsel %vm2119, %v11394, %v11395
        %v11415 = vunpack.c.l.b16 %v11368
        %v11416 = vunpack.c.l.b16 %v11369
        %v11417 = vunpack.c.l.b16 %v11370
        %v11418 = vunpack.c.l.b16 %v11371
        %v11419 = vunpack.c.l.b16 %v11372
        %v11420 = vunpack.c.l.b16 %v11373
        %v11421 = vunpack.c.l.b16 %v11374
        %v11422 = vunpack.c.l.b16 %v11375
        %v11423 = vunpack.c.l.b16 %v11376
        %v11424 = vunpack.c.l.b16 %v11377
        %v11425 = vunpack.c.l.b16 %v11378
        %v11426 = vunpack.c.l.b16 %v11379
        %v11427 = vunpack.c.l.b16 %v11380
        %v11428 = vunpack.c.l.b16 %v11381
        %v11429 = vunpack.c.l.b16 %v11382
        %v11430 = vunpack.c.l.b16 %v11383
        %v11431 = vpack.c.b16 %v11416, %v11415
        %v11432 = vpack.c.b16 %v11418, %v11417
        %v11433 = vpack.c.b16 %v11420, %v11419
        %v11434 = vpack.c.b16 %v11422, %v11421
        %v11435 = vpack.c.b16 %v11424, %v11423
        %v11436 = vpack.c.b16 %v11426, %v11425
        %v11437 = vpack.c.b16 %v11428, %v11427
        %v11438 = vpack.c.b16 %v11430, %v11429
        %11447 = vmatpush.bf16.msra.mxu0 %v11438
        %11448 = vmatpush.bf16.msra.mxu0 %v11437
        %11449 = vmatpush.bf16.msra.mxu0 %v11436
        %11450 = vmatpush.bf16.msra.mxu0 %v11435
        %11451 = vmatpush.bf16.msra.mxu0 %v11434
        %11452 = vmatpush.bf16.msra.mxu0 %v11433
        %11453 = vmatpush.bf16.msra.mxu0 %v11432
        %11454 = vmatpush.bf16.msra.mxu0 %v11431
        %11455 = vmatmul.bf16.gmra.mxu0 %v11396
        %v11456 = vpop.f32.mrf.mxu0
        %v11457 = vadd.f32 0.0, %v11456
        %v11458 = vpop.f32.mrf.mxu0
        %v11459 = vadd.f32 0.0, %v11458
        %11460 = vmatmul.bf16.gmra.mxu0 %v11395
        %v11461 = vpop.f32.mrf.mxu0
        %v11462 = vadd.f32 0.0, %v11461
        %v11463 = vpop.f32.mrf.mxu0
        %11464 = vdwg.mxu0
        %v11465 = vadd.f32 %v11360, %v11457
        %v11466 = vadd.f32 %v11361, %v11459
        %v11467 = vadd.f32 %v11362, %v11462
        %v11468 = vld [vmem:[#allocation2 + $0x10] sm:$0x7]
        %s11469 = scalar_lea.vmem [#allocation5], 2752
        %v11470 = vld [vmem:[%s11469] sm:$0xf]
        %v11471 = vld [vmem:[%s11469 + $0x4] sm:$0xf]
        %v11472 = vld [vmem:[%s11469 + $0x8] sm:$0xf]
        %v11473 = vld [vmem:[%s11469 + $0xc] sm:$0xf]
        %v11474 = vld [vmem:[%s11469 + $0x10] sm:$0xf]
        %v11475 = vld [vmem:[%s11469 + $0x14] sm:$0xf]
        %v11476 = vld [vmem:[%s11469 + $0x18] sm:$0xf]
        %v11477 = vld [vmem:[%s11469 + $0x1c] sm:$0xf]
        %v11478 = vld [vmem:[%s11469 + $0x20] sm:$0xf]
        %v11479 = vld [vmem:[%s11469 + $0x24] sm:$0xf]
        %v11480 = vld [vmem:[%s11469 + $0x28] sm:$0xf]
        %v11481 = vld [vmem:[%s11469 + $0x2c] sm:$0xf]
        %v11482 = vld [vmem:[%s11469 + $0x30] sm:$0xf]
        %v11483 = vld [vmem:[%s11469 + $0x34] sm:$0xf]
        %v11484 = vld [vmem:[%s11469 + $0x38] sm:$0xf]
        %v11485 = vld [vmem:[%s11469 + $0x3c] sm:$0xf]
        %v11487 = vunpack.c.l.b16 %v11468
        %v11488 = vpack.c.b16 %v11487, %v11390
        %v11490 = vshrl.u32 %v11392, 16
        %v11492 = vrot.slane %v11490, 2
        %v11493 = vshll.u32 %v11392, 16
        %v11495 = vrot.slane %v11493, 3
        %v11496 = vor.u32 %v11492, %v11495
        %v11498 = vshrl.u32 %v11488, 16
        %v11500 = vrot.slane %v11498, 2
        %v11501 = vshll.u32 %v11488, 16
        %v11503 = vrot.slane %v11501, 3
        %v11504 = vor.u32 %v11500, %v11503
        %v11505 = vsel %vm2764, %v11496, %v11504
        %v11524 = vunpack.c.l.b16 %v11470
        %v11525 = vunpack.c.l.b16 %v11471
        %v11526 = vunpack.c.l.b16 %v11472
        %v11527 = vunpack.c.l.b16 %v11473
        %v11528 = vunpack.c.l.b16 %v11474
        %v11529 = vunpack.c.l.b16 %v11475
        %v11530 = vunpack.c.l.b16 %v11476
        %v11531 = vunpack.c.l.b16 %v11477
        %v11532 = vunpack.c.l.b16 %v11478
        %v11533 = vunpack.c.l.b16 %v11479
        %v11534 = vunpack.c.l.b16 %v11480
        %v11535 = vunpack.c.l.b16 %v11481
        %v11536 = vunpack.c.l.b16 %v11482
        %v11537 = vunpack.c.l.b16 %v11483
        %v11538 = vunpack.c.l.b16 %v11484
        %v11539 = vunpack.c.l.b16 %v11485
        %v11540 = vpack.c.b16 %v11525, %v11524
        %v11541 = vpack.c.b16 %v11527, %v11526
        %v11542 = vpack.c.b16 %v11529, %v11528
        %v11543 = vpack.c.b16 %v11531, %v11530
        %v11544 = vpack.c.b16 %v11533, %v11532
        %v11545 = vpack.c.b16 %v11535, %v11534
        %v11546 = vpack.c.b16 %v11537, %v11536
        %v11547 = vpack.c.b16 %v11539, %v11538
        %11556 = vmatpush.bf16.msra.mxu0 %v11547
        %11557 = vmatpush.bf16.msra.mxu0 %v11546
        %11558 = vmatpush.bf16.msra.mxu0 %v11545
        %11559 = vmatpush.bf16.msra.mxu0 %v11544
        %11560 = vmatpush.bf16.msra.mxu0 %v11543
        %11561 = vmatpush.bf16.msra.mxu0 %v11542
        %11562 = vmatpush.bf16.msra.mxu0 %v11541
        %11563 = vmatpush.bf16.msra.mxu0 %v11540
        %11564 = vmatmul.bf16.gmra.mxu0 %v11505
        %v11565 = vpop.f32.mrf.mxu0
        %v11566 = vadd.f32 0.0, %v11565
        %v11567 = vpop.f32.mrf.mxu0
        %v11568 = vadd.f32 0.0, %v11567
        %11569 = vmatmul.bf16.gmra.mxu0 %v11504
        %v11570 = vpop.f32.mrf.mxu0
        %v11571 = vadd.f32 0.0, %v11570
        %v11572 = vpop.f32.mrf.mxu0
        %11573 = vdwg.mxu0
        %v11574 = vadd.f32 %v11465, %v11566
        %v11575 = vadd.f32 %v11466, %v11568
        %v11576 = vadd.f32 %v11467, %v11571
        %v11577 = vld [vmem:[#allocation2 + $0x4] sm:$0x8]
        %s11578 = scalar_lea.vmem [#allocation5], 2816
        %v11579 = vld [vmem:[%s11578] sm:$0xf]
        %v11580 = vld [vmem:[%s11578 + $0x4] sm:$0xf]
        %v11581 = vld [vmem:[%s11578 + $0x8] sm:$0xf]
        %v11582 = vld [vmem:[%s11578 + $0xc] sm:$0xf]
        %v11583 = vld [vmem:[%s11578 + $0x10] sm:$0xf]
        %v11584 = vld [vmem:[%s11578 + $0x14] sm:$0xf]
        %v11585 = vld [vmem:[%s11578 + $0x18] sm:$0xf]
        %v11586 = vld [vmem:[%s11578 + $0x1c] sm:$0xf]
        %v11587 = vld [vmem:[%s11578 + $0x20] sm:$0xf]
        %v11588 = vld [vmem:[%s11578 + $0x24] sm:$0xf]
        %v11589 = vld [vmem:[%s11578 + $0x28] sm:$0xf]
        %v11590 = vld [vmem:[%s11578 + $0x2c] sm:$0xf]
        %v11591 = vld [vmem:[%s11578 + $0x30] sm:$0xf]
        %v11592 = vld [vmem:[%s11578 + $0x34] sm:$0xf]
        %v11593 = vld [vmem:[%s11578 + $0x38] sm:$0xf]
        %v11594 = vld [vmem:[%s11578 + $0x3c] sm:$0xf]
        %v11596 = vunpack.c.l.b16 %v11577
        %v11597 = vpack.c.b16 %v11389, %v11596
        %v11598 = vrot.slane %v11597, 3
        %v11599 = vrot.slane %v11488, 3
        %v11600 = vsel %vm3157, %v11598, %v11599
        %v11619 = vunpack.c.l.b16 %v11579
        %v11620 = vunpack.c.l.b16 %v11580
        %v11621 = vunpack.c.l.b16 %v11581
        %v11622 = vunpack.c.l.b16 %v11582
        %v11623 = vunpack.c.l.b16 %v11583
        %v11624 = vunpack.c.l.b16 %v11584
        %v11625 = vunpack.c.l.b16 %v11585
        %v11626 = vunpack.c.l.b16 %v11586
        %v11627 = vunpack.c.l.b16 %v11587
        %v11628 = vunpack.c.l.b16 %v11588
        %v11629 = vunpack.c.l.b16 %v11589
        %v11630 = vunpack.c.l.b16 %v11590
        %v11631 = vunpack.c.l.b16 %v11591
        %v11632 = vunpack.c.l.b16 %v11592
        %v11633 = vunpack.c.l.b16 %v11593
        %v11634 = vunpack.c.l.b16 %v11594
        %v11635 = vpack.c.b16 %v11620, %v11619
        %v11636 = vpack.c.b16 %v11622, %v11621
        %v11637 = vpack.c.b16 %v11624, %v11623
        %v11638 = vpack.c.b16 %v11626, %v11625
        %v11639 = vpack.c.b16 %v11628, %v11627
        %v11640 = vpack.c.b16 %v11630, %v11629
        %v11641 = vpack.c.b16 %v11632, %v11631
        %v11642 = vpack.c.b16 %v11634, %v11633
        %11651 = vmatpush.bf16.msra.mxu0 %v11642
        %11652 = vmatpush.bf16.msra.mxu0 %v11641
        %11653 = vmatpush.bf16.msra.mxu0 %v11640
        %11654 = vmatpush.bf16.msra.mxu0 %v11639
        %11655 = vmatpush.bf16.msra.mxu0 %v11638
        %11656 = vmatpush.bf16.msra.mxu0 %v11637
        %11657 = vmatpush.bf16.msra.mxu0 %v11636
        %11658 = vmatpush.bf16.msra.mxu0 %v11635
        %11659 = vmatmul.bf16.gmra.mxu0 %v11600
        %v11660 = vpop.f32.mrf.mxu0
        %v11661 = vadd.f32 0.0, %v11660
        %v11662 = vpop.f32.mrf.mxu0
        %v11663 = vadd.f32 0.0, %v11662
        %11664 = vmatmul.bf16.gmra.mxu0 %v11599
        %v11665 = vpop.f32.mrf.mxu0
        %v11666 = vadd.f32 0.0, %v11665
        %v11667 = vpop.f32.mrf.mxu0
        %11668 = vdwg.mxu0
        %v11669 = vadd.f32 %v11574, %v11661
        %v11670 = vadd.f32 %v11575, %v11663
        %v11671 = vadd.f32 %v11576, %v11666
        %s11672 = scalar_lea.vmem [#allocation8], 4
        %v11673 = vld [vmem:[%s11672] sm:$0x1]
        %v11675 = vperm.slane %v11673, 0
        %v11677 = vadd.f32 %v11669, %v11675
        %v11678 = vadd.f32 %v11670, %v11675
        %v11679 = vadd.f32 %v11671, %v11675
        %v11680 = vmax.f32 %v11677, 0.0
        %v11681 = vmax.f32 %v11678, 0.0
        %v11682 = vmax.f32 %v11679, 0.0
        %v11683 = vld [vmem:[#allocation16] sm:$0xff]
        %v11684 = vld [vmem:[#allocation16 + $0x8] sm:$0xff]
        %v11685 = vld [vmem:[#allocation16 + $0x10] sm:$0xff]
        %11687 = vset.pattern.permute.xlu0 0
        %11688 = vperm.xlu0 %11687, %v11683
        %v11689 = vpop.permute.xlu0 %11688
        %11692 = vset.pattern.permute.xlu0 0
        %11693 = vperm.xlu0 %11692, %v11684
        %v11694 = vpop.permute.xlu0 %11693
        %11697 = vset.pattern.permute.xlu0 0
        %11698 = vperm.xlu0 %11697, %v11685
        %v11699 = vpop.permute.xlu0 %11698
        %v11701 = vmul.f32 %v11680, %v11689
        %v11702 = vmul.f32 %v11681, %v11694
        %v11703 = vmul.f32 %v11682, %v11699
        %v11704 = vadd.f32 %v11701, %v11702
        %v11705 = vadd.f32 %v11704, %v11703
        %v11706 = vrot.slane %v11705, 4
        %v11707 = vadd.f32 %v11705, %v11706
        %v11708 = vrot.slane %v11707, 2
        %v11709 = vadd.f32 %v11707, %v11708
        %v11710 = vrot.slane %v11709, 1
        %v11711 = vadd.f32 %v11709, %v11710
        %v11712 = vpack.c.bf16 %v11711, %v11711
        %v11713 = vld [vmem:[#allocation10] sm:$0xf]
        %v11714 = vld [vmem:[#allocation10 + $0x4] sm:$0xf]
        %v11715 = vld [vmem:[#allocation10 + $0x8] sm:$0xf]
        %v11716 = vld [vmem:[#allocation10 + $0xc] sm:$0xf]
        %v11717 = vld [vmem:[#allocation10 + $0x10] sm:$0xf]
        %v11718 = vld [vmem:[#allocation10 + $0x14] sm:$0xf]
        %v11719 = vld [vmem:[#allocation10 + $0x18] sm:$0xf]
        %v11720 = vld [vmem:[#allocation10 + $0x1c] sm:$0xf]
        %v11721 = vld [vmem:[#allocation10 + $0x20] sm:$0xf]
        %v11722 = vld [vmem:[#allocation10 + $0x24] sm:$0xf]
        %v11723 = vld [vmem:[#allocation10 + $0x28] sm:$0xf]
        %v11724 = vld [vmem:[#allocation10 + $0x2c] sm:$0xf]
        %v11725 = vld [vmem:[#allocation10 + $0x30] sm:$0xf]
        %v11726 = vld [vmem:[#allocation10 + $0x34] sm:$0xf]
        %v11727 = vld [vmem:[#allocation10 + $0x38] sm:$0xf]
        %v11728 = vld [vmem:[#allocation10 + $0x3c] sm:$0xf]
        %v11729 = vld [vmem:[#allocation11] sm:$0x1]
        %v11746 = vunpack.c.l.b16 %v11713
        %v11747 = vunpack.c.l.b16 %v11714
        %v11748 = vunpack.c.l.b16 %v11715
        %v11749 = vunpack.c.l.b16 %v11716
        %v11750 = vunpack.c.l.b16 %v11717
        %v11751 = vunpack.c.l.b16 %v11718
        %v11752 = vunpack.c.l.b16 %v11719
        %v11753 = vunpack.c.l.b16 %v11720
        %v11754 = vunpack.c.l.b16 %v11721
        %v11755 = vunpack.c.l.b16 %v11722
        %v11756 = vunpack.c.l.b16 %v11723
        %v11757 = vunpack.c.l.b16 %v11724
        %v11758 = vunpack.c.l.b16 %v11725
        %v11759 = vunpack.c.l.b16 %v11726
        %v11760 = vunpack.c.l.b16 %v11727
        %v11761 = vunpack.c.l.b16 %v11728
        %v11762 = vpack.c.b16 %v11747, %v11746
        %v11763 = vpack.c.b16 %v11749, %v11748
        %v11764 = vpack.c.b16 %v11751, %v11750
        %v11765 = vpack.c.b16 %v11753, %v11752
        %v11766 = vpack.c.b16 %v11755, %v11754
        %v11767 = vpack.c.b16 %v11757, %v11756
        %v11768 = vpack.c.b16 %v11759, %v11758
        %v11769 = vpack.c.b16 %v11761, %v11760
        %11778 = vmatpush.bf16.msra.mxu0 %v11769
        %11779 = vmatpush.bf16.msra.mxu0 %v11768
        %11780 = vmatpush.bf16.msra.mxu0 %v11767
        %11781 = vmatpush.bf16.msra.mxu0 %v11766
        %11782 = vmatpush.bf16.msra.mxu0 %v11765
        %11783 = vmatpush.bf16.msra.mxu0 %v11764
        %11784 = vmatpush.bf16.msra.mxu0 %v11763
        %11785 = vmatpush.bf16.msra.mxu0 %v11762
        %11786 = vmatmul.bf16.gmra.mxu0 %v11712
        %v11787 = vpop.f32.mrf.mxu0
        %v11788 = vadd.f32 %v11729, %v11787
        %v11789 = vpop.f32.mrf.mxu0
        %11790 = vdwg.mxu0
        %11791 = vst [vmem:[%s411] sm:$0x1] %v11788
        %s11792 = sand.u32 %s207, 1
        %s11793 = scalar_lea.sflag [#allocation7], %s11792
        %s11794 = sand.u32 %s207, 1
        %s11795 = scalar_lea.vmem [#allocation17], %s11794
        // Predicated region
        $region81: #{my_convnet_forward.1} parent=51 // pred_check
          %p11796 = pneg %p217
        $region82: #{my_convnet_forward.1} parent=51 // pred_check_branch
          %11798 = sbr.rel (%p11796) target = $region84
        $region83: #{my_convnet_forward.1} parent=51 // pred_region
          %11800 = vsyncadd %s11793, 0
          %s11801 = scalar_lea.hbm %s8, %s26
          %s11803 = sshll.u32 %s11795, 4
          %s11804 = int_to_ptr.vmem [resolvable:$true] %s11803
          %s11805 = sshll.u32 %s11801, 4
          %s11806 = int_to_ptr.hbm [resolvable:$true] %s11805
          %11808 = dma.vmem_to_hbm [thread:$0]  %s11804, 16, %s11806, %s11793
        $region84: #{my_convnet_forward.1} parent=51 // pred_fallthru
          _
      $region52: #{my_convnet_forward.1} parent=5 // pred_fallthru
        _
      %p11809 = scmp.le.s32.totalorder 2, %s21
      // Predicated region
      $region85: #{my_convnet_forward.1} parent=5 // pred_check
        %p11810 = pneg %p11809
      $region86: #{my_convnet_forward.1} parent=5 // pred_check_branch
        %11812 = sbr.rel (%p11810) target = $region88
      $region87: #{my_convnet_forward.1} parent=5 // pred_region
        %s11813 = ssub.s32 %s21, 2
        // Predicated region
        $region89: #{my_convnet_forward.1} parent=87 // pred_check
          %p11814 = pneg %p223
        $region90: #{my_convnet_forward.1} parent=87 // pred_check_branch
          %11816 = sbr.rel (%p11814) target = $region92
        $region91: #{my_convnet_forward.1} parent=87 // pred_region
          %s11817 = sand.u32 %s208, 1
          %s11818 = scalar_lea.sflag [#allocation7], %s11817
          %s11819 = sand.u32 %s208, 1
          %s11820 = scalar_lea.vmem [#allocation17], %s11819
          %11822 = dma.done %s11818, 16
        $region92: #{my_convnet_forward.1} parent=87 // pred_fallthru
          _
      $region88: #{my_convnet_forward.1} parent=5 // pred_fallthru
        _
    $region6: #{my_convnet_forward.1} parent=1 // loop_footer
      %s25 = sadd.s32 1, %s21
    $region7: #{my_convnet_forward.1} parent=1 // loop_footer_branch
      %20 = sbr.rel target = $region3
    $region8: #{my_convnet_forward.1} parent=1 // loop_exit
      _
    %11823 = vsyncpa [#allocation6], 1
    %s11824 = scalar_lea.sflag [#allocation6], 1
    %11825 = vsyncpa %s11824, 1
    %11826 = vsyncpa [#allocation9], 1
    %11827 = vsyncpa [#allocation12], 1
    %11828 = vsyncpa [#allocation15], 1
    %11829 = vsyncpa [#allocation7], 1
    %s11830 = scalar_lea.sflag [#allocation7], 1
    %11831 = vsyncpa %s11830, 1

</llo_original>
